<compile_context>
chip_gen: v7x
topology: tpu7x:2x2x1
jax: 0.10.0
libtpu: 0.0.40
codegen_flags: <defaults>
</compile_context>

<pallas_src>
import functools

import jax
import jax.numpy as jnp
from jax import lax
from jax.experimental import pallas as pl
from jax.experimental.pallas import tpu as pltpu


# ---------------------------------------------------------------------------
# Fused head kernel: one image per grid step, everything resident in VMEM.
# ---------------------------------------------------------------------------
def _head_kernel(x_ref, w1_ref, s1_ref, b1_ref, w2_ref, s2_ref, b2_ref,
                 w3_ref, s3_ref, b3_ref, wd_ref, bd_ref, sel_ref,
                 o_ref,
                 padm_ref, colm_ref, padd_ref, cold_ref,
                 *, H, W, num_blocks):
    HW = H * W
    f32 = jnp.float32
    bf16 = jnp.bfloat16

    # ---- one-time setup per grid step ------------------------------------
    # Zero the halo rows of both padded tap buffers.  Layout of a pad buffer
    # ((H+4)*W rows): [0, 2W) zero halo, [2W, 2W+HW) image, [2W+HW, (H+4)W)
    # zero halo.  The 2W-row top halo keeps the (kh=0, dw=-1) tap's start
    # offset (W-1) in-bounds.  Halos stay zero for the whole kernel; only the
    # interior is rewritten per conv.
    for pad_ref in (padm_ref, padd_ref):
        C = pad_ref.shape[-1]
        pad_ref[pl.ds(0, 2 * W), :] = jnp.zeros((2 * W, C), f32)
        pad_ref[pl.ds(2 * W + HW, 2 * W), :] = jnp.zeros((2 * W, C), f32)

    # Hoisted column-border masks (built once, reused by every 3x3 conv).
    w_idx = lax.broadcasted_iota(jnp.int32, (HW, 1), 0) % W
    left = w_idx == 0          # output column w == 0     (mask for dw = -1)
    right = w_idx == W - 1     # output column w == W - 1 (mask for dw = +1)

    def im2col3x3(y, pad_ref, col_ref):
        """Fill col_ref (HW, 9*C) bf16 with the 9 shifted taps of y (HW, C) f32.

        Tap (kh, kw) of output pixel (h, w) is input pixel (h+kh-1, w+kw-1)
        (zero outside the image).  Reading the padded buffer at static row
        offset (kh+1)*W + (kw-1) gives exactly that value except for the
        cross-row wrap at w==0 (dw=-1) / w==W-1 (dw=+1), which is masked.
        """
        C = pad_ref.shape[-1]
        pad_ref[pl.ds(2 * W, HW), :] = y
        for kh in range(3):
            for kw in range(3):
                dw = kw - 1
                v = pad_ref[pl.ds((kh + 1) * W + dw, HW), :]
                if dw == -1:
                    v = jnp.where(left, 0.0, v)
                elif dw == 1:
                    v = jnp.where(right, 0.0, v)
                t = kh * 3 + kw
                col_ref[:, t * C:(t + 1) * C] = v.astype(bf16)

    # ---- residual blocks --------------------------------------------------
    x = x_ref[...]                                            # (HW, Cin) f32
    for b in range(num_blocks):
        # 1x1 conv -> BN -> ReLU
        y = jnp.dot(x.astype(bf16), w1_ref[b], preferred_element_type=f32)
        y = jnp.maximum(y * s1_ref[b] + b1_ref[b], 0.0)
        # 3x3 conv (pad=1) as one im2col matmul -> BN -> ReLU
        im2col3x3(y, padm_ref, colm_ref)
        y = jnp.dot(colm_ref[...], w2_ref[b], preferred_element_type=f32)
        y = jnp.maximum(y * s2_ref[b] + b2_ref[b], 0.0)
        # 1x1 conv -> BN -> ReLU, then residual add (residual stays in VMEM)
        y = jnp.dot(y.astype(bf16), w3_ref[b], preferred_element_type=f32)
        y = jnp.maximum(y * s3_ref[b] + b3_ref[b], 0.0)
        x = y + x

    # ---- downsample: 3x3 conv, stride 2, pad 1, + bias --------------------
    # Build the full-resolution im2col slab, gather the stride-2 output rows
    # of the bf16 slab with a one-hot selection matmul (exact: 1.0 * bf16
    # products accumulate in f32), then one small matmul + bias.
    im2col3x3(x, padd_ref, cold_ref)
    sub = jnp.dot(sel_ref[...], cold_ref[...],
                  preferred_element_type=f32).astype(bf16)     # exact gather
    out = jnp.dot(sub, wd_ref[...], preferred_element_type=f32) + bd_ref[...]
    o_ref[...] = out.astype(o_ref.dtype)


# ---------------------------------------------------------------------------
# ConvHead forward (Pallas) — input/output NCHW like PyTorch
# ---------------------------------------------------------------------------
def conv_head_forward(x_nchw, params):
    N, Cin, H, W = x_nchw.shape
    blocks = params["blocks"]
    nb = len(blocks)
    Cmid = blocks[0]["w1"].shape[-1]
    HW, Ho, Wo = H * W, H // 2, W // 2
    bf = jnp.bfloat16

    # NCHW -> (N, HW, C): channels on the 128-lane axis, spatial as rows.
    x = jnp.transpose(x_nchw, (0, 2, 3, 1)).reshape(N, HW, Cin)

    # Stack per-block weights on a leading block axis (all VMEM-resident).
    w1 = jnp.stack([b["w1"] for b in blocks]).astype(bf)              # (nb, Cin, Cmid)
    w2 = jnp.stack([b["w2"].reshape(9 * Cmid, Cmid)
                    for b in blocks]).astype(bf)                      # (nb, 9*Cmid, Cmid)
    w3 = jnp.stack([b["w3"] for b in blocks]).astype(bf)              # (nb, Cmid, Cin)
    s1 = jnp.stack([b["s1"] for b in blocks]).reshape(nb, 1, Cmid)
    b1 = jnp.stack([b["b1"] for b in blocks]).reshape(nb, 1, Cmid)
    s2 = jnp.stack([b["s2"] for b in blocks]).reshape(nb, 1, Cmid)
    b2 = jnp.stack([b["b2"] for b in blocks]).reshape(nb, 1, Cmid)
    s3 = jnp.stack([b["s3"] for b in blocks]).reshape(nb, 1, Cin)
    b3 = jnp.stack([b["b3"] for b in blocks]).reshape(nb, 1, Cin)
    wd = params["wd"].reshape(9 * Cin, Cmid).astype(bf)               # (9*Cin, Cmid)
    bd = params["bd"].reshape(1, Cmid)

    # One-hot row-selection matrix for the stride-2 subsample: row j picks
    # full-resolution row 2*(j//Wo)*W + 2*(j%Wo).  Built host-side once.
    j = jnp.arange(Ho * Wo)
    rows = 2 * (j // Wo) * W + 2 * (j % Wo)
    sel = (rows[:, None] == jnp.arange(HW)[None, :]).astype(bf)       # (Ho*Wo, HW)

    def full(shape):
        return pl.BlockSpec(shape, lambda n, _nd=len(shape): (0,) * _nd)

    grid_spec = pltpu.PrefetchScalarGridSpec(
        num_scalar_prefetch=0,
        grid=(N,),
        in_specs=[
            pl.BlockSpec((None, HW, Cin), lambda n: (n, 0, 0)),  # activations
            full((nb, Cin, Cmid)),                               # w1
            full((nb, 1, Cmid)), full((nb, 1, Cmid)),            # s1, b1
            full((nb, 9 * Cmid, Cmid)),                          # w2 (im2col)
            full((nb, 1, Cmid)), full((nb, 1, Cmid)),            # s2, b2
            full((nb, Cmid, Cin)),                               # w3
            full((nb, 1, Cin)), full((nb, 1, Cin)),              # s3, b3
            full((9 * Cin, Cmid)),                               # wd (im2col)
            full((1, Cmid)),                                     # bd
            full((Ho * Wo, HW)),                                 # stride-2 selector
        ],
        out_specs=pl.BlockSpec((None, Ho * Wo, Cmid), lambda n: (n, 0, 0)),
        scratch_shapes=[
            pltpu.VMEM(((H + 4) * W, Cmid), jnp.float32),        # padded taps (blocks)
            pltpu.VMEM((HW, 9 * Cmid), jnp.bfloat16),            # im2col slab (blocks)
            pltpu.VMEM(((H + 4) * W, Cin), jnp.float32),         # padded taps (downsample)
            pltpu.VMEM((HW, 9 * Cin), jnp.bfloat16),             # im2col slab (downsample)
        ],
    )
    y = pl.pallas_call(
        functools.partial(_head_kernel, H=H, W=W, num_blocks=nb),
        out_shape=jax.ShapeDtypeStruct((N, Ho * Wo, Cmid), jnp.float32),
        grid_spec=grid_spec,
        compiler_params=pltpu.CompilerParams(
            dimension_semantics=("parallel",)),
    )(x, w1, s1, b1, w2, s2, b2, w3, s3, b3, wd, bd, sel)

    y = y.reshape(N, Ho, Wo, Cmid)
    return jnp.transpose(y, (0, 3, 1, 2))


# ---------------------------------------------------------------------------
# Parameters (deterministic, synthetic) — BN folded to scale/bias
# ---------------------------------------------------------------------------
def _fold_bn(gamma, beta, mean, var, eps=1e-5):
    scale = gamma / jnp.sqrt(var + eps)
    bias = beta - mean * scale
    return scale, bias


def init_params(key, num_blocks=1, cin=32, cmid=64):
    keys = iter(jax.random.split(key, 16 * num_blocks + 8))
    nk = lambda: next(keys)

    def conv_w(shape, fan_in):
        return jax.random.normal(nk(), shape, jnp.float32) / jnp.sqrt(float(fan_in))

    def bn(c):
        gamma = jax.random.uniform(nk(), (c,), jnp.float32, 0.8, 1.2)
        beta = 0.1 * jax.random.normal(nk(), (c,), jnp.float32)
        mean = 0.1 * jax.random.normal(nk(), (c,), jnp.float32)
        var = jax.random.uniform(nk(), (c,), jnp.float32, 0.5, 1.5)
        return _fold_bn(gamma, beta, mean, var)

    blocks = []
    for _ in range(num_blocks):
        w1 = conv_w((cin, cmid), cin)               # 1x1 conv  (Cin, Cout)
        s1, b1 = bn(cmid)
        w2 = conv_w((3, 3, cmid, cmid), 9 * cmid)   # 3x3 conv  HWIO
        s2, b2 = bn(cmid)
        w3 = conv_w((cmid, cin), cmid)              # 1x1 conv  (Cin, Cout)
        s3, b3 = bn(cin)
        blocks.append(dict(w1=w1, s1=s1, b1=b1, w2=w2, s2=s2, b2=b2,
                           w3=w3, s3=s3, b3=b3))
    wd = conv_w((3, 3, cin, cmid), 9 * cin)         # downsample 3x3/s2, HWIO
    bd = 0.1 * jax.random.normal(nk(), (cmid,), jnp.float32)
    return dict(blocks=blocks, wd=wd, bd=bd)


# ---------------------------------------------------------------------------
# Pure-JAX reference (lax.conv).  quantize_bf16=True mirrors the kernel's
# bf16 MXU inputs (f32 accumulation), so the comparison isolates indexing /
# padding / stride / BN / residual correctness from the intended precision.
# ---------------------------------------------------------------------------
def ref_forward(x_nchw, params, *, quantize_bf16=True):
    q = ((lambda t: t.astype(jnp.bfloat16).astype(jnp.float32))
         if quantize_bf16 else (lambda t: t))
    dn = ("NHWC", "HWIO", "NHWC")
    P = lax.Precision.HIGHEST
    x = jnp.transpose(x_nchw, (0, 2, 3, 1))
    for blk in params["blocks"]:
        cin, cmid = blk["w1"].shape
        y = lax.conv_general_dilated(q(x), q(blk["w1"]).reshape(1, 1, cin, cmid),
                                     (1, 1), "VALID", dimension_numbers=dn,
                                     precision=P)
        y = jnp.maximum(y * blk["s1"] + blk["b1"], 0.0)
        y = lax.conv_general_dilated(q(y), q(blk["w2"]), (1, 1),
                                     [(1, 1), (1, 1)], dimension_numbers=dn,
                                     precision=P)
        y = jnp.maximum(y * blk["s2"] + blk["b2"], 0.0)
        y = lax.conv_general_dilated(q(y), q(blk["w3"]).reshape(1, 1, cmid, cin),
                                     (1, 1), "VALID", dimension_numbers=dn,
                                     precision=P)
        y = jnp.maximum(y * blk["s3"] + blk["b3"], 0.0)
        x = y + x
    y = lax.conv_general_dilated(q(x), q(params["wd"]), (2, 2),
                                 [(1, 1), (1, 1)], dimension_numbers=dn,
                                 precision=P)
    y = y + params["bd"]
    return jnp.transpose(y, (0, 3, 1, 2))


if __name__ == "__main__":
    key = jax.random.PRNGKey(0)
    kx, kp = jax.random.split(key)

    N, Cin, Cmid, H, W = 2, 32, 64, 16, 16          # embed_dim_in=32, embed_dim_out=64
    x = jax.random.normal(kx, (N, Cin, H, W), jnp.float32)   # NCHW like PyTorch
    params = init_params(kp, num_blocks=1, cin=Cin, cmid=Cmid)

    fwd = jax.jit(conv_head_forward)
    out = jax.block_until_ready(fwd(x, params))
    ref = jax.block_until_ready(ref_forward(x, params, quantize_bf16=True))

    assert out.shape == (N, Cmid, H // 2, W // 2), out.shape
    assert bool(jnp.allclose(out, ref, atol=5e-3, rtol=5e-3)), (
        float(jnp.max(jnp.abs(out - ref))))
    print("KERNEL_OK")
</pallas_src>

<mosaic_0001>
module attributes {stable_mosaic.version = 11 : i64} {
  func.func @_head_kernel(%arg0: i32, %arg1: memref<1x256x32xf32, #tpu.memory_space<vmem>>, %arg2: memref<1x32x64xbf16, #tpu.memory_space<vmem>>, %arg3: memref<1x1x64xf32, #tpu.memory_space<vmem>>, %arg4: memref<1x1x64xf32, #tpu.memory_space<vmem>>, %arg5: memref<1x576x64xbf16, #tpu.memory_space<vmem>>, %arg6: memref<1x1x64xf32, #tpu.memory_space<vmem>>, %arg7: memref<1x1x64xf32, #tpu.memory_space<vmem>>, %arg8: memref<1x64x32xbf16, #tpu.memory_space<vmem>>, %arg9: memref<1x1x32xf32, #tpu.memory_space<vmem>>, %arg10: memref<1x1x32xf32, #tpu.memory_space<vmem>>, %arg11: memref<288x64xbf16, #tpu.memory_space<vmem>>, %arg12: memref<1x64xf32, #tpu.memory_space<vmem>>, %arg13: memref<64x256xbf16, #tpu.memory_space<vmem>>, %arg14: memref<1x64x64xf32, #tpu.memory_space<vmem>>, %arg15: memref<320x64xf32, #tpu.memory_space<vmem>>, %arg16: memref<256x576xbf16, #tpu.memory_space<vmem>>, %arg17: memref<320x32xf32, #tpu.memory_space<vmem>>, %arg18: memref<256x288xbf16, #tpu.memory_space<vmem>>) attributes {dimension_semantics = [#tpu.dimension_semantics<parallel>], iteration_bounds = array<i64: 2>, scalar_prefetch = 0 : i64, scratch_operands = 4 : i64, tpu.core_type = #tpu.core_type<tc>, window_params = [{transform_indices = @transform_0, window_bounds = array<i64: 1, 256, 32>}, {pipeline_mode = #tpu.pipeline_mode<synchronous>, transform_indices = @transform_1, window_bounds = array<i64: 1, 32, 64>}, {pipeline_mode = #tpu.pipeline_mode<synchronous>, transform_indices = @transform_2, window_bounds = array<i64: 1, 1, 64>}, {pipeline_mode = #tpu.pipeline_mode<synchronous>, transform_indices = @transform_3, window_bounds = array<i64: 1, 1, 64>}, {pipeline_mode = #tpu.pipeline_mode<synchronous>, transform_indices = @transform_4, window_bounds = array<i64: 1, 576, 64>}, {pipeline_mode = #tpu.pipeline_mode<synchronous>, transform_indices = @transform_5, window_bounds = array<i64: 1, 1, 64>}, {pipeline_mode = #tpu.pipeline_mode<synchronous>, transform_indices = @transform_6, window_bounds = array<i64: 1, 1, 64>}, {pipeline_mode = #tpu.pipeline_mode<synchronous>, transform_indices = @transform_7, window_bounds = array<i64: 1, 64, 32>}, {pipeline_mode = #tpu.pipeline_mode<synchronous>, transform_indices = @transform_8, window_bounds = array<i64: 1, 1, 32>}, {pipeline_mode = #tpu.pipeline_mode<synchronous>, transform_indices = @transform_9, window_bounds = array<i64: 1, 1, 32>}, {pipeline_mode = #tpu.pipeline_mode<synchronous>, transform_indices = @transform_10, window_bounds = array<i64: 288, 64>}, {pipeline_mode = #tpu.pipeline_mode<synchronous>, transform_indices = @transform_11, window_bounds = array<i64: 1, 64>}, {pipeline_mode = #tpu.pipeline_mode<synchronous>, transform_indices = @transform_12, window_bounds = array<i64: 64, 256>}, {transform_indices = @transform_13, window_bounds = array<i64: 1, 64, 64>}]} {
    %cst = arith.constant 0.000000e+00 : f32
    %0 = vector.broadcast %cst : f32 to vector<32x64xf32>
    %c0 = arith.constant 0 : index
    %c0_0 = arith.constant 0 : index
    %1 = vector.load %arg15[%c0, %c0_0] : memref<320x64xf32, #tpu.memory_space<vmem>>, vector<32x64xf32>
    tpu.vector_store %arg15[%c0, %c0_0], %0 {strides = array<i32>} : memref<320x64xf32, #tpu.memory_space<vmem>>, vector<32x64xf32>,
    %cst_1 = arith.constant 0.000000e+00 : f32
    %2 = vector.broadcast %cst_1 : f32 to vector<32x64xf32>
    %c288 = arith.constant 288 : index
    %c0_2 = arith.constant 0 : index
    %3 = vector.load %arg15[%c288, %c0_2] : memref<320x64xf32, #tpu.memory_space<vmem>>, vector<32x64xf32>
    tpu.vector_store %arg15[%c288, %c0_2], %2 {strides = array<i32>} : memref<320x64xf32, #tpu.memory_space<vmem>>, vector<32x64xf32>,
    %cst_3 = arith.constant 0.000000e+00 : f32
    %4 = vector.broadcast %cst_3 : f32 to vector<32x32xf32>
    %c0_4 = arith.constant 0 : index
    %c0_5 = arith.constant 0 : index
    %5 = vector.load %arg17[%c0_4, %c0_5] : memref<320x32xf32, #tpu.memory_space<vmem>>, vector<32x32xf32>
    tpu.vector_store %arg17[%c0_4, %c0_5], %4 {strides = array<i32>} : memref<320x32xf32, #tpu.memory_space<vmem>>, vector<32x32xf32>,
    %cst_6 = arith.constant 0.000000e+00 : f32
    %6 = vector.broadcast %cst_6 : f32 to vector<32x32xf32>
    %c288_7 = arith.constant 288 : index
    %c0_8 = arith.constant 0 : index
    %7 = vector.load %arg17[%c288_7, %c0_8] : memref<320x32xf32, #tpu.memory_space<vmem>>, vector<32x32xf32>
    tpu.vector_store %arg17[%c288_7, %c0_8], %6 {strides = array<i32>} : memref<320x32xf32, #tpu.memory_space<vmem>>, vector<32x32xf32>,
    %8 = tpu.iota {dimensions = array<i32: 0>} : vector<256x1xi32>
    %c16_i32 = arith.constant 16 : i32
    %c0_i32 = arith.constant 0 : i32
    %9 = arith.cmpi eq, %c16_i32, %c0_i32 : i32
    %c1_i32 = arith.constant 1 : i32
    %10 = arith.select %9, %c1_i32, %c16_i32 : i32
    %11 = vector.broadcast %10 : i32 to vector<256x1xi32>
    %12 = arith.remsi %8, %11 : vector<256x1xi32>
    %c0_i32_9 = arith.constant 0 : i32
    %13 = vector.broadcast %c0_i32_9 : i32 to vector<256x1xi32>
    %14 = arith.cmpi ne, %12, %13 : vector<256x1xi32>
    %c0_i32_10 = arith.constant 0 : i32
    %15 = vector.broadcast %c0_i32_10 : i32 to vector<256x1xi32>
    %16 = arith.cmpi slt, %12, %15 : vector<256x1xi32>
    %c0_i32_11 = arith.constant 0 : i32
    %17 = arith.cmpi slt, %10, %c0_i32_11 : i32
    %18 = vector.broadcast %17 : i1 to vector<256x1xi1>
    %19 = vector.broadcast %18 : vector<256x1xi1> to vector<256x1xi1>
    %20 = arith.xori %16, %19 : vector<256x1xi1>
    %21 = arith.andi %20, %14 : vector<256x1xi1>
    %22 = vector.broadcast %10 : i32 to vector<256x1xi32>
    %23 = arith.addi %12, %22 : vector<256x1xi32>
    %24 = arith.select %21, %23, %12 : vector<256x1xi1>, vector<256x1xi32>
    %c0_i32_12 = arith.constant 0 : i32
    %25 = vector.broadcast %c0_i32_12 : i32 to vector<256x1xi32>
    %26 = arith.cmpi eq, %24, %25 : vector<256x1xi32>
    %c15_i32 = arith.constant 15 : i32
    %27 = vector.broadcast %c15_i32 : i32 to vector<256x1xi32>
    %28 = arith.cmpi eq, %24, %27 : vector<256x1xi32>
    %c0_13 = arith.constant 0 : index
    %c0_14 = arith.constant 0 : index
    %c0_15 = arith.constant 0 : index
    %29 = vector.load %arg1[%c0_13, %c0_14, %c0_15] : memref<1x256x32xf32, #tpu.memory_space<vmem>>, vector<1x256x32xf32>
    %30 = vector.shape_cast %29 : vector<1x256x32xf32> to vector<256x32xf32>
    %31 = arith.truncf %30 : vector<256x32xf32> to vector<256x32xbf16>
    %c0_16 = arith.constant 0 : index
    %c0_17 = arith.constant 0 : index
    %c0_18 = arith.constant 0 : index
    %32 = vector.load %arg2[%c0_16, %c0_17, %c0_18] : memref<1x32x64xbf16, #tpu.memory_space<vmem>>, vector<1x32x64xbf16>
    %33 = vector.shape_cast %32 : vector<1x32x64xbf16> to vector<32x64xbf16>
    %cst_19 = arith.constant dense<0.000000e+00> : vector<256x64xf32>
    %34 = tpu.matmul %31, %33, %cst_19 {dimension_numbers = #tpu.dot_dimension_numbers<[1], [0], [0], [1], [0, 0, 1, 1], [], []>} : vector<256x32xbf16>, vector<32x64xbf16>, vector<256x64xf32> -> vector<256x64xf32>
    %c0_20 = arith.constant 0 : index
    %c0_21 = arith.constant 0 : index
    %c0_22 = arith.constant 0 : index
    %35 = vector.load %arg3[%c0_20, %c0_21, %c0_22] : memref<1x1x64xf32, #tpu.memory_space<vmem>>, vector<1x1x64xf32>
    %36 = vector.shape_cast %35 : vector<1x1x64xf32> to vector<1x64xf32>
    %37 = vector.broadcast %36 : vector<1x64xf32> to vector<256x64xf32>
    %38 = arith.mulf %34, %37 : vector<256x64xf32>
    %c0_23 = arith.constant 0 : index
    %c0_24 = arith.constant 0 : index
    %c0_25 = arith.constant 0 : index
    %39 = vector.load %arg4[%c0_23, %c0_24, %c0_25] : memref<1x1x64xf32, #tpu.memory_space<vmem>>, vector<1x1x64xf32>
    %40 = vector.shape_cast %39 : vector<1x1x64xf32> to vector<1x64xf32>
    %41 = vector.broadcast %40 : vector<1x64xf32> to vector<256x64xf32>
    %42 = arith.addf %38, %41 : vector<256x64xf32>
    %cst_26 = arith.constant 0.000000e+00 : f32
    %43 = vector.broadcast %cst_26 : f32 to vector<256x64xf32>
    %44 = arith.maximumf %42, %43 : vector<256x64xf32>
    %c32 = arith.constant 32 : index
    %c0_27 = arith.constant 0 : index
    %45 = vector.load %arg15[%c32, %c0_27] : memref<320x64xf32, #tpu.memory_space<vmem>>, vector<256x64xf32>
    tpu.vector_store %arg15[%c32, %c0_27], %44 {strides = array<i32>} : memref<320x64xf32, #tpu.memory_space<vmem>>, vector<256x64xf32>,
    %c15 = arith.constant 15 : index
    %c0_28 = arith.constant 0 : index
    %46 = vector.load %arg15[%c15, %c0_28] : memref<320x64xf32, #tpu.memory_space<vmem>>, vector<256x64xf32>
    %cst_29 = arith.constant 0.000000e+00 : f32
    %47 = vector.shape_cast %26 : vector<256x1xi1> to vector<256x1xi1>
    %48 = vector.broadcast %47 : vector<256x1xi1> to vector<256x64xi1>
    %49 = vector.broadcast %cst_29 : f32 to vector<256x64xf32>
    %50 = arith.select %48, %49, %46 : vector<256x64xi1>, vector<256x64xf32>
    %51 = arith.truncf %50 : vector<256x64xf32> to vector<256x64xbf16>
    %c0_30 = arith.constant 0 : index
    %c0_31 = arith.constant 0 : index
    %52 = vector.load %arg16[%c0_30, %c0_31] : memref<256x576xbf16, #tpu.memory_space<vmem>>, vector<256x64xbf16>
    tpu.vector_store %arg16[%c0_30, %c0_31], %51 {strides = array<i32>} : memref<256x576xbf16, #tpu.memory_space<vmem>>, vector<256x64xbf16>,
    %c16 = arith.constant 16 : index
    %c0_32 = arith.constant 0 : index
    %53 = vector.load %arg15[%c16, %c0_32] : memref<320x64xf32, #tpu.memory_space<vmem>>, vector<256x64xf32>
    %54 = arith.truncf %53 : vector<256x64xf32> to vector<256x64xbf16>
    %c0_33 = arith.constant 0 : index
    %c64 = arith.constant 64 : index
    %55 = vector.load %arg16[%c0_33, %c64] : memref<256x576xbf16, #tpu.memory_space<vmem>>, vector<256x64xbf16>
    tpu.vector_store %arg16[%c0_33, %c64], %54 {strides = array<i32>} : memref<256x576xbf16, #tpu.memory_space<vmem>>, vector<256x64xbf16>,
    %c17 = arith.constant 17 : index
    %c0_34 = arith.constant 0 : index
    %56 = vector.load %arg15[%c17, %c0_34] : memref<320x64xf32, #tpu.memory_space<vmem>>, vector<256x64xf32>
    %cst_35 = arith.constant 0.000000e+00 : f32
    %57 = vector.shape_cast %28 : vector<256x1xi1> to vector<256x1xi1>
    %58 = vector.broadcast %57 : vector<256x1xi1> to vector<256x64xi1>
    %59 = vector.broadcast %cst_35 : f32 to vector<256x64xf32>
    %60 = arith.select %58, %59, %56 : vector<256x64xi1>, vector<256x64xf32>
    %61 = arith.truncf %60 : vector<256x64xf32> to vector<256x64xbf16>
    %c0_36 = arith.constant 0 : index
    %c128 = arith.constant 128 : index
    %62 = vector.load %arg16[%c0_36, %c128] : memref<256x576xbf16, #tpu.memory_space<vmem>>, vector<256x64xbf16>
    tpu.vector_store %arg16[%c0_36, %c128], %61 {strides = array<i32>} : memref<256x576xbf16, #tpu.memory_space<vmem>>, vector<256x64xbf16>,
    %c31 = arith.constant 31 : index
    %c0_37 = arith.constant 0 : index
    %63 = vector.load %arg15[%c31, %c0_37] : memref<320x64xf32, #tpu.memory_space<vmem>>, vector<256x64xf32>
    %cst_38 = arith.constant 0.000000e+00 : f32
    %64 = vector.shape_cast %26 : vector<256x1xi1> to vector<256x1xi1>
    %65 = vector.broadcast %64 : vector<256x1xi1> to vector<256x64xi1>
    %66 = vector.broadcast %cst_38 : f32 to vector<256x64xf32>
    %67 = arith.select %65, %66, %63 : vector<256x64xi1>, vector<256x64xf32>
    %68 = arith.truncf %67 : vector<256x64xf32> to vector<256x64xbf16>
    %c0_39 = arith.constant 0 : index
    %c192 = arith.constant 192 : index
    %69 = vector.load %arg16[%c0_39, %c192] : memref<256x576xbf16, #tpu.memory_space<vmem>>, vector<256x64xbf16>
    tpu.vector_store %arg16[%c0_39, %c192], %68 {strides = array<i32>} : memref<256x576xbf16, #tpu.memory_space<vmem>>, vector<256x64xbf16>,
    %c32_40 = arith.constant 32 : index
    %c0_41 = arith.constant 0 : index
    %70 = vector.load %arg15[%c32_40, %c0_41] : memref<320x64xf32, #tpu.memory_space<vmem>>, vector<256x64xf32>
    %71 = arith.truncf %70 : vector<256x64xf32> to vector<256x64xbf16>
    %c0_42 = arith.constant 0 : index
    %c256 = arith.constant 256 : index
    %72 = vector.load %arg16[%c0_42, %c256] : memref<256x576xbf16, #tpu.memory_space<vmem>>, vector<256x64xbf16>
    tpu.vector_store %arg16[%c0_42, %c256], %71 {strides = array<i32>} : memref<256x576xbf16, #tpu.memory_space<vmem>>, vector<256x64xbf16>,
    %c33 = arith.constant 33 : index
    %c0_43 = arith.constant 0 : index
    %73 = vector.load %arg15[%c33, %c0_43] : memref<320x64xf32, #tpu.memory_space<vmem>>, vector<256x64xf32>
    %cst_44 = arith.constant 0.000000e+00 : f32
    %74 = vector.shape_cast %28 : vector<256x1xi1> to vector<256x1xi1>
    %75 = vector.broadcast %74 : vector<256x1xi1> to vector<256x64xi1>
    %76 = vector.broadcast %cst_44 : f32 to vector<256x64xf32>
    %77 = arith.select %75, %76, %73 : vector<256x64xi1>, vector<256x64xf32>
    %78 = arith.truncf %77 : vector<256x64xf32> to vector<256x64xbf16>
    %c0_45 = arith.constant 0 : index
    %c320 = arith.constant 320 : index
    %79 = vector.load %arg16[%c0_45, %c320] : memref<256x576xbf16, #tpu.memory_space<vmem>>, vector<256x64xbf16>
    tpu.vector_store %arg16[%c0_45, %c320], %78 {strides = array<i32>} : memref<256x576xbf16, #tpu.memory_space<vmem>>, vector<256x64xbf16>,
    %c47 = arith.constant 47 : index
    %c0_46 = arith.constant 0 : index
    %80 = vector.load %arg15[%c47, %c0_46] : memref<320x64xf32, #tpu.memory_space<vmem>>, vector<256x64xf32>
    %cst_47 = arith.constant 0.000000e+00 : f32
    %81 = vector.shape_cast %26 : vector<256x1xi1> to vector<256x1xi1>
    %82 = vector.broadcast %81 : vector<256x1xi1> to vector<256x64xi1>
    %83 = vector.broadcast %cst_47 : f32 to vector<256x64xf32>
    %84 = arith.select %82, %83, %80 : vector<256x64xi1>, vector<256x64xf32>
    %85 = arith.truncf %84 : vector<256x64xf32> to vector<256x64xbf16>
    %c0_48 = arith.constant 0 : index
    %c384 = arith.constant 384 : index
    %86 = vector.load %arg16[%c0_48, %c384] : memref<256x576xbf16, #tpu.memory_space<vmem>>, vector<256x64xbf16>
    tpu.vector_store %arg16[%c0_48, %c384], %85 {strides = array<i32>} : memref<256x576xbf16, #tpu.memory_space<vmem>>, vector<256x64xbf16>,
    %c48 = arith.constant 48 : index
    %c0_49 = arith.constant 0 : index
    %87 = vector.load %arg15[%c48, %c0_49] : memref<320x64xf32, #tpu.memory_space<vmem>>, vector<256x64xf32>
    %88 = arith.truncf %87 : vector<256x64xf32> to vector<256x64xbf16>
    %c0_50 = arith.constant 0 : index
    %c448 = arith.constant 448 : index
    %89 = vector.load %arg16[%c0_50, %c448] : memref<256x576xbf16, #tpu.memory_space<vmem>>, vector<256x64xbf16>
    tpu.vector_store %arg16[%c0_50, %c448], %88 {strides = array<i32>} : memref<256x576xbf16, #tpu.memory_space<vmem>>, vector<256x64xbf16>,
    %c49 = arith.constant 49 : index
    %c0_51 = arith.constant 0 : index
    %90 = vector.load %arg15[%c49, %c0_51] : memref<320x64xf32, #tpu.memory_space<vmem>>, vector<256x64xf32>
    %cst_52 = arith.constant 0.000000e+00 : f32
    %91 = vector.shape_cast %28 : vector<256x1xi1> to vector<256x1xi1>
    %92 = vector.broadcast %91 : vector<256x1xi1> to vector<256x64xi1>
    %93 = vector.broadcast %cst_52 : f32 to vector<256x64xf32>
    %94 = arith.select %92, %93, %90 : vector<256x64xi1>, vector<256x64xf32>
    %95 = arith.truncf %94 : vector<256x64xf32> to vector<256x64xbf16>
    %c0_53 = arith.constant 0 : index
    %c512 = arith.constant 512 : index
    %96 = vector.load %arg16[%c0_53, %c512] : memref<256x576xbf16, #tpu.memory_space<vmem>>, vector<256x64xbf16>
    tpu.vector_store %arg16[%c0_53, %c512], %95 {strides = array<i32>} : memref<256x576xbf16, #tpu.memory_space<vmem>>, vector<256x64xbf16>,
    %c0_54 = arith.constant 0 : index
    %c0_55 = arith.constant 0 : index
    %97 = vector.load %arg16[%c0_54, %c0_55] : memref<256x576xbf16, #tpu.memory_space<vmem>>, vector<256x576xbf16>
    %c0_56 = arith.constant 0 : index
    %c0_57 = arith.constant 0 : index
    %c0_58 = arith.constant 0 : index
    %98 = vector.load %arg5[%c0_56, %c0_57, %c0_58] : memref<1x576x64xbf16, #tpu.memory_space<vmem>>, vector<1x576x64xbf16>
    %99 = vector.shape_cast %98 : vector<1x576x64xbf16> to vector<576x64xbf16>
    %cst_59 = arith.constant dense<0.000000e+00> : vector<256x64xf32>
    %100 = tpu.matmul %97, %99, %cst_59 {dimension_numbers = #tpu.dot_dimension_numbers<[1], [0], [0], [1], [0, 0, 1, 1], [], []>} : vector<256x576xbf16>, vector<576x64xbf16>, vector<256x64xf32> -> vector<256x64xf32>
    %c0_60 = arith.constant 0 : index
    %c0_61 = arith.constant 0 : index
    %c0_62 = arith.constant 0 : index
    %101 = vector.load %arg6[%c0_60, %c0_61, %c0_62] : memref<1x1x64xf32, #tpu.memory_space<vmem>>, vector<1x1x64xf32>
    %102 = vector.shape_cast %101 : vector<1x1x64xf32> to vector<1x64xf32>
    %103 = vector.broadcast %102 : vector<1x64xf32> to vector<256x64xf32>
    %104 = arith.mulf %100, %103 : vector<256x64xf32>
    %c0_63 = arith.constant 0 : index
    %c0_64 = arith.constant 0 : index
    %c0_65 = arith.constant 0 : index
    %105 = vector.load %arg7[%c0_63, %c0_64, %c0_65] : memref<1x1x64xf32, #tpu.memory_space<vmem>>, vector<1x1x64xf32>
    %106 = vector.shape_cast %105 : vector<1x1x64xf32> to vector<1x64xf32>
    %107 = vector.broadcast %106 : vector<1x64xf32> to vector<256x64xf32>
    %108 = arith.addf %104, %107 : vector<256x64xf32>
    %cst_66 = arith.constant 0.000000e+00 : f32
    %109 = vector.broadcast %cst_66 : f32 to vector<256x64xf32>
    %110 = arith.maximumf %108, %109 : vector<256x64xf32>
    %111 = arith.truncf %110 : vector<256x64xf32> to vector<256x64xbf16>
    %c0_67 = arith.constant 0 : index
    %c0_68 = arith.constant 0 : index
    %c0_69 = arith.constant 0 : index
    %112 = vector.load %arg8[%c0_67, %c0_68, %c0_69] : memref<1x64x32xbf16, #tpu.memory_space<vmem>>, vector<1x64x32xbf16>
    %113 = vector.shape_cast %112 : vector<1x64x32xbf16> to vector<64x32xbf16>
    %cst_70 = arith.constant dense<0.000000e+00> : vector<256x32xf32>
    %114 = tpu.matmul %111, %113, %cst_70 {dimension_numbers = #tpu.dot_dimension_numbers<[1], [0], [0], [1], [0, 0, 1, 1], [], []>} : vector<256x64xbf16>, vector<64x32xbf16>, vector<256x32xf32> -> vector<256x32xf32>
    %c0_71 = arith.constant 0 : index
    %c0_72 = arith.constant 0 : index
    %c0_73 = arith.constant 0 : index
    %115 = vector.load %arg9[%c0_71, %c0_72, %c0_73] : memref<1x1x32xf32, #tpu.memory_space<vmem>>, vector<1x1x32xf32>
    %116 = vector.shape_cast %115 : vector<1x1x32xf32> to vector<1x32xf32>
    %117 = vector.broadcast %116 : vector<1x32xf32> to vector<256x32xf32>
    %118 = arith.mulf %114, %117 : vector<256x32xf32>
    %c0_74 = arith.constant 0 : index
    %c0_75 = arith.constant 0 : index
    %c0_76 = arith.constant 0 : index
    %119 = vector.load %arg10[%c0_74, %c0_75, %c0_76] : memref<1x1x32xf32, #tpu.memory_space<vmem>>, vector<1x1x32xf32>
    %120 = vector.shape_cast %119 : vector<1x1x32xf32> to vector<1x32xf32>
    %121 = vector.broadcast %120 : vector<1x32xf32> to vector<256x32xf32>
    %122 = arith.addf %118, %121 : vector<256x32xf32>
    %cst_77 = arith.constant 0.000000e+00 : f32
    %123 = vector.broadcast %cst_77 : f32 to vector<256x32xf32>
    %124 = arith.maximumf %122, %123 : vector<256x32xf32>
    %125 = arith.addf %124, %30 : vector<256x32xf32>
    %c32_78 = arith.constant 32 : index
    %c0_79 = arith.constant 0 : index
    %126 = vector.load %arg17[%c32_78, %c0_79] : memref<320x32xf32, #tpu.memory_space<vmem>>, vector<256x32xf32>
    tpu.vector_store %arg17[%c32_78, %c0_79], %125 {strides = array<i32>} : memref<320x32xf32, #tpu.memory_space<vmem>>, vector<256x32xf32>,
    %c15_80 = arith.constant 15 : index
    %c0_81 = arith.constant 0 : index
    %127 = vector.load %arg17[%c15_80, %c0_81] : memref<320x32xf32, #tpu.memory_space<vmem>>, vector<256x32xf32>
    %cst_82 = arith.constant 0.000000e+00 : f32
    %128 = vector.shape_cast %26 : vector<256x1xi1> to vector<256x1xi1>
    %129 = vector.broadcast %128 : vector<256x1xi1> to vector<256x32xi1>
    %130 = vector.broadcast %cst_82 : f32 to vector<256x32xf32>
    %131 = arith.select %129, %130, %127 : vector<256x32xi1>, vector<256x32xf32>
    %132 = arith.truncf %131 : vector<256x32xf32> to vector<256x32xbf16>
    %c0_83 = arith.constant 0 : index
    %c0_84 = arith.constant 0 : index
    %133 = vector.load %arg18[%c0_83, %c0_84] : memref<256x288xbf16, #tpu.memory_space<vmem>>, vector<256x32xbf16>
    tpu.vector_store %arg18[%c0_83, %c0_84], %132 {strides = array<i32>} : memref<256x288xbf16, #tpu.memory_space<vmem>>, vector<256x32xbf16>,
    %c16_85 = arith.constant 16 : index
    %c0_86 = arith.constant 0 : index
    %134 = vector.load %arg17[%c16_85, %c0_86] : memref<320x32xf32, #tpu.memory_space<vmem>>, vector<256x32xf32>
    %135 = arith.truncf %134 : vector<256x32xf32> to vector<256x32xbf16>
    %c0_87 = arith.constant 0 : index
    %c32_88 = arith.constant 32 : index
    %136 = vector.load %arg18[%c0_87, %c32_88] : memref<256x288xbf16, #tpu.memory_space<vmem>>, vector<256x32xbf16>
    tpu.vector_store %arg18[%c0_87, %c32_88], %135 {strides = array<i32>} : memref<256x288xbf16, #tpu.memory_space<vmem>>, vector<256x32xbf16>,
    %c17_89 = arith.constant 17 : index
    %c0_90 = arith.constant 0 : index
    %137 = vector.load %arg17[%c17_89, %c0_90] : memref<320x32xf32, #tpu.memory_space<vmem>>, vector<256x32xf32>
    %cst_91 = arith.constant 0.000000e+00 : f32
    %138 = vector.shape_cast %28 : vector<256x1xi1> to vector<256x1xi1>
    %139 = vector.broadcast %138 : vector<256x1xi1> to vector<256x32xi1>
    %140 = vector.broadcast %cst_91 : f32 to vector<256x32xf32>
    %141 = arith.select %139, %140, %137 : vector<256x32xi1>, vector<256x32xf32>
    %142 = arith.truncf %141 : vector<256x32xf32> to vector<256x32xbf16>
    %c0_92 = arith.constant 0 : index
    %c64_93 = arith.constant 64 : index
    %143 = vector.load %arg18[%c0_92, %c64_93] : memref<256x288xbf16, #tpu.memory_space<vmem>>, vector<256x32xbf16>
    tpu.vector_store %arg18[%c0_92, %c64_93], %142 {strides = array<i32>} : memref<256x288xbf16, #tpu.memory_space<vmem>>, vector<256x32xbf16>,
    %c31_94 = arith.constant 31 : index
    %c0_95 = arith.constant 0 : index
    %144 = vector.load %arg17[%c31_94, %c0_95] : memref<320x32xf32, #tpu.memory_space<vmem>>, vector<256x32xf32>
    %cst_96 = arith.constant 0.000000e+00 : f32
    %145 = vector.shape_cast %26 : vector<256x1xi1> to vector<256x1xi1>
    %146 = vector.broadcast %145 : vector<256x1xi1> to vector<256x32xi1>
    %147 = vector.broadcast %cst_96 : f32 to vector<256x32xf32>
    %148 = arith.select %146, %147, %144 : vector<256x32xi1>, vector<256x32xf32>
    %149 = arith.truncf %148 : vector<256x32xf32> to vector<256x32xbf16>
    %c0_97 = arith.constant 0 : index
    %c96 = arith.constant 96 : index
    %150 = vector.load %arg18[%c0_97, %c96] : memref<256x288xbf16, #tpu.memory_space<vmem>>, vector<256x32xbf16>
    tpu.vector_store %arg18[%c0_97, %c96], %149 {strides = array<i32>} : memref<256x288xbf16, #tpu.memory_space<vmem>>, vector<256x32xbf16>,
    %c32_98 = arith.constant 32 : index
    %c0_99 = arith.constant 0 : index
    %151 = vector.load %arg17[%c32_98, %c0_99] : memref<320x32xf32, #tpu.memory_space<vmem>>, vector<256x32xf32>
    %152 = arith.truncf %151 : vector<256x32xf32> to vector<256x32xbf16>
    %c0_100 = arith.constant 0 : index
    %c128_101 = arith.constant 128 : index
    %153 = vector.load %arg18[%c0_100, %c128_101] : memref<256x288xbf16, #tpu.memory_space<vmem>>, vector<256x32xbf16>
    tpu.vector_store %arg18[%c0_100, %c128_101], %152 {strides = array<i32>} : memref<256x288xbf16, #tpu.memory_space<vmem>>, vector<256x32xbf16>,
    %c33_102 = arith.constant 33 : index
    %c0_103 = arith.constant 0 : index
    %154 = vector.load %arg17[%c33_102, %c0_103] : memref<320x32xf32, #tpu.memory_space<vmem>>, vector<256x32xf32>
    %cst_104 = arith.constant 0.000000e+00 : f32
    %155 = vector.shape_cast %28 : vector<256x1xi1> to vector<256x1xi1>
    %156 = vector.broadcast %155 : vector<256x1xi1> to vector<256x32xi1>
    %157 = vector.broadcast %cst_104 : f32 to vector<256x32xf32>
    %158 = arith.select %156, %157, %154 : vector<256x32xi1>, vector<256x32xf32>
    %159 = arith.truncf %158 : vector<256x32xf32> to vector<256x32xbf16>
    %c0_105 = arith.constant 0 : index
    %c160 = arith.constant 160 : index
    %160 = vector.load %arg18[%c0_105, %c160] : memref<256x288xbf16, #tpu.memory_space<vmem>>, vector<256x32xbf16>
    tpu.vector_store %arg18[%c0_105, %c160], %159 {strides = array<i32>} : memref<256x288xbf16, #tpu.memory_space<vmem>>, vector<256x32xbf16>,
    %c47_106 = arith.constant 47 : index
    %c0_107 = arith.constant 0 : index
    %161 = vector.load %arg17[%c47_106, %c0_107] : memref<320x32xf32, #tpu.memory_space<vmem>>, vector<256x32xf32>
    %cst_108 = arith.constant 0.000000e+00 : f32
    %162 = vector.shape_cast %26 : vector<256x1xi1> to vector<256x1xi1>
    %163 = vector.broadcast %162 : vector<256x1xi1> to vector<256x32xi1>
    %164 = vector.broadcast %cst_108 : f32 to vector<256x32xf32>
    %165 = arith.select %163, %164, %161 : vector<256x32xi1>, vector<256x32xf32>
    %166 = arith.truncf %165 : vector<256x32xf32> to vector<256x32xbf16>
    %c0_109 = arith.constant 0 : index
    %c192_110 = arith.constant 192 : index
    %167 = vector.load %arg18[%c0_109, %c192_110] : memref<256x288xbf16, #tpu.memory_space<vmem>>, vector<256x32xbf16>
    tpu.vector_store %arg18[%c0_109, %c192_110], %166 {strides = array<i32>} : memref<256x288xbf16, #tpu.memory_space<vmem>>, vector<256x32xbf16>,
    %c48_111 = arith.constant 48 : index
    %c0_112 = arith.constant 0 : index
    %168 = vector.load %arg17[%c48_111, %c0_112] : memref<320x32xf32, #tpu.memory_space<vmem>>, vector<256x32xf32>
    %169 = arith.truncf %168 : vector<256x32xf32> to vector<256x32xbf16>
    %c0_113 = arith.constant 0 : index
    %c224 = arith.constant 224 : index
    %170 = vector.load %arg18[%c0_113, %c224] : memref<256x288xbf16, #tpu.memory_space<vmem>>, vector<256x32xbf16>
    tpu.vector_store %arg18[%c0_113, %c224], %169 {strides = array<i32>} : memref<256x288xbf16, #tpu.memory_space<vmem>>, vector<256x32xbf16>,
    %c49_114 = arith.constant 49 : index
    %c0_115 = arith.constant 0 : index
    %171 = vector.load %arg17[%c49_114, %c0_115] : memref<320x32xf32, #tpu.memory_space<vmem>>, vector<256x32xf32>
    %cst_116 = arith.constant 0.000000e+00 : f32
    %172 = vector.shape_cast %28 : vector<256x1xi1> to vector<256x1xi1>
    %173 = vector.broadcast %172 : vector<256x1xi1> to vector<256x32xi1>
    %174 = vector.broadcast %cst_116 : f32 to vector<256x32xf32>
    %175 = arith.select %173, %174, %171 : vector<256x32xi1>, vector<256x32xf32>
    %176 = arith.truncf %175 : vector<256x32xf32> to vector<256x32xbf16>
    %c0_117 = arith.constant 0 : index
    %c256_118 = arith.constant 256 : index
    %177 = vector.load %arg18[%c0_117, %c256_118] : memref<256x288xbf16, #tpu.memory_space<vmem>>, vector<256x32xbf16>
    tpu.vector_store %arg18[%c0_117, %c256_118], %176 {strides = array<i32>} : memref<256x288xbf16, #tpu.memory_space<vmem>>, vector<256x32xbf16>,
    %c0_119 = arith.constant 0 : index
    %c0_120 = arith.constant 0 : index
    %178 = vector.load %arg13[%c0_119, %c0_120] : memref<64x256xbf16, #tpu.memory_space<vmem>>, vector<64x256xbf16>
    %c0_121 = arith.constant 0 : index
    %c0_122 = arith.constant 0 : index
    %179 = vector.load %arg18[%c0_121, %c0_122] : memref<256x288xbf16, #tpu.memory_space<vmem>>, vector<256x288xbf16>
    %cst_123 = arith.constant dense<0.000000e+00> : vector<64x288xf32>
    %180 = tpu.matmul %178, %179, %cst_123 {dimension_numbers = #tpu.dot_dimension_numbers<[1], [0], [0], [1], [0, 0, 1, 1], [], []>} : vector<64x256xbf16>, vector<256x288xbf16>, vector<64x288xf32> -> vector<64x288xf32>
    %181 = arith.truncf %180 : vector<64x288xf32> to vector<64x288xbf16>
    %c0_124 = arith.constant 0 : index
    %c0_125 = arith.constant 0 : index
    %182 = vector.load %arg11[%c0_124, %c0_125] : memref<288x64xbf16, #tpu.memory_space<vmem>>, vector<288x64xbf16>
    %cst_126 = arith.constant dense<0.000000e+00> : vector<64x64xf32>
    %183 = tpu.matmul %181, %182, %cst_126 {dimension_numbers = #tpu.dot_dimension_numbers<[1], [0], [0], [1], [0, 0, 1, 1], [], []>} : vector<64x288xbf16>, vector<288x64xbf16>, vector<64x64xf32> -> vector<64x64xf32>
    %c0_127 = arith.constant 0 : index
    %c0_128 = arith.constant 0 : index
    %184 = vector.load %arg12[%c0_127, %c0_128] : memref<1x64xf32, #tpu.memory_space<vmem>>, vector<1x64xf32>
    %185 = vector.broadcast %184 : vector<1x64xf32> to vector<64x64xf32>
    %186 = arith.addf %183, %185 : vector<64x64xf32>
    %c0_129 = arith.constant 0 : index
    %c0_130 = arith.constant 0 : index
    %c0_131 = arith.constant 0 : index
    %187 = vector.load %arg14[%c0_129, %c0_130, %c0_131] : memref<1x64x64xf32, #tpu.memory_space<vmem>>, vector<1x64x64xf32>
    %188 = vector.shape_cast %187 : vector<1x64x64xf32> to vector<64x64xf32>
    %189 = vector.shape_cast %186 : vector<64x64xf32> to vector<1x64x64xf32>
    tpu.vector_store %arg14[%c0_129, %c0_130, %c0_131], %189 {strides = array<i32>} : memref<1x64x64xf32, #tpu.memory_space<vmem>>, vector<1x64x64xf32>,
    return
  }
  func.func @transform_0(%arg0: i32) -> (i32, i32, i32) {
    %c0_i32 = arith.constant 0 : i32
    %c0_i32_0 = arith.constant 0 : i32
    %c0_i32_1 = arith.constant 0 : i32
    return %arg0, %c0_i32, %c0_i32_0 : i32, i32, i32
  }
  func.func @transform_1(%arg0: i32) -> (i32, i32, i32) {
    %c0_i32 = arith.constant 0 : i32
    %c0_i32_0 = arith.constant 0 : i32
    %c0_i32_1 = arith.constant 0 : i32
    %c0_i32_2 = arith.constant 0 : i32
    return %c0_i32, %c0_i32_0, %c0_i32_1 : i32, i32, i32
  }
  func.func @transform_2(%arg0: i32) -> (i32, i32, i32) {
    %c0_i32 = arith.constant 0 : i32
    %c0_i32_0 = arith.constant 0 : i32
    %c0_i32_1 = arith.constant 0 : i32
    %c0_i32_2 = arith.constant 0 : i32
    return %c0_i32, %c0_i32_0, %c0_i32_1 : i32, i32, i32
  }
  func.func @transform_3(%arg0: i32) -> (i32, i32, i32) {
    %c0_i32 = arith.constant 0 : i32
    %c0_i32_0 = arith.constant 0 : i32
    %c0_i32_1 = arith.constant 0 : i32
    %c0_i32_2 = arith.constant 0 : i32
    return %c0_i32, %c0_i32_0, %c0_i32_1 : i32, i32, i32
  }
  func.func @transform_4(%arg0: i32) -> (i32, i32, i32) {
    %c0_i32 = arith.constant 0 : i32
    %c0_i32_0 = arith.constant 0 : i32
    %c0_i32_1 = arith.constant 0 : i32
    %c0_i32_2 = arith.constant 0 : i32
    return %c0_i32, %c0_i32_0, %c0_i32_1 : i32, i32, i32
  }
  func.func @transform_5(%arg0: i32) -> (i32, i32, i32) {
    %c0_i32 = arith.constant 0 : i32
    %c0_i32_0 = arith.constant 0 : i32
    %c0_i32_1 = arith.constant 0 : i32
    %c0_i32_2 = arith.constant 0 : i32
    return %c0_i32, %c0_i32_0, %c0_i32_1 : i32, i32, i32
  }
  func.func @transform_6(%arg0: i32) -> (i32, i32, i32) {
    %c0_i32 = arith.constant 0 : i32
    %c0_i32_0 = arith.constant 0 : i32
    %c0_i32_1 = arith.constant 0 : i32
    %c0_i32_2 = arith.constant 0 : i32
    return %c0_i32, %c0_i32_0, %c0_i32_1 : i32, i32, i32
  }
  func.func @transform_7(%arg0: i32) -> (i32, i32, i32) {
    %c0_i32 = arith.constant 0 : i32
    %c0_i32_0 = arith.constant 0 : i32
    %c0_i32_1 = arith.constant 0 : i32
    %c0_i32_2 = arith.constant 0 : i32
    return %c0_i32, %c0_i32_0, %c0_i32_1 : i32, i32, i32
  }
  func.func @transform_8(%arg0: i32) -> (i32, i32, i32) {
    %c0_i32 = arith.constant 0 : i32
    %c0_i32_0 = arith.constant 0 : i32
    %c0_i32_1 = arith.constant 0 : i32
    %c0_i32_2 = arith.constant 0 : i32
    return %c0_i32, %c0_i32_0, %c0_i32_1 : i32, i32, i32
  }
  func.func @transform_9(%arg0: i32) -> (i32, i32, i32) {
    %c0_i32 = arith.constant 0 : i32
    %c0_i32_0 = arith.constant 0 : i32
    %c0_i32_1 = arith.constant 0 : i32
    %c0_i32_2 = arith.constant 0 : i32
    return %c0_i32, %c0_i32_0, %c0_i32_1 : i32, i32, i32
  }
  func.func @transform_10(%arg0: i32) -> (i32, i32) {
    %c0_i32 = arith.constant 0 : i32
    %c0_i32_0 = arith.constant 0 : i32
    %c0_i32_1 = arith.constant 0 : i32
    return %c0_i32, %c0_i32_0 : i32, i32
  }
  func.func @transform_11(%arg0: i32) -> (i32, i32) {
    %c0_i32 = arith.constant 0 : i32
    %c0_i32_0 = arith.constant 0 : i32
    %c0_i32_1 = arith.constant 0 : i32
    return %c0_i32, %c0_i32_0 : i32, i32
  }
  func.func @transform_12(%arg0: i32) -> (i32, i32) {
    %c0_i32 = arith.constant 0 : i32
    %c0_i32_0 = arith.constant 0 : i32
    %c0_i32_1 = arith.constant 0 : i32
    return %c0_i32, %c0_i32_0 : i32, i32
  }
  func.func @transform_13(%arg0: i32) -> (i32, i32, i32) {
    %c0_i32 = arith.constant 0 : i32
    %c0_i32_0 = arith.constant 0 : i32
    %c0_i32_1 = arith.constant 0 : i32
    return %arg0, %c0_i32, %c0_i32_0 : i32, i32, i32
  }
}

</mosaic_0001>

<llo_original>
// kernel: conv_head_forward.1
$region0: #{conv_head_forward.1}
  #allocation0 [shape = 'u32[]', space=smem, size = 0x4, offset = 0x4, fixed_abs, tag = 'smem constant byte address 0x4 - core index']
  #allocation1 [shape = 'u32[144,128]{1,0:T(1,128)}', space=vmem, size = 0x12000, scoped, tag = 'internal scratch']
  #allocation2 [shape = 'f32[320,64]{1,0:T(8,128)}', space=vmem, size = 0x28000, scoped, tag = 'scratch operand']
  #allocation3 [shape = 'bf16[256,576]{1,0:T(16,128)(2,1)}', space=vmem, size = 0x50000, scoped, tag = 'scratch operand']
  #allocation4 [shape = 'f32[320,32]{1,0:T(8,128)}', space=vmem, size = 0x28000, scoped, tag = 'scratch operand']
  #allocation5 [shape = 'bf16[256,288]{1,0:T(16,128)(2,1)}', space=vmem, size = 0x30000, scoped, tag = 'scratch operand']
  %s0 = inlined_call_operand.vmem [shape: f32[2,256,32], index: 0, kind: input, shape index: {}]
  %s1 = inlined_call_operand.vmem [shape: bf16[1,32,64], index: 1, kind: input, shape index: {}]
  %s2 = inlined_call_operand.vmem [shape: f32[1,1,64], index: 2, kind: input, shape index: {}]
  %s3 = inlined_call_operand.vmem [shape: f32[1,1,64], index: 3, kind: input, shape index: {}]
  %s4 = inlined_call_operand.vmem [shape: bf16[1,576,64], index: 4, kind: input, shape index: {}]
  %s5 = inlined_call_operand.vmem [shape: f32[1,1,64], index: 5, kind: input, shape index: {}]
  %s6 = inlined_call_operand.vmem [shape: f32[1,1,64], index: 6, kind: input, shape index: {}]
  %s7 = inlined_call_operand.vmem [shape: bf16[1,64,32], index: 7, kind: input, shape index: {}]
  %s8 = inlined_call_operand.vmem [shape: f32[1,1,32], index: 8, kind: input, shape index: {}]
  %s9 = inlined_call_operand.vmem [shape: f32[1,1,32], index: 9, kind: input, shape index: {}]
  %s10 = inlined_call_operand.vmem [shape: bf16[288,64], index: 10, kind: input, shape index: {}]
  %s11 = inlined_call_operand.vmem [shape: f32[1,64], index: 11, kind: input, shape index: {}]
  %s12 = inlined_call_operand.vmem [shape: bf16[64,256], index: 12, kind: input, shape index: {}]
  %s13 = inlined_call_operand.hbm [shape: f32[2,64,64], index: 13, kind: output, shape index: {}]
  %s14 = sld [smem:[#allocation0]]
  $region85: #{conv_head_forward.1} parent=0
    _
  %s16 = ssub.s32 1, %s14
  %s17 = scalar_select 0, %s16, %s14
  $region1: #{conv_head_forward.1} parent=0
    #allocation6 [shape = 'u8[65536]{0}', space=vmem, size = 0x10000, scoped, tag = 'output window, operand 0']
    #allocation7 [shape = 's32[2]{0}', space=sflag, size = 0x8, scoped, tag = 'scoped memory for conv_head_forward.1']
    %18 = vsyncpa [#allocation7], 0
    %s19 = scalar_lea.sflag [#allocation7], 1
    %20 = vsyncpa %s19, 0
    loop: start=0, step=1, limit=4
    $region2: #{conv_head_forward.1} parent=1 // loop_pre_header
      _
    $region3: #{conv_head_forward.1} parent=1 // loop_header
      %s22 = sphi 0, %s26
      %p23 = scmp.ge.s32.totalorder %s22, 4
      %s32 = sphi 0, %s34
      %s35 = sphi 0, %s32
      %s36 = sphi 0, %s35
      %s52 = sphi 0, %s36
      %s56 = sphi 0, %s56
      %s58 = sphi 0, %s56
      %s59 = sphi 0, %s58
      %s73 = sphi 0, %s59
      %s77 = sphi 0, %s77
      %s79 = sphi 0, %s77
      %s80 = sphi 0, %s79
      %s94 = sphi 0, %s80
      %s98 = sphi 0, %s98
      %s100 = sphi 0, %s98
      %s101 = sphi 0, %s100
      %s115 = sphi 0, %s101
      %s119 = sphi 0, %s119
      %s121 = sphi 0, %s119
      %s122 = sphi 0, %s121
      %s136 = sphi 0, %s122
      %s140 = sphi 0, %s140
      %s142 = sphi 0, %s140
      %s143 = sphi 0, %s142
      %s157 = sphi 0, %s143
      %s161 = sphi 0, %s161
      %s163 = sphi 0, %s161
      %s164 = sphi 0, %s163
      %s178 = sphi 0, %s164
      %s182 = sphi 0, %s182
      %s184 = sphi 0, %s182
      %s185 = sphi 0, %s184
      %s199 = sphi 0, %s185
      %s203 = sphi 0, %s203
      %s205 = sphi 0, %s203
      %s206 = sphi 0, %s205
      %s220 = sphi 0, %s206
      %s224 = sphi 0, %s224
      %s226 = sphi 0, %s224
      %s227 = sphi 0, %s226
      %s241 = sphi 0, %s227
      %s245 = sphi 0, %s245
      %s247 = sphi 0, %s245
      %s248 = sphi 0, %s247
      %s262 = sphi 0, %s248
      %s266 = sphi 0, %s266
      %s268 = sphi 0, %s266
      %s269 = sphi 0, %s268
      %s283 = sphi 0, %s269
      %s287 = sphi 0, %s287
      %s289 = sphi 0, %s287
      %s290 = sphi 0, %s289
      %s304 = sphi 0, %s290
      %s310 = sphi 0, %s312
      %s313 = sphi 0, %s310
      %s314 = sphi 0, %s313
      %s330 = sphi 0, %s314
    $region4: #{conv_head_forward.1} parent=1 // loop_header_branch
      %25 = sbr.rel (%p23) target = $region8
    $region5: #{conv_head_forward.1} parent=1 // loop_body
      %s27 = ssub.s32 %s22, 1
      %s28 = ssub.s32 %s22, 2
      %s29 = sadd.s32 %s22, 1
      %s30 = ssub.s32 %s22, %s29
      %p31 = scmp.eq.s32.totalorder %s30, 0
      %s33 = sadd.s32 %s32, 1
      %s34 = scalar_select %p31, %s32, %s33
      %p37 = pneg %p31
      %p38 = scmp.eq.s32.totalorder %s22, 1
      %p39 = por %p37, %p38
      %p40 = scmp.ne.s32.totalorder %s32, %s35
      %p41 = scmp.eq.s32.totalorder %s22, 0
      %p42 = por %p40, %p41
      %p43 = scmp.ne.s32.totalorder %s32, %s35
      %p44 = scmp.eq.s32.totalorder %s27, 1
      %p45 = por %p43, %p44
      %p46 = scmp.ne.s32.totalorder %s35, %s36
      %p47 = scmp.eq.s32.totalorder %s27, 0
      %p48 = por %p46, %p47
      %p49 = scmp.ne.s32.totalorder %s35, %s36
      %p50 = scmp.eq.s32.totalorder %s28, 1
      %p51 = por %p49, %p50
      %p53 = scmp.ne.s32.totalorder %s36, %s52
      %p54 = scmp.eq.s32.totalorder %s28, 0
      %p55 = por %p53, %p54
      %s57 = sadd.s32 %s56, 1
      %p60 = scmp.eq.s32.totalorder %s22, 1
      %p61 = scmp.ne.s32.totalorder %s56, %s58
      %p62 = scmp.eq.s32.totalorder %s22, 0
      %p63 = por %p61, %p62
      %p64 = scmp.ne.s32.totalorder %s56, %s58
      %p65 = scmp.eq.s32.totalorder %s27, 1
      %p66 = por %p64, %p65
      %p67 = scmp.ne.s32.totalorder %s58, %s59
      %p68 = scmp.eq.s32.totalorder %s27, 0
      %p69 = por %p67, %p68
      %p70 = scmp.ne.s32.totalorder %s58, %s59
      %p71 = scmp.eq.s32.totalorder %s28, 1
      %p72 = por %p70, %p71
      %p74 = scmp.ne.s32.totalorder %s59, %s73
      %p75 = scmp.eq.s32.totalorder %s28, 0
      %p76 = por %p74, %p75
      %s78 = sadd.s32 %s77, 1
      %p81 = scmp.eq.s32.totalorder %s22, 1
      %p82 = scmp.ne.s32.totalorder %s77, %s79
      %p83 = scmp.eq.s32.totalorder %s22, 0
      %p84 = por %p82, %p83
      %p85 = scmp.ne.s32.totalorder %s77, %s79
      %p86 = scmp.eq.s32.totalorder %s27, 1
      %p87 = por %p85, %p86
      %p88 = scmp.ne.s32.totalorder %s79, %s80
      %p89 = scmp.eq.s32.totalorder %s27, 0
      %p90 = por %p88, %p89
      %p91 = scmp.ne.s32.totalorder %s79, %s80
      %p92 = scmp.eq.s32.totalorder %s28, 1
      %p93 = por %p91, %p92
      %p95 = scmp.ne.s32.totalorder %s80, %s94
      %p96 = scmp.eq.s32.totalorder %s28, 0
      %p97 = por %p95, %p96
      %s99 = sadd.s32 %s98, 1
      %p102 = scmp.eq.s32.totalorder %s22, 1
      %p103 = scmp.ne.s32.totalorder %s98, %s100
      %p104 = scmp.eq.s32.totalorder %s22, 0
      %p105 = por %p103, %p104
      %p106 = scmp.ne.s32.totalorder %s98, %s100
      %p107 = scmp.eq.s32.totalorder %s27, 1
      %p108 = por %p106, %p107
      %p109 = scmp.ne.s32.totalorder %s100, %s101
      %p110 = scmp.eq.s32.totalorder %s27, 0
      %p111 = por %p109, %p110
      %p112 = scmp.ne.s32.totalorder %s100, %s101
      %p113 = scmp.eq.s32.totalorder %s28, 1
      %p114 = por %p112, %p113
      %p116 = scmp.ne.s32.totalorder %s101, %s115
      %p117 = scmp.eq.s32.totalorder %s28, 0
      %p118 = por %p116, %p117
      %s120 = sadd.s32 %s119, 1
      %p123 = scmp.eq.s32.totalorder %s22, 1
      %p124 = scmp.ne.s32.totalorder %s119, %s121
      %p125 = scmp.eq.s32.totalorder %s22, 0
      %p126 = por %p124, %p125
      %p127 = scmp.ne.s32.totalorder %s119, %s121
      %p128 = scmp.eq.s32.totalorder %s27, 1
      %p129 = por %p127, %p128
      %p130 = scmp.ne.s32.totalorder %s121, %s122
      %p131 = scmp.eq.s32.totalorder %s27, 0
      %p132 = por %p130, %p131
      %p133 = scmp.ne.s32.totalorder %s121, %s122
      %p134 = scmp.eq.s32.totalorder %s28, 1
      %p135 = por %p133, %p134
      %p137 = scmp.ne.s32.totalorder %s122, %s136
      %p138 = scmp.eq.s32.totalorder %s28, 0
      %p139 = por %p137, %p138
      %s141 = sadd.s32 %s140, 1
      %p144 = scmp.eq.s32.totalorder %s22, 1
      %p145 = scmp.ne.s32.totalorder %s140, %s142
      %p146 = scmp.eq.s32.totalorder %s22, 0
      %p147 = por %p145, %p146
      %p148 = scmp.ne.s32.totalorder %s140, %s142
      %p149 = scmp.eq.s32.totalorder %s27, 1
      %p150 = por %p148, %p149
      %p151 = scmp.ne.s32.totalorder %s142, %s143
      %p152 = scmp.eq.s32.totalorder %s27, 0
      %p153 = por %p151, %p152
      %p154 = scmp.ne.s32.totalorder %s142, %s143
      %p155 = scmp.eq.s32.totalorder %s28, 1
      %p156 = por %p154, %p155
      %p158 = scmp.ne.s32.totalorder %s143, %s157
      %p159 = scmp.eq.s32.totalorder %s28, 0
      %p160 = por %p158, %p159
      %s162 = sadd.s32 %s161, 1
      %p165 = scmp.eq.s32.totalorder %s22, 1
      %p166 = scmp.ne.s32.totalorder %s161, %s163
      %p167 = scmp.eq.s32.totalorder %s22, 0
      %p168 = por %p166, %p167
      %p169 = scmp.ne.s32.totalorder %s161, %s163
      %p170 = scmp.eq.s32.totalorder %s27, 1
      %p171 = por %p169, %p170
      %p172 = scmp.ne.s32.totalorder %s163, %s164
      %p173 = scmp.eq.s32.totalorder %s27, 0
      %p174 = por %p172, %p173
      %p175 = scmp.ne.s32.totalorder %s163, %s164
      %p176 = scmp.eq.s32.totalorder %s28, 1
      %p177 = por %p175, %p176
      %p179 = scmp.ne.s32.totalorder %s164, %s178
      %p180 = scmp.eq.s32.totalorder %s28, 0
      %p181 = por %p179, %p180
      %s183 = sadd.s32 %s182, 1
      %p186 = scmp.eq.s32.totalorder %s22, 1
      %p187 = scmp.ne.s32.totalorder %s182, %s184
      %p188 = scmp.eq.s32.totalorder %s22, 0
      %p189 = por %p187, %p188
      %p190 = scmp.ne.s32.totalorder %s182, %s184
      %p191 = scmp.eq.s32.totalorder %s27, 1
      %p192 = por %p190, %p191
      %p193 = scmp.ne.s32.totalorder %s184, %s185
      %p194 = scmp.eq.s32.totalorder %s27, 0
      %p195 = por %p193, %p194
      %p196 = scmp.ne.s32.totalorder %s184, %s185
      %p197 = scmp.eq.s32.totalorder %s28, 1
      %p198 = por %p196, %p197
      %p200 = scmp.ne.s32.totalorder %s185, %s199
      %p201 = scmp.eq.s32.totalorder %s28, 0
      %p202 = por %p200, %p201
      %s204 = sadd.s32 %s203, 1
      %p207 = scmp.eq.s32.totalorder %s22, 1
      %p208 = scmp.ne.s32.totalorder %s203, %s205
      %p209 = scmp.eq.s32.totalorder %s22, 0
      %p210 = por %p208, %p209
      %p211 = scmp.ne.s32.totalorder %s203, %s205
      %p212 = scmp.eq.s32.totalorder %s27, 1
      %p213 = por %p211, %p212
      %p214 = scmp.ne.s32.totalorder %s205, %s206
      %p215 = scmp.eq.s32.totalorder %s27, 0
      %p216 = por %p214, %p215
      %p217 = scmp.ne.s32.totalorder %s205, %s206
      %p218 = scmp.eq.s32.totalorder %s28, 1
      %p219 = por %p217, %p218
      %p221 = scmp.ne.s32.totalorder %s206, %s220
      %p222 = scmp.eq.s32.totalorder %s28, 0
      %p223 = por %p221, %p222
      %s225 = sadd.s32 %s224, 1
      %p228 = scmp.eq.s32.totalorder %s22, 1
      %p229 = scmp.ne.s32.totalorder %s224, %s226
      %p230 = scmp.eq.s32.totalorder %s22, 0
      %p231 = por %p229, %p230
      %p232 = scmp.ne.s32.totalorder %s224, %s226
      %p233 = scmp.eq.s32.totalorder %s27, 1
      %p234 = por %p232, %p233
      %p235 = scmp.ne.s32.totalorder %s226, %s227
      %p236 = scmp.eq.s32.totalorder %s27, 0
      %p237 = por %p235, %p236
      %p238 = scmp.ne.s32.totalorder %s226, %s227
      %p239 = scmp.eq.s32.totalorder %s28, 1
      %p240 = por %p238, %p239
      %p242 = scmp.ne.s32.totalorder %s227, %s241
      %p243 = scmp.eq.s32.totalorder %s28, 0
      %p244 = por %p242, %p243
      %s246 = sadd.s32 %s245, 1
      %p249 = scmp.eq.s32.totalorder %s22, 1
      %p250 = scmp.ne.s32.totalorder %s245, %s247
      %p251 = scmp.eq.s32.totalorder %s22, 0
      %p252 = por %p250, %p251
      %p253 = scmp.ne.s32.totalorder %s245, %s247
      %p254 = scmp.eq.s32.totalorder %s27, 1
      %p255 = por %p253, %p254
      %p256 = scmp.ne.s32.totalorder %s247, %s248
      %p257 = scmp.eq.s32.totalorder %s27, 0
      %p258 = por %p256, %p257
      %p259 = scmp.ne.s32.totalorder %s247, %s248
      %p260 = scmp.eq.s32.totalorder %s28, 1
      %p261 = por %p259, %p260
      %p263 = scmp.ne.s32.totalorder %s248, %s262
      %p264 = scmp.eq.s32.totalorder %s28, 0
      %p265 = por %p263, %p264
      %s267 = sadd.s32 %s266, 1
      %p270 = scmp.eq.s32.totalorder %s22, 1
      %p271 = scmp.ne.s32.totalorder %s266, %s268
      %p272 = scmp.eq.s32.totalorder %s22, 0
      %p273 = por %p271, %p272
      %p274 = scmp.ne.s32.totalorder %s266, %s268
      %p275 = scmp.eq.s32.totalorder %s27, 1
      %p276 = por %p274, %p275
      %p277 = scmp.ne.s32.totalorder %s268, %s269
      %p278 = scmp.eq.s32.totalorder %s27, 0
      %p279 = por %p277, %p278
      %p280 = scmp.ne.s32.totalorder %s268, %s269
      %p281 = scmp.eq.s32.totalorder %s28, 1
      %p282 = por %p280, %p281
      %p284 = scmp.ne.s32.totalorder %s269, %s283
      %p285 = scmp.eq.s32.totalorder %s28, 0
      %p286 = por %p284, %p285
      %s288 = sadd.s32 %s287, 1
      %p291 = scmp.eq.s32.totalorder %s22, 1
      %p292 = scmp.ne.s32.totalorder %s287, %s289
      %p293 = scmp.eq.s32.totalorder %s22, 0
      %p294 = por %p292, %p293
      %p295 = scmp.ne.s32.totalorder %s287, %s289
      %p296 = scmp.eq.s32.totalorder %s27, 1
      %p297 = por %p295, %p296
      %p298 = scmp.ne.s32.totalorder %s289, %s290
      %p299 = scmp.eq.s32.totalorder %s27, 0
      %p300 = por %p298, %p299
      %p301 = scmp.ne.s32.totalorder %s289, %s290
      %p302 = scmp.eq.s32.totalorder %s28, 1
      %p303 = por %p301, %p302
      %p305 = scmp.ne.s32.totalorder %s290, %s304
      %p306 = scmp.eq.s32.totalorder %s28, 0
      %p307 = por %p305, %p306
      %s308 = ssub.s32 %s22, %s29
      %p309 = scmp.eq.s32.totalorder %s308, 0
      %s311 = sadd.s32 %s310, 1
      %s312 = scalar_select %p309, %s310, %s311
      %p315 = pneg %p309
      %p316 = scmp.eq.s32.totalorder %s22, 1
      %p317 = por %p315, %p316
      %p318 = scmp.ne.s32.totalorder %s310, %s313
      %p319 = scmp.eq.s32.totalorder %s22, 0
      %p320 = por %p318, %p319
      %p321 = scmp.ne.s32.totalorder %s310, %s313
      %p322 = scmp.eq.s32.totalorder %s27, 1
      %p323 = por %p321, %p322
      %p324 = scmp.ne.s32.totalorder %s313, %s314
      %p325 = scmp.eq.s32.totalorder %s27, 0
      %p326 = por %p324, %p325
      %p327 = scmp.ne.s32.totalorder %s313, %s314
      %p328 = scmp.eq.s32.totalorder %s28, 1
      %p329 = por %p327, %p328
      %p331 = scmp.ne.s32.totalorder %s314, %s330
      %p332 = scmp.eq.s32.totalorder %s28, 0
      %p333 = por %p331, %p332
      %p334 = scmp.le.s32.totalorder 1, %s22
      %p335 = scmp.lt.s32.totalorder %s22, 3
      %p336 = pnand %p334, %p335
      %p337 = pneg %p336
      // Predicated region
      $region9: #{conv_head_forward.1} parent=5 // pred_check
        _
      $region10: #{conv_head_forward.1} parent=5 // pred_check_branch
        %339 = sbr.rel (%p336) target = $region12
      $region11: #{conv_head_forward.1} parent=5 // pred_region
        %s340 = ssub.s32 %s22, 1
        // Predicated region
        $region13: #{conv_head_forward.1} parent=11 // pred_check
          %p341 = pneg %p69
        $region14: #{conv_head_forward.1} parent=11 // pred_check_branch
          %343 = sbr.rel (%p341) target = $region16
        $region15: #{conv_head_forward.1} parent=11 // pred_region
          _
        $region16: #{conv_head_forward.1} parent=11 // pred_fallthru
          _
        // Predicated region
        $region17: #{conv_head_forward.1} parent=11 // pred_check
          %p344 = pneg %p90
        $region18: #{conv_head_forward.1} parent=11 // pred_check_branch
          %346 = sbr.rel (%p344) target = $region20
        $region19: #{conv_head_forward.1} parent=11 // pred_region
          _
        $region20: #{conv_head_forward.1} parent=11 // pred_fallthru
          _
        // Predicated region
        $region21: #{conv_head_forward.1} parent=11 // pred_check
          %p347 = pneg %p111
        $region22: #{conv_head_forward.1} parent=11 // pred_check_branch
          %349 = sbr.rel (%p347) target = $region24
        $region23: #{conv_head_forward.1} parent=11 // pred_region
          _
        $region24: #{conv_head_forward.1} parent=11 // pred_fallthru
          _
        // Predicated region
        $region25: #{conv_head_forward.1} parent=11 // pred_check
          %p350 = pneg %p132
        $region26: #{conv_head_forward.1} parent=11 // pred_check_branch
          %352 = sbr.rel (%p350) target = $region28
        $region27: #{conv_head_forward.1} parent=11 // pred_region
          _
        $region28: #{conv_head_forward.1} parent=11 // pred_fallthru
          _
        // Predicated region
        $region29: #{conv_head_forward.1} parent=11 // pred_check
          %p353 = pneg %p153
        $region30: #{conv_head_forward.1} parent=11 // pred_check_branch
          %355 = sbr.rel (%p353) target = $region32
        $region31: #{conv_head_forward.1} parent=11 // pred_region
          _
        $region32: #{conv_head_forward.1} parent=11 // pred_fallthru
          _
        // Predicated region
        $region33: #{conv_head_forward.1} parent=11 // pred_check
          %p356 = pneg %p174
        $region34: #{conv_head_forward.1} parent=11 // pred_check_branch
          %358 = sbr.rel (%p356) target = $region36
        $region35: #{conv_head_forward.1} parent=11 // pred_region
          _
        $region36: #{conv_head_forward.1} parent=11 // pred_fallthru
          _
        // Predicated region
        $region37: #{conv_head_forward.1} parent=11 // pred_check
          %p359 = pneg %p195
        $region38: #{conv_head_forward.1} parent=11 // pred_check_branch
          %361 = sbr.rel (%p359) target = $region40
        $region39: #{conv_head_forward.1} parent=11 // pred_region
          _
        $region40: #{conv_head_forward.1} parent=11 // pred_fallthru
          _
        // Predicated region
        $region41: #{conv_head_forward.1} parent=11 // pred_check
          %p362 = pneg %p216
        $region42: #{conv_head_forward.1} parent=11 // pred_check_branch
          %364 = sbr.rel (%p362) target = $region44
        $region43: #{conv_head_forward.1} parent=11 // pred_region
          _
        $region44: #{conv_head_forward.1} parent=11 // pred_fallthru
          _
        // Predicated region
        $region45: #{conv_head_forward.1} parent=11 // pred_check
          %p365 = pneg %p237
        $region46: #{conv_head_forward.1} parent=11 // pred_check_branch
          %367 = sbr.rel (%p365) target = $region48
        $region47: #{conv_head_forward.1} parent=11 // pred_region
          _
        $region48: #{conv_head_forward.1} parent=11 // pred_fallthru
          _
        // Predicated region
        $region49: #{conv_head_forward.1} parent=11 // pred_check
          %p368 = pneg %p258
        $region50: #{conv_head_forward.1} parent=11 // pred_check_branch
          %370 = sbr.rel (%p368) target = $region52
        $region51: #{conv_head_forward.1} parent=11 // pred_region
          _
        $region52: #{conv_head_forward.1} parent=11 // pred_fallthru
          _
        // Predicated region
        $region53: #{conv_head_forward.1} parent=11 // pred_check
          %p371 = pneg %p279
        $region54: #{conv_head_forward.1} parent=11 // pred_check_branch
          %373 = sbr.rel (%p371) target = $region56
        $region55: #{conv_head_forward.1} parent=11 // pred_region
          _
        $region56: #{conv_head_forward.1} parent=11 // pred_fallthru
          _
        // Predicated region
        $region57: #{conv_head_forward.1} parent=11 // pred_check
          %p374 = pneg %p300
        $region58: #{conv_head_forward.1} parent=11 // pred_check_branch
          %376 = sbr.rel (%p374) target = $region60
        $region59: #{conv_head_forward.1} parent=11 // pred_region
          _
        $region60: #{conv_head_forward.1} parent=11 // pred_fallthru
          _
      $region12: #{conv_head_forward.1} parent=5 // pred_fallthru
        _
      %p377 = scmp.lt.s32.totalorder %s22, 2
      // Predicated region
      $region61: #{conv_head_forward.1} parent=5 // pred_check
        %p378 = pneg %p377
      $region62: #{conv_head_forward.1} parent=5 // pred_check_branch
        %380 = sbr.rel (%p378) target = $region64
      $region63: #{conv_head_forward.1} parent=5 // pred_region
        // Predicated region
        $region65: #{conv_head_forward.1} parent=63 // pred_check
          %p381 = pneg %p42
        $region66: #{conv_head_forward.1} parent=63 // pred_check_branch
          %383 = sbr.rel (%p381) target = $region68
        $region67: #{conv_head_forward.1} parent=63 // pred_region
          %p384 = scmp.lt.s32.totalorder %s22, 1
          %s385 = scalar_select %p384, %s22, 1
          %s386 = smul.addr %s385, 32
          %s387 = smul.addr %s386, 8
          %s388 = scalar_lea.vmem %s0, %s387
        $region68: #{conv_head_forward.1} parent=63 // pred_fallthru
          _
      $region64: #{conv_head_forward.1} parent=5 // pred_fallthru
        _
      %p389 = scmp.le.s32.totalorder 1, %s22
      %p390 = scmp.lt.s32.totalorder %s22, 3
      %p391 = pnand %p389, %p390
      %p392 = pneg %p391
      // Predicated region
      $region69: #{conv_head_forward.1} parent=5 // pred_check
        _
      $region70: #{conv_head_forward.1} parent=5 // pred_check_branch
        %394 = sbr.rel (%p391) target = $region72
      $region71: #{conv_head_forward.1} parent=5 // pred_region
        %s395 = ssub.s32 %s22, 1
        %p396 = scmp.lt.s32.totalorder %s27, 1
        %s397 = scalar_select %p396, %s27, 1
        %s398 = smul.addr %s397, 32
        %s399 = smul.addr %s398, 8
        %s400 = scalar_lea.vmem %s0, %s399
        %p401 = pneg %p48
        %p402 = pneg %p45
        %p403 = pneg %p69
        %p404 = pneg %p66
        %p405 = pneg %p90
        %p406 = pneg %p87
        %p407 = pneg %p111
        %p408 = pneg %p108
        %p409 = pneg %p132
        %p410 = pneg %p129
        %p411 = pneg %p153
        %p412 = pneg %p150
        %p413 = pneg %p174
        %p414 = pneg %p171
        %p415 = pneg %p195
        %p416 = pneg %p192
        %p417 = pneg %p216
        %p418 = pneg %p213
        %p419 = pneg %p237
        %p420 = pneg %p234
        %p421 = pneg %p258
        %p422 = pneg %p255
        %p423 = pneg %p279
        %p424 = pneg %p276
        %p425 = pneg %p300
        %p426 = pneg %p297
        %p427 = pneg %p326
        %p428 = pneg %p323
        %s429 = sand.u32 %s313, 1
        %s430 = scalar_lea.sflag [#allocation7], %s429
        %s431 = sand.u32 %s313, 1
        %s432 = smul.addr %s431, 64
        %s433 = scalar_lea.vmem [#allocation6], %s432
        %p434 = scmp.lt.s32.totalorder %s27, 1
        %s435 = scalar_select %p434, %s27, 1
        %s436 = smul.addr %s435, 32
        %s437 = smul.addr %s436, 8
        %s438 = scalar_lea.vmem %s0, %s437
        %vm440 = vcmask 523264
        %441 = vst.msk [vmem:[#allocation2] sm:$0xff] %vm440, 0.0
        %442 = vst.msk [vmem:[#allocation2 + $0x8] sm:$0xff] %vm440, 0.0
        %443 = vst.msk [vmem:[#allocation2 + $0x10] sm:$0xff] %vm440, 0.0
        %444 = vst.msk [vmem:[#allocation2 + $0x18] sm:$0xff] %vm440, 0.0
        %445 = vst.msk [vmem:[#allocation2 + $0x120] sm:$0xff] %vm440, 0.0
        %446 = vst.msk [vmem:[#allocation2 + $0x128] sm:$0xff] %vm440, 0.0
        %447 = vst.msk [vmem:[#allocation2 + $0x130] sm:$0xff] %vm440, 0.0
        %448 = vst.msk [vmem:[#allocation2 + $0x138] sm:$0xff] %vm440, 0.0
        %vm449 = vcmask 261120
        %450 = vst.msk [vmem:[#allocation4] sm:$0xff] %vm449, 0.0
        %451 = vst.msk [vmem:[#allocation4 + $0x8] sm:$0xff] %vm449, 0.0
        %452 = vst.msk [vmem:[#allocation4 + $0x10] sm:$0xff] %vm449, 0.0
        %453 = vst.msk [vmem:[#allocation4 + $0x18] sm:$0xff] %vm449, 0.0
        %454 = vst.msk [vmem:[#allocation4 + $0x120] sm:$0xff] %vm449, 0.0
        %455 = vst.msk [vmem:[#allocation4 + $0x128] sm:$0xff] %vm449, 0.0
        %456 = vst.msk [vmem:[#allocation4 + $0x130] sm:$0xff] %vm449, 0.0
        %457 = vst.msk [vmem:[#allocation4 + $0x138] sm:$0xff] %vm449, 0.0
        %v458 = vlaneseq
        %v459 = vshrl.u32 %v458, 7
        %v460 = vadd.s32 %v459, 8
        %v461 = vadd.s32 %v459, 16
        %v462 = vadd.s32 %v459, 24
        %v463 = vadd.s32 %v459, 32
        %v464 = vadd.s32 %v459, 40
        %v465 = vadd.s32 %v459, 48
        %v466 = vadd.s32 %v459, 56
        %v467 = vadd.s32 %v459, 64
        %v468 = vadd.s32 %v459, 72
        %v469 = vadd.s32 %v459, 80
        %v470 = vadd.s32 %v459, 88
        %v471 = vadd.s32 %v459, 96
        %v472 = vadd.s32 %v459, 104
        %v473 = vadd.s32 %v459, 112
        %v474 = vadd.s32 %v459, 120
        %v475 = vadd.s32 %v459, 128
        %v476 = vadd.s32 %v459, 136
        %v477 = vadd.s32 %v459, 144
        %v478 = vadd.s32 %v459, 152
        %v479 = vadd.s32 %v459, 160
        %v480 = vadd.s32 %v459, 168
        %v481 = vadd.s32 %v459, 176
        %v482 = vadd.s32 %v459, 184
        %v483 = vadd.s32 %v459, 192
        %v484 = vadd.s32 %v459, 200
        %v485 = vadd.s32 %v459, 208
        %v486 = vadd.s32 %v459, 216
        %v487 = vadd.s32 %v459, 224
        %v488 = vadd.s32 %v459, 232
        %v489 = vadd.s32 %v459, 240
        %v490 = vadd.s32 %v459, 248
        %vm491 = vcmp.lt.s32.totalorder %v459, 0
        %v492 = vsub.s32 0, %v459
        %v493 = vsel %vm491, %v492, %v459
        %v494 = vshrl.u32 %v493, 4
        %v495 = vand.u32 %v493, 15
        %v496 = vsub.s32 0, %v495
        %v497 = vsel %vm491, %v496, %v495
        %vm498 = vcmp.lt.s32.totalorder %v460, 0
        %v499 = vsub.s32 0, %v460
        %v500 = vsel %vm498, %v499, %v460
        %v501 = vshrl.u32 %v500, 4
        %v502 = vand.u32 %v500, 15
        %v503 = vsub.s32 0, %v502
        %v504 = vsel %vm498, %v503, %v502
        %vm505 = vcmp.lt.s32.totalorder %v461, 0
        %v506 = vsub.s32 0, %v461
        %v507 = vsel %vm505, %v506, %v461
        %v508 = vshrl.u32 %v507, 4
        %v509 = vand.u32 %v507, 15
        %v510 = vsub.s32 0, %v509
        %v511 = vsel %vm505, %v510, %v509
        %vm512 = vcmp.lt.s32.totalorder %v462, 0
        %v513 = vsub.s32 0, %v462
        %v514 = vsel %vm512, %v513, %v462
        %v515 = vshrl.u32 %v514, 4
        %v516 = vand.u32 %v514, 15
        %v517 = vsub.s32 0, %v516
        %v518 = vsel %vm512, %v517, %v516
        %vm519 = vcmp.lt.s32.totalorder %v463, 0
        %v520 = vsub.s32 0, %v463
        %v521 = vsel %vm519, %v520, %v463
        %v522 = vshrl.u32 %v521, 4
        %v523 = vand.u32 %v521, 15
        %v524 = vsub.s32 0, %v523
        %v525 = vsel %vm519, %v524, %v523
        %vm526 = vcmp.lt.s32.totalorder %v464, 0
        %v527 = vsub.s32 0, %v464
        %v528 = vsel %vm526, %v527, %v464
        %v529 = vshrl.u32 %v528, 4
        %v530 = vand.u32 %v528, 15
        %v531 = vsub.s32 0, %v530
        %v532 = vsel %vm526, %v531, %v530
        %vm533 = vcmp.lt.s32.totalorder %v465, 0
        %v534 = vsub.s32 0, %v465
        %v535 = vsel %vm533, %v534, %v465
        %v536 = vshrl.u32 %v535, 4
        %v537 = vand.u32 %v535, 15
        %v538 = vsub.s32 0, %v537
        %v539 = vsel %vm533, %v538, %v537
        %vm540 = vcmp.lt.s32.totalorder %v466, 0
        %v541 = vsub.s32 0, %v466
        %v542 = vsel %vm540, %v541, %v466
        %v543 = vshrl.u32 %v542, 4
        %v544 = vand.u32 %v542, 15
        %v545 = vsub.s32 0, %v544
        %v546 = vsel %vm540, %v545, %v544
        %vm547 = vcmp.lt.s32.totalorder %v467, 0
        %v548 = vsub.s32 0, %v467
        %v549 = vsel %vm547, %v548, %v467
        %v550 = vshrl.u32 %v549, 4
        %v551 = vand.u32 %v549, 15
        %v552 = vsub.s32 0, %v551
        %v553 = vsel %vm547, %v552, %v551
        %vm554 = vcmp.lt.s32.totalorder %v468, 0
        %v555 = vsub.s32 0, %v468
        %v556 = vsel %vm554, %v555, %v468
        %v557 = vshrl.u32 %v556, 4
        %v558 = vand.u32 %v556, 15
        %v559 = vsub.s32 0, %v558
        %v560 = vsel %vm554, %v559, %v558
        %vm561 = vcmp.lt.s32.totalorder %v469, 0
        %v562 = vsub.s32 0, %v469
        %v563 = vsel %vm561, %v562, %v469
        %v564 = vshrl.u32 %v563, 4
        %v565 = vand.u32 %v563, 15
        %v566 = vsub.s32 0, %v565
        %v567 = vsel %vm561, %v566, %v565
        %vm568 = vcmp.lt.s32.totalorder %v470, 0
        %v569 = vsub.s32 0, %v470
        %v570 = vsel %vm568, %v569, %v470
        %v571 = vshrl.u32 %v570, 4
        %v572 = vand.u32 %v570, 15
        %v573 = vsub.s32 0, %v572
        %v574 = vsel %vm568, %v573, %v572
        %vm575 = vcmp.lt.s32.totalorder %v471, 0
        %v576 = vsub.s32 0, %v471
        %v577 = vsel %vm575, %v576, %v471
        %v578 = vshrl.u32 %v577, 4
        %v579 = vand.u32 %v577, 15
        %v580 = vsub.s32 0, %v579
        %v581 = vsel %vm575, %v580, %v579
        %vm582 = vcmp.lt.s32.totalorder %v472, 0
        %v583 = vsub.s32 0, %v472
        %v584 = vsel %vm582, %v583, %v472
        %v585 = vshrl.u32 %v584, 4
        %v586 = vand.u32 %v584, 15
        %v587 = vsub.s32 0, %v586
        %v588 = vsel %vm582, %v587, %v586
        %vm589 = vcmp.lt.s32.totalorder %v473, 0
        %v590 = vsub.s32 0, %v473
        %v591 = vsel %vm589, %v590, %v473
        %v592 = vshrl.u32 %v591, 4
        %v593 = vand.u32 %v591, 15
        %v594 = vsub.s32 0, %v593
        %v595 = vsel %vm589, %v594, %v593
        %vm596 = vcmp.lt.s32.totalorder %v474, 0
        %v597 = vsub.s32 0, %v474
        %v598 = vsel %vm596, %v597, %v474
        %v599 = vshrl.u32 %v598, 4
        %v600 = vand.u32 %v598, 15
        %v601 = vsub.s32 0, %v600
        %v602 = vsel %vm596, %v601, %v600
        %vm603 = vcmp.lt.s32.totalorder %v475, 0
        %v604 = vsub.s32 0, %v475
        %v605 = vsel %vm603, %v604, %v475
        %v606 = vshrl.u32 %v605, 4
        %v607 = vand.u32 %v605, 15
        %v608 = vsub.s32 0, %v607
        %v609 = vsel %vm603, %v608, %v607
        %vm610 = vcmp.lt.s32.totalorder %v476, 0
        %v611 = vsub.s32 0, %v476
        %v612 = vsel %vm610, %v611, %v476
        %v613 = vshrl.u32 %v612, 4
        %v614 = vand.u32 %v612, 15
        %v615 = vsub.s32 0, %v614
        %v616 = vsel %vm610, %v615, %v614
        %vm617 = vcmp.lt.s32.totalorder %v477, 0
        %v618 = vsub.s32 0, %v477
        %v619 = vsel %vm617, %v618, %v477
        %v620 = vshrl.u32 %v619, 4
        %v621 = vand.u32 %v619, 15
        %v622 = vsub.s32 0, %v621
        %v623 = vsel %vm617, %v622, %v621
        %vm624 = vcmp.lt.s32.totalorder %v478, 0
        %v625 = vsub.s32 0, %v478
        %v626 = vsel %vm624, %v625, %v478
        %v627 = vshrl.u32 %v626, 4
        %v628 = vand.u32 %v626, 15
        %v629 = vsub.s32 0, %v628
        %v630 = vsel %vm624, %v629, %v628
        %vm631 = vcmp.lt.s32.totalorder %v479, 0
        %v632 = vsub.s32 0, %v479
        %v633 = vsel %vm631, %v632, %v479
        %v634 = vshrl.u32 %v633, 4
        %v635 = vand.u32 %v633, 15
        %v636 = vsub.s32 0, %v635
        %v637 = vsel %vm631, %v636, %v635
        %vm638 = vcmp.lt.s32.totalorder %v480, 0
        %v639 = vsub.s32 0, %v480
        %v640 = vsel %vm638, %v639, %v480
        %v641 = vshrl.u32 %v640, 4
        %v642 = vand.u32 %v640, 15
        %v643 = vsub.s32 0, %v642
        %v644 = vsel %vm638, %v643, %v642
        %vm645 = vcmp.lt.s32.totalorder %v481, 0
        %v646 = vsub.s32 0, %v481
        %v647 = vsel %vm645, %v646, %v481
        %v648 = vshrl.u32 %v647, 4
        %v649 = vand.u32 %v647, 15
        %v650 = vsub.s32 0, %v649
        %v651 = vsel %vm645, %v650, %v649
        %vm652 = vcmp.lt.s32.totalorder %v482, 0
        %v653 = vsub.s32 0, %v482
        %v654 = vsel %vm652, %v653, %v482
        %v655 = vshrl.u32 %v654, 4
        %v656 = vand.u32 %v654, 15
        %v657 = vsub.s32 0, %v656
        %v658 = vsel %vm652, %v657, %v656
        %vm659 = vcmp.lt.s32.totalorder %v483, 0
        %v660 = vsub.s32 0, %v483
        %v661 = vsel %vm659, %v660, %v483
        %v662 = vshrl.u32 %v661, 4
        %v663 = vand.u32 %v661, 15
        %v664 = vsub.s32 0, %v663
        %v665 = vsel %vm659, %v664, %v663
        %vm666 = vcmp.lt.s32.totalorder %v484, 0
        %v667 = vsub.s32 0, %v484
        %v668 = vsel %vm666, %v667, %v484
        %v669 = vshrl.u32 %v668, 4
        %v670 = vand.u32 %v668, 15
        %v671 = vsub.s32 0, %v670
        %v672 = vsel %vm666, %v671, %v670
        %vm673 = vcmp.lt.s32.totalorder %v485, 0
        %v674 = vsub.s32 0, %v485
        %v675 = vsel %vm673, %v674, %v485
        %v676 = vshrl.u32 %v675, 4
        %v677 = vand.u32 %v675, 15
        %v678 = vsub.s32 0, %v677
        %v679 = vsel %vm673, %v678, %v677
        %vm680 = vcmp.lt.s32.totalorder %v486, 0
        %v681 = vsub.s32 0, %v486
        %v682 = vsel %vm680, %v681, %v486
        %v683 = vshrl.u32 %v682, 4
        %v684 = vand.u32 %v682, 15
        %v685 = vsub.s32 0, %v684
        %v686 = vsel %vm680, %v685, %v684
        %vm687 = vcmp.lt.s32.totalorder %v487, 0
        %v688 = vsub.s32 0, %v487
        %v689 = vsel %vm687, %v688, %v487
        %v690 = vshrl.u32 %v689, 4
        %v691 = vand.u32 %v689, 15
        %v692 = vsub.s32 0, %v691
        %v693 = vsel %vm687, %v692, %v691
        %vm694 = vcmp.lt.s32.totalorder %v488, 0
        %v695 = vsub.s32 0, %v488
        %v696 = vsel %vm694, %v695, %v488
        %v697 = vshrl.u32 %v696, 4
        %v698 = vand.u32 %v696, 15
        %v699 = vsub.s32 0, %v698
        %v700 = vsel %vm694, %v699, %v698
        %vm701 = vcmp.lt.s32.totalorder %v489, 0
        %v702 = vsub.s32 0, %v489
        %v703 = vsel %vm701, %v702, %v489
        %v704 = vshrl.u32 %v703, 4
        %v705 = vand.u32 %v703, 15
        %v706 = vsub.s32 0, %v705
        %v707 = vsel %vm701, %v706, %v705
        %vm708 = vcmp.lt.s32.totalorder %v490, 0
        %v709 = vsub.s32 0, %v490
        %v710 = vsel %vm708, %v709, %v490
        %v711 = vshrl.u32 %v710, 4
        %v712 = vand.u32 %v710, 15
        %v713 = vsub.s32 0, %v712
        %v714 = vsel %vm708, %v713, %v712
        %vm715 = vcmp.ne.s32.totalorder %v497, 0
        %vm716 = vcmp.ne.s32.totalorder %v504, 0
        %vm717 = vcmp.ne.s32.totalorder %v511, 0
        %vm718 = vcmp.ne.s32.totalorder %v518, 0
        %vm719 = vcmp.ne.s32.totalorder %v525, 0
        %vm720 = vcmp.ne.s32.totalorder %v532, 0
        %vm721 = vcmp.ne.s32.totalorder %v539, 0
        %vm722 = vcmp.ne.s32.totalorder %v546, 0
        %vm723 = vcmp.ne.s32.totalorder %v553, 0
        %vm724 = vcmp.ne.s32.totalorder %v560, 0
        %vm725 = vcmp.ne.s32.totalorder %v567, 0
        %vm726 = vcmp.ne.s32.totalorder %v574, 0
        %vm727 = vcmp.ne.s32.totalorder %v581, 0
        %vm728 = vcmp.ne.s32.totalorder %v588, 0
        %vm729 = vcmp.ne.s32.totalorder %v595, 0
        %vm730 = vcmp.ne.s32.totalorder %v602, 0
        %vm731 = vcmp.ne.s32.totalorder %v609, 0
        %vm732 = vcmp.ne.s32.totalorder %v616, 0
        %vm733 = vcmp.ne.s32.totalorder %v623, 0
        %vm734 = vcmp.ne.s32.totalorder %v630, 0
        %vm735 = vcmp.ne.s32.totalorder %v637, 0
        %vm736 = vcmp.ne.s32.totalorder %v644, 0
        %vm737 = vcmp.ne.s32.totalorder %v651, 0
        %vm738 = vcmp.ne.s32.totalorder %v658, 0
        %vm739 = vcmp.ne.s32.totalorder %v665, 0
        %vm740 = vcmp.ne.s32.totalorder %v672, 0
        %vm741 = vcmp.ne.s32.totalorder %v679, 0
        %vm742 = vcmp.ne.s32.totalorder %v686, 0
        %vm743 = vcmp.ne.s32.totalorder %v693, 0
        %vm744 = vcmp.ne.s32.totalorder %v700, 0
        %vm745 = vcmp.ne.s32.totalorder %v707, 0
        %vm746 = vcmp.ne.s32.totalorder %v714, 0
        %vm747 = vcmp.lt.s32.totalorder %v497, 0
        %vm748 = vcmp.lt.s32.totalorder %v504, 0
        %vm749 = vcmp.lt.s32.totalorder %v511, 0
        %vm750 = vcmp.lt.s32.totalorder %v518, 0
        %vm751 = vcmp.lt.s32.totalorder %v525, 0
        %vm752 = vcmp.lt.s32.totalorder %v532, 0
        %vm753 = vcmp.lt.s32.totalorder %v539, 0
        %vm754 = vcmp.lt.s32.totalorder %v546, 0
        %vm755 = vcmp.lt.s32.totalorder %v553, 0
        %vm756 = vcmp.lt.s32.totalorder %v560, 0
        %vm757 = vcmp.lt.s32.totalorder %v567, 0
        %vm758 = vcmp.lt.s32.totalorder %v574, 0
        %vm759 = vcmp.lt.s32.totalorder %v581, 0
        %vm760 = vcmp.lt.s32.totalorder %v588, 0
        %vm761 = vcmp.lt.s32.totalorder %v595, 0
        %vm762 = vcmp.lt.s32.totalorder %v602, 0
        %vm763 = vcmp.lt.s32.totalorder %v609, 0
        %vm764 = vcmp.lt.s32.totalorder %v616, 0
        %vm765 = vcmp.lt.s32.totalorder %v623, 0
        %vm766 = vcmp.lt.s32.totalorder %v630, 0
        %vm767 = vcmp.lt.s32.totalorder %v637, 0
        %vm768 = vcmp.lt.s32.totalorder %v644, 0
        %vm769 = vcmp.lt.s32.totalorder %v651, 0
        %vm770 = vcmp.lt.s32.totalorder %v658, 0
        %vm771 = vcmp.lt.s32.totalorder %v665, 0
        %vm772 = vcmp.lt.s32.totalorder %v672, 0
        %vm773 = vcmp.lt.s32.totalorder %v679, 0
        %vm774 = vcmp.lt.s32.totalorder %v686, 0
        %vm775 = vcmp.lt.s32.totalorder %v693, 0
        %vm776 = vcmp.lt.s32.totalorder %v700, 0
        %vm777 = vcmp.lt.s32.totalorder %v707, 0
        %vm778 = vcmp.lt.s32.totalorder %v714, 0
        %vm779 = vmand %vm747, %vm715
        %vm780 = vmand %vm748, %vm716
        %vm781 = vmand %vm749, %vm717
        %vm782 = vmand %vm750, %vm718
        %vm783 = vmand %vm751, %vm719
        %vm784 = vmand %vm752, %vm720
        %vm785 = vmand %vm753, %vm721
        %vm786 = vmand %vm754, %vm722
        %vm787 = vmand %vm755, %vm723
        %vm788 = vmand %vm756, %vm724
        %vm789 = vmand %vm757, %vm725
        %vm790 = vmand %vm758, %vm726
        %vm791 = vmand %vm759, %vm727
        %vm792 = vmand %vm760, %vm728
        %vm793 = vmand %vm761, %vm729
        %vm794 = vmand %vm762, %vm730
        %vm795 = vmand %vm763, %vm731
        %vm796 = vmand %vm764, %vm732
        %vm797 = vmand %vm765, %vm733
        %vm798 = vmand %vm766, %vm734
        %vm799 = vmand %vm767, %vm735
        %vm800 = vmand %vm768, %vm736
        %vm801 = vmand %vm769, %vm737
        %vm802 = vmand %vm770, %vm738
        %vm803 = vmand %vm771, %vm739
        %vm804 = vmand %vm772, %vm740
        %vm805 = vmand %vm773, %vm741
        %vm806 = vmand %vm774, %vm742
        %vm807 = vmand %vm775, %vm743
        %vm808 = vmand %vm776, %vm744
        %vm809 = vmand %vm777, %vm745
        %vm810 = vmand %vm778, %vm746
        %v811 = vadd.s32 %v497, 16
        %v812 = vadd.s32 %v504, 16
        %v813 = vadd.s32 %v511, 16
        %v814 = vadd.s32 %v518, 16
        %v815 = vadd.s32 %v525, 16
        %v816 = vadd.s32 %v532, 16
        %v817 = vadd.s32 %v539, 16
        %v818 = vadd.s32 %v546, 16
        %v819 = vadd.s32 %v553, 16
        %v820 = vadd.s32 %v560, 16
        %v821 = vadd.s32 %v567, 16
        %v822 = vadd.s32 %v574, 16
        %v823 = vadd.s32 %v581, 16
        %v824 = vadd.s32 %v588, 16
        %v825 = vadd.s32 %v595, 16
        %v826 = vadd.s32 %v602, 16
        %v827 = vadd.s32 %v609, 16
        %v828 = vadd.s32 %v616, 16
        %v829 = vadd.s32 %v623, 16
        %v830 = vadd.s32 %v630, 16
        %v831 = vadd.s32 %v637, 16
        %v832 = vadd.s32 %v644, 16
        %v833 = vadd.s32 %v651, 16
        %v834 = vadd.s32 %v658, 16
        %v835 = vadd.s32 %v665, 16
        %v836 = vadd.s32 %v672, 16
        %v837 = vadd.s32 %v679, 16
        %v838 = vadd.s32 %v686, 16
        %v839 = vadd.s32 %v693, 16
        %v840 = vadd.s32 %v700, 16
        %v841 = vadd.s32 %v707, 16
        %v842 = vadd.s32 %v714, 16
        %v843 = vsel %vm779, %v811, %v497
        %v844 = vsel %vm780, %v812, %v504
        %v845 = vsel %vm781, %v813, %v511
        %v846 = vsel %vm782, %v814, %v518
        %v847 = vsel %vm783, %v815, %v525
        %v848 = vsel %vm784, %v816, %v532
        %v849 = vsel %vm785, %v817, %v539
        %v850 = vsel %vm786, %v818, %v546
        %v851 = vsel %vm787, %v819, %v553
        %v852 = vsel %vm788, %v820, %v560
        %v853 = vsel %vm789, %v821, %v567
        %v854 = vsel %vm790, %v822, %v574
        %v855 = vsel %vm791, %v823, %v581
        %v856 = vsel %vm792, %v824, %v588
        %v857 = vsel %vm793, %v825, %v595
        %v858 = vsel %vm794, %v826, %v602
        %v859 = vsel %vm795, %v827, %v609
        %v860 = vsel %vm796, %v828, %v616
        %v861 = vsel %vm797, %v829, %v623
        %v862 = vsel %vm798, %v830, %v630
        %v863 = vsel %vm799, %v831, %v637
        %v864 = vsel %vm800, %v832, %v644
        %v865 = vsel %vm801, %v833, %v651
        %v866 = vsel %vm802, %v834, %v658
        %v867 = vsel %vm803, %v835, %v665
        %v868 = vsel %vm804, %v836, %v672
        %v869 = vsel %vm805, %v837, %v679
        %v870 = vsel %vm806, %v838, %v686
        %v871 = vsel %vm807, %v839, %v693
        %v872 = vsel %vm808, %v840, %v700
        %v873 = vsel %vm809, %v841, %v707
        %v874 = vsel %vm810, %v842, %v714
        %vm875 = vcmp.eq.s32.totalorder %v843, 0
        %vm876 = vcmp.eq.s32.totalorder %v844, 0
        %vm877 = vcmp.eq.s32.totalorder %v845, 0
        %vm878 = vcmp.eq.s32.totalorder %v846, 0
        %vm879 = vcmp.eq.s32.totalorder %v847, 0
        %vm880 = vcmp.eq.s32.totalorder %v848, 0
        %vm881 = vcmp.eq.s32.totalorder %v849, 0
        %vm882 = vcmp.eq.s32.totalorder %v850, 0
        %vm883 = vcmp.eq.s32.totalorder %v851, 0
        %vm884 = vcmp.eq.s32.totalorder %v852, 0
        %vm885 = vcmp.eq.s32.totalorder %v853, 0
        %vm886 = vcmp.eq.s32.totalorder %v854, 0
        %vm887 = vcmp.eq.s32.totalorder %v855, 0
        %vm888 = vcmp.eq.s32.totalorder %v856, 0
        %vm889 = vcmp.eq.s32.totalorder %v857, 0
        %vm890 = vcmp.eq.s32.totalorder %v858, 0
        %vm891 = vcmp.eq.s32.totalorder %v859, 0
        %vm892 = vcmp.eq.s32.totalorder %v860, 0
        %vm893 = vcmp.eq.s32.totalorder %v861, 0
        %vm894 = vcmp.eq.s32.totalorder %v862, 0
        %vm895 = vcmp.eq.s32.totalorder %v863, 0
        %vm896 = vcmp.eq.s32.totalorder %v864, 0
        %vm897 = vcmp.eq.s32.totalorder %v865, 0
        %vm898 = vcmp.eq.s32.totalorder %v866, 0
        %vm899 = vcmp.eq.s32.totalorder %v867, 0
        %vm900 = vcmp.eq.s32.totalorder %v868, 0
        %vm901 = vcmp.eq.s32.totalorder %v869, 0
        %vm902 = vcmp.eq.s32.totalorder %v870, 0
        %vm903 = vcmp.eq.s32.totalorder %v871, 0
        %vm904 = vcmp.eq.s32.totalorder %v872, 0
        %vm905 = vcmp.eq.s32.totalorder %v873, 0
        %vm906 = vcmp.eq.s32.totalorder %v874, 0
        %vm907 = vcmp.eq.s32.totalorder %v843, 15
        %vm908 = vcmp.eq.s32.totalorder %v844, 15
        %vm909 = vcmp.eq.s32.totalorder %v845, 15
        %vm910 = vcmp.eq.s32.totalorder %v846, 15
        %vm911 = vcmp.eq.s32.totalorder %v847, 15
        %vm912 = vcmp.eq.s32.totalorder %v848, 15
        %vm913 = vcmp.eq.s32.totalorder %v849, 15
        %vm914 = vcmp.eq.s32.totalorder %v850, 15
        %vm915 = vcmp.eq.s32.totalorder %v851, 15
        %vm916 = vcmp.eq.s32.totalorder %v852, 15
        %vm917 = vcmp.eq.s32.totalorder %v853, 15
        %vm918 = vcmp.eq.s32.totalorder %v854, 15
        %vm919 = vcmp.eq.s32.totalorder %v855, 15
        %vm920 = vcmp.eq.s32.totalorder %v856, 15
        %vm921 = vcmp.eq.s32.totalorder %v857, 15
        %vm922 = vcmp.eq.s32.totalorder %v858, 15
        %vm923 = vcmp.eq.s32.totalorder %v859, 15
        %vm924 = vcmp.eq.s32.totalorder %v860, 15
        %vm925 = vcmp.eq.s32.totalorder %v861, 15
        %vm926 = vcmp.eq.s32.totalorder %v862, 15
        %vm927 = vcmp.eq.s32.totalorder %v863, 15
        %vm928 = vcmp.eq.s32.totalorder %v864, 15
        %vm929 = vcmp.eq.s32.totalorder %v865, 15
        %vm930 = vcmp.eq.s32.totalorder %v866, 15
        %vm931 = vcmp.eq.s32.totalorder %v867, 15
        %vm932 = vcmp.eq.s32.totalorder %v868, 15
        %vm933 = vcmp.eq.s32.totalorder %v869, 15
        %vm934 = vcmp.eq.s32.totalorder %v870, 15
        %vm935 = vcmp.eq.s32.totalorder %v871, 15
        %vm936 = vcmp.eq.s32.totalorder %v872, 15
        %vm937 = vcmp.eq.s32.totalorder %v873, 15
        %vm938 = vcmp.eq.s32.totalorder %v874, 15
        %v939 = vld [vmem:[%s438] sm:$0xff]
        %v940 = vld [vmem:[%s438 + $0x8] sm:$0xff]
        %v941 = vld [vmem:[%s438 + $0x10] sm:$0xff]
        %v942 = vld [vmem:[%s438 + $0x18] sm:$0xff]
        %v943 = vld [vmem:[%s438 + $0x20] sm:$0xff]
        %v944 = vld [vmem:[%s438 + $0x28] sm:$0xff]
        %v945 = vld [vmem:[%s438 + $0x30] sm:$0xff]
        %v946 = vld [vmem:[%s438 + $0x38] sm:$0xff]
        %v947 = vld [vmem:[%s438 + $0x40] sm:$0xff]
        %v948 = vld [vmem:[%s438 + $0x48] sm:$0xff]
        %v949 = vld [vmem:[%s438 + $0x50] sm:$0xff]
        %v950 = vld [vmem:[%s438 + $0x58] sm:$0xff]
        %v951 = vld [vmem:[%s438 + $0x60] sm:$0xff]
        %v952 = vld [vmem:[%s438 + $0x68] sm:$0xff]
        %v953 = vld [vmem:[%s438 + $0x70] sm:$0xff]
        %v954 = vld [vmem:[%s438 + $0x78] sm:$0xff]
        %v955 = vld [vmem:[%s438 + $0x80] sm:$0xff]
        %v956 = vld [vmem:[%s438 + $0x88] sm:$0xff]
        %v957 = vld [vmem:[%s438 + $0x90] sm:$0xff]
        %v958 = vld [vmem:[%s438 + $0x98] sm:$0xff]
        %v959 = vld [vmem:[%s438 + $0xa0] sm:$0xff]
        %v960 = vld [vmem:[%s438 + $0xa8] sm:$0xff]
        %v961 = vld [vmem:[%s438 + $0xb0] sm:$0xff]
        %v962 = vld [vmem:[%s438 + $0xb8] sm:$0xff]
        %v963 = vld [vmem:[%s438 + $0xc0] sm:$0xff]
        %v964 = vld [vmem:[%s438 + $0xc8] sm:$0xff]
        %v965 = vld [vmem:[%s438 + $0xd0] sm:$0xff]
        %v966 = vld [vmem:[%s438 + $0xd8] sm:$0xff]
        %v967 = vld [vmem:[%s438 + $0xe0] sm:$0xff]
        %v968 = vld [vmem:[%s438 + $0xe8] sm:$0xff]
        %v969 = vld [vmem:[%s438 + $0xf0] sm:$0xff]
        %v970 = vld [vmem:[%s438 + $0xf8] sm:$0xff]
        %v971 = vpack.c.bf16 %v940, %v939
        %v972 = vpack.c.bf16 %v942, %v941
        %v973 = vpack.c.bf16 %v944, %v943
        %v974 = vpack.c.bf16 %v946, %v945
        %v975 = vpack.c.bf16 %v948, %v947
        %v976 = vpack.c.bf16 %v950, %v949
        %v977 = vpack.c.bf16 %v952, %v951
        %v978 = vpack.c.bf16 %v954, %v953
        %v979 = vpack.c.bf16 %v956, %v955
        %v980 = vpack.c.bf16 %v958, %v957
        %v981 = vpack.c.bf16 %v960, %v959
        %v982 = vpack.c.bf16 %v962, %v961
        %v983 = vpack.c.bf16 %v964, %v963
        %v984 = vpack.c.bf16 %v966, %v965
        %v985 = vpack.c.bf16 %v968, %v967
        %v986 = vpack.c.bf16 %v970, %v969
        %v987 = vld [vmem:[%s1] sm:$0xf]
        %v988 = vld [vmem:[%s1 + $0x4] sm:$0xf]
        %v989 = vld [vmem:[%s1 + $0x8] sm:$0xf]
        %v990 = vld [vmem:[%s1 + $0xc] sm:$0xf]
        %v995 = vunpack.c.l.b16 %v987
        %v996 = vunpack.c.l.b16 %v988
        %v997 = vunpack.c.l.b16 %v989
        %v998 = vunpack.c.l.b16 %v990
        %v999 = vpack.c.b16 %v996, %v995
        %v1000 = vpack.c.b16 %v998, %v997
        %v1004 = vsel %vm449, %v971, 0
        %v1007 = vsel %vm449, %v972, 0
        %v1010 = vsel %vm449, %v973, 0
        %v1013 = vsel %vm449, %v974, 0
        %v1016 = vsel %vm449, %v975, 0
        %v1019 = vsel %vm449, %v976, 0
        %v1022 = vsel %vm449, %v977, 0
        %v1025 = vsel %vm449, %v978, 0
        %v1028 = vsel %vm449, %v979, 0
        %v1031 = vsel %vm449, %v980, 0
        %v1034 = vsel %vm449, %v981, 0
        %v1037 = vsel %vm449, %v982, 0
        %v1040 = vsel %vm449, %v983, 0
        %v1043 = vsel %vm449, %v984, 0
        %v1046 = vsel %vm449, %v985, 0
        %v1049 = vsel %vm449, %v986, 0
        %1051 = vmatprep.subr.bf16.mxu0 0
        %1052 = vmatpush1.bf16.msra.mxu0 %v999
        %1053 = vmatprep.subr.bf16.mxu0 0
        %1054 = vmatpush1.bf16.msra.mxu0 %v1000
        %1055 = vmatprep.subr.bf16.mxu0 0
        %1056 = vmatpush1.bf16.msra.mxu0 0
        %1057 = vmatprep.subr.bf16.mxu0 0
        %1058 = vmatpush1.bf16.msra.mxu0 0
        %1059 = vmatprep.subr.bf16.mxu0 0
        %1060 = vmatpush1.bf16.msra.mxu0 0
        %1061 = vmatprep.subr.bf16.mxu0 0
        %1062 = vmatpush1.bf16.msra.mxu0 0
        %1063 = vmatprep.subr.bf16.mxu0 0
        %1064 = vmatpush1.bf16.msra.mxu0 0
        %1065 = vmatprep.subr.bf16.mxu0 0
        %1066 = vmatpush1.bf16.msra.mxu0 0
        %1067 = vmatprep.subr.bf16.mxu0 0
        %1068 = vmatpush1.bf16.msra.mxu0 0
        %1069 = vmatprep.subr.bf16.mxu0 0
        %1070 = vmatpush1.bf16.msra.mxu0 0
        %1071 = vmatprep.subr.bf16.mxu0 0
        %1072 = vmatpush1.bf16.msra.mxu0 0
        %1073 = vmatprep.subr.bf16.mxu0 0
        %1074 = vmatpush1.bf16.msra.mxu0 0
        %1075 = vmatprep.subr.bf16.mxu0 0
        %1076 = vmatpush1.bf16.msra.mxu0 0
        %1077 = vmatprep.subr.bf16.mxu0 0
        %1078 = vmatpush1.bf16.msra.mxu0 0
        %1079 = vmatprep.subr.bf16.mxu0 0
        %1080 = vmatpush1.bf16.msra.mxu0 0
        %1081 = vmatprep.subr.bf16.mxu0 0
        %1082 = vmatpush1.bf16.msra.mxu0 0
        %1083 = vmatprep.mubr.bf16.mxu0 0
        %1084 = vmatmul.mubr.bf16.gmra.mrb[0].mxu0 %v1004
        %v1085 = vpop.f32.mrb[0].mxu0
        %v1086 = vadd.f32 0.0, %v1085
        %v1087 = vpop.f32.mrb[0].mxu0
        %v1088 = vpop.f32.mrb[0].mxu0
        %v1089 = vadd.f32 0.0, %v1088
        %v1090 = vpop.f32.mrb[0].mxu0
        %1091 = vmatprep.mubr.bf16.mxu0 0
        %1092 = vmatmul.mubr.bf16.gmra.mrb[0].mxu0 %v1007
        %v1093 = vpop.f32.mrb[0].mxu0
        %v1094 = vadd.f32 0.0, %v1093
        %v1095 = vpop.f32.mrb[0].mxu0
        %v1096 = vpop.f32.mrb[0].mxu0
        %v1097 = vadd.f32 0.0, %v1096
        %v1098 = vpop.f32.mrb[0].mxu0
        %1099 = vmatprep.mubr.bf16.mxu0 0
        %1100 = vmatmul.mubr.bf16.gmra.mrb[0].mxu0 %v1010
        %v1101 = vpop.f32.mrb[0].mxu0
        %v1102 = vadd.f32 0.0, %v1101
        %v1103 = vpop.f32.mrb[0].mxu0
        %v1104 = vpop.f32.mrb[0].mxu0
        %v1105 = vadd.f32 0.0, %v1104
        %v1106 = vpop.f32.mrb[0].mxu0
        %1107 = vmatprep.mubr.bf16.mxu0 0
        %1108 = vmatmul.mubr.bf16.gmra.mrb[0].mxu0 %v1013
        %v1109 = vpop.f32.mrb[0].mxu0
        %v1110 = vadd.f32 0.0, %v1109
        %v1111 = vpop.f32.mrb[0].mxu0
        %v1112 = vpop.f32.mrb[0].mxu0
        %v1113 = vadd.f32 0.0, %v1112
        %v1114 = vpop.f32.mrb[0].mxu0
        %1115 = vmatprep.mubr.bf16.mxu0 0
        %1116 = vmatmul.mubr.bf16.gmra.mrb[0].mxu0 %v1016
        %v1117 = vpop.f32.mrb[0].mxu0
        %v1118 = vadd.f32 0.0, %v1117
        %v1119 = vpop.f32.mrb[0].mxu0
        %v1120 = vpop.f32.mrb[0].mxu0
        %v1121 = vadd.f32 0.0, %v1120
        %v1122 = vpop.f32.mrb[0].mxu0
        %1123 = vmatprep.mubr.bf16.mxu0 0
        %1124 = vmatmul.mubr.bf16.gmra.mrb[0].mxu0 %v1019
        %v1125 = vpop.f32.mrb[0].mxu0
        %v1126 = vadd.f32 0.0, %v1125
        %v1127 = vpop.f32.mrb[0].mxu0
        %v1128 = vpop.f32.mrb[0].mxu0
        %v1129 = vadd.f32 0.0, %v1128
        %v1130 = vpop.f32.mrb[0].mxu0
        %1131 = vmatprep.mubr.bf16.mxu0 0
        %1132 = vmatmul.mubr.bf16.gmra.mrb[0].mxu0 %v1022
        %v1133 = vpop.f32.mrb[0].mxu0
        %v1134 = vadd.f32 0.0, %v1133
        %v1135 = vpop.f32.mrb[0].mxu0
        %v1136 = vpop.f32.mrb[0].mxu0
        %v1137 = vadd.f32 0.0, %v1136
        %v1138 = vpop.f32.mrb[0].mxu0
        %1139 = vmatprep.mubr.bf16.mxu0 0
        %1140 = vmatmul.mubr.bf16.gmra.mrb[0].mxu0 %v1025
        %v1141 = vpop.f32.mrb[0].mxu0
        %v1142 = vadd.f32 0.0, %v1141
        %v1143 = vpop.f32.mrb[0].mxu0
        %v1144 = vpop.f32.mrb[0].mxu0
        %v1145 = vadd.f32 0.0, %v1144
        %v1146 = vpop.f32.mrb[0].mxu0
        %1147 = vmatprep.mubr.bf16.mxu0 0
        %1148 = vmatmul.mubr.bf16.gmra.mrb[0].mxu0 %v1028
        %v1149 = vpop.f32.mrb[0].mxu0
        %v1150 = vadd.f32 0.0, %v1149
        %v1151 = vpop.f32.mrb[0].mxu0
        %v1152 = vpop.f32.mrb[0].mxu0
        %v1153 = vadd.f32 0.0, %v1152
        %v1154 = vpop.f32.mrb[0].mxu0
        %1155 = vmatprep.mubr.bf16.mxu0 0
        %1156 = vmatmul.mubr.bf16.gmra.mrb[0].mxu0 %v1031
        %v1157 = vpop.f32.mrb[0].mxu0
        %v1158 = vadd.f32 0.0, %v1157
        %v1159 = vpop.f32.mrb[0].mxu0
        %v1160 = vpop.f32.mrb[0].mxu0
        %v1161 = vadd.f32 0.0, %v1160
        %v1162 = vpop.f32.mrb[0].mxu0
        %1163 = vmatprep.mubr.bf16.mxu0 0
        %1164 = vmatmul.mubr.bf16.gmra.mrb[0].mxu0 %v1034
        %v1165 = vpop.f32.mrb[0].mxu0
        %v1166 = vadd.f32 0.0, %v1165
        %v1167 = vpop.f32.mrb[0].mxu0
        %v1168 = vpop.f32.mrb[0].mxu0
        %v1169 = vadd.f32 0.0, %v1168
        %v1170 = vpop.f32.mrb[0].mxu0
        %1171 = vmatprep.mubr.bf16.mxu0 0
        %1172 = vmatmul.mubr.bf16.gmra.mrb[0].mxu0 %v1037
        %v1173 = vpop.f32.mrb[0].mxu0
        %v1174 = vadd.f32 0.0, %v1173
        %v1175 = vpop.f32.mrb[0].mxu0
        %v1176 = vpop.f32.mrb[0].mxu0
        %v1177 = vadd.f32 0.0, %v1176
        %v1178 = vpop.f32.mrb[0].mxu0
        %1179 = vmatprep.mubr.bf16.mxu0 0
        %1180 = vmatmul.mubr.bf16.gmra.mrb[0].mxu0 %v1040
        %v1181 = vpop.f32.mrb[0].mxu0
        %v1182 = vadd.f32 0.0, %v1181
        %v1183 = vpop.f32.mrb[0].mxu0
        %v1184 = vpop.f32.mrb[0].mxu0
        %v1185 = vadd.f32 0.0, %v1184
        %v1186 = vpop.f32.mrb[0].mxu0
        %1187 = vmatprep.mubr.bf16.mxu0 0
        %1188 = vmatmul.mubr.bf16.gmra.mrb[0].mxu0 %v1043
        %v1189 = vpop.f32.mrb[0].mxu0
        %v1190 = vadd.f32 0.0, %v1189
        %v1191 = vpop.f32.mrb[0].mxu0
        %v1192 = vpop.f32.mrb[0].mxu0
        %v1193 = vadd.f32 0.0, %v1192
        %v1194 = vpop.f32.mrb[0].mxu0
        %1195 = vmatprep.mubr.bf16.mxu0 0
        %1196 = vmatmul.mubr.bf16.gmra.mrb[0].mxu0 %v1046
        %v1197 = vpop.f32.mrb[0].mxu0
        %v1198 = vadd.f32 0.0, %v1197
        %v1199 = vpop.f32.mrb[0].mxu0
        %v1200 = vpop.f32.mrb[0].mxu0
        %v1201 = vadd.f32 0.0, %v1200
        %v1202 = vpop.f32.mrb[0].mxu0
        %1203 = vmatprep.mubr.bf16.mxu0 0
        %1204 = vmatmul.mubr.bf16.gmra.mrb[0].mxu0 %v1049
        %v1205 = vpop.f32.mrb[0].mxu0
        %v1206 = vadd.f32 0.0, %v1205
        %v1207 = vpop.f32.mrb[0].mxu0
        %v1208 = vpop.f32.mrb[0].mxu0
        %v1209 = vadd.f32 0.0, %v1208
        %v1210 = vpop.f32.mrb[0].mxu0
        %1211 = vdwg.mxu0
        %v1212 = vld [vmem:[%s2] sm:$0x1]
        %v1214 = vlaneseq
        %v1215 = vshrl.u32 %v1214, 7
        %v1216 = vsub.s32 0, %v1215
        %v1217 = vrot.slane %v1212, %v1216
        %v1219 = vmul.f32 %v1086, %v1217
        %v1220 = vmul.f32 %v1089, %v1217
        %v1221 = vmul.f32 %v1094, %v1217
        %v1222 = vmul.f32 %v1097, %v1217
        %v1223 = vmul.f32 %v1102, %v1217
        %v1224 = vmul.f32 %v1105, %v1217
        %v1225 = vmul.f32 %v1110, %v1217
        %v1226 = vmul.f32 %v1113, %v1217
        %v1227 = vmul.f32 %v1118, %v1217
        %v1228 = vmul.f32 %v1121, %v1217
        %v1229 = vmul.f32 %v1126, %v1217
        %v1230 = vmul.f32 %v1129, %v1217
        %v1231 = vmul.f32 %v1134, %v1217
        %v1232 = vmul.f32 %v1137, %v1217
        %v1233 = vmul.f32 %v1142, %v1217
        %v1234 = vmul.f32 %v1145, %v1217
        %v1235 = vmul.f32 %v1150, %v1217
        %v1236 = vmul.f32 %v1153, %v1217
        %v1237 = vmul.f32 %v1158, %v1217
        %v1238 = vmul.f32 %v1161, %v1217
        %v1239 = vmul.f32 %v1166, %v1217
        %v1240 = vmul.f32 %v1169, %v1217
        %v1241 = vmul.f32 %v1174, %v1217
        %v1242 = vmul.f32 %v1177, %v1217
        %v1243 = vmul.f32 %v1182, %v1217
        %v1244 = vmul.f32 %v1185, %v1217
        %v1245 = vmul.f32 %v1190, %v1217
        %v1246 = vmul.f32 %v1193, %v1217
        %v1247 = vmul.f32 %v1198, %v1217
        %v1248 = vmul.f32 %v1201, %v1217
        %v1249 = vmul.f32 %v1206, %v1217
        %v1250 = vmul.f32 %v1209, %v1217
        %v1251 = vld [vmem:[%s3] sm:$0x1]
        %v1253 = vlaneseq
        %v1254 = vshrl.u32 %v1253, 7
        %v1255 = vsub.s32 0, %v1254
        %v1256 = vrot.slane %v1251, %v1255
        %v1258 = vadd.f32 %v1219, %v1256
        %v1259 = vadd.f32 %v1220, %v1256
        %v1260 = vadd.f32 %v1221, %v1256
        %v1261 = vadd.f32 %v1222, %v1256
        %v1262 = vadd.f32 %v1223, %v1256
        %v1263 = vadd.f32 %v1224, %v1256
        %v1264 = vadd.f32 %v1225, %v1256
        %v1265 = vadd.f32 %v1226, %v1256
        %v1266 = vadd.f32 %v1227, %v1256
        %v1267 = vadd.f32 %v1228, %v1256
        %v1268 = vadd.f32 %v1229, %v1256
        %v1269 = vadd.f32 %v1230, %v1256
        %v1270 = vadd.f32 %v1231, %v1256
        %v1271 = vadd.f32 %v1232, %v1256
        %v1272 = vadd.f32 %v1233, %v1256
        %v1273 = vadd.f32 %v1234, %v1256
        %v1274 = vadd.f32 %v1235, %v1256
        %v1275 = vadd.f32 %v1236, %v1256
        %v1276 = vadd.f32 %v1237, %v1256
        %v1277 = vadd.f32 %v1238, %v1256
        %v1278 = vadd.f32 %v1239, %v1256
        %v1279 = vadd.f32 %v1240, %v1256
        %v1280 = vadd.f32 %v1241, %v1256
        %v1281 = vadd.f32 %v1242, %v1256
        %v1282 = vadd.f32 %v1243, %v1256
        %v1283 = vadd.f32 %v1244, %v1256
        %v1284 = vadd.f32 %v1245, %v1256
        %v1285 = vadd.f32 %v1246, %v1256
        %v1286 = vadd.f32 %v1247, %v1256
        %v1287 = vadd.f32 %v1248, %v1256
        %v1288 = vadd.f32 %v1249, %v1256
        %v1289 = vadd.f32 %v1250, %v1256
        %v1290 = vmax.f32 %v1258, 0.0
        %v1291 = vmax.f32 %v1259, 0.0
        %v1292 = vmax.f32 %v1260, 0.0
        %v1293 = vmax.f32 %v1261, 0.0
        %v1294 = vmax.f32 %v1262, 0.0
        %v1295 = vmax.f32 %v1263, 0.0
        %v1296 = vmax.f32 %v1264, 0.0
        %v1297 = vmax.f32 %v1265, 0.0
        %v1298 = vmax.f32 %v1266, 0.0
        %v1299 = vmax.f32 %v1267, 0.0
        %v1300 = vmax.f32 %v1268, 0.0
        %v1301 = vmax.f32 %v1269, 0.0
        %v1302 = vmax.f32 %v1270, 0.0
        %v1303 = vmax.f32 %v1271, 0.0
        %v1304 = vmax.f32 %v1272, 0.0
        %v1305 = vmax.f32 %v1273, 0.0
        %v1306 = vmax.f32 %v1274, 0.0
        %v1307 = vmax.f32 %v1275, 0.0
        %v1308 = vmax.f32 %v1276, 0.0
        %v1309 = vmax.f32 %v1277, 0.0
        %v1310 = vmax.f32 %v1278, 0.0
        %v1311 = vmax.f32 %v1279, 0.0
        %v1312 = vmax.f32 %v1280, 0.0
        %v1313 = vmax.f32 %v1281, 0.0
        %v1314 = vmax.f32 %v1282, 0.0
        %v1315 = vmax.f32 %v1283, 0.0
        %v1316 = vmax.f32 %v1284, 0.0
        %v1317 = vmax.f32 %v1285, 0.0
        %v1318 = vmax.f32 %v1286, 0.0
        %v1319 = vmax.f32 %v1287, 0.0
        %v1320 = vmax.f32 %v1288, 0.0
        %v1321 = vmax.f32 %v1289, 0.0
        %1322 = vst.msk [vmem:[#allocation2 + $0x20] sm:$0xff] %vm440, %v1290
        %1323 = vst.msk [vmem:[#allocation2 + $0x28] sm:$0xff] %vm440, %v1291
        %1324 = vst.msk [vmem:[#allocation2 + $0x30] sm:$0xff] %vm440, %v1292
        %1325 = vst.msk [vmem:[#allocation2 + $0x38] sm:$0xff] %vm440, %v1293
        %1326 = vst.msk [vmem:[#allocation2 + $0x40] sm:$0xff] %vm440, %v1294
        %1327 = vst.msk [vmem:[#allocation2 + $0x48] sm:$0xff] %vm440, %v1295
        %1328 = vst.msk [vmem:[#allocation2 + $0x50] sm:$0xff] %vm440, %v1296
        %1329 = vst.msk [vmem:[#allocation2 + $0x58] sm:$0xff] %vm440, %v1297
        %1330 = vst.msk [vmem:[#allocation2 + $0x60] sm:$0xff] %vm440, %v1298
        %1331 = vst.msk [vmem:[#allocation2 + $0x68] sm:$0xff] %vm440, %v1299
        %1332 = vst.msk [vmem:[#allocation2 + $0x70] sm:$0xff] %vm440, %v1300
        %1333 = vst.msk [vmem:[#allocation2 + $0x78] sm:$0xff] %vm440, %v1301
        %1334 = vst.msk [vmem:[#allocation2 + $0x80] sm:$0xff] %vm440, %v1302
        %1335 = vst.msk [vmem:[#allocation2 + $0x88] sm:$0xff] %vm440, %v1303
        %1336 = vst.msk [vmem:[#allocation2 + $0x90] sm:$0xff] %vm440, %v1304
        %1337 = vst.msk [vmem:[#allocation2 + $0x98] sm:$0xff] %vm440, %v1305
        %1338 = vst.msk [vmem:[#allocation2 + $0xa0] sm:$0xff] %vm440, %v1306
        %1339 = vst.msk [vmem:[#allocation2 + $0xa8] sm:$0xff] %vm440, %v1307
        %1340 = vst.msk [vmem:[#allocation2 + $0xb0] sm:$0xff] %vm440, %v1308
        %1341 = vst.msk [vmem:[#allocation2 + $0xb8] sm:$0xff] %vm440, %v1309
        %1342 = vst.msk [vmem:[#allocation2 + $0xc0] sm:$0xff] %vm440, %v1310
        %1343 = vst.msk [vmem:[#allocation2 + $0xc8] sm:$0xff] %vm440, %v1311
        %1344 = vst.msk [vmem:[#allocation2 + $0xd0] sm:$0xff] %vm440, %v1312
        %1345 = vst.msk [vmem:[#allocation2 + $0xd8] sm:$0xff] %vm440, %v1313
        %1346 = vst.msk [vmem:[#allocation2 + $0xe0] sm:$0xff] %vm440, %v1314
        %1347 = vst.msk [vmem:[#allocation2 + $0xe8] sm:$0xff] %vm440, %v1315
        %1348 = vst.msk [vmem:[#allocation2 + $0xf0] sm:$0xff] %vm440, %v1316
        %1349 = vst.msk [vmem:[#allocation2 + $0xf8] sm:$0xff] %vm440, %v1317
        %1350 = vst.msk [vmem:[#allocation2 + $0x100] sm:$0xff] %vm440, %v1318
        %1351 = vst.msk [vmem:[#allocation2 + $0x108] sm:$0xff] %vm440, %v1319
        %1352 = vst.msk [vmem:[#allocation2 + $0x110] sm:$0xff] %vm440, %v1320
        %1353 = vst.msk [vmem:[#allocation2 + $0x118] sm:$0xff] %vm440, %v1321
        %v1354 = vld [vmem:[#allocation2 + $0xf] sm:$0xff]
        %v1355 = vld [vmem:[#allocation2 + $0x17] sm:$0xff]
        %v1356 = vld [vmem:[#allocation2 + $0x1f] sm:$0xff]
        %v1357 = vld [vmem:[#allocation2 + $0x27] sm:$0xff]
        %v1358 = vld [vmem:[#allocation2 + $0x2f] sm:$0xff]
        %v1359 = vld [vmem:[#allocation2 + $0x37] sm:$0xff]
        %v1360 = vld [vmem:[#allocation2 + $0x3f] sm:$0xff]
        %v1361 = vld [vmem:[#allocation2 + $0x47] sm:$0xff]
        %v1362 = vld [vmem:[#allocation2 + $0x4f] sm:$0xff]
        %v1363 = vld [vmem:[#allocation2 + $0x57] sm:$0xff]
        %v1364 = vld [vmem:[#allocation2 + $0x5f] sm:$0xff]
        %v1365 = vld [vmem:[#allocation2 + $0x67] sm:$0xff]
        %v1366 = vld [vmem:[#allocation2 + $0x6f] sm:$0xff]
        %v1367 = vld [vmem:[#allocation2 + $0x77] sm:$0xff]
        %v1368 = vld [vmem:[#allocation2 + $0x7f] sm:$0xff]
        %v1369 = vld [vmem:[#allocation2 + $0x87] sm:$0xff]
        %v1370 = vld [vmem:[#allocation2 + $0x8f] sm:$0xff]
        %v1371 = vld [vmem:[#allocation2 + $0x97] sm:$0xff]
        %v1372 = vld [vmem:[#allocation2 + $0x9f] sm:$0xff]
        %v1373 = vld [vmem:[#allocation2 + $0xa7] sm:$0xff]
        %v1374 = vld [vmem:[#allocation2 + $0xaf] sm:$0xff]
        %v1375 = vld [vmem:[#allocation2 + $0xb7] sm:$0xff]
        %v1376 = vld [vmem:[#allocation2 + $0xbf] sm:$0xff]
        %v1377 = vld [vmem:[#allocation2 + $0xc7] sm:$0xff]
        %v1378 = vld [vmem:[#allocation2 + $0xcf] sm:$0xff]
        %v1379 = vld [vmem:[#allocation2 + $0xd7] sm:$0xff]
        %v1380 = vld [vmem:[#allocation2 + $0xdf] sm:$0xff]
        %v1381 = vld [vmem:[#allocation2 + $0xe7] sm:$0xff]
        %v1382 = vld [vmem:[#allocation2 + $0xef] sm:$0xff]
        %v1383 = vld [vmem:[#allocation2 + $0xf7] sm:$0xff]
        %v1384 = vld [vmem:[#allocation2 + $0xff] sm:$0xff]
        %v1385 = vld [vmem:[#allocation2 + $0x107] sm:$0xff]
        %v1386 = vsel %vm875, 1, 0
        %v1387 = vsel %vm876, 1, 0
        %v1388 = vsel %vm877, 1, 0
        %v1389 = vsel %vm878, 1, 0
        %v1390 = vsel %vm879, 1, 0
        %v1391 = vsel %vm880, 1, 0
        %v1392 = vsel %vm881, 1, 0
        %v1393 = vsel %vm882, 1, 0
        %v1394 = vsel %vm883, 1, 0
        %v1395 = vsel %vm884, 1, 0
        %v1396 = vsel %vm885, 1, 0
        %v1397 = vsel %vm886, 1, 0
        %v1398 = vsel %vm887, 1, 0
        %v1399 = vsel %vm888, 1, 0
        %v1400 = vsel %vm889, 1, 0
        %v1401 = vsel %vm890, 1, 0
        %v1402 = vsel %vm891, 1, 0
        %v1403 = vsel %vm892, 1, 0
        %v1404 = vsel %vm893, 1, 0
        %v1405 = vsel %vm894, 1, 0
        %v1406 = vsel %vm895, 1, 0
        %v1407 = vsel %vm896, 1, 0
        %v1408 = vsel %vm897, 1, 0
        %v1409 = vsel %vm898, 1, 0
        %v1410 = vsel %vm899, 1, 0
        %v1411 = vsel %vm900, 1, 0
        %v1412 = vsel %vm901, 1, 0
        %v1413 = vsel %vm902, 1, 0
        %v1414 = vsel %vm903, 1, 0
        %v1415 = vsel %vm904, 1, 0
        %v1416 = vsel %vm905, 1, 0
        %v1417 = vsel %vm906, 1, 0
        %vm1418 = vcmp.eq.s32.totalorder %v1386, 1
        %vm1419 = vcmp.eq.s32.totalorder %v1387, 1
        %vm1420 = vcmp.eq.s32.totalorder %v1388, 1
        %vm1421 = vcmp.eq.s32.totalorder %v1389, 1
        %vm1422 = vcmp.eq.s32.totalorder %v1390, 1
        %vm1423 = vcmp.eq.s32.totalorder %v1391, 1
        %vm1424 = vcmp.eq.s32.totalorder %v1392, 1
        %vm1425 = vcmp.eq.s32.totalorder %v1393, 1
        %vm1426 = vcmp.eq.s32.totalorder %v1394, 1
        %vm1427 = vcmp.eq.s32.totalorder %v1395, 1
        %vm1428 = vcmp.eq.s32.totalorder %v1396, 1
        %vm1429 = vcmp.eq.s32.totalorder %v1397, 1
        %vm1430 = vcmp.eq.s32.totalorder %v1398, 1
        %vm1431 = vcmp.eq.s32.totalorder %v1399, 1
        %vm1432 = vcmp.eq.s32.totalorder %v1400, 1
        %vm1433 = vcmp.eq.s32.totalorder %v1401, 1
        %vm1434 = vcmp.eq.s32.totalorder %v1402, 1
        %vm1435 = vcmp.eq.s32.totalorder %v1403, 1
        %vm1436 = vcmp.eq.s32.totalorder %v1404, 1
        %vm1437 = vcmp.eq.s32.totalorder %v1405, 1
        %vm1438 = vcmp.eq.s32.totalorder %v1406, 1
        %vm1439 = vcmp.eq.s32.totalorder %v1407, 1
        %vm1440 = vcmp.eq.s32.totalorder %v1408, 1
        %vm1441 = vcmp.eq.s32.totalorder %v1409, 1
        %vm1442 = vcmp.eq.s32.totalorder %v1410, 1
        %vm1443 = vcmp.eq.s32.totalorder %v1411, 1
        %vm1444 = vcmp.eq.s32.totalorder %v1412, 1
        %vm1445 = vcmp.eq.s32.totalorder %v1413, 1
        %vm1446 = vcmp.eq.s32.totalorder %v1414, 1
        %vm1447 = vcmp.eq.s32.totalorder %v1415, 1
        %vm1448 = vcmp.eq.s32.totalorder %v1416, 1
        %vm1449 = vcmp.eq.s32.totalorder %v1417, 1
        %v1450 = vsel %vm1418, 0.0, %v1354
        %v1451 = vsel %vm1419, 0.0, %v1355
        %v1452 = vsel %vm1420, 0.0, %v1356
        %v1453 = vsel %vm1421, 0.0, %v1357
        %v1454 = vsel %vm1422, 0.0, %v1358
        %v1455 = vsel %vm1423, 0.0, %v1359
        %v1456 = vsel %vm1424, 0.0, %v1360
        %v1457 = vsel %vm1425, 0.0, %v1361
        %v1458 = vsel %vm1426, 0.0, %v1362
        %v1459 = vsel %vm1427, 0.0, %v1363
        %v1460 = vsel %vm1428, 0.0, %v1364
        %v1461 = vsel %vm1429, 0.0, %v1365
        %v1462 = vsel %vm1430, 0.0, %v1366
        %v1463 = vsel %vm1431, 0.0, %v1367
        %v1464 = vsel %vm1432, 0.0, %v1368
        %v1465 = vsel %vm1433, 0.0, %v1369
        %v1466 = vsel %vm1434, 0.0, %v1370
        %v1467 = vsel %vm1435, 0.0, %v1371
        %v1468 = vsel %vm1436, 0.0, %v1372
        %v1469 = vsel %vm1437, 0.0, %v1373
        %v1470 = vsel %vm1438, 0.0, %v1374
        %v1471 = vsel %vm1439, 0.0, %v1375
        %v1472 = vsel %vm1440, 0.0, %v1376
        %v1473 = vsel %vm1441, 0.0, %v1377
        %v1474 = vsel %vm1442, 0.0, %v1378
        %v1475 = vsel %vm1443, 0.0, %v1379
        %v1476 = vsel %vm1444, 0.0, %v1380
        %v1477 = vsel %vm1445, 0.0, %v1381
        %v1478 = vsel %vm1446, 0.0, %v1382
        %v1479 = vsel %vm1447, 0.0, %v1383
        %v1480 = vsel %vm1448, 0.0, %v1384
        %v1481 = vsel %vm1449, 0.0, %v1385
        %v1482 = vpack.c.bf16 %v1451, %v1450
        %v1483 = vpack.c.bf16 %v1453, %v1452
        %v1484 = vpack.c.bf16 %v1455, %v1454
        %v1485 = vpack.c.bf16 %v1457, %v1456
        %v1486 = vpack.c.bf16 %v1459, %v1458
        %v1487 = vpack.c.bf16 %v1461, %v1460
        %v1488 = vpack.c.bf16 %v1463, %v1462
        %v1489 = vpack.c.bf16 %v1465, %v1464
        %v1490 = vpack.c.bf16 %v1467, %v1466
        %v1491 = vpack.c.bf16 %v1469, %v1468
        %v1492 = vpack.c.bf16 %v1471, %v1470
        %v1493 = vpack.c.bf16 %v1473, %v1472
        %v1494 = vpack.c.bf16 %v1475, %v1474
        %v1495 = vpack.c.bf16 %v1477, %v1476
        %v1496 = vpack.c.bf16 %v1479, %v1478
        %v1497 = vpack.c.bf16 %v1481, %v1480
        %1498 = vst.msk [vmem:[#allocation3] sm:$0xff] %vm440, %v1482
        %1499 = vst.msk [vmem:[#allocation3 + $0x28] sm:$0xff] %vm440, %v1483
        %1500 = vst.msk [vmem:[#allocation3 + $0x50] sm:$0xff] %vm440, %v1484
        %1501 = vst.msk [vmem:[#allocation3 + $0x78] sm:$0xff] %vm440, %v1485
        %1502 = vst.msk [vmem:[#allocation3 + $0xa0] sm:$0xff] %vm440, %v1486
        %1503 = vst.msk [vmem:[#allocation3 + $0xc8] sm:$0xff] %vm440, %v1487
        %1504 = vst.msk [vmem:[#allocation3 + $0xf0] sm:$0xff] %vm440, %v1488
        %1505 = vst.msk [vmem:[#allocation3 + $0x118] sm:$0xff] %vm440, %v1489
        %1506 = vst.msk [vmem:[#allocation3 + $0x140] sm:$0xff] %vm440, %v1490
        %1507 = vst.msk [vmem:[#allocation3 + $0x168] sm:$0xff] %vm440, %v1491
        %1508 = vst.msk [vmem:[#allocation3 + $0x190] sm:$0xff] %vm440, %v1492
        %1509 = vst.msk [vmem:[#allocation3 + $0x1b8] sm:$0xff] %vm440, %v1493
        %1510 = vst.msk [vmem:[#allocation3 + $0x1e0] sm:$0xff] %vm440, %v1494
        %1511 = vst.msk [vmem:[#allocation3 + $0x208] sm:$0xff] %vm440, %v1495
        %1512 = vst.msk [vmem:[#allocation3 + $0x230] sm:$0xff] %vm440, %v1496
        %1513 = vst.msk [vmem:[#allocation3 + $0x258] sm:$0xff] %vm440, %v1497
        %v1514 = vld [vmem:[#allocation2 + $0x10] sm:$0xff]
        %v1515 = vld [vmem:[#allocation2 + $0x18] sm:$0xff]
        %v1516 = vld [vmem:[#allocation2 + $0x20] sm:$0xff]
        %v1517 = vld [vmem:[#allocation2 + $0x28] sm:$0xff]
        %v1518 = vld [vmem:[#allocation2 + $0x30] sm:$0xff]
        %v1519 = vld [vmem:[#allocation2 + $0x38] sm:$0xff]
        %v1520 = vld [vmem:[#allocation2 + $0x40] sm:$0xff]
        %v1521 = vld [vmem:[#allocation2 + $0x48] sm:$0xff]
        %v1522 = vld [vmem:[#allocation2 + $0x50] sm:$0xff]
        %v1523 = vld [vmem:[#allocation2 + $0x58] sm:$0xff]
        %v1524 = vld [vmem:[#allocation2 + $0x60] sm:$0xff]
        %v1525 = vld [vmem:[#allocation2 + $0x68] sm:$0xff]
        %v1526 = vld [vmem:[#allocation2 + $0x70] sm:$0xff]
        %v1527 = vld [vmem:[#allocation2 + $0x78] sm:$0xff]
        %v1528 = vld [vmem:[#allocation2 + $0x80] sm:$0xff]
        %v1529 = vld [vmem:[#allocation2 + $0x88] sm:$0xff]
        %v1530 = vld [vmem:[#allocation2 + $0x90] sm:$0xff]
        %v1531 = vld [vmem:[#allocation2 + $0x98] sm:$0xff]
        %v1532 = vld [vmem:[#allocation2 + $0xa0] sm:$0xff]
        %v1533 = vld [vmem:[#allocation2 + $0xa8] sm:$0xff]
        %v1534 = vld [vmem:[#allocation2 + $0xb0] sm:$0xff]
        %v1535 = vld [vmem:[#allocation2 + $0xb8] sm:$0xff]
        %v1536 = vld [vmem:[#allocation2 + $0xc0] sm:$0xff]
        %v1537 = vld [vmem:[#allocation2 + $0xc8] sm:$0xff]
        %v1538 = vld [vmem:[#allocation2 + $0xd0] sm:$0xff]
        %v1539 = vld [vmem:[#allocation2 + $0xd8] sm:$0xff]
        %v1540 = vld [vmem:[#allocation2 + $0xe0] sm:$0xff]
        %v1541 = vld [vmem:[#allocation2 + $0xe8] sm:$0xff]
        %v1542 = vld [vmem:[#allocation2 + $0xf0] sm:$0xff]
        %v1543 = vld [vmem:[#allocation2 + $0xf8] sm:$0xff]
        %v1544 = vld [vmem:[#allocation2 + $0x100] sm:$0xff]
        %v1545 = vld [vmem:[#allocation2 + $0x108] sm:$0xff]
        %v1546 = vpack.c.bf16 %v1515, %v1514
        %v1547 = vpack.c.bf16 %v1517, %v1516
        %v1548 = vpack.c.bf16 %v1519, %v1518
        %v1549 = vpack.c.bf16 %v1521, %v1520
        %v1550 = vpack.c.bf16 %v1523, %v1522
        %v1551 = vpack.c.bf16 %v1525, %v1524
        %v1552 = vpack.c.bf16 %v1527, %v1526
        %v1553 = vpack.c.bf16 %v1529, %v1528
        %v1554 = vpack.c.bf16 %v1531, %v1530
        %v1555 = vpack.c.bf16 %v1533, %v1532
        %v1556 = vpack.c.bf16 %v1535, %v1534
        %v1557 = vpack.c.bf16 %v1537, %v1536
        %v1558 = vpack.c.bf16 %v1539, %v1538
        %v1559 = vpack.c.bf16 %v1541, %v1540
        %v1560 = vpack.c.bf16 %v1543, %v1542
        %v1561 = vpack.c.bf16 %v1545, %v1544
        %1578 = vrot.lane.b32.xlu0 %v1546, 64
        %v1579 = vpop.permute.xlu0 %1578
        %1580 = vrot.lane.b32.xlu0 %v1547, 64
        %v1581 = vpop.permute.xlu0 %1580
        %1582 = vrot.lane.b32.xlu0 %v1548, 64
        %v1583 = vpop.permute.xlu0 %1582
        %1584 = vrot.lane.b32.xlu0 %v1549, 64
        %v1585 = vpop.permute.xlu0 %1584
        %1586 = vrot.lane.b32.xlu0 %v1550, 64
        %v1587 = vpop.permute.xlu0 %1586
        %1588 = vrot.lane.b32.xlu0 %v1551, 64
        %v1589 = vpop.permute.xlu0 %1588
        %1590 = vrot.lane.b32.xlu0 %v1552, 64
        %v1591 = vpop.permute.xlu0 %1590
        %1592 = vrot.lane.b32.xlu0 %v1553, 64
        %v1593 = vpop.permute.xlu0 %1592
        %1594 = vrot.lane.b32.xlu0 %v1554, 64
        %v1595 = vpop.permute.xlu0 %1594
        %1596 = vrot.lane.b32.xlu0 %v1555, 64
        %v1597 = vpop.permute.xlu0 %1596
        %1598 = vrot.lane.b32.xlu0 %v1556, 64
        %v1599 = vpop.permute.xlu0 %1598
        %1600 = vrot.lane.b32.xlu0 %v1557, 64
        %v1601 = vpop.permute.xlu0 %1600
        %1602 = vrot.lane.b32.xlu0 %v1558, 64
        %v1603 = vpop.permute.xlu0 %1602
        %1604 = vrot.lane.b32.xlu0 %v1559, 64
        %v1605 = vpop.permute.xlu0 %1604
        %1606 = vrot.lane.b32.xlu0 %v1560, 64
        %v1607 = vpop.permute.xlu0 %1606
        %1608 = vrot.lane.b32.xlu0 %v1561, 64
        %v1609 = vpop.permute.xlu0 %1608
        %vm1626 = vcmask 1048064
        %1627 = vst.msk [vmem:[#allocation3] sm:$0xff] %vm1626, %v1579
        %1628 = vst.msk [vmem:[#allocation3 + $0x28] sm:$0xff] %vm1626, %v1581
        %1629 = vst.msk [vmem:[#allocation3 + $0x50] sm:$0xff] %vm1626, %v1583
        %1630 = vst.msk [vmem:[#allocation3 + $0x78] sm:$0xff] %vm1626, %v1585
        %1631 = vst.msk [vmem:[#allocation3 + $0xa0] sm:$0xff] %vm1626, %v1587
        %1632 = vst.msk [vmem:[#allocation3 + $0xc8] sm:$0xff] %vm1626, %v1589
        %1633 = vst.msk [vmem:[#allocation3 + $0xf0] sm:$0xff] %vm1626, %v1591
        %1634 = vst.msk [vmem:[#allocation3 + $0x118] sm:$0xff] %vm1626, %v1593
        %1635 = vst.msk [vmem:[#allocation3 + $0x140] sm:$0xff] %vm1626, %v1595
        %1636 = vst.msk [vmem:[#allocation3 + $0x168] sm:$0xff] %vm1626, %v1597
        %1637 = vst.msk [vmem:[#allocation3 + $0x190] sm:$0xff] %vm1626, %v1599
        %1638 = vst.msk [vmem:[#allocation3 + $0x1b8] sm:$0xff] %vm1626, %v1601
        %1639 = vst.msk [vmem:[#allocation3 + $0x1e0] sm:$0xff] %vm1626, %v1603
        %1640 = vst.msk [vmem:[#allocation3 + $0x208] sm:$0xff] %vm1626, %v1605
        %1641 = vst.msk [vmem:[#allocation3 + $0x230] sm:$0xff] %vm1626, %v1607
        %1642 = vst.msk [vmem:[#allocation3 + $0x258] sm:$0xff] %vm1626, %v1609
        %v1643 = vld [vmem:[#allocation2 + $0x11] sm:$0xff]
        %v1644 = vld [vmem:[#allocation2 + $0x19] sm:$0xff]
        %v1645 = vld [vmem:[#allocation2 + $0x21] sm:$0xff]
        %v1646 = vld [vmem:[#allocation2 + $0x29] sm:$0xff]
        %v1647 = vld [vmem:[#allocation2 + $0x31] sm:$0xff]
        %v1648 = vld [vmem:[#allocation2 + $0x39] sm:$0xff]
        %v1649 = vld [vmem:[#allocation2 + $0x41] sm:$0xff]
        %v1650 = vld [vmem:[#allocation2 + $0x49] sm:$0xff]
        %v1651 = vld [vmem:[#allocation2 + $0x51] sm:$0xff]
        %v1652 = vld [vmem:[#allocation2 + $0x59] sm:$0xff]
        %v1653 = vld [vmem:[#allocation2 + $0x61] sm:$0xff]
        %v1654 = vld [vmem:[#allocation2 + $0x69] sm:$0xff]
        %v1655 = vld [vmem:[#allocation2 + $0x71] sm:$0xff]
        %v1656 = vld [vmem:[#allocation2 + $0x79] sm:$0xff]
        %v1657 = vld [vmem:[#allocation2 + $0x81] sm:$0xff]
        %v1658 = vld [vmem:[#allocation2 + $0x89] sm:$0xff]
        %v1659 = vld [vmem:[#allocation2 + $0x91] sm:$0xff]
        %v1660 = vld [vmem:[#allocation2 + $0x99] sm:$0xff]
        %v1661 = vld [vmem:[#allocation2 + $0xa1] sm:$0xff]
        %v1662 = vld [vmem:[#allocation2 + $0xa9] sm:$0xff]
        %v1663 = vld [vmem:[#allocation2 + $0xb1] sm:$0xff]
        %v1664 = vld [vmem:[#allocation2 + $0xb9] sm:$0xff]
        %v1665 = vld [vmem:[#allocation2 + $0xc1] sm:$0xff]
        %v1666 = vld [vmem:[#allocation2 + $0xc9] sm:$0xff]
        %v1667 = vld [vmem:[#allocation2 + $0xd1] sm:$0xff]
        %v1668 = vld [vmem:[#allocation2 + $0xd9] sm:$0xff]
        %v1669 = vld [vmem:[#allocation2 + $0xe1] sm:$0xff]
        %v1670 = vld [vmem:[#allocation2 + $0xe9] sm:$0xff]
        %v1671 = vld [vmem:[#allocation2 + $0xf1] sm:$0xff]
        %v1672 = vld [vmem:[#allocation2 + $0xf9] sm:$0xff]
        %v1673 = vld [vmem:[#allocation2 + $0x101] sm:$0xff]
        %v1674 = vld [vmem:[#allocation2 + $0x109] sm:$0xff]
        %v1675 = vsel %vm907, 1, 0
        %v1676 = vsel %vm908, 1, 0
        %v1677 = vsel %vm909, 1, 0
        %v1678 = vsel %vm910, 1, 0
        %v1679 = vsel %vm911, 1, 0
        %v1680 = vsel %vm912, 1, 0
        %v1681 = vsel %vm913, 1, 0
        %v1682 = vsel %vm914, 1, 0
        %v1683 = vsel %vm915, 1, 0
        %v1684 = vsel %vm916, 1, 0
        %v1685 = vsel %vm917, 1, 0
        %v1686 = vsel %vm918, 1, 0
        %v1687 = vsel %vm919, 1, 0
        %v1688 = vsel %vm920, 1, 0
        %v1689 = vsel %vm921, 1, 0
        %v1690 = vsel %vm922, 1, 0
        %v1691 = vsel %vm923, 1, 0
        %v1692 = vsel %vm924, 1, 0
        %v1693 = vsel %vm925, 1, 0
        %v1694 = vsel %vm926, 1, 0
        %v1695 = vsel %vm927, 1, 0
        %v1696 = vsel %vm928, 1, 0
        %v1697 = vsel %vm929, 1, 0
        %v1698 = vsel %vm930, 1, 0
        %v1699 = vsel %vm931, 1, 0
        %v1700 = vsel %vm932, 1, 0
        %v1701 = vsel %vm933, 1, 0
        %v1702 = vsel %vm934, 1, 0
        %v1703 = vsel %vm935, 1, 0
        %v1704 = vsel %vm936, 1, 0
        %v1705 = vsel %vm937, 1, 0
        %v1706 = vsel %vm938, 1, 0
        %vm1707 = vcmp.eq.s32.totalorder %v1675, 1
        %vm1708 = vcmp.eq.s32.totalorder %v1676, 1
        %vm1709 = vcmp.eq.s32.totalorder %v1677, 1
        %vm1710 = vcmp.eq.s32.totalorder %v1678, 1
        %vm1711 = vcmp.eq.s32.totalorder %v1679, 1
        %vm1712 = vcmp.eq.s32.totalorder %v1680, 1
        %vm1713 = vcmp.eq.s32.totalorder %v1681, 1
        %vm1714 = vcmp.eq.s32.totalorder %v1682, 1
        %vm1715 = vcmp.eq.s32.totalorder %v1683, 1
        %vm1716 = vcmp.eq.s32.totalorder %v1684, 1
        %vm1717 = vcmp.eq.s32.totalorder %v1685, 1
        %vm1718 = vcmp.eq.s32.totalorder %v1686, 1
        %vm1719 = vcmp.eq.s32.totalorder %v1687, 1
        %vm1720 = vcmp.eq.s32.totalorder %v1688, 1
        %vm1721 = vcmp.eq.s32.totalorder %v1689, 1
        %vm1722 = vcmp.eq.s32.totalorder %v1690, 1
        %vm1723 = vcmp.eq.s32.totalorder %v1691, 1
        %vm1724 = vcmp.eq.s32.totalorder %v1692, 1
        %vm1725 = vcmp.eq.s32.totalorder %v1693, 1
        %vm1726 = vcmp.eq.s32.totalorder %v1694, 1
        %vm1727 = vcmp.eq.s32.totalorder %v1695, 1
        %vm1728 = vcmp.eq.s32.totalorder %v1696, 1
        %vm1729 = vcmp.eq.s32.totalorder %v1697, 1
        %vm1730 = vcmp.eq.s32.totalorder %v1698, 1
        %vm1731 = vcmp.eq.s32.totalorder %v1699, 1
        %vm1732 = vcmp.eq.s32.totalorder %v1700, 1
        %vm1733 = vcmp.eq.s32.totalorder %v1701, 1
        %vm1734 = vcmp.eq.s32.totalorder %v1702, 1
        %vm1735 = vcmp.eq.s32.totalorder %v1703, 1
        %vm1736 = vcmp.eq.s32.totalorder %v1704, 1
        %vm1737 = vcmp.eq.s32.totalorder %v1705, 1
        %vm1738 = vcmp.eq.s32.totalorder %v1706, 1
        %v1739 = vsel %vm1707, 0.0, %v1643
        %v1740 = vsel %vm1708, 0.0, %v1644
        %v1741 = vsel %vm1709, 0.0, %v1645
        %v1742 = vsel %vm1710, 0.0, %v1646
        %v1743 = vsel %vm1711, 0.0, %v1647
        %v1744 = vsel %vm1712, 0.0, %v1648
        %v1745 = vsel %vm1713, 0.0, %v1649
        %v1746 = vsel %vm1714, 0.0, %v1650
        %v1747 = vsel %vm1715, 0.0, %v1651
        %v1748 = vsel %vm1716, 0.0, %v1652
        %v1749 = vsel %vm1717, 0.0, %v1653
        %v1750 = vsel %vm1718, 0.0, %v1654
        %v1751 = vsel %vm1719, 0.0, %v1655
        %v1752 = vsel %vm1720, 0.0, %v1656
        %v1753 = vsel %vm1721, 0.0, %v1657
        %v1754 = vsel %vm1722, 0.0, %v1658
        %v1755 = vsel %vm1723, 0.0, %v1659
        %v1756 = vsel %vm1724, 0.0, %v1660
        %v1757 = vsel %vm1725, 0.0, %v1661
        %v1758 = vsel %vm1726, 0.0, %v1662
        %v1759 = vsel %vm1727, 0.0, %v1663
        %v1760 = vsel %vm1728, 0.0, %v1664
        %v1761 = vsel %vm1729, 0.0, %v1665
        %v1762 = vsel %vm1730, 0.0, %v1666
        %v1763 = vsel %vm1731, 0.0, %v1667
        %v1764 = vsel %vm1732, 0.0, %v1668
        %v1765 = vsel %vm1733, 0.0, %v1669
        %v1766 = vsel %vm1734, 0.0, %v1670
        %v1767 = vsel %vm1735, 0.0, %v1671
        %v1768 = vsel %vm1736, 0.0, %v1672
        %v1769 = vsel %vm1737, 0.0, %v1673
        %v1770 = vsel %vm1738, 0.0, %v1674
        %v1771 = vpack.c.bf16 %v1740, %v1739
        %v1772 = vpack.c.bf16 %v1742, %v1741
        %v1773 = vpack.c.bf16 %v1744, %v1743
        %v1774 = vpack.c.bf16 %v1746, %v1745
        %v1775 = vpack.c.bf16 %v1748, %v1747
        %v1776 = vpack.c.bf16 %v1750, %v1749
        %v1777 = vpack.c.bf16 %v1752, %v1751
        %v1778 = vpack.c.bf16 %v1754, %v1753
        %v1779 = vpack.c.bf16 %v1756, %v1755
        %v1780 = vpack.c.bf16 %v1758, %v1757
        %v1781 = vpack.c.bf16 %v1760, %v1759
        %v1782 = vpack.c.bf16 %v1762, %v1761
        %v1783 = vpack.c.bf16 %v1764, %v1763
        %v1784 = vpack.c.bf16 %v1766, %v1765
        %v1785 = vpack.c.bf16 %v1768, %v1767
        %v1786 = vpack.c.bf16 %v1770, %v1769
        %1787 = vst.msk [vmem:[#allocation3 + $0x8] sm:$0xff] %vm440, %v1771
        %1788 = vst.msk [vmem:[#allocation3 + $0x30] sm:$0xff] %vm440, %v1772
        %1789 = vst.msk [vmem:[#allocation3 + $0x58] sm:$0xff] %vm440, %v1773
        %1790 = vst.msk [vmem:[#allocation3 + $0x80] sm:$0xff] %vm440, %v1774
        %1791 = vst.msk [vmem:[#allocation3 + $0xa8] sm:$0xff] %vm440, %v1775
        %1792 = vst.msk [vmem:[#allocation3 + $0xd0] sm:$0xff] %vm440, %v1776
        %1793 = vst.msk [vmem:[#allocation3 + $0xf8] sm:$0xff] %vm440, %v1777
        %1794 = vst.msk [vmem:[#allocation3 + $0x120] sm:$0xff] %vm440, %v1778
        %1795 = vst.msk [vmem:[#allocation3 + $0x148] sm:$0xff] %vm440, %v1779
        %1796 = vst.msk [vmem:[#allocation3 + $0x170] sm:$0xff] %vm440, %v1780
        %1797 = vst.msk [vmem:[#allocation3 + $0x198] sm:$0xff] %vm440, %v1781
        %1798 = vst.msk [vmem:[#allocation3 + $0x1c0] sm:$0xff] %vm440, %v1782
        %1799 = vst.msk [vmem:[#allocation3 + $0x1e8] sm:$0xff] %vm440, %v1783
        %1800 = vst.msk [vmem:[#allocation3 + $0x210] sm:$0xff] %vm440, %v1784
        %1801 = vst.msk [vmem:[#allocation3 + $0x238] sm:$0xff] %vm440, %v1785
        %1802 = vst.msk [vmem:[#allocation3 + $0x260] sm:$0xff] %vm440, %v1786
        %v1803 = vld [vmem:[#allocation2 + $0x1f] sm:$0xff]
        %v1804 = vld [vmem:[#allocation2 + $0x27] sm:$0xff]
        %v1805 = vld [vmem:[#allocation2 + $0x2f] sm:$0xff]
        %v1806 = vld [vmem:[#allocation2 + $0x37] sm:$0xff]
        %v1807 = vld [vmem:[#allocation2 + $0x3f] sm:$0xff]
        %v1808 = vld [vmem:[#allocation2 + $0x47] sm:$0xff]
        %v1809 = vld [vmem:[#allocation2 + $0x4f] sm:$0xff]
        %v1810 = vld [vmem:[#allocation2 + $0x57] sm:$0xff]
        %v1811 = vld [vmem:[#allocation2 + $0x5f] sm:$0xff]
        %v1812 = vld [vmem:[#allocation2 + $0x67] sm:$0xff]
        %v1813 = vld [vmem:[#allocation2 + $0x6f] sm:$0xff]
        %v1814 = vld [vmem:[#allocation2 + $0x77] sm:$0xff]
        %v1815 = vld [vmem:[#allocation2 + $0x7f] sm:$0xff]
        %v1816 = vld [vmem:[#allocation2 + $0x87] sm:$0xff]
        %v1817 = vld [vmem:[#allocation2 + $0x8f] sm:$0xff]
        %v1818 = vld [vmem:[#allocation2 + $0x97] sm:$0xff]
        %v1819 = vld [vmem:[#allocation2 + $0x9f] sm:$0xff]
        %v1820 = vld [vmem:[#allocation2 + $0xa7] sm:$0xff]
        %v1821 = vld [vmem:[#allocation2 + $0xaf] sm:$0xff]
        %v1822 = vld [vmem:[#allocation2 + $0xb7] sm:$0xff]
        %v1823 = vld [vmem:[#allocation2 + $0xbf] sm:$0xff]
        %v1824 = vld [vmem:[#allocation2 + $0xc7] sm:$0xff]
        %v1825 = vld [vmem:[#allocation2 + $0xcf] sm:$0xff]
        %v1826 = vld [vmem:[#allocation2 + $0xd7] sm:$0xff]
        %v1827 = vld [vmem:[#allocation2 + $0xdf] sm:$0xff]
        %v1828 = vld [vmem:[#allocation2 + $0xe7] sm:$0xff]
        %v1829 = vld [vmem:[#allocation2 + $0xef] sm:$0xff]
        %v1830 = vld [vmem:[#allocation2 + $0xf7] sm:$0xff]
        %v1831 = vld [vmem:[#allocation2 + $0xff] sm:$0xff]
        %v1832 = vld [vmem:[#allocation2 + $0x107] sm:$0xff]
        %v1833 = vld [vmem:[#allocation2 + $0x10f] sm:$0xff]
        %v1834 = vld [vmem:[#allocation2 + $0x117] sm:$0xff]
        %v1835 = vsel %vm1418, 0.0, %v1803
        %v1836 = vsel %vm1419, 0.0, %v1804
        %v1837 = vsel %vm1420, 0.0, %v1805
        %v1838 = vsel %vm1421, 0.0, %v1806
        %v1839 = vsel %vm1422, 0.0, %v1807
        %v1840 = vsel %vm1423, 0.0, %v1808
        %v1841 = vsel %vm1424, 0.0, %v1809
        %v1842 = vsel %vm1425, 0.0, %v1810
        %v1843 = vsel %vm1426, 0.0, %v1811
        %v1844 = vsel %vm1427, 0.0, %v1812
        %v1845 = vsel %vm1428, 0.0, %v1813
        %v1846 = vsel %vm1429, 0.0, %v1814
        %v1847 = vsel %vm1430, 0.0, %v1815
        %v1848 = vsel %vm1431, 0.0, %v1816
        %v1849 = vsel %vm1432, 0.0, %v1817
        %v1850 = vsel %vm1433, 0.0, %v1818
        %v1851 = vsel %vm1434, 0.0, %v1819
        %v1852 = vsel %vm1435, 0.0, %v1820
        %v1853 = vsel %vm1436, 0.0, %v1821
        %v1854 = vsel %vm1437, 0.0, %v1822
        %v1855 = vsel %vm1438, 0.0, %v1823
        %v1856 = vsel %vm1439, 0.0, %v1824
        %v1857 = vsel %vm1440, 0.0, %v1825
        %v1858 = vsel %vm1441, 0.0, %v1826
        %v1859 = vsel %vm1442, 0.0, %v1827
        %v1860 = vsel %vm1443, 0.0, %v1828
        %v1861 = vsel %vm1444, 0.0, %v1829
        %v1862 = vsel %vm1445, 0.0, %v1830
        %v1863 = vsel %vm1446, 0.0, %v1831
        %v1864 = vsel %vm1447, 0.0, %v1832
        %v1865 = vsel %vm1448, 0.0, %v1833
        %v1866 = vsel %vm1449, 0.0, %v1834
        %v1867 = vpack.c.bf16 %v1836, %v1835
        %v1868 = vpack.c.bf16 %v1838, %v1837
        %v1869 = vpack.c.bf16 %v1840, %v1839
        %v1870 = vpack.c.bf16 %v1842, %v1841
        %v1871 = vpack.c.bf16 %v1844, %v1843
        %v1872 = vpack.c.bf16 %v1846, %v1845
        %v1873 = vpack.c.bf16 %v1848, %v1847
        %v1874 = vpack.c.bf16 %v1850, %v1849
        %v1875 = vpack.c.bf16 %v1852, %v1851
        %v1876 = vpack.c.bf16 %v1854, %v1853
        %v1877 = vpack.c.bf16 %v1856, %v1855
        %v1878 = vpack.c.bf16 %v1858, %v1857
        %v1879 = vpack.c.bf16 %v1860, %v1859
        %v1880 = vpack.c.bf16 %v1862, %v1861
        %v1881 = vpack.c.bf16 %v1864, %v1863
        %v1882 = vpack.c.bf16 %v1866, %v1865
        %1899 = vrot.lane.b32.xlu0 %v1867, 64
        %v1900 = vpop.permute.xlu0 %1899
        %1901 = vrot.lane.b32.xlu0 %v1868, 64
        %v1902 = vpop.permute.xlu0 %1901
        %1903 = vrot.lane.b32.xlu0 %v1869, 64
        %v1904 = vpop.permute.xlu0 %1903
        %1905 = vrot.lane.b32.xlu0 %v1870, 64
        %v1906 = vpop.permute.xlu0 %1905
        %1907 = vrot.lane.b32.xlu0 %v1871, 64
        %v1908 = vpop.permute.xlu0 %1907
        %1909 = vrot.lane.b32.xlu0 %v1872, 64
        %v1910 = vpop.permute.xlu0 %1909
        %1911 = vrot.lane.b32.xlu0 %v1873, 64
        %v1912 = vpop.permute.xlu0 %1911
        %1913 = vrot.lane.b32.xlu0 %v1874, 64
        %v1914 = vpop.permute.xlu0 %1913
        %1915 = vrot.lane.b32.xlu0 %v1875, 64
        %v1916 = vpop.permute.xlu0 %1915
        %1917 = vrot.lane.b32.xlu0 %v1876, 64
        %v1918 = vpop.permute.xlu0 %1917
        %1919 = vrot.lane.b32.xlu0 %v1877, 64
        %v1920 = vpop.permute.xlu0 %1919
        %1921 = vrot.lane.b32.xlu0 %v1878, 64
        %v1922 = vpop.permute.xlu0 %1921
        %1923 = vrot.lane.b32.xlu0 %v1879, 64
        %v1924 = vpop.permute.xlu0 %1923
        %1925 = vrot.lane.b32.xlu0 %v1880, 64
        %v1926 = vpop.permute.xlu0 %1925
        %1927 = vrot.lane.b32.xlu0 %v1881, 64
        %v1928 = vpop.permute.xlu0 %1927
        %1929 = vrot.lane.b32.xlu0 %v1882, 64
        %v1930 = vpop.permute.xlu0 %1929
        %1947 = vst.msk [vmem:[#allocation3 + $0x8] sm:$0xff] %vm1626, %v1900
        %1948 = vst.msk [vmem:[#allocation3 + $0x30] sm:$0xff] %vm1626, %v1902
        %1949 = vst.msk [vmem:[#allocation3 + $0x58] sm:$0xff] %vm1626, %v1904
        %1950 = vst.msk [vmem:[#allocation3 + $0x80] sm:$0xff] %vm1626, %v1906
        %1951 = vst.msk [vmem:[#allocation3 + $0xa8] sm:$0xff] %vm1626, %v1908
        %1952 = vst.msk [vmem:[#allocation3 + $0xd0] sm:$0xff] %vm1626, %v1910
        %1953 = vst.msk [vmem:[#allocation3 + $0xf8] sm:$0xff] %vm1626, %v1912
        %1954 = vst.msk [vmem:[#allocation3 + $0x120] sm:$0xff] %vm1626, %v1914
        %1955 = vst.msk [vmem:[#allocation3 + $0x148] sm:$0xff] %vm1626, %v1916
        %1956 = vst.msk [vmem:[#allocation3 + $0x170] sm:$0xff] %vm1626, %v1918
        %1957 = vst.msk [vmem:[#allocation3 + $0x198] sm:$0xff] %vm1626, %v1920
        %1958 = vst.msk [vmem:[#allocation3 + $0x1c0] sm:$0xff] %vm1626, %v1922
        %1959 = vst.msk [vmem:[#allocation3 + $0x1e8] sm:$0xff] %vm1626, %v1924
        %1960 = vst.msk [vmem:[#allocation3 + $0x210] sm:$0xff] %vm1626, %v1926
        %1961 = vst.msk [vmem:[#allocation3 + $0x238] sm:$0xff] %vm1626, %v1928
        %1962 = vst.msk [vmem:[#allocation3 + $0x260] sm:$0xff] %vm1626, %v1930
        %v1963 = vld [vmem:[#allocation2 + $0x20] sm:$0xff]
        %v1964 = vld [vmem:[#allocation2 + $0x28] sm:$0xff]
        %v1965 = vld [vmem:[#allocation2 + $0x30] sm:$0xff]
        %v1966 = vld [vmem:[#allocation2 + $0x38] sm:$0xff]
        %v1967 = vld [vmem:[#allocation2 + $0x40] sm:$0xff]
        %v1968 = vld [vmem:[#allocation2 + $0x48] sm:$0xff]
        %v1969 = vld [vmem:[#allocation2 + $0x50] sm:$0xff]
        %v1970 = vld [vmem:[#allocation2 + $0x58] sm:$0xff]
        %v1971 = vld [vmem:[#allocation2 + $0x60] sm:$0xff]
        %v1972 = vld [vmem:[#allocation2 + $0x68] sm:$0xff]
        %v1973 = vld [vmem:[#allocation2 + $0x70] sm:$0xff]
        %v1974 = vld [vmem:[#allocation2 + $0x78] sm:$0xff]
        %v1975 = vld [vmem:[#allocation2 + $0x80] sm:$0xff]
        %v1976 = vld [vmem:[#allocation2 + $0x88] sm:$0xff]
        %v1977 = vld [vmem:[#allocation2 + $0x90] sm:$0xff]
        %v1978 = vld [vmem:[#allocation2 + $0x98] sm:$0xff]
        %v1979 = vld [vmem:[#allocation2 + $0xa0] sm:$0xff]
        %v1980 = vld [vmem:[#allocation2 + $0xa8] sm:$0xff]
        %v1981 = vld [vmem:[#allocation2 + $0xb0] sm:$0xff]
        %v1982 = vld [vmem:[#allocation2 + $0xb8] sm:$0xff]
        %v1983 = vld [vmem:[#allocation2 + $0xc0] sm:$0xff]
        %v1984 = vld [vmem:[#allocation2 + $0xc8] sm:$0xff]
        %v1985 = vld [vmem:[#allocation2 + $0xd0] sm:$0xff]
        %v1986 = vld [vmem:[#allocation2 + $0xd8] sm:$0xff]
        %v1987 = vld [vmem:[#allocation2 + $0xe0] sm:$0xff]
        %v1988 = vld [vmem:[#allocation2 + $0xe8] sm:$0xff]
        %v1989 = vld [vmem:[#allocation2 + $0xf0] sm:$0xff]
        %v1990 = vld [vmem:[#allocation2 + $0xf8] sm:$0xff]
        %v1991 = vld [vmem:[#allocation2 + $0x100] sm:$0xff]
        %v1992 = vld [vmem:[#allocation2 + $0x108] sm:$0xff]
        %v1993 = vld [vmem:[#allocation2 + $0x110] sm:$0xff]
        %v1994 = vld [vmem:[#allocation2 + $0x118] sm:$0xff]
        %v1995 = vpack.c.bf16 %v1964, %v1963
        %v1996 = vpack.c.bf16 %v1966, %v1965
        %v1997 = vpack.c.bf16 %v1968, %v1967
        %v1998 = vpack.c.bf16 %v1970, %v1969
        %v1999 = vpack.c.bf16 %v1972, %v1971
        %v2000 = vpack.c.bf16 %v1974, %v1973
        %v2001 = vpack.c.bf16 %v1976, %v1975
        %v2002 = vpack.c.bf16 %v1978, %v1977
        %v2003 = vpack.c.bf16 %v1980, %v1979
        %v2004 = vpack.c.bf16 %v1982, %v1981
        %v2005 = vpack.c.bf16 %v1984, %v1983
        %v2006 = vpack.c.bf16 %v1986, %v1985
        %v2007 = vpack.c.bf16 %v1988, %v1987
        %v2008 = vpack.c.bf16 %v1990, %v1989
        %v2009 = vpack.c.bf16 %v1992, %v1991
        %v2010 = vpack.c.bf16 %v1994, %v1993
        %2011 = vst.msk [vmem:[#allocation3 + $0x10] sm:$0xff] %vm440, %v1995
        %2012 = vst.msk [vmem:[#allocation3 + $0x38] sm:$0xff] %vm440, %v1996
        %2013 = vst.msk [vmem:[#allocation3 + $0x60] sm:$0xff] %vm440, %v1997
        %2014 = vst.msk [vmem:[#allocation3 + $0x88] sm:$0xff] %vm440, %v1998
        %2015 = vst.msk [vmem:[#allocation3 + $0xb0] sm:$0xff] %vm440, %v1999
        %2016 = vst.msk [vmem:[#allocation3 + $0xd8] sm:$0xff] %vm440, %v2000
        %2017 = vst.msk [vmem:[#allocation3 + $0x100] sm:$0xff] %vm440, %v2001
        %2018 = vst.msk [vmem:[#allocation3 + $0x128] sm:$0xff] %vm440, %v2002
        %2019 = vst.msk [vmem:[#allocation3 + $0x150] sm:$0xff] %vm440, %v2003
        %2020 = vst.msk [vmem:[#allocation3 + $0x178] sm:$0xff] %vm440, %v2004
        %2021 = vst.msk [vmem:[#allocation3 + $0x1a0] sm:$0xff] %vm440, %v2005
        %2022 = vst.msk [vmem:[#allocation3 + $0x1c8] sm:$0xff] %vm440, %v2006
        %2023 = vst.msk [vmem:[#allocation3 + $0x1f0] sm:$0xff] %vm440, %v2007
        %2024 = vst.msk [vmem:[#allocation3 + $0x218] sm:$0xff] %vm440, %v2008
        %2025 = vst.msk [vmem:[#allocation3 + $0x240] sm:$0xff] %vm440, %v2009
        %2026 = vst.msk [vmem:[#allocation3 + $0x268] sm:$0xff] %vm440, %v2010
        %v2027 = vld [vmem:[#allocation2 + $0x21] sm:$0xff]
        %v2028 = vld [vmem:[#allocation2 + $0x29] sm:$0xff]
        %v2029 = vld [vmem:[#allocation2 + $0x31] sm:$0xff]
        %v2030 = vld [vmem:[#allocation2 + $0x39] sm:$0xff]
        %v2031 = vld [vmem:[#allocation2 + $0x41] sm:$0xff]
        %v2032 = vld [vmem:[#allocation2 + $0x49] sm:$0xff]
        %v2033 = vld [vmem:[#allocation2 + $0x51] sm:$0xff]
        %v2034 = vld [vmem:[#allocation2 + $0x59] sm:$0xff]
        %v2035 = vld [vmem:[#allocation2 + $0x61] sm:$0xff]
        %v2036 = vld [vmem:[#allocation2 + $0x69] sm:$0xff]
        %v2037 = vld [vmem:[#allocation2 + $0x71] sm:$0xff]
        %v2038 = vld [vmem:[#allocation2 + $0x79] sm:$0xff]
        %v2039 = vld [vmem:[#allocation2 + $0x81] sm:$0xff]
        %v2040 = vld [vmem:[#allocation2 + $0x89] sm:$0xff]
        %v2041 = vld [vmem:[#allocation2 + $0x91] sm:$0xff]
        %v2042 = vld [vmem:[#allocation2 + $0x99] sm:$0xff]
        %v2043 = vld [vmem:[#allocation2 + $0xa1] sm:$0xff]
        %v2044 = vld [vmem:[#allocation2 + $0xa9] sm:$0xff]
        %v2045 = vld [vmem:[#allocation2 + $0xb1] sm:$0xff]
        %v2046 = vld [vmem:[#allocation2 + $0xb9] sm:$0xff]
        %v2047 = vld [vmem:[#allocation2 + $0xc1] sm:$0xff]
        %v2048 = vld [vmem:[#allocation2 + $0xc9] sm:$0xff]
        %v2049 = vld [vmem:[#allocation2 + $0xd1] sm:$0xff]
        %v2050 = vld [vmem:[#allocation2 + $0xd9] sm:$0xff]
        %v2051 = vld [vmem:[#allocation2 + $0xe1] sm:$0xff]
        %v2052 = vld [vmem:[#allocation2 + $0xe9] sm:$0xff]
        %v2053 = vld [vmem:[#allocation2 + $0xf1] sm:$0xff]
        %v2054 = vld [vmem:[#allocation2 + $0xf9] sm:$0xff]
        %v2055 = vld [vmem:[#allocation2 + $0x101] sm:$0xff]
        %v2056 = vld [vmem:[#allocation2 + $0x109] sm:$0xff]
        %v2057 = vld [vmem:[#allocation2 + $0x111] sm:$0xff]
        %v2058 = vld [vmem:[#allocation2 + $0x119] sm:$0xff]
        %v2059 = vsel %vm1707, 0.0, %v2027
        %v2060 = vsel %vm1708, 0.0, %v2028
        %v2061 = vsel %vm1709, 0.0, %v2029
        %v2062 = vsel %vm1710, 0.0, %v2030
        %v2063 = vsel %vm1711, 0.0, %v2031
        %v2064 = vsel %vm1712, 0.0, %v2032
        %v2065 = vsel %vm1713, 0.0, %v2033
        %v2066 = vsel %vm1714, 0.0, %v2034
        %v2067 = vsel %vm1715, 0.0, %v2035
        %v2068 = vsel %vm1716, 0.0, %v2036
        %v2069 = vsel %vm1717, 0.0, %v2037
        %v2070 = vsel %vm1718, 0.0, %v2038
        %v2071 = vsel %vm1719, 0.0, %v2039
        %v2072 = vsel %vm1720, 0.0, %v2040
        %v2073 = vsel %vm1721, 0.0, %v2041
        %v2074 = vsel %vm1722, 0.0, %v2042
        %v2075 = vsel %vm1723, 0.0, %v2043
        %v2076 = vsel %vm1724, 0.0, %v2044
        %v2077 = vsel %vm1725, 0.0, %v2045
        %v2078 = vsel %vm1726, 0.0, %v2046
        %v2079 = vsel %vm1727, 0.0, %v2047
        %v2080 = vsel %vm1728, 0.0, %v2048
        %v2081 = vsel %vm1729, 0.0, %v2049
        %v2082 = vsel %vm1730, 0.0, %v2050
        %v2083 = vsel %vm1731, 0.0, %v2051
        %v2084 = vsel %vm1732, 0.0, %v2052
        %v2085 = vsel %vm1733, 0.0, %v2053
        %v2086 = vsel %vm1734, 0.0, %v2054
        %v2087 = vsel %vm1735, 0.0, %v2055
        %v2088 = vsel %vm1736, 0.0, %v2056
        %v2089 = vsel %vm1737, 0.0, %v2057
        %v2090 = vsel %vm1738, 0.0, %v2058
        %v2091 = vpack.c.bf16 %v2060, %v2059
        %v2092 = vpack.c.bf16 %v2062, %v2061
        %v2093 = vpack.c.bf16 %v2064, %v2063
        %v2094 = vpack.c.bf16 %v2066, %v2065
        %v2095 = vpack.c.bf16 %v2068, %v2067
        %v2096 = vpack.c.bf16 %v2070, %v2069
        %v2097 = vpack.c.bf16 %v2072, %v2071
        %v2098 = vpack.c.bf16 %v2074, %v2073
        %v2099 = vpack.c.bf16 %v2076, %v2075
        %v2100 = vpack.c.bf16 %v2078, %v2077
        %v2101 = vpack.c.bf16 %v2080, %v2079
        %v2102 = vpack.c.bf16 %v2082, %v2081
        %v2103 = vpack.c.bf16 %v2084, %v2083
        %v2104 = vpack.c.bf16 %v2086, %v2085
        %v2105 = vpack.c.bf16 %v2088, %v2087
        %v2106 = vpack.c.bf16 %v2090, %v2089
        %2123 = vrot.lane.b32.xlu0 %v2091, 64
        %v2124 = vpop.permute.xlu0 %2123
        %2125 = vrot.lane.b32.xlu0 %v2092, 64
        %v2126 = vpop.permute.xlu0 %2125
        %2127 = vrot.lane.b32.xlu0 %v2093, 64
        %v2128 = vpop.permute.xlu0 %2127
        %2129 = vrot.lane.b32.xlu0 %v2094, 64
        %v2130 = vpop.permute.xlu0 %2129
        %2131 = vrot.lane.b32.xlu0 %v2095, 64
        %v2132 = vpop.permute.xlu0 %2131
        %2133 = vrot.lane.b32.xlu0 %v2096, 64
        %v2134 = vpop.permute.xlu0 %2133
        %2135 = vrot.lane.b32.xlu0 %v2097, 64
        %v2136 = vpop.permute.xlu0 %2135
        %2137 = vrot.lane.b32.xlu0 %v2098, 64
        %v2138 = vpop.permute.xlu0 %2137
        %2139 = vrot.lane.b32.xlu0 %v2099, 64
        %v2140 = vpop.permute.xlu0 %2139
        %2141 = vrot.lane.b32.xlu0 %v2100, 64
        %v2142 = vpop.permute.xlu0 %2141
        %2143 = vrot.lane.b32.xlu0 %v2101, 64
        %v2144 = vpop.permute.xlu0 %2143
        %2145 = vrot.lane.b32.xlu0 %v2102, 64
        %v2146 = vpop.permute.xlu0 %2145
        %2147 = vrot.lane.b32.xlu0 %v2103, 64
        %v2148 = vpop.permute.xlu0 %2147
        %2149 = vrot.lane.b32.xlu0 %v2104, 64
        %v2150 = vpop.permute.xlu0 %2149
        %2151 = vrot.lane.b32.xlu0 %v2105, 64
        %v2152 = vpop.permute.xlu0 %2151
        %2153 = vrot.lane.b32.xlu0 %v2106, 64
        %v2154 = vpop.permute.xlu0 %2153
        %2171 = vst.msk [vmem:[#allocation3 + $0x10] sm:$0xff] %vm1626, %v2124
        %2172 = vst.msk [vmem:[#allocation3 + $0x38] sm:$0xff] %vm1626, %v2126
        %2173 = vst.msk [vmem:[#allocation3 + $0x60] sm:$0xff] %vm1626, %v2128
        %2174 = vst.msk [vmem:[#allocation3 + $0x88] sm:$0xff] %vm1626, %v2130
        %2175 = vst.msk [vmem:[#allocation3 + $0xb0] sm:$0xff] %vm1626, %v2132
        %2176 = vst.msk [vmem:[#allocation3 + $0xd8] sm:$0xff] %vm1626, %v2134
        %2177 = vst.msk [vmem:[#allocation3 + $0x100] sm:$0xff] %vm1626, %v2136
        %2178 = vst.msk [vmem:[#allocation3 + $0x128] sm:$0xff] %vm1626, %v2138
        %2179 = vst.msk [vmem:[#allocation3 + $0x150] sm:$0xff] %vm1626, %v2140
        %2180 = vst.msk [vmem:[#allocation3 + $0x178] sm:$0xff] %vm1626, %v2142
        %2181 = vst.msk [vmem:[#allocation3 + $0x1a0] sm:$0xff] %vm1626, %v2144
        %2182 = vst.msk [vmem:[#allocation3 + $0x1c8] sm:$0xff] %vm1626, %v2146
        %2183 = vst.msk [vmem:[#allocation3 + $0x1f0] sm:$0xff] %vm1626, %v2148
        %2184 = vst.msk [vmem:[#allocation3 + $0x218] sm:$0xff] %vm1626, %v2150
        %2185 = vst.msk [vmem:[#allocation3 + $0x240] sm:$0xff] %vm1626, %v2152
        %2186 = vst.msk [vmem:[#allocation3 + $0x268] sm:$0xff] %vm1626, %v2154
        %v2187 = vld [vmem:[#allocation2 + $0x2f] sm:$0xff]
        %v2188 = vld [vmem:[#allocation2 + $0x37] sm:$0xff]
        %v2189 = vld [vmem:[#allocation2 + $0x3f] sm:$0xff]
        %v2190 = vld [vmem:[#allocation2 + $0x47] sm:$0xff]
        %v2191 = vld [vmem:[#allocation2 + $0x4f] sm:$0xff]
        %v2192 = vld [vmem:[#allocation2 + $0x57] sm:$0xff]
        %v2193 = vld [vmem:[#allocation2 + $0x5f] sm:$0xff]
        %v2194 = vld [vmem:[#allocation2 + $0x67] sm:$0xff]
        %v2195 = vld [vmem:[#allocation2 + $0x6f] sm:$0xff]
        %v2196 = vld [vmem:[#allocation2 + $0x77] sm:$0xff]
        %v2197 = vld [vmem:[#allocation2 + $0x7f] sm:$0xff]
        %v2198 = vld [vmem:[#allocation2 + $0x87] sm:$0xff]
        %v2199 = vld [vmem:[#allocation2 + $0x8f] sm:$0xff]
        %v2200 = vld [vmem:[#allocation2 + $0x97] sm:$0xff]
        %v2201 = vld [vmem:[#allocation2 + $0x9f] sm:$0xff]
        %v2202 = vld [vmem:[#allocation2 + $0xa7] sm:$0xff]
        %v2203 = vld [vmem:[#allocation2 + $0xaf] sm:$0xff]
        %v2204 = vld [vmem:[#allocation2 + $0xb7] sm:$0xff]
        %v2205 = vld [vmem:[#allocation2 + $0xbf] sm:$0xff]
        %v2206 = vld [vmem:[#allocation2 + $0xc7] sm:$0xff]
        %v2207 = vld [vmem:[#allocation2 + $0xcf] sm:$0xff]
        %v2208 = vld [vmem:[#allocation2 + $0xd7] sm:$0xff]
        %v2209 = vld [vmem:[#allocation2 + $0xdf] sm:$0xff]
        %v2210 = vld [vmem:[#allocation2 + $0xe7] sm:$0xff]
        %v2211 = vld [vmem:[#allocation2 + $0xef] sm:$0xff]
        %v2212 = vld [vmem:[#allocation2 + $0xf7] sm:$0xff]
        %v2213 = vld [vmem:[#allocation2 + $0xff] sm:$0xff]
        %v2214 = vld [vmem:[#allocation2 + $0x107] sm:$0xff]
        %v2215 = vld [vmem:[#allocation2 + $0x10f] sm:$0xff]
        %v2216 = vld [vmem:[#allocation2 + $0x117] sm:$0xff]
        %v2217 = vld [vmem:[#allocation2 + $0x11f] sm:$0xff]
        %v2218 = vld [vmem:[#allocation2 + $0x127] sm:$0xff]
        %v2219 = vsel %vm1418, 0.0, %v2187
        %v2220 = vsel %vm1419, 0.0, %v2188
        %v2221 = vsel %vm1420, 0.0, %v2189
        %v2222 = vsel %vm1421, 0.0, %v2190
        %v2223 = vsel %vm1422, 0.0, %v2191
        %v2224 = vsel %vm1423, 0.0, %v2192
        %v2225 = vsel %vm1424, 0.0, %v2193
        %v2226 = vsel %vm1425, 0.0, %v2194
        %v2227 = vsel %vm1426, 0.0, %v2195
        %v2228 = vsel %vm1427, 0.0, %v2196
        %v2229 = vsel %vm1428, 0.0, %v2197
        %v2230 = vsel %vm1429, 0.0, %v2198
        %v2231 = vsel %vm1430, 0.0, %v2199
        %v2232 = vsel %vm1431, 0.0, %v2200
        %v2233 = vsel %vm1432, 0.0, %v2201
        %v2234 = vsel %vm1433, 0.0, %v2202
        %v2235 = vsel %vm1434, 0.0, %v2203
        %v2236 = vsel %vm1435, 0.0, %v2204
        %v2237 = vsel %vm1436, 0.0, %v2205
        %v2238 = vsel %vm1437, 0.0, %v2206
        %v2239 = vsel %vm1438, 0.0, %v2207
        %v2240 = vsel %vm1439, 0.0, %v2208
        %v2241 = vsel %vm1440, 0.0, %v2209
        %v2242 = vsel %vm1441, 0.0, %v2210
        %v2243 = vsel %vm1442, 0.0, %v2211
        %v2244 = vsel %vm1443, 0.0, %v2212
        %v2245 = vsel %vm1444, 0.0, %v2213
        %v2246 = vsel %vm1445, 0.0, %v2214
        %v2247 = vsel %vm1446, 0.0, %v2215
        %v2248 = vsel %vm1447, 0.0, %v2216
        %v2249 = vsel %vm1448, 0.0, %v2217
        %v2250 = vsel %vm1449, 0.0, %v2218
        %v2251 = vpack.c.bf16 %v2220, %v2219
        %v2252 = vpack.c.bf16 %v2222, %v2221
        %v2253 = vpack.c.bf16 %v2224, %v2223
        %v2254 = vpack.c.bf16 %v2226, %v2225
        %v2255 = vpack.c.bf16 %v2228, %v2227
        %v2256 = vpack.c.bf16 %v2230, %v2229
        %v2257 = vpack.c.bf16 %v2232, %v2231
        %v2258 = vpack.c.bf16 %v2234, %v2233
        %v2259 = vpack.c.bf16 %v2236, %v2235
        %v2260 = vpack.c.bf16 %v2238, %v2237
        %v2261 = vpack.c.bf16 %v2240, %v2239
        %v2262 = vpack.c.bf16 %v2242, %v2241
        %v2263 = vpack.c.bf16 %v2244, %v2243
        %v2264 = vpack.c.bf16 %v2246, %v2245
        %v2265 = vpack.c.bf16 %v2248, %v2247
        %v2266 = vpack.c.bf16 %v2250, %v2249
        %2267 = vst.msk [vmem:[#allocation3 + $0x18] sm:$0xff] %vm440, %v2251
        %2268 = vst.msk [vmem:[#allocation3 + $0x40] sm:$0xff] %vm440, %v2252
        %2269 = vst.msk [vmem:[#allocation3 + $0x68] sm:$0xff] %vm440, %v2253
        %2270 = vst.msk [vmem:[#allocation3 + $0x90] sm:$0xff] %vm440, %v2254
        %2271 = vst.msk [vmem:[#allocation3 + $0xb8] sm:$0xff] %vm440, %v2255
        %2272 = vst.msk [vmem:[#allocation3 + $0xe0] sm:$0xff] %vm440, %v2256
        %2273 = vst.msk [vmem:[#allocation3 + $0x108] sm:$0xff] %vm440, %v2257
        %2274 = vst.msk [vmem:[#allocation3 + $0x130] sm:$0xff] %vm440, %v2258
        %2275 = vst.msk [vmem:[#allocation3 + $0x158] sm:$0xff] %vm440, %v2259
        %2276 = vst.msk [vmem:[#allocation3 + $0x180] sm:$0xff] %vm440, %v2260
        %2277 = vst.msk [vmem:[#allocation3 + $0x1a8] sm:$0xff] %vm440, %v2261
        %2278 = vst.msk [vmem:[#allocation3 + $0x1d0] sm:$0xff] %vm440, %v2262
        %2279 = vst.msk [vmem:[#allocation3 + $0x1f8] sm:$0xff] %vm440, %v2263
        %2280 = vst.msk [vmem:[#allocation3 + $0x220] sm:$0xff] %vm440, %v2264
        %2281 = vst.msk [vmem:[#allocation3 + $0x248] sm:$0xff] %vm440, %v2265
        %2282 = vst.msk [vmem:[#allocation3 + $0x270] sm:$0xff] %vm440, %v2266
        %v2283 = vld [vmem:[#allocation2 + $0x30] sm:$0xff]
        %v2284 = vld [vmem:[#allocation2 + $0x38] sm:$0xff]
        %v2285 = vld [vmem:[#allocation2 + $0x40] sm:$0xff]
        %v2286 = vld [vmem:[#allocation2 + $0x48] sm:$0xff]
        %v2287 = vld [vmem:[#allocation2 + $0x50] sm:$0xff]
        %v2288 = vld [vmem:[#allocation2 + $0x58] sm:$0xff]
        %v2289 = vld [vmem:[#allocation2 + $0x60] sm:$0xff]
        %v2290 = vld [vmem:[#allocation2 + $0x68] sm:$0xff]
        %v2291 = vld [vmem:[#allocation2 + $0x70] sm:$0xff]
        %v2292 = vld [vmem:[#allocation2 + $0x78] sm:$0xff]
        %v2293 = vld [vmem:[#allocation2 + $0x80] sm:$0xff]
        %v2294 = vld [vmem:[#allocation2 + $0x88] sm:$0xff]
        %v2295 = vld [vmem:[#allocation2 + $0x90] sm:$0xff]
        %v2296 = vld [vmem:[#allocation2 + $0x98] sm:$0xff]
        %v2297 = vld [vmem:[#allocation2 + $0xa0] sm:$0xff]
        %v2298 = vld [vmem:[#allocation2 + $0xa8] sm:$0xff]
        %v2299 = vld [vmem:[#allocation2 + $0xb0] sm:$0xff]
        %v2300 = vld [vmem:[#allocation2 + $0xb8] sm:$0xff]
        %v2301 = vld [vmem:[#allocation2 + $0xc0] sm:$0xff]
        %v2302 = vld [vmem:[#allocation2 + $0xc8] sm:$0xff]
        %v2303 = vld [vmem:[#allocation2 + $0xd0] sm:$0xff]
        %v2304 = vld [vmem:[#allocation2 + $0xd8] sm:$0xff]
        %v2305 = vld [vmem:[#allocation2 + $0xe0] sm:$0xff]
        %v2306 = vld [vmem:[#allocation2 + $0xe8] sm:$0xff]
        %v2307 = vld [vmem:[#allocation2 + $0xf0] sm:$0xff]
        %v2308 = vld [vmem:[#allocation2 + $0xf8] sm:$0xff]
        %v2309 = vld [vmem:[#allocation2 + $0x100] sm:$0xff]
        %v2310 = vld [vmem:[#allocation2 + $0x108] sm:$0xff]
        %v2311 = vld [vmem:[#allocation2 + $0x110] sm:$0xff]
        %v2312 = vld [vmem:[#allocation2 + $0x118] sm:$0xff]
        %v2313 = vld [vmem:[#allocation2 + $0x120] sm:$0xff]
        %v2314 = vld [vmem:[#allocation2 + $0x128] sm:$0xff]
        %v2315 = vpack.c.bf16 %v2284, %v2283
        %v2316 = vpack.c.bf16 %v2286, %v2285
        %v2317 = vpack.c.bf16 %v2288, %v2287
        %v2318 = vpack.c.bf16 %v2290, %v2289
        %v2319 = vpack.c.bf16 %v2292, %v2291
        %v2320 = vpack.c.bf16 %v2294, %v2293
        %v2321 = vpack.c.bf16 %v2296, %v2295
        %v2322 = vpack.c.bf16 %v2298, %v2297
        %v2323 = vpack.c.bf16 %v2300, %v2299
        %v2324 = vpack.c.bf16 %v2302, %v2301
        %v2325 = vpack.c.bf16 %v2304, %v2303
        %v2326 = vpack.c.bf16 %v2306, %v2305
        %v2327 = vpack.c.bf16 %v2308, %v2307
        %v2328 = vpack.c.bf16 %v2310, %v2309
        %v2329 = vpack.c.bf16 %v2312, %v2311
        %v2330 = vpack.c.bf16 %v2314, %v2313
        %2347 = vrot.lane.b32.xlu0 %v2315, 64
        %v2348 = vpop.permute.xlu0 %2347
        %2349 = vrot.lane.b32.xlu0 %v2316, 64
        %v2350 = vpop.permute.xlu0 %2349
        %2351 = vrot.lane.b32.xlu0 %v2317, 64
        %v2352 = vpop.permute.xlu0 %2351
        %2353 = vrot.lane.b32.xlu0 %v2318, 64
        %v2354 = vpop.permute.xlu0 %2353
        %2355 = vrot.lane.b32.xlu0 %v2319, 64
        %v2356 = vpop.permute.xlu0 %2355
        %2357 = vrot.lane.b32.xlu0 %v2320, 64
        %v2358 = vpop.permute.xlu0 %2357
        %2359 = vrot.lane.b32.xlu0 %v2321, 64
        %v2360 = vpop.permute.xlu0 %2359
        %2361 = vrot.lane.b32.xlu0 %v2322, 64
        %v2362 = vpop.permute.xlu0 %2361
        %2363 = vrot.lane.b32.xlu0 %v2323, 64
        %v2364 = vpop.permute.xlu0 %2363
        %2365 = vrot.lane.b32.xlu0 %v2324, 64
        %v2366 = vpop.permute.xlu0 %2365
        %2367 = vrot.lane.b32.xlu0 %v2325, 64
        %v2368 = vpop.permute.xlu0 %2367
        %2369 = vrot.lane.b32.xlu0 %v2326, 64
        %v2370 = vpop.permute.xlu0 %2369
        %2371 = vrot.lane.b32.xlu0 %v2327, 64
        %v2372 = vpop.permute.xlu0 %2371
        %2373 = vrot.lane.b32.xlu0 %v2328, 64
        %v2374 = vpop.permute.xlu0 %2373
        %2375 = vrot.lane.b32.xlu0 %v2329, 64
        %v2376 = vpop.permute.xlu0 %2375
        %2377 = vrot.lane.b32.xlu0 %v2330, 64
        %v2378 = vpop.permute.xlu0 %2377
        %2395 = vst.msk [vmem:[#allocation3 + $0x18] sm:$0xff] %vm1626, %v2348
        %2396 = vst.msk [vmem:[#allocation3 + $0x40] sm:$0xff] %vm1626, %v2350
        %2397 = vst.msk [vmem:[#allocation3 + $0x68] sm:$0xff] %vm1626, %v2352
        %2398 = vst.msk [vmem:[#allocation3 + $0x90] sm:$0xff] %vm1626, %v2354
        %2399 = vst.msk [vmem:[#allocation3 + $0xb8] sm:$0xff] %vm1626, %v2356
        %2400 = vst.msk [vmem:[#allocation3 + $0xe0] sm:$0xff] %vm1626, %v2358
        %2401 = vst.msk [vmem:[#allocation3 + $0x108] sm:$0xff] %vm1626, %v2360
        %2402 = vst.msk [vmem:[#allocation3 + $0x130] sm:$0xff] %vm1626, %v2362
        %2403 = vst.msk [vmem:[#allocation3 + $0x158] sm:$0xff] %vm1626, %v2364
        %2404 = vst.msk [vmem:[#allocation3 + $0x180] sm:$0xff] %vm1626, %v2366
        %2405 = vst.msk [vmem:[#allocation3 + $0x1a8] sm:$0xff] %vm1626, %v2368
        %2406 = vst.msk [vmem:[#allocation3 + $0x1d0] sm:$0xff] %vm1626, %v2370
        %2407 = vst.msk [vmem:[#allocation3 + $0x1f8] sm:$0xff] %vm1626, %v2372
        %2408 = vst.msk [vmem:[#allocation3 + $0x220] sm:$0xff] %vm1626, %v2374
        %2409 = vst.msk [vmem:[#allocation3 + $0x248] sm:$0xff] %vm1626, %v2376
        %2410 = vst.msk [vmem:[#allocation3 + $0x270] sm:$0xff] %vm1626, %v2378
        %v2411 = vld [vmem:[#allocation2 + $0x31] sm:$0xff]
        %v2412 = vld [vmem:[#allocation2 + $0x39] sm:$0xff]
        %v2413 = vld [vmem:[#allocation2 + $0x41] sm:$0xff]
        %v2414 = vld [vmem:[#allocation2 + $0x49] sm:$0xff]
        %v2415 = vld [vmem:[#allocation2 + $0x51] sm:$0xff]
        %v2416 = vld [vmem:[#allocation2 + $0x59] sm:$0xff]
        %v2417 = vld [vmem:[#allocation2 + $0x61] sm:$0xff]
        %v2418 = vld [vmem:[#allocation2 + $0x69] sm:$0xff]
        %v2419 = vld [vmem:[#allocation2 + $0x71] sm:$0xff]
        %v2420 = vld [vmem:[#allocation2 + $0x79] sm:$0xff]
        %v2421 = vld [vmem:[#allocation2 + $0x81] sm:$0xff]
        %v2422 = vld [vmem:[#allocation2 + $0x89] sm:$0xff]
        %v2423 = vld [vmem:[#allocation2 + $0x91] sm:$0xff]
        %v2424 = vld [vmem:[#allocation2 + $0x99] sm:$0xff]
        %v2425 = vld [vmem:[#allocation2 + $0xa1] sm:$0xff]
        %v2426 = vld [vmem:[#allocation2 + $0xa9] sm:$0xff]
        %v2427 = vld [vmem:[#allocation2 + $0xb1] sm:$0xff]
        %v2428 = vld [vmem:[#allocation2 + $0xb9] sm:$0xff]
        %v2429 = vld [vmem:[#allocation2 + $0xc1] sm:$0xff]
        %v2430 = vld [vmem:[#allocation2 + $0xc9] sm:$0xff]
        %v2431 = vld [vmem:[#allocation2 + $0xd1] sm:$0xff]
        %v2432 = vld [vmem:[#allocation2 + $0xd9] sm:$0xff]
        %v2433 = vld [vmem:[#allocation2 + $0xe1] sm:$0xff]
        %v2434 = vld [vmem:[#allocation2 + $0xe9] sm:$0xff]
        %v2435 = vld [vmem:[#allocation2 + $0xf1] sm:$0xff]
        %v2436 = vld [vmem:[#allocation2 + $0xf9] sm:$0xff]
        %v2437 = vld [vmem:[#allocation2 + $0x101] sm:$0xff]
        %v2438 = vld [vmem:[#allocation2 + $0x109] sm:$0xff]
        %v2439 = vld [vmem:[#allocation2 + $0x111] sm:$0xff]
        %v2440 = vld [vmem:[#allocation2 + $0x119] sm:$0xff]
        %v2441 = vld [vmem:[#allocation2 + $0x121] sm:$0xff]
        %v2442 = vld [vmem:[#allocation2 + $0x129] sm:$0xff]
        %v2443 = vsel %vm1707, 0.0, %v2411
        %v2444 = vsel %vm1708, 0.0, %v2412
        %v2445 = vsel %vm1709, 0.0, %v2413
        %v2446 = vsel %vm1710, 0.0, %v2414
        %v2447 = vsel %vm1711, 0.0, %v2415
        %v2448 = vsel %vm1712, 0.0, %v2416
        %v2449 = vsel %vm1713, 0.0, %v2417
        %v2450 = vsel %vm1714, 0.0, %v2418
        %v2451 = vsel %vm1715, 0.0, %v2419
        %v2452 = vsel %vm1716, 0.0, %v2420
        %v2453 = vsel %vm1717, 0.0, %v2421
        %v2454 = vsel %vm1718, 0.0, %v2422
        %v2455 = vsel %vm1719, 0.0, %v2423
        %v2456 = vsel %vm1720, 0.0, %v2424
        %v2457 = vsel %vm1721, 0.0, %v2425
        %v2458 = vsel %vm1722, 0.0, %v2426
        %v2459 = vsel %vm1723, 0.0, %v2427
        %v2460 = vsel %vm1724, 0.0, %v2428
        %v2461 = vsel %vm1725, 0.0, %v2429
        %v2462 = vsel %vm1726, 0.0, %v2430
        %v2463 = vsel %vm1727, 0.0, %v2431
        %v2464 = vsel %vm1728, 0.0, %v2432
        %v2465 = vsel %vm1729, 0.0, %v2433
        %v2466 = vsel %vm1730, 0.0, %v2434
        %v2467 = vsel %vm1731, 0.0, %v2435
        %v2468 = vsel %vm1732, 0.0, %v2436
        %v2469 = vsel %vm1733, 0.0, %v2437
        %v2470 = vsel %vm1734, 0.0, %v2438
        %v2471 = vsel %vm1735, 0.0, %v2439
        %v2472 = vsel %vm1736, 0.0, %v2440
        %v2473 = vsel %vm1737, 0.0, %v2441
        %v2474 = vsel %vm1738, 0.0, %v2442
        %v2475 = vpack.c.bf16 %v2444, %v2443
        %v2476 = vpack.c.bf16 %v2446, %v2445
        %v2477 = vpack.c.bf16 %v2448, %v2447
        %v2478 = vpack.c.bf16 %v2450, %v2449
        %v2479 = vpack.c.bf16 %v2452, %v2451
        %v2480 = vpack.c.bf16 %v2454, %v2453
        %v2481 = vpack.c.bf16 %v2456, %v2455
        %v2482 = vpack.c.bf16 %v2458, %v2457
        %v2483 = vpack.c.bf16 %v2460, %v2459
        %v2484 = vpack.c.bf16 %v2462, %v2461
        %v2485 = vpack.c.bf16 %v2464, %v2463
        %v2486 = vpack.c.bf16 %v2466, %v2465
        %v2487 = vpack.c.bf16 %v2468, %v2467
        %v2488 = vpack.c.bf16 %v2470, %v2469
        %v2489 = vpack.c.bf16 %v2472, %v2471
        %v2490 = vpack.c.bf16 %v2474, %v2473
        %2491 = vst.msk [vmem:[#allocation3 + $0x20] sm:$0xff] %vm440, %v2475
        %2492 = vst.msk [vmem:[#allocation3 + $0x48] sm:$0xff] %vm440, %v2476
        %2493 = vst.msk [vmem:[#allocation3 + $0x70] sm:$0xff] %vm440, %v2477
        %2494 = vst.msk [vmem:[#allocation3 + $0x98] sm:$0xff] %vm440, %v2478
        %2495 = vst.msk [vmem:[#allocation3 + $0xc0] sm:$0xff] %vm440, %v2479
        %2496 = vst.msk [vmem:[#allocation3 + $0xe8] sm:$0xff] %vm440, %v2480
        %2497 = vst.msk [vmem:[#allocation3 + $0x110] sm:$0xff] %vm440, %v2481
        %2498 = vst.msk [vmem:[#allocation3 + $0x138] sm:$0xff] %vm440, %v2482
        %2499 = vst.msk [vmem:[#allocation3 + $0x160] sm:$0xff] %vm440, %v2483
        %2500 = vst.msk [vmem:[#allocation3 + $0x188] sm:$0xff] %vm440, %v2484
        %2501 = vst.msk [vmem:[#allocation3 + $0x1b0] sm:$0xff] %vm440, %v2485
        %2502 = vst.msk [vmem:[#allocation3 + $0x1d8] sm:$0xff] %vm440, %v2486
        %2503 = vst.msk [vmem:[#allocation3 + $0x200] sm:$0xff] %vm440, %v2487
        %2504 = vst.msk [vmem:[#allocation3 + $0x228] sm:$0xff] %vm440, %v2488
        %2505 = vst.msk [vmem:[#allocation3 + $0x250] sm:$0xff] %vm440, %v2489
        %2506 = vst.msk [vmem:[#allocation3 + $0x278] sm:$0xff] %vm440, %v2490
        %v2507 = vld [vmem:[#allocation3] sm:$0xff]
        %v2508 = vld [vmem:[#allocation3 + $0x8] sm:$0xff]
        %v2509 = vld [vmem:[#allocation3 + $0x10] sm:$0xff]
        %v2510 = vld [vmem:[#allocation3 + $0x18] sm:$0xff]
        %v2511 = vld [vmem:[#allocation3 + $0x20] sm:$0xff]
        %v2512 = vld [vmem:[#allocation3 + $0x28] sm:$0xff]
        %v2513 = vld [vmem:[#allocation3 + $0x30] sm:$0xff]
        %v2514 = vld [vmem:[#allocation3 + $0x38] sm:$0xff]
        %v2515 = vld [vmem:[#allocation3 + $0x40] sm:$0xff]
        %v2516 = vld [vmem:[#allocation3 + $0x48] sm:$0xff]
        %v2517 = vld [vmem:[#allocation3 + $0x50] sm:$0xff]
        %v2518 = vld [vmem:[#allocation3 + $0x58] sm:$0xff]
        %v2519 = vld [vmem:[#allocation3 + $0x60] sm:$0xff]
        %v2520 = vld [vmem:[#allocation3 + $0x68] sm:$0xff]
        %v2521 = vld [vmem:[#allocation3 + $0x70] sm:$0xff]
        %v2522 = vld [vmem:[#allocation3 + $0x78] sm:$0xff]
        %v2523 = vld [vmem:[#allocation3 + $0x80] sm:$0xff]
        %v2524 = vld [vmem:[#allocation3 + $0x88] sm:$0xff]
        %v2525 = vld [vmem:[#allocation3 + $0x90] sm:$0xff]
        %v2526 = vld [vmem:[#allocation3 + $0x98] sm:$0xff]
        %v2527 = vld [vmem:[#allocation3 + $0xa0] sm:$0xff]
        %v2528 = vld [vmem:[#allocation3 + $0xa8] sm:$0xff]
        %v2529 = vld [vmem:[#allocation3 + $0xb0] sm:$0xff]
        %v2530 = vld [vmem:[#allocation3 + $0xb8] sm:$0xff]
        %v2531 = vld [vmem:[#allocation3 + $0xc0] sm:$0xff]
        %v2532 = vld [vmem:[#allocation3 + $0xc8] sm:$0xff]
        %v2533 = vld [vmem:[#allocation3 + $0xd0] sm:$0xff]
        %v2534 = vld [vmem:[#allocation3 + $0xd8] sm:$0xff]
        %v2535 = vld [vmem:[#allocation3 + $0xe0] sm:$0xff]
        %v2536 = vld [vmem:[#allocation3 + $0xe8] sm:$0xff]
        %v2537 = vld [vmem:[#allocation3 + $0xf0] sm:$0xff]
        %v2538 = vld [vmem:[#allocation3 + $0xf8] sm:$0xff]
        %v2539 = vld [vmem:[#allocation3 + $0x100] sm:$0xff]
        %v2540 = vld [vmem:[#allocation3 + $0x108] sm:$0xff]
        %v2541 = vld [vmem:[#allocation3 + $0x110] sm:$0xff]
        %v2542 = vld [vmem:[#allocation3 + $0x118] sm:$0xff]
        %v2543 = vld [vmem:[#allocation3 + $0x120] sm:$0xff]
        %v2544 = vld [vmem:[#allocation3 + $0x128] sm:$0xff]
        %v2545 = vld [vmem:[#allocation3 + $0x130] sm:$0xff]
        %v2546 = vld [vmem:[#allocation3 + $0x138] sm:$0xff]
        %v2547 = vld [vmem:[#allocation3 + $0x140] sm:$0xff]
        %v2548 = vld [vmem:[#allocation3 + $0x148] sm:$0xff]
        %v2549 = vld [vmem:[#allocation3 + $0x150] sm:$0xff]
        %v2550 = vld [vmem:[#allocation3 + $0x158] sm:$0xff]
        %v2551 = vld [vmem:[#allocation3 + $0x160] sm:$0xff]
        %v2552 = vld [vmem:[#allocation3 + $0x168] sm:$0xff]
        %v2553 = vld [vmem:[#allocation3 + $0x170] sm:$0xff]
        %v2554 = vld [vmem:[#allocation3 + $0x178] sm:$0xff]
        %v2555 = vld [vmem:[#allocation3 + $0x180] sm:$0xff]
        %v2556 = vld [vmem:[#allocation3 + $0x188] sm:$0xff]
        %v2557 = vld [vmem:[#allocation3 + $0x190] sm:$0xff]
        %v2558 = vld [vmem:[#allocation3 + $0x198] sm:$0xff]
        %v2559 = vld [vmem:[#allocation3 + $0x1a0] sm:$0xff]
        %v2560 = vld [vmem:[#allocation3 + $0x1a8] sm:$0xff]
        %v2561 = vld [vmem:[#allocation3 + $0x1b0] sm:$0xff]
        %v2562 = vld [vmem:[#allocation3 + $0x1b8] sm:$0xff]
        %v2563 = vld [vmem:[#allocation3 + $0x1c0] sm:$0xff]
        %v2564 = vld [vmem:[#allocation3 + $0x1c8] sm:$0xff]
        %v2565 = vld [vmem:[#allocation3 + $0x1d0] sm:$0xff]
        %v2566 = vld [vmem:[#allocation3 + $0x1d8] sm:$0xff]
        %v2567 = vld [vmem:[#allocation3 + $0x1e0] sm:$0xff]
        %v2568 = vld [vmem:[#allocation3 + $0x1e8] sm:$0xff]
        %v2569 = vld [vmem:[#allocation3 + $0x1f0] sm:$0xff]
        %v2570 = vld [vmem:[#allocation3 + $0x1f8] sm:$0xff]
        %v2571 = vld [vmem:[#allocation3 + $0x200] sm:$0xff]
        %v2572 = vld [vmem:[#allocation3 + $0x208] sm:$0xff]
        %v2573 = vld [vmem:[#allocation3 + $0x210] sm:$0xff]
        %v2574 = vld [vmem:[#allocation3 + $0x218] sm:$0xff]
        %v2575 = vld [vmem:[#allocation3 + $0x220] sm:$0xff]
        %v2576 = vld [vmem:[#allocation3 + $0x228] sm:$0xff]
        %v2577 = vld [vmem:[#allocation3 + $0x230] sm:$0xff]
        %v2578 = vld [vmem:[#allocation3 + $0x238] sm:$0xff]
        %v2579 = vld [vmem:[#allocation3 + $0x240] sm:$0xff]
        %v2580 = vld [vmem:[#allocation3 + $0x248] sm:$0xff]
        %v2581 = vld [vmem:[#allocation3 + $0x250] sm:$0xff]
        %v2582 = vld [vmem:[#allocation3 + $0x258] sm:$0xff]
        %v2583 = vld [vmem:[#allocation3 + $0x260] sm:$0xff]
        %v2584 = vld [vmem:[#allocation3 + $0x268] sm:$0xff]
        %v2585 = vld [vmem:[#allocation3 + $0x270] sm:$0xff]
        %v2586 = vld [vmem:[#allocation3 + $0x278] sm:$0xff]
        %v2587 = vld [vmem:[%s4] sm:$0xf]
        %v2588 = vld [vmem:[%s4 + $0x4] sm:$0xf]
        %v2589 = vld [vmem:[%s4 + $0x8] sm:$0xf]
        %v2590 = vld [vmem:[%s4 + $0xc] sm:$0xf]
        %v2591 = vld [vmem:[%s4 + $0x10] sm:$0xf]
        %v2592 = vld [vmem:[%s4 + $0x14] sm:$0xf]
        %v2593 = vld [vmem:[%s4 + $0x18] sm:$0xf]
        %v2594 = vld [vmem:[%s4 + $0x1c] sm:$0xf]
        %v2595 = vld [vmem:[%s4 + $0x20] sm:$0xf]
        %v2596 = vld [vmem:[%s4 + $0x24] sm:$0xf]
        %v2597 = vld [vmem:[%s4 + $0x28] sm:$0xf]
        %v2598 = vld [vmem:[%s4 + $0x2c] sm:$0xf]
        %v2599 = vld [vmem:[%s4 + $0x30] sm:$0xf]
        %v2600 = vld [vmem:[%s4 + $0x34] sm:$0xf]
        %v2601 = vld [vmem:[%s4 + $0x38] sm:$0xf]
        %v2602 = vld [vmem:[%s4 + $0x3c] sm:$0xf]
        %v2603 = vld [vmem:[%s4 + $0x40] sm:$0xf]
        %v2604 = vld [vmem:[%s4 + $0x44] sm:$0xf]
        %v2605 = vld [vmem:[%s4 + $0x48] sm:$0xf]
        %v2606 = vld [vmem:[%s4 + $0x4c] sm:$0xf]
        %v2607 = vld [vmem:[%s4 + $0x50] sm:$0xf]
        %v2608 = vld [vmem:[%s4 + $0x54] sm:$0xf]
        %v2609 = vld [vmem:[%s4 + $0x58] sm:$0xf]
        %v2610 = vld [vmem:[%s4 + $0x5c] sm:$0xf]
        %v2611 = vld [vmem:[%s4 + $0x60] sm:$0xf]
        %v2612 = vld [vmem:[%s4 + $0x64] sm:$0xf]
        %v2613 = vld [vmem:[%s4 + $0x68] sm:$0xf]
        %v2614 = vld [vmem:[%s4 + $0x6c] sm:$0xf]
        %v2615 = vld [vmem:[%s4 + $0x70] sm:$0xf]
        %v2616 = vld [vmem:[%s4 + $0x74] sm:$0xf]
        %v2617 = vld [vmem:[%s4 + $0x78] sm:$0xf]
        %v2618 = vld [vmem:[%s4 + $0x7c] sm:$0xf]
        %v2619 = vld [vmem:[%s4 + $0x80] sm:$0xf]
        %v2620 = vld [vmem:[%s4 + $0x84] sm:$0xf]
        %v2621 = vld [vmem:[%s4 + $0x88] sm:$0xf]
        %v2622 = vld [vmem:[%s4 + $0x8c] sm:$0xf]
        %v2623 = vld [vmem:[%s4 + $0x90] sm:$0xf]
        %v2624 = vld [vmem:[%s4 + $0x94] sm:$0xf]
        %v2625 = vld [vmem:[%s4 + $0x98] sm:$0xf]
        %v2626 = vld [vmem:[%s4 + $0x9c] sm:$0xf]
        %v2627 = vld [vmem:[%s4 + $0xa0] sm:$0xf]
        %v2628 = vld [vmem:[%s4 + $0xa4] sm:$0xf]
        %v2629 = vld [vmem:[%s4 + $0xa8] sm:$0xf]
        %v2630 = vld [vmem:[%s4 + $0xac] sm:$0xf]
        %v2631 = vld [vmem:[%s4 + $0xb0] sm:$0xf]
        %v2632 = vld [vmem:[%s4 + $0xb4] sm:$0xf]
        %v2633 = vld [vmem:[%s4 + $0xb8] sm:$0xf]
        %v2634 = vld [vmem:[%s4 + $0xbc] sm:$0xf]
        %v2635 = vld [vmem:[%s4 + $0xc0] sm:$0xf]
        %v2636 = vld [vmem:[%s4 + $0xc4] sm:$0xf]
        %v2637 = vld [vmem:[%s4 + $0xc8] sm:$0xf]
        %v2638 = vld [vmem:[%s4 + $0xcc] sm:$0xf]
        %v2639 = vld [vmem:[%s4 + $0xd0] sm:$0xf]
        %v2640 = vld [vmem:[%s4 + $0xd4] sm:$0xf]
        %v2641 = vld [vmem:[%s4 + $0xd8] sm:$0xf]
        %v2642 = vld [vmem:[%s4 + $0xdc] sm:$0xf]
        %v2643 = vld [vmem:[%s4 + $0xe0] sm:$0xf]
        %v2644 = vld [vmem:[%s4 + $0xe4] sm:$0xf]
        %v2645 = vld [vmem:[%s4 + $0xe8] sm:$0xf]
        %v2646 = vld [vmem:[%s4 + $0xec] sm:$0xf]
        %v2647 = vld [vmem:[%s4 + $0xf0] sm:$0xf]
        %v2648 = vld [vmem:[%s4 + $0xf4] sm:$0xf]
        %v2649 = vld [vmem:[%s4 + $0xf8] sm:$0xf]
        %v2650 = vld [vmem:[%s4 + $0xfc] sm:$0xf]
        %v2651 = vld [vmem:[%s4 + $0x100] sm:$0xf]
        %v2652 = vld [vmem:[%s4 + $0x104] sm:$0xf]
        %v2653 = vld [vmem:[%s4 + $0x108] sm:$0xf]
        %v2654 = vld [vmem:[%s4 + $0x10c] sm:$0xf]
        %v2655 = vld [vmem:[%s4 + $0x110] sm:$0xf]
        %v2656 = vld [vmem:[%s4 + $0x114] sm:$0xf]
        %v2657 = vld [vmem:[%s4 + $0x118] sm:$0xf]
        %v2658 = vld [vmem:[%s4 + $0x11c] sm:$0xf]
        %v2731 = vunpack.c.l.b16 %v2587
        %v2732 = vunpack.c.l.b16 %v2588
        %v2733 = vunpack.c.l.b16 %v2589
        %v2734 = vunpack.c.l.b16 %v2590
        %v2735 = vunpack.c.l.b16 %v2591
        %v2736 = vunpack.c.l.b16 %v2592
        %v2737 = vunpack.c.l.b16 %v2593
        %v2738 = vunpack.c.l.b16 %v2594
        %v2739 = vunpack.c.l.b16 %v2595
        %v2740 = vunpack.c.l.b16 %v2596
        %v2741 = vunpack.c.l.b16 %v2597
        %v2742 = vunpack.c.l.b16 %v2598
        %v2743 = vunpack.c.l.b16 %v2599
        %v2744 = vunpack.c.l.b16 %v2600
        %v2745 = vunpack.c.l.b16 %v2601
        %v2746 = vunpack.c.l.b16 %v2602
        %v2747 = vunpack.c.l.b16 %v2603
        %v2748 = vunpack.c.l.b16 %v2604
        %v2749 = vunpack.c.l.b16 %v2605
        %v2750 = vunpack.c.l.b16 %v2606
        %v2751 = vunpack.c.l.b16 %v2607
        %v2752 = vunpack.c.l.b16 %v2608
        %v2753 = vunpack.c.l.b16 %v2609
        %v2754 = vunpack.c.l.b16 %v2610
        %v2755 = vunpack.c.l.b16 %v2611
        %v2756 = vunpack.c.l.b16 %v2612
        %v2757 = vunpack.c.l.b16 %v2613
        %v2758 = vunpack.c.l.b16 %v2614
        %v2759 = vunpack.c.l.b16 %v2615
        %v2760 = vunpack.c.l.b16 %v2616
        %v2761 = vunpack.c.l.b16 %v2617
        %v2762 = vunpack.c.l.b16 %v2618
        %v2763 = vunpack.c.l.b16 %v2619
        %v2764 = vunpack.c.l.b16 %v2620
        %v2765 = vunpack.c.l.b16 %v2621
        %v2766 = vunpack.c.l.b16 %v2622
        %v2767 = vunpack.c.l.b16 %v2623
        %v2768 = vunpack.c.l.b16 %v2624
        %v2769 = vunpack.c.l.b16 %v2625
        %v2770 = vunpack.c.l.b16 %v2626
        %v2771 = vunpack.c.l.b16 %v2627
        %v2772 = vunpack.c.l.b16 %v2628
        %v2773 = vunpack.c.l.b16 %v2629
        %v2774 = vunpack.c.l.b16 %v2630
        %v2775 = vunpack.c.l.b16 %v2631
        %v2776 = vunpack.c.l.b16 %v2632
        %v2777 = vunpack.c.l.b16 %v2633
        %v2778 = vunpack.c.l.b16 %v2634
        %v2779 = vunpack.c.l.b16 %v2635
        %v2780 = vunpack.c.l.b16 %v2636
        %v2781 = vunpack.c.l.b16 %v2637
        %v2782 = vunpack.c.l.b16 %v2638
        %v2783 = vunpack.c.l.b16 %v2639
        %v2784 = vunpack.c.l.b16 %v2640
        %v2785 = vunpack.c.l.b16 %v2641
        %v2786 = vunpack.c.l.b16 %v2642
        %v2787 = vunpack.c.l.b16 %v2643
        %v2788 = vunpack.c.l.b16 %v2644
        %v2789 = vunpack.c.l.b16 %v2645
        %v2790 = vunpack.c.l.b16 %v2646
        %v2791 = vunpack.c.l.b16 %v2647
        %v2792 = vunpack.c.l.b16 %v2648
        %v2793 = vunpack.c.l.b16 %v2649
        %v2794 = vunpack.c.l.b16 %v2650
        %v2795 = vunpack.c.l.b16 %v2651
        %v2796 = vunpack.c.l.b16 %v2652
        %v2797 = vunpack.c.l.b16 %v2653
        %v2798 = vunpack.c.l.b16 %v2654
        %v2799 = vunpack.c.l.b16 %v2655
        %v2800 = vunpack.c.l.b16 %v2656
        %v2801 = vunpack.c.l.b16 %v2657
        %v2802 = vunpack.c.l.b16 %v2658
        %v2803 = vpack.c.b16 %v2732, %v2731
        %v2804 = vpack.c.b16 %v2734, %v2733
        %v2805 = vpack.c.b16 %v2736, %v2735
        %v2806 = vpack.c.b16 %v2738, %v2737
        %v2807 = vpack.c.b16 %v2740, %v2739
        %v2808 = vpack.c.b16 %v2742, %v2741
        %v2809 = vpack.c.b16 %v2744, %v2743
        %v2810 = vpack.c.b16 %v2746, %v2745
        %v2811 = vpack.c.b16 %v2748, %v2747
        %v2812 = vpack.c.b16 %v2750, %v2749
        %v2813 = vpack.c.b16 %v2752, %v2751
        %v2814 = vpack.c.b16 %v2754, %v2753
        %v2815 = vpack.c.b16 %v2756, %v2755
        %v2816 = vpack.c.b16 %v2758, %v2757
        %v2817 = vpack.c.b16 %v2760, %v2759
        %v2818 = vpack.c.b16 %v2762, %v2761
        %v2819 = vpack.c.b16 %v2764, %v2763
        %v2820 = vpack.c.b16 %v2766, %v2765
        %v2821 = vpack.c.b16 %v2768, %v2767
        %v2822 = vpack.c.b16 %v2770, %v2769
        %v2823 = vpack.c.b16 %v2772, %v2771
        %v2824 = vpack.c.b16 %v2774, %v2773
        %v2825 = vpack.c.b16 %v2776, %v2775
        %v2826 = vpack.c.b16 %v2778, %v2777
        %v2827 = vpack.c.b16 %v2780, %v2779
        %v2828 = vpack.c.b16 %v2782, %v2781
        %v2829 = vpack.c.b16 %v2784, %v2783
        %v2830 = vpack.c.b16 %v2786, %v2785
        %v2831 = vpack.c.b16 %v2788, %v2787
        %v2832 = vpack.c.b16 %v2790, %v2789
        %v2833 = vpack.c.b16 %v2792, %v2791
        %v2834 = vpack.c.b16 %v2794, %v2793
        %v2835 = vpack.c.b16 %v2796, %v2795
        %v2836 = vpack.c.b16 %v2798, %v2797
        %v2837 = vpack.c.b16 %v2800, %v2799
        %v2838 = vpack.c.b16 %v2802, %v2801
        %v2876 = vsel %vm440, %v2511, 0
        %v2879 = vsel %vm440, %v2516, 0
        %v2882 = vsel %vm440, %v2521, 0
        %v2885 = vsel %vm440, %v2526, 0
        %v2888 = vsel %vm440, %v2531, 0
        %v2891 = vsel %vm440, %v2536, 0
        %v2894 = vsel %vm440, %v2541, 0
        %v2897 = vsel %vm440, %v2546, 0
        %v2900 = vsel %vm440, %v2551, 0
        %v2903 = vsel %vm440, %v2556, 0
        %v2906 = vsel %vm440, %v2561, 0
        %v2909 = vsel %vm440, %v2566, 0
        %v2912 = vsel %vm440, %v2571, 0
        %v2915 = vsel %vm440, %v2576, 0
        %v2918 = vsel %vm440, %v2581, 0
        %v2921 = vsel %vm440, %v2586, 0
        %2923 = vmatprep.subr.bf16.mxu0 0
        %2924 = vmatpush1.bf16.msra.mxu0 %v2803
        %2925 = vmatprep.subr.bf16.mxu0 0
        %2926 = vmatpush1.bf16.msra.mxu0 %v2804
        %2927 = vmatprep.subr.bf16.mxu0 0
        %2928 = vmatpush1.bf16.msra.mxu0 %v2805
        %2929 = vmatprep.subr.bf16.mxu0 0
        %2930 = vmatpush1.bf16.msra.mxu0 %v2806
        %2931 = vmatprep.subr.bf16.mxu0 0
        %2932 = vmatpush1.bf16.msra.mxu0 %v2807
        %2933 = vmatprep.subr.bf16.mxu0 0
        %2934 = vmatpush1.bf16.msra.mxu0 %v2808
        %2935 = vmatprep.subr.bf16.mxu0 0
        %2936 = vmatpush1.bf16.msra.mxu0 %v2809
        %2937 = vmatprep.subr.bf16.mxu0 0
        %2938 = vmatpush1.bf16.msra.mxu0 %v2810
        %2939 = vmatprep.subr.bf16.mxu0 0
        %2940 = vmatpush1.bf16.msra.mxu0 %v2811
        %2941 = vmatprep.subr.bf16.mxu0 0
        %2942 = vmatpush1.bf16.msra.mxu0 %v2812
        %2943 = vmatprep.subr.bf16.mxu0 0
        %2944 = vmatpush1.bf16.msra.mxu0 %v2813
        %2945 = vmatprep.subr.bf16.mxu0 0
        %2946 = vmatpush1.bf16.msra.mxu0 %v2814
        %2947 = vmatprep.subr.bf16.mxu0 0
        %2948 = vmatpush1.bf16.msra.mxu0 %v2815
        %2949 = vmatprep.subr.bf16.mxu0 0
        %2950 = vmatpush1.bf16.msra.mxu0 %v2816
        %2951 = vmatprep.subr.bf16.mxu0 0
        %2952 = vmatpush1.bf16.msra.mxu0 %v2817
        %2953 = vmatprep.subr.bf16.mxu0 0
        %2954 = vmatpush1.bf16.msra.mxu0 %v2818
        %2955 = vmatprep.mubr.bf16.mxu0 %v2508
        %2956 = vmatmul.mubr.bf16.gmra.mrb[0].mxu0 %v2507
        %v2957 = vpop.f32.mrb[0].mxu0
        %v2958 = vadd.f32 0.0, %v2957
        %v2959 = vpop.f32.mrb[0].mxu0
        %v2960 = vpop.f32.mrb[0].mxu0
        %v2961 = vadd.f32 0.0, %v2960
        %v2962 = vpop.f32.mrb[0].mxu0
        %2963 = vmatprep.mubr.bf16.mxu0 %v2513
        %2964 = vmatmul.mubr.bf16.gmra.mrb[0].mxu0 %v2512
        %v2965 = vpop.f32.mrb[0].mxu0
        %v2966 = vadd.f32 0.0, %v2965
        %v2967 = vpop.f32.mrb[0].mxu0
        %v2968 = vpop.f32.mrb[0].mxu0
        %v2969 = vadd.f32 0.0, %v2968
        %v2970 = vpop.f32.mrb[0].mxu0
        %2971 = vmatprep.mubr.bf16.mxu0 %v2518
        %2972 = vmatmul.mubr.bf16.gmra.mrb[0].mxu0 %v2517
        %v2973 = vpop.f32.mrb[0].mxu0
        %v2974 = vadd.f32 0.0, %v2973
        %v2975 = vpop.f32.mrb[0].mxu0
        %v2976 = vpop.f32.mrb[0].mxu0
        %v2977 = vadd.f32 0.0, %v2976
        %v2978 = vpop.f32.mrb[0].mxu0
        %2979 = vmatprep.mubr.bf16.mxu0 %v2523
        %2980 = vmatmul.mubr.bf16.gmra.mrb[0].mxu0 %v2522
        %v2981 = vpop.f32.mrb[0].mxu0
        %v2982 = vadd.f32 0.0, %v2981
        %v2983 = vpop.f32.mrb[0].mxu0
        %v2984 = vpop.f32.mrb[0].mxu0
        %v2985 = vadd.f32 0.0, %v2984
        %v2986 = vpop.f32.mrb[0].mxu0
        %2987 = vmatprep.mubr.bf16.mxu0 %v2528
        %2988 = vmatmul.mubr.bf16.gmra.mrb[0].mxu0 %v2527
        %v2989 = vpop.f32.mrb[0].mxu0
        %v2990 = vadd.f32 0.0, %v2989
        %v2991 = vpop.f32.mrb[0].mxu0
        %v2992 = vpop.f32.mrb[0].mxu0
        %v2993 = vadd.f32 0.0, %v2992
        %v2994 = vpop.f32.mrb[0].mxu0
        %2995 = vmatprep.mubr.bf16.mxu0 %v2533
        %2996 = vmatmul.mubr.bf16.gmra.mrb[0].mxu0 %v2532
        %v2997 = vpop.f32.mrb[0].mxu0
        %v2998 = vadd.f32 0.0, %v2997
        %v2999 = vpop.f32.mrb[0].mxu0
        %v3000 = vpop.f32.mrb[0].mxu0
        %v3001 = vadd.f32 0.0, %v3000
        %v3002 = vpop.f32.mrb[0].mxu0
        %3003 = vmatprep.mubr.bf16.mxu0 %v2538
        %3004 = vmatmul.mubr.bf16.gmra.mrb[0].mxu0 %v2537
        %v3005 = vpop.f32.mrb[0].mxu0
        %v3006 = vadd.f32 0.0, %v3005
        %v3007 = vpop.f32.mrb[0].mxu0
        %v3008 = vpop.f32.mrb[0].mxu0
        %v3009 = vadd.f32 0.0, %v3008
        %v3010 = vpop.f32.mrb[0].mxu0
        %3011 = vmatprep.mubr.bf16.mxu0 %v2543
        %3012 = vmatmul.mubr.bf16.gmra.mrb[0].mxu0 %v2542
        %v3013 = vpop.f32.mrb[0].mxu0
        %v3014 = vadd.f32 0.0, %v3013
        %v3015 = vpop.f32.mrb[0].mxu0
        %v3016 = vpop.f32.mrb[0].mxu0
        %v3017 = vadd.f32 0.0, %v3016
        %v3018 = vpop.f32.mrb[0].mxu0
        %3019 = vmatprep.mubr.bf16.mxu0 %v2548
        %3020 = vmatmul.mubr.bf16.gmra.mrb[0].mxu0 %v2547
        %v3021 = vpop.f32.mrb[0].mxu0
        %v3022 = vadd.f32 0.0, %v3021
        %v3023 = vpop.f32.mrb[0].mxu0
        %v3024 = vpop.f32.mrb[0].mxu0
        %v3025 = vadd.f32 0.0, %v3024
        %v3026 = vpop.f32.mrb[0].mxu0
        %3027 = vmatprep.mubr.bf16.mxu0 %v2553
        %3028 = vmatmul.mubr.bf16.gmra.mrb[0].mxu0 %v2552
        %v3029 = vpop.f32.mrb[0].mxu0
        %v3030 = vadd.f32 0.0, %v3029
        %v3031 = vpop.f32.mrb[0].mxu0
        %v3032 = vpop.f32.mrb[0].mxu0
        %v3033 = vadd.f32 0.0, %v3032
        %v3034 = vpop.f32.mrb[0].mxu0
        %3035 = vmatprep.mubr.bf16.mxu0 %v2558
        %3036 = vmatmul.mubr.bf16.gmra.mrb[0].mxu0 %v2557
        %v3037 = vpop.f32.mrb[0].mxu0
        %v3038 = vadd.f32 0.0, %v3037
        %v3039 = vpop.f32.mrb[0].mxu0
        %v3040 = vpop.f32.mrb[0].mxu0
        %v3041 = vadd.f32 0.0, %v3040
        %v3042 = vpop.f32.mrb[0].mxu0
        %3043 = vmatprep.mubr.bf16.mxu0 %v2563
        %3044 = vmatmul.mubr.bf16.gmra.mrb[0].mxu0 %v2562
        %v3045 = vpop.f32.mrb[0].mxu0
        %v3046 = vadd.f32 0.0, %v3045
        %v3047 = vpop.f32.mrb[0].mxu0
        %v3048 = vpop.f32.mrb[0].mxu0
        %v3049 = vadd.f32 0.0, %v3048
        %v3050 = vpop.f32.mrb[0].mxu0
        %3051 = vmatprep.mubr.bf16.mxu0 %v2568
        %3052 = vmatmul.mubr.bf16.gmra.mrb[0].mxu0 %v2567
        %v3053 = vpop.f32.mrb[0].mxu0
        %v3054 = vadd.f32 0.0, %v3053
        %v3055 = vpop.f32.mrb[0].mxu0
        %v3056 = vpop.f32.mrb[0].mxu0
        %v3057 = vadd.f32 0.0, %v3056
        %v3058 = vpop.f32.mrb[0].mxu0
        %3059 = vmatprep.mubr.bf16.mxu0 %v2573
        %3060 = vmatmul.mubr.bf16.gmra.mrb[0].mxu0 %v2572
        %v3061 = vpop.f32.mrb[0].mxu0
        %v3062 = vadd.f32 0.0, %v3061
        %v3063 = vpop.f32.mrb[0].mxu0
        %v3064 = vpop.f32.mrb[0].mxu0
        %v3065 = vadd.f32 0.0, %v3064
        %v3066 = vpop.f32.mrb[0].mxu0
        %3067 = vmatprep.mubr.bf16.mxu0 %v2578
        %3068 = vmatmul.mubr.bf16.gmra.mrb[0].mxu0 %v2577
        %v3069 = vpop.f32.mrb[0].mxu0
        %v3070 = vadd.f32 0.0, %v3069
        %v3071 = vpop.f32.mrb[0].mxu0
        %v3072 = vpop.f32.mrb[0].mxu0
        %v3073 = vadd.f32 0.0, %v3072
        %v3074 = vpop.f32.mrb[0].mxu0
        %3075 = vmatprep.mubr.bf16.mxu0 %v2583
        %3076 = vmatmul.mubr.bf16.gmra.mrb[0].mxu0 %v2582
        %v3077 = vpop.f32.mrb[0].mxu0
        %v3078 = vadd.f32 0.0, %v3077
        %v3079 = vpop.f32.mrb[0].mxu0
        %v3080 = vpop.f32.mrb[0].mxu0
        %v3081 = vadd.f32 0.0, %v3080
        %v3082 = vpop.f32.mrb[0].mxu0
        %3083 = vdwg.mxu0
        %3084 = vmatprep.subr.bf16.mxu0 0
        %3085 = vmatpush1.bf16.msra.mxu0 %v2819
        %3086 = vmatprep.subr.bf16.mxu0 0
        %3087 = vmatpush1.bf16.msra.mxu0 %v2820
        %3088 = vmatprep.subr.bf16.mxu0 0
        %3089 = vmatpush1.bf16.msra.mxu0 %v2821
        %3090 = vmatprep.subr.bf16.mxu0 0
        %3091 = vmatpush1.bf16.msra.mxu0 %v2822
        %3092 = vmatprep.subr.bf16.mxu0 0
        %3093 = vmatpush1.bf16.msra.mxu0 %v2823
        %3094 = vmatprep.subr.bf16.mxu0 0
        %3095 = vmatpush1.bf16.msra.mxu0 %v2824
        %3096 = vmatprep.subr.bf16.mxu0 0
        %3097 = vmatpush1.bf16.msra.mxu0 %v2825
        %3098 = vmatprep.subr.bf16.mxu0 0
        %3099 = vmatpush1.bf16.msra.mxu0 %v2826
        %3100 = vmatprep.subr.bf16.mxu0 0
        %3101 = vmatpush1.bf16.msra.mxu0 %v2827
        %3102 = vmatprep.subr.bf16.mxu0 0
        %3103 = vmatpush1.bf16.msra.mxu0 %v2828
        %3104 = vmatprep.subr.bf16.mxu0 0
        %3105 = vmatpush1.bf16.msra.mxu0 %v2829
        %3106 = vmatprep.subr.bf16.mxu0 0
        %3107 = vmatpush1.bf16.msra.mxu0 %v2830
        %3108 = vmatprep.subr.bf16.mxu0 0
        %3109 = vmatpush1.bf16.msra.mxu0 %v2831
        %3110 = vmatprep.subr.bf16.mxu0 0
        %3111 = vmatpush1.bf16.msra.mxu0 %v2832
        %3112 = vmatprep.subr.bf16.mxu0 0
        %3113 = vmatpush1.bf16.msra.mxu0 %v2833
        %3114 = vmatprep.subr.bf16.mxu0 0
        %3115 = vmatpush1.bf16.msra.mxu0 %v2834
        %3116 = vmatprep.mubr.bf16.mxu0 %v2510
        %3117 = vmatmul.mubr.bf16.gmra.mrb[0].mxu0 %v2509
        %v3118 = vpop.f32.mrb[0].mxu0
        %v3119 = vadd.f32 %v2958, %v3118
        %v3120 = vpop.f32.mrb[0].mxu0
        %v3121 = vpop.f32.mrb[0].mxu0
        %v3122 = vadd.f32 %v2961, %v3121
        %v3123 = vpop.f32.mrb[0].mxu0
        %3124 = vmatprep.mubr.bf16.mxu0 %v2515
        %3125 = vmatmul.mubr.bf16.gmra.mrb[0].mxu0 %v2514
        %v3126 = vpop.f32.mrb[0].mxu0
        %v3127 = vadd.f32 %v2966, %v3126
        %v3128 = vpop.f32.mrb[0].mxu0
        %v3129 = vpop.f32.mrb[0].mxu0
        %v3130 = vadd.f32 %v2969, %v3129
        %v3131 = vpop.f32.mrb[0].mxu0
        %3132 = vmatprep.mubr.bf16.mxu0 %v2520
        %3133 = vmatmul.mubr.bf16.gmra.mrb[0].mxu0 %v2519
        %v3134 = vpop.f32.mrb[0].mxu0
        %v3135 = vadd.f32 %v2974, %v3134
        %v3136 = vpop.f32.mrb[0].mxu0
        %v3137 = vpop.f32.mrb[0].mxu0
        %v3138 = vadd.f32 %v2977, %v3137
        %v3139 = vpop.f32.mrb[0].mxu0
        %3140 = vmatprep.mubr.bf16.mxu0 %v2525
        %3141 = vmatmul.mubr.bf16.gmra.mrb[0].mxu0 %v2524
        %v3142 = vpop.f32.mrb[0].mxu0
        %v3143 = vadd.f32 %v2982, %v3142
        %v3144 = vpop.f32.mrb[0].mxu0
        %v3145 = vpop.f32.mrb[0].mxu0
        %v3146 = vadd.f32 %v2985, %v3145
        %v3147 = vpop.f32.mrb[0].mxu0
        %3148 = vmatprep.mubr.bf16.mxu0 %v2530
        %3149 = vmatmul.mubr.bf16.gmra.mrb[0].mxu0 %v2529
        %v3150 = vpop.f32.mrb[0].mxu0
        %v3151 = vadd.f32 %v2990, %v3150
        %v3152 = vpop.f32.mrb[0].mxu0
        %v3153 = vpop.f32.mrb[0].mxu0
        %v3154 = vadd.f32 %v2993, %v3153
        %v3155 = vpop.f32.mrb[0].mxu0
        %3156 = vmatprep.mubr.bf16.mxu0 %v2535
        %3157 = vmatmul.mubr.bf16.gmra.mrb[0].mxu0 %v2534
        %v3158 = vpop.f32.mrb[0].mxu0
        %v3159 = vadd.f32 %v2998, %v3158
        %v3160 = vpop.f32.mrb[0].mxu0
        %v3161 = vpop.f32.mrb[0].mxu0
        %v3162 = vadd.f32 %v3001, %v3161
        %v3163 = vpop.f32.mrb[0].mxu0
        %3164 = vmatprep.mubr.bf16.mxu0 %v2540
        %3165 = vmatmul.mubr.bf16.gmra.mrb[0].mxu0 %v2539
        %v3166 = vpop.f32.mrb[0].mxu0
        %v3167 = vadd.f32 %v3006, %v3166
        %v3168 = vpop.f32.mrb[0].mxu0
        %v3169 = vpop.f32.mrb[0].mxu0
        %v3170 = vadd.f32 %v3009, %v3169
        %v3171 = vpop.f32.mrb[0].mxu0
        %3172 = vmatprep.mubr.bf16.mxu0 %v2545
        %3173 = vmatmul.mubr.bf16.gmra.mrb[0].mxu0 %v2544
        %v3174 = vpop.f32.mrb[0].mxu0
        %v3175 = vadd.f32 %v3014, %v3174
        %v3176 = vpop.f32.mrb[0].mxu0
        %v3177 = vpop.f32.mrb[0].mxu0
        %v3178 = vadd.f32 %v3017, %v3177
        %v3179 = vpop.f32.mrb[0].mxu0
        %3180 = vmatprep.mubr.bf16.mxu0 %v2550
        %3181 = vmatmul.mubr.bf16.gmra.mrb[0].mxu0 %v2549
        %v3182 = vpop.f32.mrb[0].mxu0
        %v3183 = vadd.f32 %v3022, %v3182
        %v3184 = vpop.f32.mrb[0].mxu0
        %v3185 = vpop.f32.mrb[0].mxu0
        %v3186 = vadd.f32 %v3025, %v3185
        %v3187 = vpop.f32.mrb[0].mxu0
        %3188 = vmatprep.mubr.bf16.mxu0 %v2555
        %3189 = vmatmul.mubr.bf16.gmra.mrb[0].mxu0 %v2554
        %v3190 = vpop.f32.mrb[0].mxu0
        %v3191 = vadd.f32 %v3030, %v3190
        %v3192 = vpop.f32.mrb[0].mxu0
        %v3193 = vpop.f32.mrb[0].mxu0
        %v3194 = vadd.f32 %v3033, %v3193
        %v3195 = vpop.f32.mrb[0].mxu0
        %3196 = vmatprep.mubr.bf16.mxu0 %v2560
        %3197 = vmatmul.mubr.bf16.gmra.mrb[0].mxu0 %v2559
        %v3198 = vpop.f32.mrb[0].mxu0
        %v3199 = vadd.f32 %v3038, %v3198
        %v3200 = vpop.f32.mrb[0].mxu0
        %v3201 = vpop.f32.mrb[0].mxu0
        %v3202 = vadd.f32 %v3041, %v3201
        %v3203 = vpop.f32.mrb[0].mxu0
        %3204 = vmatprep.mubr.bf16.mxu0 %v2565
        %3205 = vmatmul.mubr.bf16.gmra.mrb[0].mxu0 %v2564
        %v3206 = vpop.f32.mrb[0].mxu0
        %v3207 = vadd.f32 %v3046, %v3206
        %v3208 = vpop.f32.mrb[0].mxu0
        %v3209 = vpop.f32.mrb[0].mxu0
        %v3210 = vadd.f32 %v3049, %v3209
        %v3211 = vpop.f32.mrb[0].mxu0
        %3212 = vmatprep.mubr.bf16.mxu0 %v2570
        %3213 = vmatmul.mubr.bf16.gmra.mrb[0].mxu0 %v2569
        %v3214 = vpop.f32.mrb[0].mxu0
        %v3215 = vadd.f32 %v3054, %v3214
        %v3216 = vpop.f32.mrb[0].mxu0
        %v3217 = vpop.f32.mrb[0].mxu0
        %v3218 = vadd.f32 %v3057, %v3217
        %v3219 = vpop.f32.mrb[0].mxu0
        %3220 = vmatprep.mubr.bf16.mxu0 %v2575
        %3221 = vmatmul.mubr.bf16.gmra.mrb[0].mxu0 %v2574
        %v3222 = vpop.f32.mrb[0].mxu0
        %v3223 = vadd.f32 %v3062, %v3222
        %v3224 = vpop.f32.mrb[0].mxu0
        %v3225 = vpop.f32.mrb[0].mxu0
        %v3226 = vadd.f32 %v3065, %v3225
        %v3227 = vpop.f32.mrb[0].mxu0
        %3228 = vmatprep.mubr.bf16.mxu0 %v2580
        %3229 = vmatmul.mubr.bf16.gmra.mrb[0].mxu0 %v2579
        %v3230 = vpop.f32.mrb[0].mxu0
        %v3231 = vadd.f32 %v3070, %v3230
        %v3232 = vpop.f32.mrb[0].mxu0
        %v3233 = vpop.f32.mrb[0].mxu0
        %v3234 = vadd.f32 %v3073, %v3233
        %v3235 = vpop.f32.mrb[0].mxu0
        %3236 = vmatprep.mubr.bf16.mxu0 %v2585
        %3237 = vmatmul.mubr.bf16.gmra.mrb[0].mxu0 %v2584
        %v3238 = vpop.f32.mrb[0].mxu0
        %v3239 = vadd.f32 %v3078, %v3238
        %v3240 = vpop.f32.mrb[0].mxu0
        %v3241 = vpop.f32.mrb[0].mxu0
        %v3242 = vadd.f32 %v3081, %v3241
        %v3243 = vpop.f32.mrb[0].mxu0
        %3244 = vdwg.mxu0
        %3245 = vmatprep.subr.bf16.mxu0 0
        %3246 = vmatpush1.bf16.msra.mxu0 %v2835
        %3247 = vmatprep.subr.bf16.mxu0 0
        %3248 = vmatpush1.bf16.msra.mxu0 %v2836
        %3249 = vmatprep.subr.bf16.mxu0 0
        %3250 = vmatpush1.bf16.msra.mxu0 %v2837
        %3251 = vmatprep.subr.bf16.mxu0 0
        %3252 = vmatpush1.bf16.msra.mxu0 %v2838
        %3253 = vmatprep.subr.bf16.mxu0 0
        %3254 = vmatpush1.bf16.msra.mxu0 0
        %3255 = vmatprep.subr.bf16.mxu0 0
        %3256 = vmatpush1.bf16.msra.mxu0 0
        %3257 = vmatprep.subr.bf16.mxu0 0
        %3258 = vmatpush1.bf16.msra.mxu0 0
        %3259 = vmatprep.subr.bf16.mxu0 0
        %3260 = vmatpush1.bf16.msra.mxu0 0
        %3261 = vmatprep.subr.bf16.mxu0 0
        %3262 = vmatpush1.bf16.msra.mxu0 0
        %3263 = vmatprep.subr.bf16.mxu0 0
        %3264 = vmatpush1.bf16.msra.mxu0 0
        %3265 = vmatprep.subr.bf16.mxu0 0
        %3266 = vmatpush1.bf16.msra.mxu0 0
        %3267 = vmatprep.subr.bf16.mxu0 0
        %3268 = vmatpush1.bf16.msra.mxu0 0
        %3269 = vmatprep.subr.bf16.mxu0 0
        %3270 = vmatpush1.bf16.msra.mxu0 0
        %3271 = vmatprep.subr.bf16.mxu0 0
        %3272 = vmatpush1.bf16.msra.mxu0 0
        %3273 = vmatprep.subr.bf16.mxu0 0
        %3274 = vmatpush1.bf16.msra.mxu0 0
        %3275 = vmatprep.subr.bf16.mxu0 0
        %3276 = vmatpush1.bf16.msra.mxu0 0
        %3277 = vmatprep.mubr.bf16.mxu0 0
        %3278 = vmatmul.mubr.bf16.gmra.mrb[0].mxu0 %v2876
        %v3279 = vpop.f32.mrb[0].mxu0
        %v3280 = vadd.f32 %v3119, %v3279
        %v3281 = vpop.f32.mrb[0].mxu0
        %v3282 = vpop.f32.mrb[0].mxu0
        %v3283 = vadd.f32 %v3122, %v3282
        %v3284 = vpop.f32.mrb[0].mxu0
        %3285 = vmatprep.mubr.bf16.mxu0 0
        %3286 = vmatmul.mubr.bf16.gmra.mrb[0].mxu0 %v2879
        %v3287 = vpop.f32.mrb[0].mxu0
        %v3288 = vadd.f32 %v3127, %v3287
        %v3289 = vpop.f32.mrb[0].mxu0
        %v3290 = vpop.f32.mrb[0].mxu0
        %v3291 = vadd.f32 %v3130, %v3290
        %v3292 = vpop.f32.mrb[0].mxu0
        %3293 = vmatprep.mubr.bf16.mxu0 0
        %3294 = vmatmul.mubr.bf16.gmra.mrb[0].mxu0 %v2882
        %v3295 = vpop.f32.mrb[0].mxu0
        %v3296 = vadd.f32 %v3135, %v3295
        %v3297 = vpop.f32.mrb[0].mxu0
        %v3298 = vpop.f32.mrb[0].mxu0
        %v3299 = vadd.f32 %v3138, %v3298
        %v3300 = vpop.f32.mrb[0].mxu0
        %3301 = vmatprep.mubr.bf16.mxu0 0
        %3302 = vmatmul.mubr.bf16.gmra.mrb[0].mxu0 %v2885
        %v3303 = vpop.f32.mrb[0].mxu0
        %v3304 = vadd.f32 %v3143, %v3303
        %v3305 = vpop.f32.mrb[0].mxu0
        %v3306 = vpop.f32.mrb[0].mxu0
        %v3307 = vadd.f32 %v3146, %v3306
        %v3308 = vpop.f32.mrb[0].mxu0
        %3309 = vmatprep.mubr.bf16.mxu0 0
        %3310 = vmatmul.mubr.bf16.gmra.mrb[0].mxu0 %v2888
        %v3311 = vpop.f32.mrb[0].mxu0
        %v3312 = vadd.f32 %v3151, %v3311
        %v3313 = vpop.f32.mrb[0].mxu0
        %v3314 = vpop.f32.mrb[0].mxu0
        %v3315 = vadd.f32 %v3154, %v3314
        %v3316 = vpop.f32.mrb[0].mxu0
        %3317 = vmatprep.mubr.bf16.mxu0 0
        %3318 = vmatmul.mubr.bf16.gmra.mrb[0].mxu0 %v2891
        %v3319 = vpop.f32.mrb[0].mxu0
        %v3320 = vadd.f32 %v3159, %v3319
        %v3321 = vpop.f32.mrb[0].mxu0
        %v3322 = vpop.f32.mrb[0].mxu0
        %v3323 = vadd.f32 %v3162, %v3322
        %v3324 = vpop.f32.mrb[0].mxu0
        %3325 = vmatprep.mubr.bf16.mxu0 0
        %3326 = vmatmul.mubr.bf16.gmra.mrb[0].mxu0 %v2894
        %v3327 = vpop.f32.mrb[0].mxu0
        %v3328 = vadd.f32 %v3167, %v3327
        %v3329 = vpop.f32.mrb[0].mxu0
        %v3330 = vpop.f32.mrb[0].mxu0
        %v3331 = vadd.f32 %v3170, %v3330
        %v3332 = vpop.f32.mrb[0].mxu0
        %3333 = vmatprep.mubr.bf16.mxu0 0
        %3334 = vmatmul.mubr.bf16.gmra.mrb[0].mxu0 %v2897
        %v3335 = vpop.f32.mrb[0].mxu0
        %v3336 = vadd.f32 %v3175, %v3335
        %v3337 = vpop.f32.mrb[0].mxu0
        %v3338 = vpop.f32.mrb[0].mxu0
        %v3339 = vadd.f32 %v3178, %v3338
        %v3340 = vpop.f32.mrb[0].mxu0
        %3341 = vmatprep.mubr.bf16.mxu0 0
        %3342 = vmatmul.mubr.bf16.gmra.mrb[0].mxu0 %v2900
        %v3343 = vpop.f32.mrb[0].mxu0
        %v3344 = vadd.f32 %v3183, %v3343
        %v3345 = vpop.f32.mrb[0].mxu0
        %v3346 = vpop.f32.mrb[0].mxu0
        %v3347 = vadd.f32 %v3186, %v3346
        %v3348 = vpop.f32.mrb[0].mxu0
        %3349 = vmatprep.mubr.bf16.mxu0 0
        %3350 = vmatmul.mubr.bf16.gmra.mrb[0].mxu0 %v2903
        %v3351 = vpop.f32.mrb[0].mxu0
        %v3352 = vadd.f32 %v3191, %v3351
        %v3353 = vpop.f32.mrb[0].mxu0
        %v3354 = vpop.f32.mrb[0].mxu0
        %v3355 = vadd.f32 %v3194, %v3354
        %v3356 = vpop.f32.mrb[0].mxu0
        %3357 = vmatprep.mubr.bf16.mxu0 0
        %3358 = vmatmul.mubr.bf16.gmra.mrb[0].mxu0 %v2906
        %v3359 = vpop.f32.mrb[0].mxu0
        %v3360 = vadd.f32 %v3199, %v3359
        %v3361 = vpop.f32.mrb[0].mxu0
        %v3362 = vpop.f32.mrb[0].mxu0
        %v3363 = vadd.f32 %v3202, %v3362
        %v3364 = vpop.f32.mrb[0].mxu0
        %3365 = vmatprep.mubr.bf16.mxu0 0
        %3366 = vmatmul.mubr.bf16.gmra.mrb[0].mxu0 %v2909
        %v3367 = vpop.f32.mrb[0].mxu0
        %v3368 = vadd.f32 %v3207, %v3367
        %v3369 = vpop.f32.mrb[0].mxu0
        %v3370 = vpop.f32.mrb[0].mxu0
        %v3371 = vadd.f32 %v3210, %v3370
        %v3372 = vpop.f32.mrb[0].mxu0
        %3373 = vmatprep.mubr.bf16.mxu0 0
        %3374 = vmatmul.mubr.bf16.gmra.mrb[0].mxu0 %v2912
        %v3375 = vpop.f32.mrb[0].mxu0
        %v3376 = vadd.f32 %v3215, %v3375
        %v3377 = vpop.f32.mrb[0].mxu0
        %v3378 = vpop.f32.mrb[0].mxu0
        %v3379 = vadd.f32 %v3218, %v3378
        %v3380 = vpop.f32.mrb[0].mxu0
        %3381 = vmatprep.mubr.bf16.mxu0 0
        %3382 = vmatmul.mubr.bf16.gmra.mrb[0].mxu0 %v2915
        %v3383 = vpop.f32.mrb[0].mxu0
        %v3384 = vadd.f32 %v3223, %v3383
        %v3385 = vpop.f32.mrb[0].mxu0
        %v3386 = vpop.f32.mrb[0].mxu0
        %v3387 = vadd.f32 %v3226, %v3386
        %v3388 = vpop.f32.mrb[0].mxu0
        %3389 = vmatprep.mubr.bf16.mxu0 0
        %3390 = vmatmul.mubr.bf16.gmra.mrb[0].mxu0 %v2918
        %v3391 = vpop.f32.mrb[0].mxu0
        %v3392 = vadd.f32 %v3231, %v3391
        %v3393 = vpop.f32.mrb[0].mxu0
        %v3394 = vpop.f32.mrb[0].mxu0
        %v3395 = vadd.f32 %v3234, %v3394
        %v3396 = vpop.f32.mrb[0].mxu0
        %3397 = vmatprep.mubr.bf16.mxu0 0
        %3398 = vmatmul.mubr.bf16.gmra.mrb[0].mxu0 %v2921
        %v3399 = vpop.f32.mrb[0].mxu0
        %v3400 = vadd.f32 %v3239, %v3399
        %v3401 = vpop.f32.mrb[0].mxu0
        %v3402 = vpop.f32.mrb[0].mxu0
        %v3403 = vadd.f32 %v3242, %v3402
        %v3404 = vpop.f32.mrb[0].mxu0
        %3405 = vdwg.mxu0
        %v3406 = vld [vmem:[%s5] sm:$0x1]
        %v3408 = vlaneseq
        %v3409 = vshrl.u32 %v3408, 7
        %v3410 = vsub.s32 0, %v3409
        %v3411 = vrot.slane %v3406, %v3410
        %v3413 = vmul.f32 %v3280, %v3411
        %v3414 = vmul.f32 %v3283, %v3411
        %v3415 = vmul.f32 %v3288, %v3411
        %v3416 = vmul.f32 %v3291, %v3411
        %v3417 = vmul.f32 %v3296, %v3411
        %v3418 = vmul.f32 %v3299, %v3411
        %v3419 = vmul.f32 %v3304, %v3411
        %v3420 = vmul.f32 %v3307, %v3411
        %v3421 = vmul.f32 %v3312, %v3411
        %v3422 = vmul.f32 %v3315, %v3411
        %v3423 = vmul.f32 %v3320, %v3411
        %v3424 = vmul.f32 %v3323, %v3411
        %v3425 = vmul.f32 %v3328, %v3411
        %v3426 = vmul.f32 %v3331, %v3411
        %v3427 = vmul.f32 %v3336, %v3411
        %v3428 = vmul.f32 %v3339, %v3411
        %v3429 = vmul.f32 %v3344, %v3411
        %v3430 = vmul.f32 %v3347, %v3411
        %v3431 = vmul.f32 %v3352, %v3411
        %v3432 = vmul.f32 %v3355, %v3411
        %v3433 = vmul.f32 %v3360, %v3411
        %v3434 = vmul.f32 %v3363, %v3411
        %v3435 = vmul.f32 %v3368, %v3411
        %v3436 = vmul.f32 %v3371, %v3411
        %v3437 = vmul.f32 %v3376, %v3411
        %v3438 = vmul.f32 %v3379, %v3411
        %v3439 = vmul.f32 %v3384, %v3411
        %v3440 = vmul.f32 %v3387, %v3411
        %v3441 = vmul.f32 %v3392, %v3411
        %v3442 = vmul.f32 %v3395, %v3411
        %v3443 = vmul.f32 %v3400, %v3411
        %v3444 = vmul.f32 %v3403, %v3411
        %v3445 = vld [vmem:[%s6] sm:$0x1]
        %v3447 = vlaneseq
        %v3448 = vshrl.u32 %v3447, 7
        %v3449 = vsub.s32 0, %v3448
        %v3450 = vrot.slane %v3445, %v3449
        %v3452 = vadd.f32 %v3413, %v3450
        %v3453 = vadd.f32 %v3414, %v3450
        %v3454 = vadd.f32 %v3415, %v3450
        %v3455 = vadd.f32 %v3416, %v3450
        %v3456 = vadd.f32 %v3417, %v3450
        %v3457 = vadd.f32 %v3418, %v3450
        %v3458 = vadd.f32 %v3419, %v3450
        %v3459 = vadd.f32 %v3420, %v3450
        %v3460 = vadd.f32 %v3421, %v3450
        %v3461 = vadd.f32 %v3422, %v3450
        %v3462 = vadd.f32 %v3423, %v3450
        %v3463 = vadd.f32 %v3424, %v3450
        %v3464 = vadd.f32 %v3425, %v3450
        %v3465 = vadd.f32 %v3426, %v3450
        %v3466 = vadd.f32 %v3427, %v3450
        %v3467 = vadd.f32 %v3428, %v3450
        %v3468 = vadd.f32 %v3429, %v3450
        %v3469 = vadd.f32 %v3430, %v3450
        %v3470 = vadd.f32 %v3431, %v3450
        %v3471 = vadd.f32 %v3432, %v3450
        %v3472 = vadd.f32 %v3433, %v3450
        %v3473 = vadd.f32 %v3434, %v3450
        %v3474 = vadd.f32 %v3435, %v3450
        %v3475 = vadd.f32 %v3436, %v3450
        %v3476 = vadd.f32 %v3437, %v3450
        %v3477 = vadd.f32 %v3438, %v3450
        %v3478 = vadd.f32 %v3439, %v3450
        %v3479 = vadd.f32 %v3440, %v3450
        %v3480 = vadd.f32 %v3441, %v3450
        %v3481 = vadd.f32 %v3442, %v3450
        %v3482 = vadd.f32 %v3443, %v3450
        %v3483 = vadd.f32 %v3444, %v3450
        %v3484 = vmax.f32 %v3452, 0.0
        %v3485 = vmax.f32 %v3453, 0.0
        %v3486 = vmax.f32 %v3454, 0.0
        %v3487 = vmax.f32 %v3455, 0.0
        %v3488 = vmax.f32 %v3456, 0.0
        %v3489 = vmax.f32 %v3457, 0.0
        %v3490 = vmax.f32 %v3458, 0.0
        %v3491 = vmax.f32 %v3459, 0.0
        %v3492 = vmax.f32 %v3460, 0.0
        %v3493 = vmax.f32 %v3461, 0.0
        %v3494 = vmax.f32 %v3462, 0.0
        %v3495 = vmax.f32 %v3463, 0.0
        %v3496 = vmax.f32 %v3464, 0.0
        %v3497 = vmax.f32 %v3465, 0.0
        %v3498 = vmax.f32 %v3466, 0.0
        %v3499 = vmax.f32 %v3467, 0.0
        %v3500 = vmax.f32 %v3468, 0.0
        %v3501 = vmax.f32 %v3469, 0.0
        %v3502 = vmax.f32 %v3470, 0.0
        %v3503 = vmax.f32 %v3471, 0.0
        %v3504 = vmax.f32 %v3472, 0.0
        %v3505 = vmax.f32 %v3473, 0.0
        %v3506 = vmax.f32 %v3474, 0.0
        %v3507 = vmax.f32 %v3475, 0.0
        %v3508 = vmax.f32 %v3476, 0.0
        %v3509 = vmax.f32 %v3477, 0.0
        %v3510 = vmax.f32 %v3478, 0.0
        %v3511 = vmax.f32 %v3479, 0.0
        %v3512 = vmax.f32 %v3480, 0.0
        %v3513 = vmax.f32 %v3481, 0.0
        %v3514 = vmax.f32 %v3482, 0.0
        %v3515 = vmax.f32 %v3483, 0.0
        %v3516 = vpack.c.bf16 %v3485, %v3484
        %v3517 = vpack.c.bf16 %v3487, %v3486
        %v3518 = vpack.c.bf16 %v3489, %v3488
        %v3519 = vpack.c.bf16 %v3491, %v3490
        %v3520 = vpack.c.bf16 %v3493, %v3492
        %v3521 = vpack.c.bf16 %v3495, %v3494
        %v3522 = vpack.c.bf16 %v3497, %v3496
        %v3523 = vpack.c.bf16 %v3499, %v3498
        %v3524 = vpack.c.bf16 %v3501, %v3500
        %v3525 = vpack.c.bf16 %v3503, %v3502
        %v3526 = vpack.c.bf16 %v3505, %v3504
        %v3527 = vpack.c.bf16 %v3507, %v3506
        %v3528 = vpack.c.bf16 %v3509, %v3508
        %v3529 = vpack.c.bf16 %v3511, %v3510
        %v3530 = vpack.c.bf16 %v3513, %v3512
        %v3531 = vpack.c.bf16 %v3515, %v3514
        %v3532 = vld [vmem:[%s7] sm:$0xf]
        %v3533 = vld [vmem:[%s7 + $0x4] sm:$0xf]
        %v3534 = vld [vmem:[%s7 + $0x8] sm:$0xf]
        %v3535 = vld [vmem:[%s7 + $0xc] sm:$0xf]
        %v3536 = vld [vmem:[%s7 + $0x10] sm:$0xf]
        %v3537 = vld [vmem:[%s7 + $0x14] sm:$0xf]
        %v3538 = vld [vmem:[%s7 + $0x18] sm:$0xf]
        %v3539 = vld [vmem:[%s7 + $0x1c] sm:$0xf]
        %v3548 = vunpack.c.l.b16 %v3532
        %v3549 = vunpack.c.l.b16 %v3533
        %v3550 = vunpack.c.l.b16 %v3534
        %v3551 = vunpack.c.l.b16 %v3535
        %v3552 = vunpack.c.l.b16 %v3536
        %v3553 = vunpack.c.l.b16 %v3537
        %v3554 = vunpack.c.l.b16 %v3538
        %v3555 = vunpack.c.l.b16 %v3539
        %v3556 = vpack.c.b16 %v3549, %v3548
        %v3557 = vpack.c.b16 %v3551, %v3550
        %v3558 = vpack.c.b16 %v3553, %v3552
        %v3559 = vpack.c.b16 %v3555, %v3554
        %v3565 = vsel %vm440, %v3516, 0
        %v3568 = vsel %vm440, %v3517, 0
        %v3571 = vsel %vm440, %v3518, 0
        %v3574 = vsel %vm440, %v3519, 0
        %v3577 = vsel %vm440, %v3520, 0
        %v3580 = vsel %vm440, %v3521, 0
        %v3583 = vsel %vm440, %v3522, 0
        %v3586 = vsel %vm440, %v3523, 0
        %v3589 = vsel %vm440, %v3524, 0
        %v3592 = vsel %vm440, %v3525, 0
        %v3595 = vsel %vm440, %v3526, 0
        %v3598 = vsel %vm440, %v3527, 0
        %v3601 = vsel %vm440, %v3528, 0
        %v3604 = vsel %vm440, %v3529, 0
        %v3607 = vsel %vm440, %v3530, 0
        %v3610 = vsel %vm440, %v3531, 0
        %3612 = vmatprep.subr.bf16.mxu0 0
        %3613 = vmatpush1.bf16.msra.mxu0 %v3556
        %3614 = vmatprep.subr.bf16.mxu0 0
        %3615 = vmatpush1.bf16.msra.mxu0 %v3557
        %3616 = vmatprep.subr.bf16.mxu0 0
        %3617 = vmatpush1.bf16.msra.mxu0 %v3558
        %3618 = vmatprep.subr.bf16.mxu0 0
        %3619 = vmatpush1.bf16.msra.mxu0 %v3559
        %3620 = vmatprep.subr.bf16.mxu0 0
        %3621 = vmatpush1.bf16.msra.mxu0 0
        %3622 = vmatprep.subr.bf16.mxu0 0
        %3623 = vmatpush1.bf16.msra.mxu0 0
        %3624 = vmatprep.subr.bf16.mxu0 0
        %3625 = vmatpush1.bf16.msra.mxu0 0
        %3626 = vmatprep.subr.bf16.mxu0 0
        %3627 = vmatpush1.bf16.msra.mxu0 0
        %3628 = vmatprep.subr.bf16.mxu0 0
        %3629 = vmatpush1.bf16.msra.mxu0 0
        %3630 = vmatprep.subr.bf16.mxu0 0
        %3631 = vmatpush1.bf16.msra.mxu0 0
        %3632 = vmatprep.subr.bf16.mxu0 0
        %3633 = vmatpush1.bf16.msra.mxu0 0
        %3634 = vmatprep.subr.bf16.mxu0 0
        %3635 = vmatpush1.bf16.msra.mxu0 0
        %3636 = vmatprep.subr.bf16.mxu0 0
        %3637 = vmatpush1.bf16.msra.mxu0 0
        %3638 = vmatprep.subr.bf16.mxu0 0
        %3639 = vmatpush1.bf16.msra.mxu0 0
        %3640 = vmatprep.subr.bf16.mxu0 0
        %3641 = vmatpush1.bf16.msra.mxu0 0
        %3642 = vmatprep.subr.bf16.mxu0 0
        %3643 = vmatpush1.bf16.msra.mxu0 0
        %3644 = vmatprep.mubr.bf16.mxu0 0
        %3645 = vmatmul.mubr.bf16.gmra.mrb[0].mxu0 %v3565
        %v3646 = vpop.f32.mrb[0].mxu0
        %v3647 = vadd.f32 0.0, %v3646
        %v3648 = vpop.f32.mrb[0].mxu0
        %v3649 = vpop.f32.mrb[0].mxu0
        %v3650 = vadd.f32 0.0, %v3649
        %v3651 = vpop.f32.mrb[0].mxu0
        %3652 = vmatprep.mubr.bf16.mxu0 0
        %3653 = vmatmul.mubr.bf16.gmra.mrb[0].mxu0 %v3568
        %v3654 = vpop.f32.mrb[0].mxu0
        %v3655 = vadd.f32 0.0, %v3654
        %v3656 = vpop.f32.mrb[0].mxu0
        %v3657 = vpop.f32.mrb[0].mxu0
        %v3658 = vadd.f32 0.0, %v3657
        %v3659 = vpop.f32.mrb[0].mxu0
        %3660 = vmatprep.mubr.bf16.mxu0 0
        %3661 = vmatmul.mubr.bf16.gmra.mrb[0].mxu0 %v3571
        %v3662 = vpop.f32.mrb[0].mxu0
        %v3663 = vadd.f32 0.0, %v3662
        %v3664 = vpop.f32.mrb[0].mxu0
        %v3665 = vpop.f32.mrb[0].mxu0
        %v3666 = vadd.f32 0.0, %v3665
        %v3667 = vpop.f32.mrb[0].mxu0
        %3668 = vmatprep.mubr.bf16.mxu0 0
        %3669 = vmatmul.mubr.bf16.gmra.mrb[0].mxu0 %v3574
        %v3670 = vpop.f32.mrb[0].mxu0
        %v3671 = vadd.f32 0.0, %v3670
        %v3672 = vpop.f32.mrb[0].mxu0
        %v3673 = vpop.f32.mrb[0].mxu0
        %v3674 = vadd.f32 0.0, %v3673
        %v3675 = vpop.f32.mrb[0].mxu0
        %3676 = vmatprep.mubr.bf16.mxu0 0
        %3677 = vmatmul.mubr.bf16.gmra.mrb[0].mxu0 %v3577
        %v3678 = vpop.f32.mrb[0].mxu0
        %v3679 = vadd.f32 0.0, %v3678
        %v3680 = vpop.f32.mrb[0].mxu0
        %v3681 = vpop.f32.mrb[0].mxu0
        %v3682 = vadd.f32 0.0, %v3681
        %v3683 = vpop.f32.mrb[0].mxu0
        %3684 = vmatprep.mubr.bf16.mxu0 0
        %3685 = vmatmul.mubr.bf16.gmra.mrb[0].mxu0 %v3580
        %v3686 = vpop.f32.mrb[0].mxu0
        %v3687 = vadd.f32 0.0, %v3686
        %v3688 = vpop.f32.mrb[0].mxu0
        %v3689 = vpop.f32.mrb[0].mxu0
        %v3690 = vadd.f32 0.0, %v3689
        %v3691 = vpop.f32.mrb[0].mxu0
        %3692 = vmatprep.mubr.bf16.mxu0 0
        %3693 = vmatmul.mubr.bf16.gmra.mrb[0].mxu0 %v3583
        %v3694 = vpop.f32.mrb[0].mxu0
        %v3695 = vadd.f32 0.0, %v3694
        %v3696 = vpop.f32.mrb[0].mxu0
        %v3697 = vpop.f32.mrb[0].mxu0
        %v3698 = vadd.f32 0.0, %v3697
        %v3699 = vpop.f32.mrb[0].mxu0
        %3700 = vmatprep.mubr.bf16.mxu0 0
        %3701 = vmatmul.mubr.bf16.gmra.mrb[0].mxu0 %v3586
        %v3702 = vpop.f32.mrb[0].mxu0
        %v3703 = vadd.f32 0.0, %v3702
        %v3704 = vpop.f32.mrb[0].mxu0
        %v3705 = vpop.f32.mrb[0].mxu0
        %v3706 = vadd.f32 0.0, %v3705
        %v3707 = vpop.f32.mrb[0].mxu0
        %3708 = vmatprep.mubr.bf16.mxu0 0
        %3709 = vmatmul.mubr.bf16.gmra.mrb[0].mxu0 %v3589
        %v3710 = vpop.f32.mrb[0].mxu0
        %v3711 = vadd.f32 0.0, %v3710
        %v3712 = vpop.f32.mrb[0].mxu0
        %v3713 = vpop.f32.mrb[0].mxu0
        %v3714 = vadd.f32 0.0, %v3713
        %v3715 = vpop.f32.mrb[0].mxu0
        %3716 = vmatprep.mubr.bf16.mxu0 0
        %3717 = vmatmul.mubr.bf16.gmra.mrb[0].mxu0 %v3592
        %v3718 = vpop.f32.mrb[0].mxu0
        %v3719 = vadd.f32 0.0, %v3718
        %v3720 = vpop.f32.mrb[0].mxu0
        %v3721 = vpop.f32.mrb[0].mxu0
        %v3722 = vadd.f32 0.0, %v3721
        %v3723 = vpop.f32.mrb[0].mxu0
        %3724 = vmatprep.mubr.bf16.mxu0 0
        %3725 = vmatmul.mubr.bf16.gmra.mrb[0].mxu0 %v3595
        %v3726 = vpop.f32.mrb[0].mxu0
        %v3727 = vadd.f32 0.0, %v3726
        %v3728 = vpop.f32.mrb[0].mxu0
        %v3729 = vpop.f32.mrb[0].mxu0
        %v3730 = vadd.f32 0.0, %v3729
        %v3731 = vpop.f32.mrb[0].mxu0
        %3732 = vmatprep.mubr.bf16.mxu0 0
        %3733 = vmatmul.mubr.bf16.gmra.mrb[0].mxu0 %v3598
        %v3734 = vpop.f32.mrb[0].mxu0
        %v3735 = vadd.f32 0.0, %v3734
        %v3736 = vpop.f32.mrb[0].mxu0
        %v3737 = vpop.f32.mrb[0].mxu0
        %v3738 = vadd.f32 0.0, %v3737
        %v3739 = vpop.f32.mrb[0].mxu0
        %3740 = vmatprep.mubr.bf16.mxu0 0
        %3741 = vmatmul.mubr.bf16.gmra.mrb[0].mxu0 %v3601
        %v3742 = vpop.f32.mrb[0].mxu0
        %v3743 = vadd.f32 0.0, %v3742
        %v3744 = vpop.f32.mrb[0].mxu0
        %v3745 = vpop.f32.mrb[0].mxu0
        %v3746 = vadd.f32 0.0, %v3745
        %v3747 = vpop.f32.mrb[0].mxu0
        %3748 = vmatprep.mubr.bf16.mxu0 0
        %3749 = vmatmul.mubr.bf16.gmra.mrb[0].mxu0 %v3604
        %v3750 = vpop.f32.mrb[0].mxu0
        %v3751 = vadd.f32 0.0, %v3750
        %v3752 = vpop.f32.mrb[0].mxu0
        %v3753 = vpop.f32.mrb[0].mxu0
        %v3754 = vadd.f32 0.0, %v3753
        %v3755 = vpop.f32.mrb[0].mxu0
        %3756 = vmatprep.mubr.bf16.mxu0 0
        %3757 = vmatmul.mubr.bf16.gmra.mrb[0].mxu0 %v3607
        %v3758 = vpop.f32.mrb[0].mxu0
        %v3759 = vadd.f32 0.0, %v3758
        %v3760 = vpop.f32.mrb[0].mxu0
        %v3761 = vpop.f32.mrb[0].mxu0
        %v3762 = vadd.f32 0.0, %v3761
        %v3763 = vpop.f32.mrb[0].mxu0
        %3764 = vmatprep.mubr.bf16.mxu0 0
        %3765 = vmatmul.mubr.bf16.gmra.mrb[0].mxu0 %v3610
        %v3766 = vpop.f32.mrb[0].mxu0
        %v3767 = vadd.f32 0.0, %v3766
        %v3768 = vpop.f32.mrb[0].mxu0
        %v3769 = vpop.f32.mrb[0].mxu0
        %v3770 = vadd.f32 0.0, %v3769
        %v3771 = vpop.f32.mrb[0].mxu0
        %3772 = vdwg.mxu0
        %v3773 = vld [vmem:[%s8] sm:$0x1]
        %v3775 = vlaneseq
        %v3776 = vshrl.u32 %v3775, 7
        %v3777 = vsub.s32 0, %v3776
        %v3778 = vrot.slane %v3773, %v3777
        %v3780 = vmul.f32 %v3647, %v3778
        %v3781 = vmul.f32 %v3650, %v3778
        %v3782 = vmul.f32 %v3655, %v3778
        %v3783 = vmul.f32 %v3658, %v3778
        %v3784 = vmul.f32 %v3663, %v3778
        %v3785 = vmul.f32 %v3666, %v3778
        %v3786 = vmul.f32 %v3671, %v3778
        %v3787 = vmul.f32 %v3674, %v3778
        %v3788 = vmul.f32 %v3679, %v3778
        %v3789 = vmul.f32 %v3682, %v3778
        %v3790 = vmul.f32 %v3687, %v3778
        %v3791 = vmul.f32 %v3690, %v3778
        %v3792 = vmul.f32 %v3695, %v3778
        %v3793 = vmul.f32 %v3698, %v3778
        %v3794 = vmul.f32 %v3703, %v3778
        %v3795 = vmul.f32 %v3706, %v3778
        %v3796 = vmul.f32 %v3711, %v3778
        %v3797 = vmul.f32 %v3714, %v3778
        %v3798 = vmul.f32 %v3719, %v3778
        %v3799 = vmul.f32 %v3722, %v3778
        %v3800 = vmul.f32 %v3727, %v3778
        %v3801 = vmul.f32 %v3730, %v3778
        %v3802 = vmul.f32 %v3735, %v3778
        %v3803 = vmul.f32 %v3738, %v3778
        %v3804 = vmul.f32 %v3743, %v3778
        %v3805 = vmul.f32 %v3746, %v3778
        %v3806 = vmul.f32 %v3751, %v3778
        %v3807 = vmul.f32 %v3754, %v3778
        %v3808 = vmul.f32 %v3759, %v3778
        %v3809 = vmul.f32 %v3762, %v3778
        %v3810 = vmul.f32 %v3767, %v3778
        %v3811 = vmul.f32 %v3770, %v3778
        %v3812 = vld [vmem:[%s9] sm:$0x1]
        %v3814 = vlaneseq
        %v3815 = vshrl.u32 %v3814, 7
        %v3816 = vsub.s32 0, %v3815
        %v3817 = vrot.slane %v3812, %v3816
        %v3819 = vadd.f32 %v3780, %v3817
        %v3820 = vadd.f32 %v3781, %v3817
        %v3821 = vadd.f32 %v3782, %v3817
        %v3822 = vadd.f32 %v3783, %v3817
        %v3823 = vadd.f32 %v3784, %v3817
        %v3824 = vadd.f32 %v3785, %v3817
        %v3825 = vadd.f32 %v3786, %v3817
        %v3826 = vadd.f32 %v3787, %v3817
        %v3827 = vadd.f32 %v3788, %v3817
        %v3828 = vadd.f32 %v3789, %v3817
        %v3829 = vadd.f32 %v3790, %v3817
        %v3830 = vadd.f32 %v3791, %v3817
        %v3831 = vadd.f32 %v3792, %v3817
        %v3832 = vadd.f32 %v3793, %v3817
        %v3833 = vadd.f32 %v3794, %v3817
        %v3834 = vadd.f32 %v3795, %v3817
        %v3835 = vadd.f32 %v3796, %v3817
        %v3836 = vadd.f32 %v3797, %v3817
        %v3837 = vadd.f32 %v3798, %v3817
        %v3838 = vadd.f32 %v3799, %v3817
        %v3839 = vadd.f32 %v3800, %v3817
        %v3840 = vadd.f32 %v3801, %v3817
        %v3841 = vadd.f32 %v3802, %v3817
        %v3842 = vadd.f32 %v3803, %v3817
        %v3843 = vadd.f32 %v3804, %v3817
        %v3844 = vadd.f32 %v3805, %v3817
        %v3845 = vadd.f32 %v3806, %v3817
        %v3846 = vadd.f32 %v3807, %v3817
        %v3847 = vadd.f32 %v3808, %v3817
        %v3848 = vadd.f32 %v3809, %v3817
        %v3849 = vadd.f32 %v3810, %v3817
        %v3850 = vadd.f32 %v3811, %v3817
        %v3851 = vmax.f32 %v3819, 0.0
        %v3852 = vmax.f32 %v3820, 0.0
        %v3853 = vmax.f32 %v3821, 0.0
        %v3854 = vmax.f32 %v3822, 0.0
        %v3855 = vmax.f32 %v3823, 0.0
        %v3856 = vmax.f32 %v3824, 0.0
        %v3857 = vmax.f32 %v3825, 0.0
        %v3858 = vmax.f32 %v3826, 0.0
        %v3859 = vmax.f32 %v3827, 0.0
        %v3860 = vmax.f32 %v3828, 0.0
        %v3861 = vmax.f32 %v3829, 0.0
        %v3862 = vmax.f32 %v3830, 0.0
        %v3863 = vmax.f32 %v3831, 0.0
        %v3864 = vmax.f32 %v3832, 0.0
        %v3865 = vmax.f32 %v3833, 0.0
        %v3866 = vmax.f32 %v3834, 0.0
        %v3867 = vmax.f32 %v3835, 0.0
        %v3868 = vmax.f32 %v3836, 0.0
        %v3869 = vmax.f32 %v3837, 0.0
        %v3870 = vmax.f32 %v3838, 0.0
        %v3871 = vmax.f32 %v3839, 0.0
        %v3872 = vmax.f32 %v3840, 0.0
        %v3873 = vmax.f32 %v3841, 0.0
        %v3874 = vmax.f32 %v3842, 0.0
        %v3875 = vmax.f32 %v3843, 0.0
        %v3876 = vmax.f32 %v3844, 0.0
        %v3877 = vmax.f32 %v3845, 0.0
        %v3878 = vmax.f32 %v3846, 0.0
        %v3879 = vmax.f32 %v3847, 0.0
        %v3880 = vmax.f32 %v3848, 0.0
        %v3881 = vmax.f32 %v3849, 0.0
        %v3882 = vmax.f32 %v3850, 0.0
        %v3883 = vadd.f32 %v3851, %v939
        %v3884 = vadd.f32 %v3852, %v940
        %v3885 = vadd.f32 %v3853, %v941
        %v3886 = vadd.f32 %v3854, %v942
        %v3887 = vadd.f32 %v3855, %v943
        %v3888 = vadd.f32 %v3856, %v944
        %v3889 = vadd.f32 %v3857, %v945
        %v3890 = vadd.f32 %v3858, %v946
        %v3891 = vadd.f32 %v3859, %v947
        %v3892 = vadd.f32 %v3860, %v948
        %v3893 = vadd.f32 %v3861, %v949
        %v3894 = vadd.f32 %v3862, %v950
        %v3895 = vadd.f32 %v3863, %v951
        %v3896 = vadd.f32 %v3864, %v952
        %v3897 = vadd.f32 %v3865, %v953
        %v3898 = vadd.f32 %v3866, %v954
        %v3899 = vadd.f32 %v3867, %v955
        %v3900 = vadd.f32 %v3868, %v956
        %v3901 = vadd.f32 %v3869, %v957
        %v3902 = vadd.f32 %v3870, %v958
        %v3903 = vadd.f32 %v3871, %v959
        %v3904 = vadd.f32 %v3872, %v960
        %v3905 = vadd.f32 %v3873, %v961
        %v3906 = vadd.f32 %v3874, %v962
        %v3907 = vadd.f32 %v3875, %v963
        %v3908 = vadd.f32 %v3876, %v964
        %v3909 = vadd.f32 %v3877, %v965
        %v3910 = vadd.f32 %v3878, %v966
        %v3911 = vadd.f32 %v3879, %v967
        %v3912 = vadd.f32 %v3880, %v968
        %v3913 = vadd.f32 %v3881, %v969
        %v3914 = vadd.f32 %v3882, %v970
        %3915 = vst.msk [vmem:[#allocation4 + $0x20] sm:$0xff] %vm449, %v3883
        %3916 = vst.msk [vmem:[#allocation4 + $0x28] sm:$0xff] %vm449, %v3884
        %3917 = vst.msk [vmem:[#allocation4 + $0x30] sm:$0xff] %vm449, %v3885
        %3918 = vst.msk [vmem:[#allocation4 + $0x38] sm:$0xff] %vm449, %v3886
        %3919 = vst.msk [vmem:[#allocation4 + $0x40] sm:$0xff] %vm449, %v3887
        %3920 = vst.msk [vmem:[#allocation4 + $0x48] sm:$0xff] %vm449, %v3888
        %3921 = vst.msk [vmem:[#allocation4 + $0x50] sm:$0xff] %vm449, %v3889
        %3922 = vst.msk [vmem:[#allocation4 + $0x58] sm:$0xff] %vm449, %v3890
        %3923 = vst.msk [vmem:[#allocation4 + $0x60] sm:$0xff] %vm449, %v3891
        %3924 = vst.msk [vmem:[#allocation4 + $0x68] sm:$0xff] %vm449, %v3892
        %3925 = vst.msk [vmem:[#allocation4 + $0x70] sm:$0xff] %vm449, %v3893
        %3926 = vst.msk [vmem:[#allocation4 + $0x78] sm:$0xff] %vm449, %v3894
        %3927 = vst.msk [vmem:[#allocation4 + $0x80] sm:$0xff] %vm449, %v3895
        %3928 = vst.msk [vmem:[#allocation4 + $0x88] sm:$0xff] %vm449, %v3896
        %3929 = vst.msk [vmem:[#allocation4 + $0x90] sm:$0xff] %vm449, %v3897
        %3930 = vst.msk [vmem:[#allocation4 + $0x98] sm:$0xff] %vm449, %v3898
        %3931 = vst.msk [vmem:[#allocation4 + $0xa0] sm:$0xff] %vm449, %v3899
        %3932 = vst.msk [vmem:[#allocation4 + $0xa8] sm:$0xff] %vm449, %v3900
        %3933 = vst.msk [vmem:[#allocation4 + $0xb0] sm:$0xff] %vm449, %v3901
        %3934 = vst.msk [vmem:[#allocation4 + $0xb8] sm:$0xff] %vm449, %v3902
        %3935 = vst.msk [vmem:[#allocation4 + $0xc0] sm:$0xff] %vm449, %v3903
        %3936 = vst.msk [vmem:[#allocation4 + $0xc8] sm:$0xff] %vm449, %v3904
        %3937 = vst.msk [vmem:[#allocation4 + $0xd0] sm:$0xff] %vm449, %v3905
        %3938 = vst.msk [vmem:[#allocation4 + $0xd8] sm:$0xff] %vm449, %v3906
        %3939 = vst.msk [vmem:[#allocation4 + $0xe0] sm:$0xff] %vm449, %v3907
        %3940 = vst.msk [vmem:[#allocation4 + $0xe8] sm:$0xff] %vm449, %v3908
        %3941 = vst.msk [vmem:[#allocation4 + $0xf0] sm:$0xff] %vm449, %v3909
        %3942 = vst.msk [vmem:[#allocation4 + $0xf8] sm:$0xff] %vm449, %v3910
        %3943 = vst.msk [vmem:[#allocation4 + $0x100] sm:$0xff] %vm449, %v3911
        %3944 = vst.msk [vmem:[#allocation4 + $0x108] sm:$0xff] %vm449, %v3912
        %3945 = vst.msk [vmem:[#allocation4 + $0x110] sm:$0xff] %vm449, %v3913
        %3946 = vst.msk [vmem:[#allocation4 + $0x118] sm:$0xff] %vm449, %v3914
        %v3947 = vld [vmem:[#allocation4 + $0xf] sm:$0xff]
        %v3948 = vld [vmem:[#allocation4 + $0x17] sm:$0xff]
        %v3949 = vld [vmem:[#allocation4 + $0x1f] sm:$0xff]
        %v3950 = vld [vmem:[#allocation4 + $0x27] sm:$0xff]
        %v3951 = vld [vmem:[#allocation4 + $0x2f] sm:$0xff]
        %v3952 = vld [vmem:[#allocation4 + $0x37] sm:$0xff]
        %v3953 = vld [vmem:[#allocation4 + $0x3f] sm:$0xff]
        %v3954 = vld [vmem:[#allocation4 + $0x47] sm:$0xff]
        %v3955 = vld [vmem:[#allocation4 + $0x4f] sm:$0xff]
        %v3956 = vld [vmem:[#allocation4 + $0x57] sm:$0xff]
        %v3957 = vld [vmem:[#allocation4 + $0x5f] sm:$0xff]
        %v3958 = vld [vmem:[#allocation4 + $0x67] sm:$0xff]
        %v3959 = vld [vmem:[#allocation4 + $0x6f] sm:$0xff]
        %v3960 = vld [vmem:[#allocation4 + $0x77] sm:$0xff]
        %v3961 = vld [vmem:[#allocation4 + $0x7f] sm:$0xff]
        %v3962 = vld [vmem:[#allocation4 + $0x87] sm:$0xff]
        %v3963 = vld [vmem:[#allocation4 + $0x8f] sm:$0xff]
        %v3964 = vld [vmem:[#allocation4 + $0x97] sm:$0xff]
        %v3965 = vld [vmem:[#allocation4 + $0x9f] sm:$0xff]
        %v3966 = vld [vmem:[#allocation4 + $0xa7] sm:$0xff]
        %v3967 = vld [vmem:[#allocation4 + $0xaf] sm:$0xff]
        %v3968 = vld [vmem:[#allocation4 + $0xb7] sm:$0xff]
        %v3969 = vld [vmem:[#allocation4 + $0xbf] sm:$0xff]
        %v3970 = vld [vmem:[#allocation4 + $0xc7] sm:$0xff]
        %v3971 = vld [vmem:[#allocation4 + $0xcf] sm:$0xff]
        %v3972 = vld [vmem:[#allocation4 + $0xd7] sm:$0xff]
        %v3973 = vld [vmem:[#allocation4 + $0xdf] sm:$0xff]
        %v3974 = vld [vmem:[#allocation4 + $0xe7] sm:$0xff]
        %v3975 = vld [vmem:[#allocation4 + $0xef] sm:$0xff]
        %v3976 = vld [vmem:[#allocation4 + $0xf7] sm:$0xff]
        %v3977 = vld [vmem:[#allocation4 + $0xff] sm:$0xff]
        %v3978 = vld [vmem:[#allocation4 + $0x107] sm:$0xff]
        %v3979 = vsel %vm1418, 0.0, %v3947
        %v3980 = vsel %vm1419, 0.0, %v3948
        %v3981 = vsel %vm1420, 0.0, %v3949
        %v3982 = vsel %vm1421, 0.0, %v3950
        %v3983 = vsel %vm1422, 0.0, %v3951
        %v3984 = vsel %vm1423, 0.0, %v3952
        %v3985 = vsel %vm1424, 0.0, %v3953
        %v3986 = vsel %vm1425, 0.0, %v3954
        %v3987 = vsel %vm1426, 0.0, %v3955
        %v3988 = vsel %vm1427, 0.0, %v3956
        %v3989 = vsel %vm1428, 0.0, %v3957
        %v3990 = vsel %vm1429, 0.0, %v3958
        %v3991 = vsel %vm1430, 0.0, %v3959
        %v3992 = vsel %vm1431, 0.0, %v3960
        %v3993 = vsel %vm1432, 0.0, %v3961
        %v3994 = vsel %vm1433, 0.0, %v3962
        %v3995 = vsel %vm1434, 0.0, %v3963
        %v3996 = vsel %vm1435, 0.0, %v3964
        %v3997 = vsel %vm1436, 0.0, %v3965
        %v3998 = vsel %vm1437, 0.0, %v3966
        %v3999 = vsel %vm1438, 0.0, %v3967
        %v4000 = vsel %vm1439, 0.0, %v3968
        %v4001 = vsel %vm1440, 0.0, %v3969
        %v4002 = vsel %vm1441, 0.0, %v3970
        %v4003 = vsel %vm1442, 0.0, %v3971
        %v4004 = vsel %vm1443, 0.0, %v3972
        %v4005 = vsel %vm1444, 0.0, %v3973
        %v4006 = vsel %vm1445, 0.0, %v3974
        %v4007 = vsel %vm1446, 0.0, %v3975
        %v4008 = vsel %vm1447, 0.0, %v3976
        %v4009 = vsel %vm1448, 0.0, %v3977
        %v4010 = vsel %vm1449, 0.0, %v3978
        %v4011 = vpack.c.bf16 %v3980, %v3979
        %v4012 = vpack.c.bf16 %v3982, %v3981
        %v4013 = vpack.c.bf16 %v3984, %v3983
        %v4014 = vpack.c.bf16 %v3986, %v3985
        %v4015 = vpack.c.bf16 %v3988, %v3987
        %v4016 = vpack.c.bf16 %v3990, %v3989
        %v4017 = vpack.c.bf16 %v3992, %v3991
        %v4018 = vpack.c.bf16 %v3994, %v3993
        %v4019 = vpack.c.bf16 %v3996, %v3995
        %v4020 = vpack.c.bf16 %v3998, %v3997
        %v4021 = vpack.c.bf16 %v4000, %v3999
        %v4022 = vpack.c.bf16 %v4002, %v4001
        %v4023 = vpack.c.bf16 %v4004, %v4003
        %v4024 = vpack.c.bf16 %v4006, %v4005
        %v4025 = vpack.c.bf16 %v4008, %v4007
        %v4026 = vpack.c.bf16 %v4010, %v4009
        %4027 = vst.msk [vmem:[#allocation5] sm:$0xff] %vm449, %v4011
        %4028 = vst.msk [vmem:[#allocation5 + $0x18] sm:$0xff] %vm449, %v4012
        %4029 = vst.msk [vmem:[#allocation5 + $0x30] sm:$0xff] %vm449, %v4013
        %4030 = vst.msk [vmem:[#allocation5 + $0x48] sm:$0xff] %vm449, %v4014
        %4031 = vst.msk [vmem:[#allocation5 + $0x60] sm:$0xff] %vm449, %v4015
        %4032 = vst.msk [vmem:[#allocation5 + $0x78] sm:$0xff] %vm449, %v4016
        %4033 = vst.msk [vmem:[#allocation5 + $0x90] sm:$0xff] %vm449, %v4017
        %4034 = vst.msk [vmem:[#allocation5 + $0xa8] sm:$0xff] %vm449, %v4018
        %4035 = vst.msk [vmem:[#allocation5 + $0xc0] sm:$0xff] %vm449, %v4019
        %4036 = vst.msk [vmem:[#allocation5 + $0xd8] sm:$0xff] %vm449, %v4020
        %4037 = vst.msk [vmem:[#allocation5 + $0xf0] sm:$0xff] %vm449, %v4021
        %4038 = vst.msk [vmem:[#allocation5 + $0x108] sm:$0xff] %vm449, %v4022
        %4039 = vst.msk [vmem:[#allocation5 + $0x120] sm:$0xff] %vm449, %v4023
        %4040 = vst.msk [vmem:[#allocation5 + $0x138] sm:$0xff] %vm449, %v4024
        %4041 = vst.msk [vmem:[#allocation5 + $0x150] sm:$0xff] %vm449, %v4025
        %4042 = vst.msk [vmem:[#allocation5 + $0x168] sm:$0xff] %vm449, %v4026
        %v4043 = vld [vmem:[#allocation4 + $0x10] sm:$0xff]
        %v4044 = vld [vmem:[#allocation4 + $0x18] sm:$0xff]
        %v4045 = vld [vmem:[#allocation4 + $0x20] sm:$0xff]
        %v4046 = vld [vmem:[#allocation4 + $0x28] sm:$0xff]
        %v4047 = vld [vmem:[#allocation4 + $0x30] sm:$0xff]
        %v4048 = vld [vmem:[#allocation4 + $0x38] sm:$0xff]
        %v4049 = vld [vmem:[#allocation4 + $0x40] sm:$0xff]
        %v4050 = vld [vmem:[#allocation4 + $0x48] sm:$0xff]
        %v4051 = vld [vmem:[#allocation4 + $0x50] sm:$0xff]
        %v4052 = vld [vmem:[#allocation4 + $0x58] sm:$0xff]
        %v4053 = vld [vmem:[#allocation4 + $0x60] sm:$0xff]
        %v4054 = vld [vmem:[#allocation4 + $0x68] sm:$0xff]
        %v4055 = vld [vmem:[#allocation4 + $0x70] sm:$0xff]
        %v4056 = vld [vmem:[#allocation4 + $0x78] sm:$0xff]
        %v4057 = vld [vmem:[#allocation4 + $0x80] sm:$0xff]
        %v4058 = vld [vmem:[#allocation4 + $0x88] sm:$0xff]
        %v4059 = vld [vmem:[#allocation4 + $0x90] sm:$0xff]
        %v4060 = vld [vmem:[#allocation4 + $0x98] sm:$0xff]
        %v4061 = vld [vmem:[#allocation4 + $0xa0] sm:$0xff]
        %v4062 = vld [vmem:[#allocation4 + $0xa8] sm:$0xff]
        %v4063 = vld [vmem:[#allocation4 + $0xb0] sm:$0xff]
        %v4064 = vld [vmem:[#allocation4 + $0xb8] sm:$0xff]
        %v4065 = vld [vmem:[#allocation4 + $0xc0] sm:$0xff]
        %v4066 = vld [vmem:[#allocation4 + $0xc8] sm:$0xff]
        %v4067 = vld [vmem:[#allocation4 + $0xd0] sm:$0xff]
        %v4068 = vld [vmem:[#allocation4 + $0xd8] sm:$0xff]
        %v4069 = vld [vmem:[#allocation4 + $0xe0] sm:$0xff]
        %v4070 = vld [vmem:[#allocation4 + $0xe8] sm:$0xff]
        %v4071 = vld [vmem:[#allocation4 + $0xf0] sm:$0xff]
        %v4072 = vld [vmem:[#allocation4 + $0xf8] sm:$0xff]
        %v4073 = vld [vmem:[#allocation4 + $0x100] sm:$0xff]
        %v4074 = vld [vmem:[#allocation4 + $0x108] sm:$0xff]
        %v4075 = vpack.c.bf16 %v4044, %v4043
        %v4076 = vpack.c.bf16 %v4046, %v4045
        %v4077 = vpack.c.bf16 %v4048, %v4047
        %v4078 = vpack.c.bf16 %v4050, %v4049
        %v4079 = vpack.c.bf16 %v4052, %v4051
        %v4080 = vpack.c.bf16 %v4054, %v4053
        %v4081 = vpack.c.bf16 %v4056, %v4055
        %v4082 = vpack.c.bf16 %v4058, %v4057
        %v4083 = vpack.c.bf16 %v4060, %v4059
        %v4084 = vpack.c.bf16 %v4062, %v4061
        %v4085 = vpack.c.bf16 %v4064, %v4063
        %v4086 = vpack.c.bf16 %v4066, %v4065
        %v4087 = vpack.c.bf16 %v4068, %v4067
        %v4088 = vpack.c.bf16 %v4070, %v4069
        %v4089 = vpack.c.bf16 %v4072, %v4071
        %v4090 = vpack.c.bf16 %v4074, %v4073
        %4107 = vrot.lane.b32.xlu0 %v4075, 32
        %v4108 = vpop.permute.xlu0 %4107
        %4109 = vrot.lane.b32.xlu0 %v4076, 32
        %v4110 = vpop.permute.xlu0 %4109
        %4111 = vrot.lane.b32.xlu0 %v4077, 32
        %v4112 = vpop.permute.xlu0 %4111
        %4113 = vrot.lane.b32.xlu0 %v4078, 32
        %v4114 = vpop.permute.xlu0 %4113
        %4115 = vrot.lane.b32.xlu0 %v4079, 32
        %v4116 = vpop.permute.xlu0 %4115
        %4117 = vrot.lane.b32.xlu0 %v4080, 32
        %v4118 = vpop.permute.xlu0 %4117
        %4119 = vrot.lane.b32.xlu0 %v4081, 32
        %v4120 = vpop.permute.xlu0 %4119
        %4121 = vrot.lane.b32.xlu0 %v4082, 32
        %v4122 = vpop.permute.xlu0 %4121
        %4123 = vrot.lane.b32.xlu0 %v4083, 32
        %v4124 = vpop.permute.xlu0 %4123
        %4125 = vrot.lane.b32.xlu0 %v4084, 32
        %v4126 = vpop.permute.xlu0 %4125
        %4127 = vrot.lane.b32.xlu0 %v4085, 32
        %v4128 = vpop.permute.xlu0 %4127
        %4129 = vrot.lane.b32.xlu0 %v4086, 32
        %v4130 = vpop.permute.xlu0 %4129
        %4131 = vrot.lane.b32.xlu0 %v4087, 32
        %v4132 = vpop.permute.xlu0 %4131
        %4133 = vrot.lane.b32.xlu0 %v4088, 32
        %v4134 = vpop.permute.xlu0 %4133
        %4135 = vrot.lane.b32.xlu0 %v4089, 32
        %v4136 = vpop.permute.xlu0 %4135
        %4137 = vrot.lane.b32.xlu0 %v4090, 32
        %v4138 = vpop.permute.xlu0 %4137
        %vm4155 = vcmask 523520
        %4156 = vst.msk [vmem:[#allocation5] sm:$0xff] %vm4155, %v4108
        %4157 = vst.msk [vmem:[#allocation5 + $0x18] sm:$0xff] %vm4155, %v4110
        %4158 = vst.msk [vmem:[#allocation5 + $0x30] sm:$0xff] %vm4155, %v4112
        %4159 = vst.msk [vmem:[#allocation5 + $0x48] sm:$0xff] %vm4155, %v4114
        %4160 = vst.msk [vmem:[#allocation5 + $0x60] sm:$0xff] %vm4155, %v4116
        %4161 = vst.msk [vmem:[#allocation5 + $0x78] sm:$0xff] %vm4155, %v4118
        %4162 = vst.msk [vmem:[#allocation5 + $0x90] sm:$0xff] %vm4155, %v4120
        %4163 = vst.msk [vmem:[#allocation5 + $0xa8] sm:$0xff] %vm4155, %v4122
        %4164 = vst.msk [vmem:[#allocation5 + $0xc0] sm:$0xff] %vm4155, %v4124
        %4165 = vst.msk [vmem:[#allocation5 + $0xd8] sm:$0xff] %vm4155, %v4126
        %4166 = vst.msk [vmem:[#allocation5 + $0xf0] sm:$0xff] %vm4155, %v4128
        %4167 = vst.msk [vmem:[#allocation5 + $0x108] sm:$0xff] %vm4155, %v4130
        %4168 = vst.msk [vmem:[#allocation5 + $0x120] sm:$0xff] %vm4155, %v4132
        %4169 = vst.msk [vmem:[#allocation5 + $0x138] sm:$0xff] %vm4155, %v4134
        %4170 = vst.msk [vmem:[#allocation5 + $0x150] sm:$0xff] %vm4155, %v4136
        %4171 = vst.msk [vmem:[#allocation5 + $0x168] sm:$0xff] %vm4155, %v4138
        %v4172 = vld [vmem:[#allocation4 + $0x11] sm:$0xff]
        %v4173 = vld [vmem:[#allocation4 + $0x19] sm:$0xff]
        %v4174 = vld [vmem:[#allocation4 + $0x21] sm:$0xff]
        %v4175 = vld [vmem:[#allocation4 + $0x29] sm:$0xff]
        %v4176 = vld [vmem:[#allocation4 + $0x31] sm:$0xff]
        %v4177 = vld [vmem:[#allocation4 + $0x39] sm:$0xff]
        %v4178 = vld [vmem:[#allocation4 + $0x41] sm:$0xff]
        %v4179 = vld [vmem:[#allocation4 + $0x49] sm:$0xff]
        %v4180 = vld [vmem:[#allocation4 + $0x51] sm:$0xff]
        %v4181 = vld [vmem:[#allocation4 + $0x59] sm:$0xff]
        %v4182 = vld [vmem:[#allocation4 + $0x61] sm:$0xff]
        %v4183 = vld [vmem:[#allocation4 + $0x69] sm:$0xff]
        %v4184 = vld [vmem:[#allocation4 + $0x71] sm:$0xff]
        %v4185 = vld [vmem:[#allocation4 + $0x79] sm:$0xff]
        %v4186 = vld [vmem:[#allocation4 + $0x81] sm:$0xff]
        %v4187 = vld [vmem:[#allocation4 + $0x89] sm:$0xff]
        %v4188 = vld [vmem:[#allocation4 + $0x91] sm:$0xff]
        %v4189 = vld [vmem:[#allocation4 + $0x99] sm:$0xff]
        %v4190 = vld [vmem:[#allocation4 + $0xa1] sm:$0xff]
        %v4191 = vld [vmem:[#allocation4 + $0xa9] sm:$0xff]
        %v4192 = vld [vmem:[#allocation4 + $0xb1] sm:$0xff]
        %v4193 = vld [vmem:[#allocation4 + $0xb9] sm:$0xff]
        %v4194 = vld [vmem:[#allocation4 + $0xc1] sm:$0xff]
        %v4195 = vld [vmem:[#allocation4 + $0xc9] sm:$0xff]
        %v4196 = vld [vmem:[#allocation4 + $0xd1] sm:$0xff]
        %v4197 = vld [vmem:[#allocation4 + $0xd9] sm:$0xff]
        %v4198 = vld [vmem:[#allocation4 + $0xe1] sm:$0xff]
        %v4199 = vld [vmem:[#allocation4 + $0xe9] sm:$0xff]
        %v4200 = vld [vmem:[#allocation4 + $0xf1] sm:$0xff]
        %v4201 = vld [vmem:[#allocation4 + $0xf9] sm:$0xff]
        %v4202 = vld [vmem:[#allocation4 + $0x101] sm:$0xff]
        %v4203 = vld [vmem:[#allocation4 + $0x109] sm:$0xff]
        %v4204 = vsel %vm1707, 0.0, %v4172
        %v4205 = vsel %vm1708, 0.0, %v4173
        %v4206 = vsel %vm1709, 0.0, %v4174
        %v4207 = vsel %vm1710, 0.0, %v4175
        %v4208 = vsel %vm1711, 0.0, %v4176
        %v4209 = vsel %vm1712, 0.0, %v4177
        %v4210 = vsel %vm1713, 0.0, %v4178
        %v4211 = vsel %vm1714, 0.0, %v4179
        %v4212 = vsel %vm1715, 0.0, %v4180
        %v4213 = vsel %vm1716, 0.0, %v4181
        %v4214 = vsel %vm1717, 0.0, %v4182
        %v4215 = vsel %vm1718, 0.0, %v4183
        %v4216 = vsel %vm1719, 0.0, %v4184
        %v4217 = vsel %vm1720, 0.0, %v4185
        %v4218 = vsel %vm1721, 0.0, %v4186
        %v4219 = vsel %vm1722, 0.0, %v4187
        %v4220 = vsel %vm1723, 0.0, %v4188
        %v4221 = vsel %vm1724, 0.0, %v4189
        %v4222 = vsel %vm1725, 0.0, %v4190
        %v4223 = vsel %vm1726, 0.0, %v4191
        %v4224 = vsel %vm1727, 0.0, %v4192
        %v4225 = vsel %vm1728, 0.0, %v4193
        %v4226 = vsel %vm1729, 0.0, %v4194
        %v4227 = vsel %vm1730, 0.0, %v4195
        %v4228 = vsel %vm1731, 0.0, %v4196
        %v4229 = vsel %vm1732, 0.0, %v4197
        %v4230 = vsel %vm1733, 0.0, %v4198
        %v4231 = vsel %vm1734, 0.0, %v4199
        %v4232 = vsel %vm1735, 0.0, %v4200
        %v4233 = vsel %vm1736, 0.0, %v4201
        %v4234 = vsel %vm1737, 0.0, %v4202
        %v4235 = vsel %vm1738, 0.0, %v4203
        %v4236 = vpack.c.bf16 %v4205, %v4204
        %v4237 = vpack.c.bf16 %v4207, %v4206
        %v4238 = vpack.c.bf16 %v4209, %v4208
        %v4239 = vpack.c.bf16 %v4211, %v4210
        %v4240 = vpack.c.bf16 %v4213, %v4212
        %v4241 = vpack.c.bf16 %v4215, %v4214
        %v4242 = vpack.c.bf16 %v4217, %v4216
        %v4243 = vpack.c.bf16 %v4219, %v4218
        %v4244 = vpack.c.bf16 %v4221, %v4220
        %v4245 = vpack.c.bf16 %v4223, %v4222
        %v4246 = vpack.c.bf16 %v4225, %v4224
        %v4247 = vpack.c.bf16 %v4227, %v4226
        %v4248 = vpack.c.bf16 %v4229, %v4228
        %v4249 = vpack.c.bf16 %v4231, %v4230
        %v4250 = vpack.c.bf16 %v4233, %v4232
        %v4251 = vpack.c.bf16 %v4235, %v4234
        %4268 = vrot.lane.b32.xlu0 %v4236, 64
        %v4269 = vpop.permute.xlu0 %4268
        %4270 = vrot.lane.b32.xlu0 %v4237, 64
        %v4271 = vpop.permute.xlu0 %4270
        %4272 = vrot.lane.b32.xlu0 %v4238, 64
        %v4273 = vpop.permute.xlu0 %4272
        %4274 = vrot.lane.b32.xlu0 %v4239, 64
        %v4275 = vpop.permute.xlu0 %4274
        %4276 = vrot.lane.b32.xlu0 %v4240, 64
        %v4277 = vpop.permute.xlu0 %4276
        %4278 = vrot.lane.b32.xlu0 %v4241, 64
        %v4279 = vpop.permute.xlu0 %4278
        %4280 = vrot.lane.b32.xlu0 %v4242, 64
        %v4281 = vpop.permute.xlu0 %4280
        %4282 = vrot.lane.b32.xlu0 %v4243, 64
        %v4283 = vpop.permute.xlu0 %4282
        %4284 = vrot.lane.b32.xlu0 %v4244, 64
        %v4285 = vpop.permute.xlu0 %4284
        %4286 = vrot.lane.b32.xlu0 %v4245, 64
        %v4287 = vpop.permute.xlu0 %4286
        %4288 = vrot.lane.b32.xlu0 %v4246, 64
        %v4289 = vpop.permute.xlu0 %4288
        %4290 = vrot.lane.b32.xlu0 %v4247, 64
        %v4291 = vpop.permute.xlu0 %4290
        %4292 = vrot.lane.b32.xlu0 %v4248, 64
        %v4293 = vpop.permute.xlu0 %4292
        %4294 = vrot.lane.b32.xlu0 %v4249, 64
        %v4295 = vpop.permute.xlu0 %4294
        %4296 = vrot.lane.b32.xlu0 %v4250, 64
        %v4297 = vpop.permute.xlu0 %4296
        %4298 = vrot.lane.b32.xlu0 %v4251, 64
        %v4299 = vpop.permute.xlu0 %4298
        %vm4316 = vcmask 785920
        %4317 = vst.msk [vmem:[#allocation5] sm:$0xff] %vm4316, %v4269
        %4318 = vst.msk [vmem:[#allocation5 + $0x18] sm:$0xff] %vm4316, %v4271
        %4319 = vst.msk [vmem:[#allocation5 + $0x30] sm:$0xff] %vm4316, %v4273
        %4320 = vst.msk [vmem:[#allocation5 + $0x48] sm:$0xff] %vm4316, %v4275
        %4321 = vst.msk [vmem:[#allocation5 + $0x60] sm:$0xff] %vm4316, %v4277
        %4322 = vst.msk [vmem:[#allocation5 + $0x78] sm:$0xff] %vm4316, %v4279
        %4323 = vst.msk [vmem:[#allocation5 + $0x90] sm:$0xff] %vm4316, %v4281
        %4324 = vst.msk [vmem:[#allocation5 + $0xa8] sm:$0xff] %vm4316, %v4283
        %4325 = vst.msk [vmem:[#allocation5 + $0xc0] sm:$0xff] %vm4316, %v4285
        %4326 = vst.msk [vmem:[#allocation5 + $0xd8] sm:$0xff] %vm4316, %v4287
        %4327 = vst.msk [vmem:[#allocation5 + $0xf0] sm:$0xff] %vm4316, %v4289
        %4328 = vst.msk [vmem:[#allocation5 + $0x108] sm:$0xff] %vm4316, %v4291
        %4329 = vst.msk [vmem:[#allocation5 + $0x120] sm:$0xff] %vm4316, %v4293
        %4330 = vst.msk [vmem:[#allocation5 + $0x138] sm:$0xff] %vm4316, %v4295
        %4331 = vst.msk [vmem:[#allocation5 + $0x150] sm:$0xff] %vm4316, %v4297
        %4332 = vst.msk [vmem:[#allocation5 + $0x168] sm:$0xff] %vm4316, %v4299
        %v4333 = vld [vmem:[#allocation4 + $0x1f] sm:$0xff]
        %v4334 = vld [vmem:[#allocation4 + $0x27] sm:$0xff]
        %v4335 = vld [vmem:[#allocation4 + $0x2f] sm:$0xff]
        %v4336 = vld [vmem:[#allocation4 + $0x37] sm:$0xff]
        %v4337 = vld [vmem:[#allocation4 + $0x3f] sm:$0xff]
        %v4338 = vld [vmem:[#allocation4 + $0x47] sm:$0xff]
        %v4339 = vld [vmem:[#allocation4 + $0x4f] sm:$0xff]
        %v4340 = vld [vmem:[#allocation4 + $0x57] sm:$0xff]
        %v4341 = vld [vmem:[#allocation4 + $0x5f] sm:$0xff]
        %v4342 = vld [vmem:[#allocation4 + $0x67] sm:$0xff]
        %v4343 = vld [vmem:[#allocation4 + $0x6f] sm:$0xff]
        %v4344 = vld [vmem:[#allocation4 + $0x77] sm:$0xff]
        %v4345 = vld [vmem:[#allocation4 + $0x7f] sm:$0xff]
        %v4346 = vld [vmem:[#allocation4 + $0x87] sm:$0xff]
        %v4347 = vld [vmem:[#allocation4 + $0x8f] sm:$0xff]
        %v4348 = vld [vmem:[#allocation4 + $0x97] sm:$0xff]
        %v4349 = vld [vmem:[#allocation4 + $0x9f] sm:$0xff]
        %v4350 = vld [vmem:[#allocation4 + $0xa7] sm:$0xff]
        %v4351 = vld [vmem:[#allocation4 + $0xaf] sm:$0xff]
        %v4352 = vld [vmem:[#allocation4 + $0xb7] sm:$0xff]
        %v4353 = vld [vmem:[#allocation4 + $0xbf] sm:$0xff]
        %v4354 = vld [vmem:[#allocation4 + $0xc7] sm:$0xff]
        %v4355 = vld [vmem:[#allocation4 + $0xcf] sm:$0xff]
        %v4356 = vld [vmem:[#allocation4 + $0xd7] sm:$0xff]
        %v4357 = vld [vmem:[#allocation4 + $0xdf] sm:$0xff]
        %v4358 = vld [vmem:[#allocation4 + $0xe7] sm:$0xff]
        %v4359 = vld [vmem:[#allocation4 + $0xef] sm:$0xff]
        %v4360 = vld [vmem:[#allocation4 + $0xf7] sm:$0xff]
        %v4361 = vld [vmem:[#allocation4 + $0xff] sm:$0xff]
        %v4362 = vld [vmem:[#allocation4 + $0x107] sm:$0xff]
        %v4363 = vld [vmem:[#allocation4 + $0x10f] sm:$0xff]
        %v4364 = vld [vmem:[#allocation4 + $0x117] sm:$0xff]
        %v4365 = vsel %vm1418, 0.0, %v4333
        %v4366 = vsel %vm1419, 0.0, %v4334
        %v4367 = vsel %vm1420, 0.0, %v4335
        %v4368 = vsel %vm1421, 0.0, %v4336
        %v4369 = vsel %vm1422, 0.0, %v4337
        %v4370 = vsel %vm1423, 0.0, %v4338
        %v4371 = vsel %vm1424, 0.0, %v4339
        %v4372 = vsel %vm1425, 0.0, %v4340
        %v4373 = vsel %vm1426, 0.0, %v4341
        %v4374 = vsel %vm1427, 0.0, %v4342
        %v4375 = vsel %vm1428, 0.0, %v4343
        %v4376 = vsel %vm1429, 0.0, %v4344
        %v4377 = vsel %vm1430, 0.0, %v4345
        %v4378 = vsel %vm1431, 0.0, %v4346
        %v4379 = vsel %vm1432, 0.0, %v4347
        %v4380 = vsel %vm1433, 0.0, %v4348
        %v4381 = vsel %vm1434, 0.0, %v4349
        %v4382 = vsel %vm1435, 0.0, %v4350
        %v4383 = vsel %vm1436, 0.0, %v4351
        %v4384 = vsel %vm1437, 0.0, %v4352
        %v4385 = vsel %vm1438, 0.0, %v4353
        %v4386 = vsel %vm1439, 0.0, %v4354
        %v4387 = vsel %vm1440, 0.0, %v4355
        %v4388 = vsel %vm1441, 0.0, %v4356
        %v4389 = vsel %vm1442, 0.0, %v4357
        %v4390 = vsel %vm1443, 0.0, %v4358
        %v4391 = vsel %vm1444, 0.0, %v4359
        %v4392 = vsel %vm1445, 0.0, %v4360
        %v4393 = vsel %vm1446, 0.0, %v4361
        %v4394 = vsel %vm1447, 0.0, %v4362
        %v4395 = vsel %vm1448, 0.0, %v4363
        %v4396 = vsel %vm1449, 0.0, %v4364
        %v4397 = vpack.c.bf16 %v4366, %v4365
        %v4398 = vpack.c.bf16 %v4368, %v4367
        %v4399 = vpack.c.bf16 %v4370, %v4369
        %v4400 = vpack.c.bf16 %v4372, %v4371
        %v4401 = vpack.c.bf16 %v4374, %v4373
        %v4402 = vpack.c.bf16 %v4376, %v4375
        %v4403 = vpack.c.bf16 %v4378, %v4377
        %v4404 = vpack.c.bf16 %v4380, %v4379
        %v4405 = vpack.c.bf16 %v4382, %v4381
        %v4406 = vpack.c.bf16 %v4384, %v4383
        %v4407 = vpack.c.bf16 %v4386, %v4385
        %v4408 = vpack.c.bf16 %v4388, %v4387
        %v4409 = vpack.c.bf16 %v4390, %v4389
        %v4410 = vpack.c.bf16 %v4392, %v4391
        %v4411 = vpack.c.bf16 %v4394, %v4393
        %v4412 = vpack.c.bf16 %v4396, %v4395
        %4429 = vrot.lane.b32.xlu0 %v4397, 96
        %v4430 = vpop.permute.xlu0 %4429
        %4431 = vrot.lane.b32.xlu0 %v4398, 96
        %v4432 = vpop.permute.xlu0 %4431
        %4433 = vrot.lane.b32.xlu0 %v4399, 96
        %v4434 = vpop.permute.xlu0 %4433
        %4435 = vrot.lane.b32.xlu0 %v4400, 96
        %v4436 = vpop.permute.xlu0 %4435
        %4437 = vrot.lane.b32.xlu0 %v4401, 96
        %v4438 = vpop.permute.xlu0 %4437
        %4439 = vrot.lane.b32.xlu0 %v4402, 96
        %v4440 = vpop.permute.xlu0 %4439
        %4441 = vrot.lane.b32.xlu0 %v4403, 96
        %v4442 = vpop.permute.xlu0 %4441
        %4443 = vrot.lane.b32.xlu0 %v4404, 96
        %v4444 = vpop.permute.xlu0 %4443
        %4445 = vrot.lane.b32.xlu0 %v4405, 96
        %v4446 = vpop.permute.xlu0 %4445
        %4447 = vrot.lane.b32.xlu0 %v4406, 96
        %v4448 = vpop.permute.xlu0 %4447
        %4449 = vrot.lane.b32.xlu0 %v4407, 96
        %v4450 = vpop.permute.xlu0 %4449
        %4451 = vrot.lane.b32.xlu0 %v4408, 96
        %v4452 = vpop.permute.xlu0 %4451
        %4453 = vrot.lane.b32.xlu0 %v4409, 96
        %v4454 = vpop.permute.xlu0 %4453
        %4455 = vrot.lane.b32.xlu0 %v4410, 96
        %v4456 = vpop.permute.xlu0 %4455
        %4457 = vrot.lane.b32.xlu0 %v4411, 96
        %v4458 = vpop.permute.xlu0 %4457
        %4459 = vrot.lane.b32.xlu0 %v4412, 96
        %v4460 = vpop.permute.xlu0 %4459
        %vm4477 = vcmask 1048320
        %4478 = vst.msk [vmem:[#allocation5] sm:$0xff] %vm4477, %v4430
        %4479 = vst.msk [vmem:[#allocation5 + $0x18] sm:$0xff] %vm4477, %v4432
        %4480 = vst.msk [vmem:[#allocation5 + $0x30] sm:$0xff] %vm4477, %v4434
        %4481 = vst.msk [vmem:[#allocation5 + $0x48] sm:$0xff] %vm4477, %v4436
        %4482 = vst.msk [vmem:[#allocation5 + $0x60] sm:$0xff] %vm4477, %v4438
        %4483 = vst.msk [vmem:[#allocation5 + $0x78] sm:$0xff] %vm4477, %v4440
        %4484 = vst.msk [vmem:[#allocation5 + $0x90] sm:$0xff] %vm4477, %v4442
        %4485 = vst.msk [vmem:[#allocation5 + $0xa8] sm:$0xff] %vm4477, %v4444
        %4486 = vst.msk [vmem:[#allocation5 + $0xc0] sm:$0xff] %vm4477, %v4446
        %4487 = vst.msk [vmem:[#allocation5 + $0xd8] sm:$0xff] %vm4477, %v4448
        %4488 = vst.msk [vmem:[#allocation5 + $0xf0] sm:$0xff] %vm4477, %v4450
        %4489 = vst.msk [vmem:[#allocation5 + $0x108] sm:$0xff] %vm4477, %v4452
        %4490 = vst.msk [vmem:[#allocation5 + $0x120] sm:$0xff] %vm4477, %v4454
        %4491 = vst.msk [vmem:[#allocation5 + $0x138] sm:$0xff] %vm4477, %v4456
        %4492 = vst.msk [vmem:[#allocation5 + $0x150] sm:$0xff] %vm4477, %v4458
        %4493 = vst.msk [vmem:[#allocation5 + $0x168] sm:$0xff] %vm4477, %v4460
        %v4494 = vld [vmem:[#allocation4 + $0x20] sm:$0xff]
        %v4495 = vld [vmem:[#allocation4 + $0x28] sm:$0xff]
        %v4496 = vld [vmem:[#allocation4 + $0x30] sm:$0xff]
        %v4497 = vld [vmem:[#allocation4 + $0x38] sm:$0xff]
        %v4498 = vld [vmem:[#allocation4 + $0x40] sm:$0xff]
        %v4499 = vld [vmem:[#allocation4 + $0x48] sm:$0xff]
        %v4500 = vld [vmem:[#allocation4 + $0x50] sm:$0xff]
        %v4501 = vld [vmem:[#allocation4 + $0x58] sm:$0xff]
        %v4502 = vld [vmem:[#allocation4 + $0x60] sm:$0xff]
        %v4503 = vld [vmem:[#allocation4 + $0x68] sm:$0xff]
        %v4504 = vld [vmem:[#allocation4 + $0x70] sm:$0xff]
        %v4505 = vld [vmem:[#allocation4 + $0x78] sm:$0xff]
        %v4506 = vld [vmem:[#allocation4 + $0x80] sm:$0xff]
        %v4507 = vld [vmem:[#allocation4 + $0x88] sm:$0xff]
        %v4508 = vld [vmem:[#allocation4 + $0x90] sm:$0xff]
        %v4509 = vld [vmem:[#allocation4 + $0x98] sm:$0xff]
        %v4510 = vld [vmem:[#allocation4 + $0xa0] sm:$0xff]
        %v4511 = vld [vmem:[#allocation4 + $0xa8] sm:$0xff]
        %v4512 = vld [vmem:[#allocation4 + $0xb0] sm:$0xff]
        %v4513 = vld [vmem:[#allocation4 + $0xb8] sm:$0xff]
        %v4514 = vld [vmem:[#allocation4 + $0xc0] sm:$0xff]
        %v4515 = vld [vmem:[#allocation4 + $0xc8] sm:$0xff]
        %v4516 = vld [vmem:[#allocation4 + $0xd0] sm:$0xff]
        %v4517 = vld [vmem:[#allocation4 + $0xd8] sm:$0xff]
        %v4518 = vld [vmem:[#allocation4 + $0xe0] sm:$0xff]
        %v4519 = vld [vmem:[#allocation4 + $0xe8] sm:$0xff]
        %v4520 = vld [vmem:[#allocation4 + $0xf0] sm:$0xff]
        %v4521 = vld [vmem:[#allocation4 + $0xf8] sm:$0xff]
        %v4522 = vld [vmem:[#allocation4 + $0x100] sm:$0xff]
        %v4523 = vld [vmem:[#allocation4 + $0x108] sm:$0xff]
        %v4524 = vld [vmem:[#allocation4 + $0x110] sm:$0xff]
        %v4525 = vld [vmem:[#allocation4 + $0x118] sm:$0xff]
        %v4526 = vpack.c.bf16 %v4495, %v4494
        %v4527 = vpack.c.bf16 %v4497, %v4496
        %v4528 = vpack.c.bf16 %v4499, %v4498
        %v4529 = vpack.c.bf16 %v4501, %v4500
        %v4530 = vpack.c.bf16 %v4503, %v4502
        %v4531 = vpack.c.bf16 %v4505, %v4504
        %v4532 = vpack.c.bf16 %v4507, %v4506
        %v4533 = vpack.c.bf16 %v4509, %v4508
        %v4534 = vpack.c.bf16 %v4511, %v4510
        %v4535 = vpack.c.bf16 %v4513, %v4512
        %v4536 = vpack.c.bf16 %v4515, %v4514
        %v4537 = vpack.c.bf16 %v4517, %v4516
        %v4538 = vpack.c.bf16 %v4519, %v4518
        %v4539 = vpack.c.bf16 %v4521, %v4520
        %v4540 = vpack.c.bf16 %v4523, %v4522
        %v4541 = vpack.c.bf16 %v4525, %v4524
        %4542 = vst.msk [vmem:[#allocation5 + $0x8] sm:$0xff] %vm449, %v4526
        %4543 = vst.msk [vmem:[#allocation5 + $0x20] sm:$0xff] %vm449, %v4527
        %4544 = vst.msk [vmem:[#allocation5 + $0x38] sm:$0xff] %vm449, %v4528
        %4545 = vst.msk [vmem:[#allocation5 + $0x50] sm:$0xff] %vm449, %v4529
        %4546 = vst.msk [vmem:[#allocation5 + $0x68] sm:$0xff] %vm449, %v4530
        %4547 = vst.msk [vmem:[#allocation5 + $0x80] sm:$0xff] %vm449, %v4531
        %4548 = vst.msk [vmem:[#allocation5 + $0x98] sm:$0xff] %vm449, %v4532
        %4549 = vst.msk [vmem:[#allocation5 + $0xb0] sm:$0xff] %vm449, %v4533
        %4550 = vst.msk [vmem:[#allocation5 + $0xc8] sm:$0xff] %vm449, %v4534
        %4551 = vst.msk [vmem:[#allocation5 + $0xe0] sm:$0xff] %vm449, %v4535
        %4552 = vst.msk [vmem:[#allocation5 + $0xf8] sm:$0xff] %vm449, %v4536
        %4553 = vst.msk [vmem:[#allocation5 + $0x110] sm:$0xff] %vm449, %v4537
        %4554 = vst.msk [vmem:[#allocation5 + $0x128] sm:$0xff] %vm449, %v4538
        %4555 = vst.msk [vmem:[#allocation5 + $0x140] sm:$0xff] %vm449, %v4539
        %4556 = vst.msk [vmem:[#allocation5 + $0x158] sm:$0xff] %vm449, %v4540
        %4557 = vst.msk [vmem:[#allocation5 + $0x170] sm:$0xff] %vm449, %v4541
        %v4558 = vld [vmem:[#allocation4 + $0x21] sm:$0xff]
        %v4559 = vld [vmem:[#allocation4 + $0x29] sm:$0xff]
        %v4560 = vld [vmem:[#allocation4 + $0x31] sm:$0xff]
        %v4561 = vld [vmem:[#allocation4 + $0x39] sm:$0xff]
        %v4562 = vld [vmem:[#allocation4 + $0x41] sm:$0xff]
        %v4563 = vld [vmem:[#allocation4 + $0x49] sm:$0xff]
        %v4564 = vld [vmem:[#allocation4 + $0x51] sm:$0xff]
        %v4565 = vld [vmem:[#allocation4 + $0x59] sm:$0xff]
        %v4566 = vld [vmem:[#allocation4 + $0x61] sm:$0xff]
        %v4567 = vld [vmem:[#allocation4 + $0x69] sm:$0xff]
        %v4568 = vld [vmem:[#allocation4 + $0x71] sm:$0xff]
        %v4569 = vld [vmem:[#allocation4 + $0x79] sm:$0xff]
        %v4570 = vld [vmem:[#allocation4 + $0x81] sm:$0xff]
        %v4571 = vld [vmem:[#allocation4 + $0x89] sm:$0xff]
        %v4572 = vld [vmem:[#allocation4 + $0x91] sm:$0xff]
        %v4573 = vld [vmem:[#allocation4 + $0x99] sm:$0xff]
        %v4574 = vld [vmem:[#allocation4 + $0xa1] sm:$0xff]
        %v4575 = vld [vmem:[#allocation4 + $0xa9] sm:$0xff]
        %v4576 = vld [vmem:[#allocation4 + $0xb1] sm:$0xff]
        %v4577 = vld [vmem:[#allocation4 + $0xb9] sm:$0xff]
        %v4578 = vld [vmem:[#allocation4 + $0xc1] sm:$0xff]
        %v4579 = vld [vmem:[#allocation4 + $0xc9] sm:$0xff]
        %v4580 = vld [vmem:[#allocation4 + $0xd1] sm:$0xff]
        %v4581 = vld [vmem:[#allocation4 + $0xd9] sm:$0xff]
        %v4582 = vld [vmem:[#allocation4 + $0xe1] sm:$0xff]
        %v4583 = vld [vmem:[#allocation4 + $0xe9] sm:$0xff]
        %v4584 = vld [vmem:[#allocation4 + $0xf1] sm:$0xff]
        %v4585 = vld [vmem:[#allocation4 + $0xf9] sm:$0xff]
        %v4586 = vld [vmem:[#allocation4 + $0x101] sm:$0xff]
        %v4587 = vld [vmem:[#allocation4 + $0x109] sm:$0xff]
        %v4588 = vld [vmem:[#allocation4 + $0x111] sm:$0xff]
        %v4589 = vld [vmem:[#allocation4 + $0x119] sm:$0xff]
        %v4590 = vsel %vm1707, 0.0, %v4558
        %v4591 = vsel %vm1708, 0.0, %v4559
        %v4592 = vsel %vm1709, 0.0, %v4560
        %v4593 = vsel %vm1710, 0.0, %v4561
        %v4594 = vsel %vm1711, 0.0, %v4562
        %v4595 = vsel %vm1712, 0.0, %v4563
        %v4596 = vsel %vm1713, 0.0, %v4564
        %v4597 = vsel %vm1714, 0.0, %v4565
        %v4598 = vsel %vm1715, 0.0, %v4566
        %v4599 = vsel %vm1716, 0.0, %v4567
        %v4600 = vsel %vm1717, 0.0, %v4568
        %v4601 = vsel %vm1718, 0.0, %v4569
        %v4602 = vsel %vm1719, 0.0, %v4570
        %v4603 = vsel %vm1720, 0.0, %v4571
        %v4604 = vsel %vm1721, 0.0, %v4572
        %v4605 = vsel %vm1722, 0.0, %v4573
        %v4606 = vsel %vm1723, 0.0, %v4574
        %v4607 = vsel %vm1724, 0.0, %v4575
        %v4608 = vsel %vm1725, 0.0, %v4576
        %v4609 = vsel %vm1726, 0.0, %v4577
        %v4610 = vsel %vm1727, 0.0, %v4578
        %v4611 = vsel %vm1728, 0.0, %v4579
        %v4612 = vsel %vm1729, 0.0, %v4580
        %v4613 = vsel %vm1730, 0.0, %v4581
        %v4614 = vsel %vm1731, 0.0, %v4582
        %v4615 = vsel %vm1732, 0.0, %v4583
        %v4616 = vsel %vm1733, 0.0, %v4584
        %v4617 = vsel %vm1734, 0.0, %v4585
        %v4618 = vsel %vm1735, 0.0, %v4586
        %v4619 = vsel %vm1736, 0.0, %v4587
        %v4620 = vsel %vm1737, 0.0, %v4588
        %v4621 = vsel %vm1738, 0.0, %v4589
        %v4622 = vpack.c.bf16 %v4591, %v4590
        %v4623 = vpack.c.bf16 %v4593, %v4592
        %v4624 = vpack.c.bf16 %v4595, %v4594
        %v4625 = vpack.c.bf16 %v4597, %v4596
        %v4626 = vpack.c.bf16 %v4599, %v4598
        %v4627 = vpack.c.bf16 %v4601, %v4600
        %v4628 = vpack.c.bf16 %v4603, %v4602
        %v4629 = vpack.c.bf16 %v4605, %v4604
        %v4630 = vpack.c.bf16 %v4607, %v4606
        %v4631 = vpack.c.bf16 %v4609, %v4608
        %v4632 = vpack.c.bf16 %v4611, %v4610
        %v4633 = vpack.c.bf16 %v4613, %v4612
        %v4634 = vpack.c.bf16 %v4615, %v4614
        %v4635 = vpack.c.bf16 %v4617, %v4616
        %v4636 = vpack.c.bf16 %v4619, %v4618
        %v4637 = vpack.c.bf16 %v4621, %v4620
        %4654 = vrot.lane.b32.xlu0 %v4622, 32
        %v4655 = vpop.permute.xlu0 %4654
        %4656 = vrot.lane.b32.xlu0 %v4623, 32
        %v4657 = vpop.permute.xlu0 %4656
        %4658 = vrot.lane.b32.xlu0 %v4624, 32
        %v4659 = vpop.permute.xlu0 %4658
        %4660 = vrot.lane.b32.xlu0 %v4625, 32
        %v4661 = vpop.permute.xlu0 %4660
        %4662 = vrot.lane.b32.xlu0 %v4626, 32
        %v4663 = vpop.permute.xlu0 %4662
        %4664 = vrot.lane.b32.xlu0 %v4627, 32
        %v4665 = vpop.permute.xlu0 %4664
        %4666 = vrot.lane.b32.xlu0 %v4628, 32
        %v4667 = vpop.permute.xlu0 %4666
        %4668 = vrot.lane.b32.xlu0 %v4629, 32
        %v4669 = vpop.permute.xlu0 %4668
        %4670 = vrot.lane.b32.xlu0 %v4630, 32
        %v4671 = vpop.permute.xlu0 %4670
        %4672 = vrot.lane.b32.xlu0 %v4631, 32
        %v4673 = vpop.permute.xlu0 %4672
        %4674 = vrot.lane.b32.xlu0 %v4632, 32
        %v4675 = vpop.permute.xlu0 %4674
        %4676 = vrot.lane.b32.xlu0 %v4633, 32
        %v4677 = vpop.permute.xlu0 %4676
        %4678 = vrot.lane.b32.xlu0 %v4634, 32
        %v4679 = vpop.permute.xlu0 %4678
        %4680 = vrot.lane.b32.xlu0 %v4635, 32
        %v4681 = vpop.permute.xlu0 %4680
        %4682 = vrot.lane.b32.xlu0 %v4636, 32
        %v4683 = vpop.permute.xlu0 %4682
        %4684 = vrot.lane.b32.xlu0 %v4637, 32
        %v4685 = vpop.permute.xlu0 %4684
        %4702 = vst.msk [vmem:[#allocation5 + $0x8] sm:$0xff] %vm4155, %v4655
        %4703 = vst.msk [vmem:[#allocation5 + $0x20] sm:$0xff] %vm4155, %v4657
        %4704 = vst.msk [vmem:[#allocation5 + $0x38] sm:$0xff] %vm4155, %v4659
        %4705 = vst.msk [vmem:[#allocation5 + $0x50] sm:$0xff] %vm4155, %v4661
        %4706 = vst.msk [vmem:[#allocation5 + $0x68] sm:$0xff] %vm4155, %v4663
        %4707 = vst.msk [vmem:[#allocation5 + $0x80] sm:$0xff] %vm4155, %v4665
        %4708 = vst.msk [vmem:[#allocation5 + $0x98] sm:$0xff] %vm4155, %v4667
        %4709 = vst.msk [vmem:[#allocation5 + $0xb0] sm:$0xff] %vm4155, %v4669
        %4710 = vst.msk [vmem:[#allocation5 + $0xc8] sm:$0xff] %vm4155, %v4671
        %4711 = vst.msk [vmem:[#allocation5 + $0xe0] sm:$0xff] %vm4155, %v4673
        %4712 = vst.msk [vmem:[#allocation5 + $0xf8] sm:$0xff] %vm4155, %v4675
        %4713 = vst.msk [vmem:[#allocation5 + $0x110] sm:$0xff] %vm4155, %v4677
        %4714 = vst.msk [vmem:[#allocation5 + $0x128] sm:$0xff] %vm4155, %v4679
        %4715 = vst.msk [vmem:[#allocation5 + $0x140] sm:$0xff] %vm4155, %v4681
        %4716 = vst.msk [vmem:[#allocation5 + $0x158] sm:$0xff] %vm4155, %v4683
        %4717 = vst.msk [vmem:[#allocation5 + $0x170] sm:$0xff] %vm4155, %v4685
        %v4718 = vld [vmem:[#allocation4 + $0x2f] sm:$0xff]
        %v4719 = vld [vmem:[#allocation4 + $0x37] sm:$0xff]
        %v4720 = vld [vmem:[#allocation4 + $0x3f] sm:$0xff]
        %v4721 = vld [vmem:[#allocation4 + $0x47] sm:$0xff]
        %v4722 = vld [vmem:[#allocation4 + $0x4f] sm:$0xff]
        %v4723 = vld [vmem:[#allocation4 + $0x57] sm:$0xff]
        %v4724 = vld [vmem:[#allocation4 + $0x5f] sm:$0xff]
        %v4725 = vld [vmem:[#allocation4 + $0x67] sm:$0xff]
        %v4726 = vld [vmem:[#allocation4 + $0x6f] sm:$0xff]
        %v4727 = vld [vmem:[#allocation4 + $0x77] sm:$0xff]
        %v4728 = vld [vmem:[#allocation4 + $0x7f] sm:$0xff]
        %v4729 = vld [vmem:[#allocation4 + $0x87] sm:$0xff]
        %v4730 = vld [vmem:[#allocation4 + $0x8f] sm:$0xff]
        %v4731 = vld [vmem:[#allocation4 + $0x97] sm:$0xff]
        %v4732 = vld [vmem:[#allocation4 + $0x9f] sm:$0xff]
        %v4733 = vld [vmem:[#allocation4 + $0xa7] sm:$0xff]
        %v4734 = vld [vmem:[#allocation4 + $0xaf] sm:$0xff]
        %v4735 = vld [vmem:[#allocation4 + $0xb7] sm:$0xff]
        %v4736 = vld [vmem:[#allocation4 + $0xbf] sm:$0xff]
        %v4737 = vld [vmem:[#allocation4 + $0xc7] sm:$0xff]
        %v4738 = vld [vmem:[#allocation4 + $0xcf] sm:$0xff]
        %v4739 = vld [vmem:[#allocation4 + $0xd7] sm:$0xff]
        %v4740 = vld [vmem:[#allocation4 + $0xdf] sm:$0xff]
        %v4741 = vld [vmem:[#allocation4 + $0xe7] sm:$0xff]
        %v4742 = vld [vmem:[#allocation4 + $0xef] sm:$0xff]
        %v4743 = vld [vmem:[#allocation4 + $0xf7] sm:$0xff]
        %v4744 = vld [vmem:[#allocation4 + $0xff] sm:$0xff]
        %v4745 = vld [vmem:[#allocation4 + $0x107] sm:$0xff]
        %v4746 = vld [vmem:[#allocation4 + $0x10f] sm:$0xff]
        %v4747 = vld [vmem:[#allocation4 + $0x117] sm:$0xff]
        %v4748 = vld [vmem:[#allocation4 + $0x11f] sm:$0xff]
        %v4749 = vld [vmem:[#allocation4 + $0x127] sm:$0xff]
        %v4750 = vsel %vm1418, 0.0, %v4718
        %v4751 = vsel %vm1419, 0.0, %v4719
        %v4752 = vsel %vm1420, 0.0, %v4720
        %v4753 = vsel %vm1421, 0.0, %v4721
        %v4754 = vsel %vm1422, 0.0, %v4722
        %v4755 = vsel %vm1423, 0.0, %v4723
        %v4756 = vsel %vm1424, 0.0, %v4724
        %v4757 = vsel %vm1425, 0.0, %v4725
        %v4758 = vsel %vm1426, 0.0, %v4726
        %v4759 = vsel %vm1427, 0.0, %v4727
        %v4760 = vsel %vm1428, 0.0, %v4728
        %v4761 = vsel %vm1429, 0.0, %v4729
        %v4762 = vsel %vm1430, 0.0, %v4730
        %v4763 = vsel %vm1431, 0.0, %v4731
        %v4764 = vsel %vm1432, 0.0, %v4732
        %v4765 = vsel %vm1433, 0.0, %v4733
        %v4766 = vsel %vm1434, 0.0, %v4734
        %v4767 = vsel %vm1435, 0.0, %v4735
        %v4768 = vsel %vm1436, 0.0, %v4736
        %v4769 = vsel %vm1437, 0.0, %v4737
        %v4770 = vsel %vm1438, 0.0, %v4738
        %v4771 = vsel %vm1439, 0.0, %v4739
        %v4772 = vsel %vm1440, 0.0, %v4740
        %v4773 = vsel %vm1441, 0.0, %v4741
        %v4774 = vsel %vm1442, 0.0, %v4742
        %v4775 = vsel %vm1443, 0.0, %v4743
        %v4776 = vsel %vm1444, 0.0, %v4744
        %v4777 = vsel %vm1445, 0.0, %v4745
        %v4778 = vsel %vm1446, 0.0, %v4746
        %v4779 = vsel %vm1447, 0.0, %v4747
        %v4780 = vsel %vm1448, 0.0, %v4748
        %v4781 = vsel %vm1449, 0.0, %v4749
        %v4782 = vpack.c.bf16 %v4751, %v4750
        %v4783 = vpack.c.bf16 %v4753, %v4752
        %v4784 = vpack.c.bf16 %v4755, %v4754
        %v4785 = vpack.c.bf16 %v4757, %v4756
        %v4786 = vpack.c.bf16 %v4759, %v4758
        %v4787 = vpack.c.bf16 %v4761, %v4760
        %v4788 = vpack.c.bf16 %v4763, %v4762
        %v4789 = vpack.c.bf16 %v4765, %v4764
        %v4790 = vpack.c.bf16 %v4767, %v4766
        %v4791 = vpack.c.bf16 %v4769, %v4768
        %v4792 = vpack.c.bf16 %v4771, %v4770
        %v4793 = vpack.c.bf16 %v4773, %v4772
        %v4794 = vpack.c.bf16 %v4775, %v4774
        %v4795 = vpack.c.bf16 %v4777, %v4776
        %v4796 = vpack.c.bf16 %v4779, %v4778
        %v4797 = vpack.c.bf16 %v4781, %v4780
        %4814 = vrot.lane.b32.xlu0 %v4782, 64
        %v4815 = vpop.permute.xlu0 %4814
        %4816 = vrot.lane.b32.xlu0 %v4783, 64
        %v4817 = vpop.permute.xlu0 %4816
        %4818 = vrot.lane.b32.xlu0 %v4784, 64
        %v4819 = vpop.permute.xlu0 %4818
        %4820 = vrot.lane.b32.xlu0 %v4785, 64
        %v4821 = vpop.permute.xlu0 %4820
        %4822 = vrot.lane.b32.xlu0 %v4786, 64
        %v4823 = vpop.permute.xlu0 %4822
        %4824 = vrot.lane.b32.xlu0 %v4787, 64
        %v4825 = vpop.permute.xlu0 %4824
        %4826 = vrot.lane.b32.xlu0 %v4788, 64
        %v4827 = vpop.permute.xlu0 %4826
        %4828 = vrot.lane.b32.xlu0 %v4789, 64
        %v4829 = vpop.permute.xlu0 %4828
        %4830 = vrot.lane.b32.xlu0 %v4790, 64
        %v4831 = vpop.permute.xlu0 %4830
        %4832 = vrot.lane.b32.xlu0 %v4791, 64
        %v4833 = vpop.permute.xlu0 %4832
        %4834 = vrot.lane.b32.xlu0 %v4792, 64
        %v4835 = vpop.permute.xlu0 %4834
        %4836 = vrot.lane.b32.xlu0 %v4793, 64
        %v4837 = vpop.permute.xlu0 %4836
        %4838 = vrot.lane.b32.xlu0 %v4794, 64
        %v4839 = vpop.permute.xlu0 %4838
        %4840 = vrot.lane.b32.xlu0 %v4795, 64
        %v4841 = vpop.permute.xlu0 %4840
        %4842 = vrot.lane.b32.xlu0 %v4796, 64
        %v4843 = vpop.permute.xlu0 %4842
        %4844 = vrot.lane.b32.xlu0 %v4797, 64
        %v4845 = vpop.permute.xlu0 %4844
        %4862 = vst.msk [vmem:[#allocation5 + $0x8] sm:$0xff] %vm4316, %v4815
        %4863 = vst.msk [vmem:[#allocation5 + $0x20] sm:$0xff] %vm4316, %v4817
        %4864 = vst.msk [vmem:[#allocation5 + $0x38] sm:$0xff] %vm4316, %v4819
        %4865 = vst.msk [vmem:[#allocation5 + $0x50] sm:$0xff] %vm4316, %v4821
        %4866 = vst.msk [vmem:[#allocation5 + $0x68] sm:$0xff] %vm4316, %v4823
        %4867 = vst.msk [vmem:[#allocation5 + $0x80] sm:$0xff] %vm4316, %v4825
        %4868 = vst.msk [vmem:[#allocation5 + $0x98] sm:$0xff] %vm4316, %v4827
        %4869 = vst.msk [vmem:[#allocation5 + $0xb0] sm:$0xff] %vm4316, %v4829
        %4870 = vst.msk [vmem:[#allocation5 + $0xc8] sm:$0xff] %vm4316, %v4831
        %4871 = vst.msk [vmem:[#allocation5 + $0xe0] sm:$0xff] %vm4316, %v4833
        %4872 = vst.msk [vmem:[#allocation5 + $0xf8] sm:$0xff] %vm4316, %v4835
        %4873 = vst.msk [vmem:[#allocation5 + $0x110] sm:$0xff] %vm4316, %v4837
        %4874 = vst.msk [vmem:[#allocation5 + $0x128] sm:$0xff] %vm4316, %v4839
        %4875 = vst.msk [vmem:[#allocation5 + $0x140] sm:$0xff] %vm4316, %v4841
        %4876 = vst.msk [vmem:[#allocation5 + $0x158] sm:$0xff] %vm4316, %v4843
        %4877 = vst.msk [vmem:[#allocation5 + $0x170] sm:$0xff] %vm4316, %v4845
        %v4878 = vld [vmem:[#allocation4 + $0x30] sm:$0xff]
        %v4879 = vld [vmem:[#allocation4 + $0x38] sm:$0xff]
        %v4880 = vld [vmem:[#allocation4 + $0x40] sm:$0xff]
        %v4881 = vld [vmem:[#allocation4 + $0x48] sm:$0xff]
        %v4882 = vld [vmem:[#allocation4 + $0x50] sm:$0xff]
        %v4883 = vld [vmem:[#allocation4 + $0x58] sm:$0xff]
        %v4884 = vld [vmem:[#allocation4 + $0x60] sm:$0xff]
        %v4885 = vld [vmem:[#allocation4 + $0x68] sm:$0xff]
        %v4886 = vld [vmem:[#allocation4 + $0x70] sm:$0xff]
        %v4887 = vld [vmem:[#allocation4 + $0x78] sm:$0xff]
        %v4888 = vld [vmem:[#allocation4 + $0x80] sm:$0xff]
        %v4889 = vld [vmem:[#allocation4 + $0x88] sm:$0xff]
        %v4890 = vld [vmem:[#allocation4 + $0x90] sm:$0xff]
        %v4891 = vld [vmem:[#allocation4 + $0x98] sm:$0xff]
        %v4892 = vld [vmem:[#allocation4 + $0xa0] sm:$0xff]
        %v4893 = vld [vmem:[#allocation4 + $0xa8] sm:$0xff]
        %v4894 = vld [vmem:[#allocation4 + $0xb0] sm:$0xff]
        %v4895 = vld [vmem:[#allocation4 + $0xb8] sm:$0xff]
        %v4896 = vld [vmem:[#allocation4 + $0xc0] sm:$0xff]
        %v4897 = vld [vmem:[#allocation4 + $0xc8] sm:$0xff]
        %v4898 = vld [vmem:[#allocation4 + $0xd0] sm:$0xff]
        %v4899 = vld [vmem:[#allocation4 + $0xd8] sm:$0xff]
        %v4900 = vld [vmem:[#allocation4 + $0xe0] sm:$0xff]
        %v4901 = vld [vmem:[#allocation4 + $0xe8] sm:$0xff]
        %v4902 = vld [vmem:[#allocation4 + $0xf0] sm:$0xff]
        %v4903 = vld [vmem:[#allocation4 + $0xf8] sm:$0xff]
        %v4904 = vld [vmem:[#allocation4 + $0x100] sm:$0xff]
        %v4905 = vld [vmem:[#allocation4 + $0x108] sm:$0xff]
        %v4906 = vld [vmem:[#allocation4 + $0x110] sm:$0xff]
        %v4907 = vld [vmem:[#allocation4 + $0x118] sm:$0xff]
        %v4908 = vld [vmem:[#allocation4 + $0x120] sm:$0xff]
        %v4909 = vld [vmem:[#allocation4 + $0x128] sm:$0xff]
        %v4910 = vpack.c.bf16 %v4879, %v4878
        %v4911 = vpack.c.bf16 %v4881, %v4880
        %v4912 = vpack.c.bf16 %v4883, %v4882
        %v4913 = vpack.c.bf16 %v4885, %v4884
        %v4914 = vpack.c.bf16 %v4887, %v4886
        %v4915 = vpack.c.bf16 %v4889, %v4888
        %v4916 = vpack.c.bf16 %v4891, %v4890
        %v4917 = vpack.c.bf16 %v4893, %v4892
        %v4918 = vpack.c.bf16 %v4895, %v4894
        %v4919 = vpack.c.bf16 %v4897, %v4896
        %v4920 = vpack.c.bf16 %v4899, %v4898
        %v4921 = vpack.c.bf16 %v4901, %v4900
        %v4922 = vpack.c.bf16 %v4903, %v4902
        %v4923 = vpack.c.bf16 %v4905, %v4904
        %v4924 = vpack.c.bf16 %v4907, %v4906
        %v4925 = vpack.c.bf16 %v4909, %v4908
        %4942 = vrot.lane.b32.xlu0 %v4910, 96
        %v4943 = vpop.permute.xlu0 %4942
        %4944 = vrot.lane.b32.xlu0 %v4911, 96
        %v4945 = vpop.permute.xlu0 %4944
        %4946 = vrot.lane.b32.xlu0 %v4912, 96
        %v4947 = vpop.permute.xlu0 %4946
        %4948 = vrot.lane.b32.xlu0 %v4913, 96
        %v4949 = vpop.permute.xlu0 %4948
        %4950 = vrot.lane.b32.xlu0 %v4914, 96
        %v4951 = vpop.permute.xlu0 %4950
        %4952 = vrot.lane.b32.xlu0 %v4915, 96
        %v4953 = vpop.permute.xlu0 %4952
        %4954 = vrot.lane.b32.xlu0 %v4916, 96
        %v4955 = vpop.permute.xlu0 %4954
        %4956 = vrot.lane.b32.xlu0 %v4917, 96
        %v4957 = vpop.permute.xlu0 %4956
        %4958 = vrot.lane.b32.xlu0 %v4918, 96
        %v4959 = vpop.permute.xlu0 %4958
        %4960 = vrot.lane.b32.xlu0 %v4919, 96
        %v4961 = vpop.permute.xlu0 %4960
        %4962 = vrot.lane.b32.xlu0 %v4920, 96
        %v4963 = vpop.permute.xlu0 %4962
        %4964 = vrot.lane.b32.xlu0 %v4921, 96
        %v4965 = vpop.permute.xlu0 %4964
        %4966 = vrot.lane.b32.xlu0 %v4922, 96
        %v4967 = vpop.permute.xlu0 %4966
        %4968 = vrot.lane.b32.xlu0 %v4923, 96
        %v4969 = vpop.permute.xlu0 %4968
        %4970 = vrot.lane.b32.xlu0 %v4924, 96
        %v4971 = vpop.permute.xlu0 %4970
        %4972 = vrot.lane.b32.xlu0 %v4925, 96
        %v4973 = vpop.permute.xlu0 %4972
        %4990 = vst.msk [vmem:[#allocation5 + $0x8] sm:$0xff] %vm4477, %v4943
        %4991 = vst.msk [vmem:[#allocation5 + $0x20] sm:$0xff] %vm4477, %v4945
        %4992 = vst.msk [vmem:[#allocation5 + $0x38] sm:$0xff] %vm4477, %v4947
        %4993 = vst.msk [vmem:[#allocation5 + $0x50] sm:$0xff] %vm4477, %v4949
        %4994 = vst.msk [vmem:[#allocation5 + $0x68] sm:$0xff] %vm4477, %v4951
        %4995 = vst.msk [vmem:[#allocation5 + $0x80] sm:$0xff] %vm4477, %v4953
        %4996 = vst.msk [vmem:[#allocation5 + $0x98] sm:$0xff] %vm4477, %v4955
        %4997 = vst.msk [vmem:[#allocation5 + $0xb0] sm:$0xff] %vm4477, %v4957
        %4998 = vst.msk [vmem:[#allocation5 + $0xc8] sm:$0xff] %vm4477, %v4959
        %4999 = vst.msk [vmem:[#allocation5 + $0xe0] sm:$0xff] %vm4477, %v4961
        %5000 = vst.msk [vmem:[#allocation5 + $0xf8] sm:$0xff] %vm4477, %v4963
        %5001 = vst.msk [vmem:[#allocation5 + $0x110] sm:$0xff] %vm4477, %v4965
        %5002 = vst.msk [vmem:[#allocation5 + $0x128] sm:$0xff] %vm4477, %v4967
        %5003 = vst.msk [vmem:[#allocation5 + $0x140] sm:$0xff] %vm4477, %v4969
        %5004 = vst.msk [vmem:[#allocation5 + $0x158] sm:$0xff] %vm4477, %v4971
        %5005 = vst.msk [vmem:[#allocation5 + $0x170] sm:$0xff] %vm4477, %v4973
        %v5006 = vld [vmem:[#allocation4 + $0x31] sm:$0xff]
        %v5007 = vld [vmem:[#allocation4 + $0x39] sm:$0xff]
        %v5008 = vld [vmem:[#allocation4 + $0x41] sm:$0xff]
        %v5009 = vld [vmem:[#allocation4 + $0x49] sm:$0xff]
        %v5010 = vld [vmem:[#allocation4 + $0x51] sm:$0xff]
        %v5011 = vld [vmem:[#allocation4 + $0x59] sm:$0xff]
        %v5012 = vld [vmem:[#allocation4 + $0x61] sm:$0xff]
        %v5013 = vld [vmem:[#allocation4 + $0x69] sm:$0xff]
        %v5014 = vld [vmem:[#allocation4 + $0x71] sm:$0xff]
        %v5015 = vld [vmem:[#allocation4 + $0x79] sm:$0xff]
        %v5016 = vld [vmem:[#allocation4 + $0x81] sm:$0xff]
        %v5017 = vld [vmem:[#allocation4 + $0x89] sm:$0xff]
        %v5018 = vld [vmem:[#allocation4 + $0x91] sm:$0xff]
        %v5019 = vld [vmem:[#allocation4 + $0x99] sm:$0xff]
        %v5020 = vld [vmem:[#allocation4 + $0xa1] sm:$0xff]
        %v5021 = vld [vmem:[#allocation4 + $0xa9] sm:$0xff]
        %v5022 = vld [vmem:[#allocation4 + $0xb1] sm:$0xff]
        %v5023 = vld [vmem:[#allocation4 + $0xb9] sm:$0xff]
        %v5024 = vld [vmem:[#allocation4 + $0xc1] sm:$0xff]
        %v5025 = vld [vmem:[#allocation4 + $0xc9] sm:$0xff]
        %v5026 = vld [vmem:[#allocation4 + $0xd1] sm:$0xff]
        %v5027 = vld [vmem:[#allocation4 + $0xd9] sm:$0xff]
        %v5028 = vld [vmem:[#allocation4 + $0xe1] sm:$0xff]
        %v5029 = vld [vmem:[#allocation4 + $0xe9] sm:$0xff]
        %v5030 = vld [vmem:[#allocation4 + $0xf1] sm:$0xff]
        %v5031 = vld [vmem:[#allocation4 + $0xf9] sm:$0xff]
        %v5032 = vld [vmem:[#allocation4 + $0x101] sm:$0xff]
        %v5033 = vld [vmem:[#allocation4 + $0x109] sm:$0xff]
        %v5034 = vld [vmem:[#allocation4 + $0x111] sm:$0xff]
        %v5035 = vld [vmem:[#allocation4 + $0x119] sm:$0xff]
        %v5036 = vld [vmem:[#allocation4 + $0x121] sm:$0xff]
        %v5037 = vld [vmem:[#allocation4 + $0x129] sm:$0xff]
        %v5038 = vsel %vm1707, 0.0, %v5006
        %v5039 = vsel %vm1708, 0.0, %v5007
        %v5040 = vsel %vm1709, 0.0, %v5008
        %v5041 = vsel %vm1710, 0.0, %v5009
        %v5042 = vsel %vm1711, 0.0, %v5010
        %v5043 = vsel %vm1712, 0.0, %v5011
        %v5044 = vsel %vm1713, 0.0, %v5012
        %v5045 = vsel %vm1714, 0.0, %v5013
        %v5046 = vsel %vm1715, 0.0, %v5014
        %v5047 = vsel %vm1716, 0.0, %v5015
        %v5048 = vsel %vm1717, 0.0, %v5016
        %v5049 = vsel %vm1718, 0.0, %v5017
        %v5050 = vsel %vm1719, 0.0, %v5018
        %v5051 = vsel %vm1720, 0.0, %v5019
        %v5052 = vsel %vm1721, 0.0, %v5020
        %v5053 = vsel %vm1722, 0.0, %v5021
        %v5054 = vsel %vm1723, 0.0, %v5022
        %v5055 = vsel %vm1724, 0.0, %v5023
        %v5056 = vsel %vm1725, 0.0, %v5024
        %v5057 = vsel %vm1726, 0.0, %v5025
        %v5058 = vsel %vm1727, 0.0, %v5026
        %v5059 = vsel %vm1728, 0.0, %v5027
        %v5060 = vsel %vm1729, 0.0, %v5028
        %v5061 = vsel %vm1730, 0.0, %v5029
        %v5062 = vsel %vm1731, 0.0, %v5030
        %v5063 = vsel %vm1732, 0.0, %v5031
        %v5064 = vsel %vm1733, 0.0, %v5032
        %v5065 = vsel %vm1734, 0.0, %v5033
        %v5066 = vsel %vm1735, 0.0, %v5034
        %v5067 = vsel %vm1736, 0.0, %v5035
        %v5068 = vsel %vm1737, 0.0, %v5036
        %v5069 = vsel %vm1738, 0.0, %v5037
        %v5070 = vpack.c.bf16 %v5039, %v5038
        %v5071 = vpack.c.bf16 %v5041, %v5040
        %v5072 = vpack.c.bf16 %v5043, %v5042
        %v5073 = vpack.c.bf16 %v5045, %v5044
        %v5074 = vpack.c.bf16 %v5047, %v5046
        %v5075 = vpack.c.bf16 %v5049, %v5048
        %v5076 = vpack.c.bf16 %v5051, %v5050
        %v5077 = vpack.c.bf16 %v5053, %v5052
        %v5078 = vpack.c.bf16 %v5055, %v5054
        %v5079 = vpack.c.bf16 %v5057, %v5056
        %v5080 = vpack.c.bf16 %v5059, %v5058
        %v5081 = vpack.c.bf16 %v5061, %v5060
        %v5082 = vpack.c.bf16 %v5063, %v5062
        %v5083 = vpack.c.bf16 %v5065, %v5064
        %v5084 = vpack.c.bf16 %v5067, %v5066
        %v5085 = vpack.c.bf16 %v5069, %v5068
        %5086 = vst.msk [vmem:[#allocation5 + $0x10] sm:$0xff] %vm449, %v5070
        %5087 = vst.msk [vmem:[#allocation5 + $0x28] sm:$0xff] %vm449, %v5071
        %5088 = vst.msk [vmem:[#allocation5 + $0x40] sm:$0xff] %vm449, %v5072
        %5089 = vst.msk [vmem:[#allocation5 + $0x58] sm:$0xff] %vm449, %v5073
        %5090 = vst.msk [vmem:[#allocation5 + $0x70] sm:$0xff] %vm449, %v5074
        %5091 = vst.msk [vmem:[#allocation5 + $0x88] sm:$0xff] %vm449, %v5075
        %5092 = vst.msk [vmem:[#allocation5 + $0xa0] sm:$0xff] %vm449, %v5076
        %5093 = vst.msk [vmem:[#allocation5 + $0xb8] sm:$0xff] %vm449, %v5077
        %5094 = vst.msk [vmem:[#allocation5 + $0xd0] sm:$0xff] %vm449, %v5078
        %5095 = vst.msk [vmem:[#allocation5 + $0xe8] sm:$0xff] %vm449, %v5079
        %5096 = vst.msk [vmem:[#allocation5 + $0x100] sm:$0xff] %vm449, %v5080
        %5097 = vst.msk [vmem:[#allocation5 + $0x118] sm:$0xff] %vm449, %v5081
        %5098 = vst.msk [vmem:[#allocation5 + $0x130] sm:$0xff] %vm449, %v5082
        %5099 = vst.msk [vmem:[#allocation5 + $0x148] sm:$0xff] %vm449, %v5083
        %5100 = vst.msk [vmem:[#allocation5 + $0x160] sm:$0xff] %vm449, %v5084
        %5101 = vst.msk [vmem:[#allocation5 + $0x178] sm:$0xff] %vm449, %v5085
        %v5102 = vld [vmem:[%s12] sm:$0xff]
        %v5103 = vld [vmem:[%s12 + $0x8] sm:$0xff]
        %v5104 = vld [vmem:[%s12 + $0x10] sm:$0xff]
        %v5105 = vld [vmem:[%s12 + $0x18] sm:$0xff]
        %v5106 = vld [vmem:[%s12 + $0x20] sm:$0xff]
        %v5107 = vld [vmem:[%s12 + $0x28] sm:$0xff]
        %v5108 = vld [vmem:[%s12 + $0x30] sm:$0xff]
        %v5109 = vld [vmem:[%s12 + $0x38] sm:$0xff]
        %v5110 = vld [vmem:[#allocation5] sm:$0xff]
        %v5111 = vld [vmem:[#allocation5 + $0x8] sm:$0xff]
        %v5112 = vld [vmem:[#allocation5 + $0x10] sm:$0xff]
        %v5113 = vld [vmem:[#allocation5 + $0x18] sm:$0xff]
        %v5114 = vld [vmem:[#allocation5 + $0x20] sm:$0xff]
        %v5115 = vld [vmem:[#allocation5 + $0x28] sm:$0xff]
        %v5116 = vld [vmem:[#allocation5 + $0x30] sm:$0xff]
        %v5117 = vld [vmem:[#allocation5 + $0x38] sm:$0xff]
        %v5118 = vld [vmem:[#allocation5 + $0x40] sm:$0xff]
        %v5119 = vld [vmem:[#allocation5 + $0x48] sm:$0xff]
        %v5120 = vld [vmem:[#allocation5 + $0x50] sm:$0xff]
        %v5121 = vld [vmem:[#allocation5 + $0x58] sm:$0xff]
        %v5122 = vld [vmem:[#allocation5 + $0x60] sm:$0xff]
        %v5123 = vld [vmem:[#allocation5 + $0x68] sm:$0xff]
        %v5124 = vld [vmem:[#allocation5 + $0x70] sm:$0xff]
        %v5125 = vld [vmem:[#allocation5 + $0x78] sm:$0xff]
        %v5126 = vld [vmem:[#allocation5 + $0x80] sm:$0xff]
        %v5127 = vld [vmem:[#allocation5 + $0x88] sm:$0xff]
        %v5128 = vld [vmem:[#allocation5 + $0x90] sm:$0xff]
        %v5129 = vld [vmem:[#allocation5 + $0x98] sm:$0xff]
        %v5130 = vld [vmem:[#allocation5 + $0xa0] sm:$0xff]
        %v5131 = vld [vmem:[#allocation5 + $0xa8] sm:$0xff]
        %v5132 = vld [vmem:[#allocation5 + $0xb0] sm:$0xff]
        %v5133 = vld [vmem:[#allocation5 + $0xb8] sm:$0xff]
        %v5134 = vld [vmem:[#allocation5 + $0xc0] sm:$0xff]
        %v5135 = vld [vmem:[#allocation5 + $0xc8] sm:$0xff]
        %v5136 = vld [vmem:[#allocation5 + $0xd0] sm:$0xff]
        %v5137 = vld [vmem:[#allocation5 + $0xd8] sm:$0xff]
        %v5138 = vld [vmem:[#allocation5 + $0xe0] sm:$0xff]
        %v5139 = vld [vmem:[#allocation5 + $0xe8] sm:$0xff]
        %v5140 = vld [vmem:[#allocation5 + $0xf0] sm:$0xff]
        %v5141 = vld [vmem:[#allocation5 + $0xf8] sm:$0xff]
        %v5142 = vld [vmem:[#allocation5 + $0x100] sm:$0xff]
        %v5143 = vld [vmem:[#allocation5 + $0x108] sm:$0xff]
        %v5144 = vld [vmem:[#allocation5 + $0x110] sm:$0xff]
        %v5145 = vld [vmem:[#allocation5 + $0x118] sm:$0xff]
        %v5146 = vld [vmem:[#allocation5 + $0x120] sm:$0xff]
        %v5147 = vld [vmem:[#allocation5 + $0x128] sm:$0xff]
        %v5148 = vld [vmem:[#allocation5 + $0x130] sm:$0xff]
        %v5149 = vld [vmem:[#allocation5 + $0x138] sm:$0xff]
        %v5150 = vld [vmem:[#allocation5 + $0x140] sm:$0xff]
        %v5151 = vld [vmem:[#allocation5 + $0x148] sm:$0xff]
        %v5152 = vld [vmem:[#allocation5 + $0x150] sm:$0xff]
        %v5153 = vld [vmem:[#allocation5 + $0x158] sm:$0xff]
        %v5154 = vld [vmem:[#allocation5 + $0x160] sm:$0xff]
        %v5155 = vld [vmem:[#allocation5 + $0x168] sm:$0xff]
        %v5156 = vld [vmem:[#allocation5 + $0x170] sm:$0xff]
        %v5157 = vld [vmem:[#allocation5 + $0x178] sm:$0xff]
        %v5166 = vunpack.c.l.b16 %v5102
        %v5167 = vunpack.c.h.b16 %v5102
        %v5168 = vunpack.c.l.b16 %v5103
        %v5169 = vunpack.c.h.b16 %v5103
        %v5170 = vunpack.c.l.b16 %v5104
        %v5171 = vunpack.c.h.b16 %v5104
        %v5172 = vunpack.c.l.b16 %v5105
        %v5173 = vunpack.c.h.b16 %v5105
        %v5174 = vunpack.c.l.b16 %v5106
        %v5175 = vunpack.c.h.b16 %v5106
        %v5176 = vunpack.c.l.b16 %v5107
        %v5177 = vunpack.c.h.b16 %v5107
        %v5178 = vunpack.c.l.b16 %v5108
        %v5179 = vunpack.c.h.b16 %v5108
        %v5180 = vunpack.c.l.b16 %v5109
        %v5181 = vunpack.c.h.b16 %v5109
        %v5182 = vpack.c.b16 %v5168, %v5166
        %v5183 = vpack.c.b16 %v5169, %v5167
        %v5184 = vpack.c.b16 %v5172, %v5170
        %v5185 = vpack.c.b16 %v5173, %v5171
        %v5186 = vpack.c.b16 %v5176, %v5174
        %v5187 = vpack.c.b16 %v5177, %v5175
        %v5188 = vpack.c.b16 %v5180, %v5178
        %v5189 = vpack.c.b16 %v5181, %v5179
        %5198 = vmatprep.subr.bf16.mxu0 %v5111
        %5199 = vmatpush1.bf16.msra.mxu0 %v5110
        %5200 = vmatprep.subr.bf16.mxu0 %v5114
        %5201 = vmatpush1.bf16.msra.mxu0 %v5113
        %5202 = vmatprep.subr.bf16.mxu0 %v5117
        %5203 = vmatpush1.bf16.msra.mxu0 %v5116
        %5204 = vmatprep.subr.bf16.mxu0 %v5120
        %5205 = vmatpush1.bf16.msra.mxu0 %v5119
        %5206 = vmatprep.subr.bf16.mxu0 %v5123
        %5207 = vmatpush1.bf16.msra.mxu0 %v5122
        %5208 = vmatprep.subr.bf16.mxu0 %v5126
        %5209 = vmatpush1.bf16.msra.mxu0 %v5125
        %5210 = vmatprep.subr.bf16.mxu0 %v5129
        %5211 = vmatpush1.bf16.msra.mxu0 %v5128
        %5212 = vmatprep.subr.bf16.mxu0 %v5132
        %5213 = vmatpush1.bf16.msra.mxu0 %v5131
        %5214 = vmatprep.subr.bf16.mxu0 %v5135
        %5215 = vmatpush1.bf16.msra.mxu0 %v5134
        %5216 = vmatprep.subr.bf16.mxu0 %v5138
        %5217 = vmatpush1.bf16.msra.mxu0 %v5137
        %5218 = vmatprep.subr.bf16.mxu0 %v5141
        %5219 = vmatpush1.bf16.msra.mxu0 %v5140
        %5220 = vmatprep.subr.bf16.mxu0 %v5144
        %5221 = vmatpush1.bf16.msra.mxu0 %v5143
        %5222 = vmatprep.subr.bf16.mxu0 %v5147
        %5223 = vmatpush1.bf16.msra.mxu0 %v5146
        %5224 = vmatprep.subr.bf16.mxu0 %v5150
        %5225 = vmatpush1.bf16.msra.mxu0 %v5149
        %5226 = vmatprep.subr.bf16.mxu0 %v5153
        %5227 = vmatpush1.bf16.msra.mxu0 %v5152
        %5228 = vmatprep.subr.bf16.mxu0 %v5156
        %5229 = vmatpush1.bf16.msra.mxu0 %v5155
        %5230 = vmatprep.mubr.bf16.mxu0 %v5183
        %5231 = vmatmul.mubr.bf16.gmra.mrb[0].mxu0 %v5182
        %v5232 = vpop.f32.mrb[0].mxu0
        %v5233 = vadd.f32 0.0, %v5232
        %v5234 = vpop.f32.mrb[0].mxu0
        %v5235 = vadd.f32 0.0, %v5234
        %v5236 = vpop.f32.mrb[0].mxu0
        %v5237 = vadd.f32 0.0, %v5236
        %v5238 = vpop.f32.mrb[0].mxu0
        %v5239 = vadd.f32 0.0, %v5238
        %5240 = vmatprep.mubr.bf16.mxu0 %v5185
        %5241 = vmatmul.mubr.bf16.gmra.mrb[0].mxu0 %v5184
        %v5242 = vpop.f32.mrb[0].mxu0
        %v5243 = vadd.f32 0.0, %v5242
        %v5244 = vpop.f32.mrb[0].mxu0
        %v5245 = vadd.f32 0.0, %v5244
        %v5246 = vpop.f32.mrb[0].mxu0
        %v5247 = vadd.f32 0.0, %v5246
        %v5248 = vpop.f32.mrb[0].mxu0
        %v5249 = vadd.f32 0.0, %v5248
        %5250 = vmatprep.mubr.bf16.mxu0 %v5187
        %5251 = vmatmul.mubr.bf16.gmra.mrb[0].mxu0 %v5186
        %v5252 = vpop.f32.mrb[0].mxu0
        %v5253 = vadd.f32 0.0, %v5252
        %v5254 = vpop.f32.mrb[0].mxu0
        %v5255 = vadd.f32 0.0, %v5254
        %v5256 = vpop.f32.mrb[0].mxu0
        %v5257 = vadd.f32 0.0, %v5256
        %v5258 = vpop.f32.mrb[0].mxu0
        %v5259 = vadd.f32 0.0, %v5258
        %5260 = vmatprep.mubr.bf16.mxu0 %v5189
        %5261 = vmatmul.mubr.bf16.gmra.mrb[0].mxu0 %v5188
        %v5262 = vpop.f32.mrb[0].mxu0
        %v5263 = vadd.f32 0.0, %v5262
        %v5264 = vpop.f32.mrb[0].mxu0
        %v5265 = vadd.f32 0.0, %v5264
        %v5266 = vpop.f32.mrb[0].mxu0
        %v5267 = vadd.f32 0.0, %v5266
        %v5268 = vpop.f32.mrb[0].mxu0
        %v5269 = vadd.f32 0.0, %v5268
        %5270 = vdwg.mxu0
        %5271 = vmatprep.subr.bf16.mxu0 0
        %5272 = vmatpush1.bf16.msra.mxu0 %v5112
        %5273 = vmatprep.subr.bf16.mxu0 0
        %5274 = vmatpush1.bf16.msra.mxu0 %v5115
        %5275 = vmatprep.subr.bf16.mxu0 0
        %5276 = vmatpush1.bf16.msra.mxu0 %v5118
        %5277 = vmatprep.subr.bf16.mxu0 0
        %5278 = vmatpush1.bf16.msra.mxu0 %v5121
        %5279 = vmatprep.subr.bf16.mxu0 0
        %5280 = vmatpush1.bf16.msra.mxu0 %v5124
        %5281 = vmatprep.subr.bf16.mxu0 0
        %5282 = vmatpush1.bf16.msra.mxu0 %v5127
        %5283 = vmatprep.subr.bf16.mxu0 0
        %5284 = vmatpush1.bf16.msra.mxu0 %v5130
        %5285 = vmatprep.subr.bf16.mxu0 0
        %5286 = vmatpush1.bf16.msra.mxu0 %v5133
        %5287 = vmatprep.subr.bf16.mxu0 0
        %5288 = vmatpush1.bf16.msra.mxu0 %v5136
        %5289 = vmatprep.subr.bf16.mxu0 0
        %5290 = vmatpush1.bf16.msra.mxu0 %v5139
        %5291 = vmatprep.subr.bf16.mxu0 0
        %5292 = vmatpush1.bf16.msra.mxu0 %v5142
        %5293 = vmatprep.subr.bf16.mxu0 0
        %5294 = vmatpush1.bf16.msra.mxu0 %v5145
        %5295 = vmatprep.subr.bf16.mxu0 0
        %5296 = vmatpush1.bf16.msra.mxu0 %v5148
        %5297 = vmatprep.subr.bf16.mxu0 0
        %5298 = vmatpush1.bf16.msra.mxu0 %v5151
        %5299 = vmatprep.subr.bf16.mxu0 0
        %5300 = vmatpush1.bf16.msra.mxu0 %v5154
        %5301 = vmatprep.subr.bf16.mxu0 0
        %5302 = vmatpush1.bf16.msra.mxu0 %v5157
        %5303 = vmatprep.mubr.bf16.mxu0 %v5183
        %5304 = vmatmul.mubr.bf16.gmra.mrb[0].mxu0 %v5182
        %v5305 = vpop.f32.mrb[0].mxu0
        %v5306 = vadd.f32 0.0, %v5305
        %v5307 = vpop.f32.mrb[0].mxu0
        %v5308 = vpop.f32.mrb[0].mxu0
        %v5309 = vadd.f32 0.0, %v5308
        %v5310 = vpop.f32.mrb[0].mxu0
        %5311 = vmatprep.mubr.bf16.mxu0 %v5185
        %5312 = vmatmul.mubr.bf16.gmra.mrb[0].mxu0 %v5184
        %v5313 = vpop.f32.mrb[0].mxu0
        %v5314 = vadd.f32 0.0, %v5313
        %v5315 = vpop.f32.mrb[0].mxu0
        %v5316 = vpop.f32.mrb[0].mxu0
        %v5317 = vadd.f32 0.0, %v5316
        %v5318 = vpop.f32.mrb[0].mxu0
        %5319 = vmatprep.mubr.bf16.mxu0 %v5187
        %5320 = vmatmul.mubr.bf16.gmra.mrb[0].mxu0 %v5186
        %v5321 = vpop.f32.mrb[0].mxu0
        %v5322 = vadd.f32 0.0, %v5321
        %v5323 = vpop.f32.mrb[0].mxu0
        %v5324 = vpop.f32.mrb[0].mxu0
        %v5325 = vadd.f32 0.0, %v5324
        %v5326 = vpop.f32.mrb[0].mxu0
        %5327 = vmatprep.mubr.bf16.mxu0 %v5189
        %5328 = vmatmul.mubr.bf16.gmra.mrb[0].mxu0 %v5188
        %v5329 = vpop.f32.mrb[0].mxu0
        %v5330 = vadd.f32 0.0, %v5329
        %v5331 = vpop.f32.mrb[0].mxu0
        %v5332 = vpop.f32.mrb[0].mxu0
        %v5333 = vadd.f32 0.0, %v5332
        %v5334 = vpop.f32.mrb[0].mxu0
        %5335 = vdwg.mxu0
        %v5336 = vpack.c.bf16 %v5237, %v5233
        %v5337 = vpack.c.bf16 %v5239, %v5235
        %v5338 = vpack.c.bf16 %v5309, %v5306
        %v5339 = vpack.c.bf16 %v5247, %v5243
        %v5340 = vpack.c.bf16 %v5249, %v5245
        %v5341 = vpack.c.bf16 %v5317, %v5314
        %v5342 = vpack.c.bf16 %v5257, %v5253
        %v5343 = vpack.c.bf16 %v5259, %v5255
        %v5344 = vpack.c.bf16 %v5325, %v5322
        %v5345 = vpack.c.bf16 %v5267, %v5263
        %v5346 = vpack.c.bf16 %v5269, %v5265
        %v5347 = vpack.c.bf16 %v5333, %v5330
        %v5348 = vld [vmem:[%s10] sm:$0xf]
        %v5349 = vld [vmem:[%s10 + $0x4] sm:$0xf]
        %v5350 = vld [vmem:[%s10 + $0x8] sm:$0xf]
        %v5351 = vld [vmem:[%s10 + $0xc] sm:$0xf]
        %v5352 = vld [vmem:[%s10 + $0x10] sm:$0xf]
        %v5353 = vld [vmem:[%s10 + $0x14] sm:$0xf]
        %v5354 = vld [vmem:[%s10 + $0x18] sm:$0xf]
        %v5355 = vld [vmem:[%s10 + $0x1c] sm:$0xf]
        %v5356 = vld [vmem:[%s10 + $0x20] sm:$0xf]
        %v5357 = vld [vmem:[%s10 + $0x24] sm:$0xf]
        %v5358 = vld [vmem:[%s10 + $0x28] sm:$0xf]
        %v5359 = vld [vmem:[%s10 + $0x2c] sm:$0xf]
        %v5360 = vld [vmem:[%s10 + $0x30] sm:$0xf]
        %v5361 = vld [vmem:[%s10 + $0x34] sm:$0xf]
        %v5362 = vld [vmem:[%s10 + $0x38] sm:$0xf]
        %v5363 = vld [vmem:[%s10 + $0x3c] sm:$0xf]
        %v5364 = vld [vmem:[%s10 + $0x40] sm:$0xf]
        %v5365 = vld [vmem:[%s10 + $0x44] sm:$0xf]
        %v5366 = vld [vmem:[%s10 + $0x48] sm:$0xf]
        %v5367 = vld [vmem:[%s10 + $0x4c] sm:$0xf]
        %v5368 = vld [vmem:[%s10 + $0x50] sm:$0xf]
        %v5369 = vld [vmem:[%s10 + $0x54] sm:$0xf]
        %v5370 = vld [vmem:[%s10 + $0x58] sm:$0xf]
        %v5371 = vld [vmem:[%s10 + $0x5c] sm:$0xf]
        %v5372 = vld [vmem:[%s10 + $0x60] sm:$0xf]
        %v5373 = vld [vmem:[%s10 + $0x64] sm:$0xf]
        %v5374 = vld [vmem:[%s10 + $0x68] sm:$0xf]
        %v5375 = vld [vmem:[%s10 + $0x6c] sm:$0xf]
        %v5376 = vld [vmem:[%s10 + $0x70] sm:$0xf]
        %v5377 = vld [vmem:[%s10 + $0x74] sm:$0xf]
        %v5378 = vld [vmem:[%s10 + $0x78] sm:$0xf]
        %v5379 = vld [vmem:[%s10 + $0x7c] sm:$0xf]
        %v5380 = vld [vmem:[%s10 + $0x80] sm:$0xf]
        %v5381 = vld [vmem:[%s10 + $0x84] sm:$0xf]
        %v5382 = vld [vmem:[%s10 + $0x88] sm:$0xf]
        %v5383 = vld [vmem:[%s10 + $0x8c] sm:$0xf]
        %v5384 = vld [vmem:[%s11] sm:$0x1]
        %v5386 = vlaneseq
        %v5387 = vshrl.u32 %v5386, 7
        %v5388 = vsub.s32 0, %v5387
        %v5389 = vrot.slane %v5384, %v5388
        %v5427 = vunpack.c.l.b16 %v5348
        %v5428 = vunpack.c.l.b16 %v5349
        %v5429 = vunpack.c.l.b16 %v5350
        %v5430 = vunpack.c.l.b16 %v5351
        %v5431 = vunpack.c.l.b16 %v5352
        %v5432 = vunpack.c.l.b16 %v5353
        %v5433 = vunpack.c.l.b16 %v5354
        %v5434 = vunpack.c.l.b16 %v5355
        %v5435 = vunpack.c.l.b16 %v5356
        %v5436 = vunpack.c.l.b16 %v5357
        %v5437 = vunpack.c.l.b16 %v5358
        %v5438 = vunpack.c.l.b16 %v5359
        %v5439 = vunpack.c.l.b16 %v5360
        %v5440 = vunpack.c.l.b16 %v5361
        %v5441 = vunpack.c.l.b16 %v5362
        %v5442 = vunpack.c.l.b16 %v5363
        %v5443 = vunpack.c.l.b16 %v5364
        %v5444 = vunpack.c.l.b16 %v5365
        %v5445 = vunpack.c.l.b16 %v5366
        %v5446 = vunpack.c.l.b16 %v5367
        %v5447 = vunpack.c.l.b16 %v5368
        %v5448 = vunpack.c.l.b16 %v5369
        %v5449 = vunpack.c.l.b16 %v5370
        %v5450 = vunpack.c.l.b16 %v5371
        %v5451 = vunpack.c.l.b16 %v5372
        %v5452 = vunpack.c.l.b16 %v5373
        %v5453 = vunpack.c.l.b16 %v5374
        %v5454 = vunpack.c.l.b16 %v5375
        %v5455 = vunpack.c.l.b16 %v5376
        %v5456 = vunpack.c.l.b16 %v5377
        %v5457 = vunpack.c.l.b16 %v5378
        %v5458 = vunpack.c.l.b16 %v5379
        %v5459 = vunpack.c.l.b16 %v5380
        %v5460 = vunpack.c.l.b16 %v5381
        %v5461 = vunpack.c.l.b16 %v5382
        %v5462 = vunpack.c.l.b16 %v5383
        %v5463 = vpack.c.b16 %v5428, %v5427
        %v5464 = vpack.c.b16 %v5430, %v5429
        %v5465 = vpack.c.b16 %v5432, %v5431
        %v5466 = vpack.c.b16 %v5434, %v5433
        %v5467 = vpack.c.b16 %v5436, %v5435
        %v5468 = vpack.c.b16 %v5438, %v5437
        %v5469 = vpack.c.b16 %v5440, %v5439
        %v5470 = vpack.c.b16 %v5442, %v5441
        %v5471 = vpack.c.b16 %v5444, %v5443
        %v5472 = vpack.c.b16 %v5446, %v5445
        %v5473 = vpack.c.b16 %v5448, %v5447
        %v5474 = vpack.c.b16 %v5450, %v5449
        %v5475 = vpack.c.b16 %v5452, %v5451
        %v5476 = vpack.c.b16 %v5454, %v5453
        %v5477 = vpack.c.b16 %v5456, %v5455
        %v5478 = vpack.c.b16 %v5458, %v5457
        %v5479 = vpack.c.b16 %v5460, %v5459
        %v5480 = vpack.c.b16 %v5462, %v5461
        %v5500 = vsel %vm449, %v5338, 0
        %v5503 = vsel %vm449, %v5341, 0
        %v5506 = vsel %vm449, %v5344, 0
        %v5509 = vsel %vm449, %v5347, 0
        %5511 = vmatprep.subr.bf16.mxu0 0
        %5512 = vmatpush1.bf16.msra.mxu0 %v5463
        %5513 = vmatprep.subr.bf16.mxu0 0
        %5514 = vmatpush1.bf16.msra.mxu0 %v5464
        %5515 = vmatprep.subr.bf16.mxu0 0
        %5516 = vmatpush1.bf16.msra.mxu0 %v5465
        %5517 = vmatprep.subr.bf16.mxu0 0
        %5518 = vmatpush1.bf16.msra.mxu0 %v5466
        %5519 = vmatprep.subr.bf16.mxu0 0
        %5520 = vmatpush1.bf16.msra.mxu0 %v5467
        %5521 = vmatprep.subr.bf16.mxu0 0
        %5522 = vmatpush1.bf16.msra.mxu0 %v5468
        %5523 = vmatprep.subr.bf16.mxu0 0
        %5524 = vmatpush1.bf16.msra.mxu0 %v5469
        %5525 = vmatprep.subr.bf16.mxu0 0
        %5526 = vmatpush1.bf16.msra.mxu0 %v5470
        %5527 = vmatprep.subr.bf16.mxu0 0
        %5528 = vmatpush1.bf16.msra.mxu0 %v5471
        %5529 = vmatprep.subr.bf16.mxu0 0
        %5530 = vmatpush1.bf16.msra.mxu0 %v5472
        %5531 = vmatprep.subr.bf16.mxu0 0
        %5532 = vmatpush1.bf16.msra.mxu0 %v5473
        %5533 = vmatprep.subr.bf16.mxu0 0
        %5534 = vmatpush1.bf16.msra.mxu0 %v5474
        %5535 = vmatprep.subr.bf16.mxu0 0
        %5536 = vmatpush1.bf16.msra.mxu0 %v5475
        %5537 = vmatprep.subr.bf16.mxu0 0
        %5538 = vmatpush1.bf16.msra.mxu0 %v5476
        %5539 = vmatprep.subr.bf16.mxu0 0
        %5540 = vmatpush1.bf16.msra.mxu0 %v5477
        %5541 = vmatprep.subr.bf16.mxu0 0
        %5542 = vmatpush1.bf16.msra.mxu0 %v5478
        %5543 = vmatprep.mubr.bf16.mxu0 %v5337
        %5544 = vmatmul.mubr.bf16.gmra.mrb[0].mxu0 %v5336
        %v5545 = vpop.f32.mrb[0].mxu0
        %v5546 = vadd.f32 %v5389, %v5545
        %v5547 = vpop.f32.mrb[0].mxu0
        %v5548 = vpop.f32.mrb[0].mxu0
        %v5549 = vadd.f32 %v5389, %v5548
        %v5550 = vpop.f32.mrb[0].mxu0
        %5551 = vmatprep.mubr.bf16.mxu0 %v5340
        %5552 = vmatmul.mubr.bf16.gmra.mrb[0].mxu0 %v5339
        %v5553 = vpop.f32.mrb[0].mxu0
        %v5554 = vadd.f32 %v5389, %v5553
        %v5555 = vpop.f32.mrb[0].mxu0
        %v5556 = vpop.f32.mrb[0].mxu0
        %v5557 = vadd.f32 %v5389, %v5556
        %v5558 = vpop.f32.mrb[0].mxu0
        %5559 = vmatprep.mubr.bf16.mxu0 %v5343
        %5560 = vmatmul.mubr.bf16.gmra.mrb[0].mxu0 %v5342
        %v5561 = vpop.f32.mrb[0].mxu0
        %v5562 = vadd.f32 %v5389, %v5561
        %v5563 = vpop.f32.mrb[0].mxu0
        %v5564 = vpop.f32.mrb[0].mxu0
        %v5565 = vadd.f32 %v5389, %v5564
        %v5566 = vpop.f32.mrb[0].mxu0
        %5567 = vmatprep.mubr.bf16.mxu0 %v5346
        %5568 = vmatmul.mubr.bf16.gmra.mrb[0].mxu0 %v5345
        %v5569 = vpop.f32.mrb[0].mxu0
        %v5570 = vadd.f32 %v5389, %v5569
        %v5571 = vpop.f32.mrb[0].mxu0
        %v5572 = vpop.f32.mrb[0].mxu0
        %v5573 = vadd.f32 %v5389, %v5572
        %v5574 = vpop.f32.mrb[0].mxu0
        %5575 = vdwg.mxu0
        %5576 = vmatprep.subr.bf16.mxu0 0
        %5577 = vmatpush1.bf16.msra.mxu0 %v5479
        %5578 = vmatprep.subr.bf16.mxu0 0
        %5579 = vmatpush1.bf16.msra.mxu0 %v5480
        %5580 = vmatprep.subr.bf16.mxu0 0
        %5581 = vmatpush1.bf16.msra.mxu0 0
        %5582 = vmatprep.subr.bf16.mxu0 0
        %5583 = vmatpush1.bf16.msra.mxu0 0
        %5584 = vmatprep.subr.bf16.mxu0 0
        %5585 = vmatpush1.bf16.msra.mxu0 0
        %5586 = vmatprep.subr.bf16.mxu0 0
        %5587 = vmatpush1.bf16.msra.mxu0 0
        %5588 = vmatprep.subr.bf16.mxu0 0
        %5589 = vmatpush1.bf16.msra.mxu0 0
        %5590 = vmatprep.subr.bf16.mxu0 0
        %5591 = vmatpush1.bf16.msra.mxu0 0
        %5592 = vmatprep.subr.bf16.mxu0 0
        %5593 = vmatpush1.bf16.msra.mxu0 0
        %5594 = vmatprep.subr.bf16.mxu0 0
        %5595 = vmatpush1.bf16.msra.mxu0 0
        %5596 = vmatprep.subr.bf16.mxu0 0
        %5597 = vmatpush1.bf16.msra.mxu0 0
        %5598 = vmatprep.subr.bf16.mxu0 0
        %5599 = vmatpush1.bf16.msra.mxu0 0
        %5600 = vmatprep.subr.bf16.mxu0 0
        %5601 = vmatpush1.bf16.msra.mxu0 0
        %5602 = vmatprep.subr.bf16.mxu0 0
        %5603 = vmatpush1.bf16.msra.mxu0 0
        %5604 = vmatprep.subr.bf16.mxu0 0
        %5605 = vmatpush1.bf16.msra.mxu0 0
        %5606 = vmatprep.subr.bf16.mxu0 0
        %5607 = vmatpush1.bf16.msra.mxu0 0
        %5608 = vmatprep.mubr.bf16.mxu0 0
        %5609 = vmatmul.mubr.bf16.gmra.mrb[0].mxu0 %v5500
        %v5610 = vpop.f32.mrb[0].mxu0
        %v5611 = vadd.f32 %v5546, %v5610
        %v5612 = vpop.f32.mrb[0].mxu0
        %v5613 = vpop.f32.mrb[0].mxu0
        %v5614 = vadd.f32 %v5549, %v5613
        %v5615 = vpop.f32.mrb[0].mxu0
        %5616 = vmatprep.mubr.bf16.mxu0 0
        %5617 = vmatmul.mubr.bf16.gmra.mrb[0].mxu0 %v5503
        %v5618 = vpop.f32.mrb[0].mxu0
        %v5619 = vadd.f32 %v5554, %v5618
        %v5620 = vpop.f32.mrb[0].mxu0
        %v5621 = vpop.f32.mrb[0].mxu0
        %v5622 = vadd.f32 %v5557, %v5621
        %v5623 = vpop.f32.mrb[0].mxu0
        %5624 = vmatprep.mubr.bf16.mxu0 0
        %5625 = vmatmul.mubr.bf16.gmra.mrb[0].mxu0 %v5506
        %v5626 = vpop.f32.mrb[0].mxu0
        %v5627 = vadd.f32 %v5562, %v5626
        %v5628 = vpop.f32.mrb[0].mxu0
        %v5629 = vpop.f32.mrb[0].mxu0
        %v5630 = vadd.f32 %v5565, %v5629
        %v5631 = vpop.f32.mrb[0].mxu0
        %5632 = vmatprep.mubr.bf16.mxu0 0
        %5633 = vmatmul.mubr.bf16.gmra.mrb[0].mxu0 %v5509
        %v5634 = vpop.f32.mrb[0].mxu0
        %v5635 = vadd.f32 %v5570, %v5634
        %v5636 = vpop.f32.mrb[0].mxu0
        %v5637 = vpop.f32.mrb[0].mxu0
        %v5638 = vadd.f32 %v5573, %v5637
        %v5639 = vpop.f32.mrb[0].mxu0
        %5640 = vdwg.mxu0
        %5641 = vst.msk [vmem:[%s433] sm:$0xff] %vm440, %v5611
        %5642 = vst.msk [vmem:[%s433 + $0x8] sm:$0xff] %vm440, %v5614
        %5643 = vst.msk [vmem:[%s433 + $0x10] sm:$0xff] %vm440, %v5619
        %5644 = vst.msk [vmem:[%s433 + $0x18] sm:$0xff] %vm440, %v5622
        %5645 = vst.msk [vmem:[%s433 + $0x20] sm:$0xff] %vm440, %v5627
        %5646 = vst.msk [vmem:[%s433 + $0x28] sm:$0xff] %vm440, %v5630
        %5647 = vst.msk [vmem:[%s433 + $0x30] sm:$0xff] %vm440, %v5635
        %5648 = vst.msk [vmem:[%s433 + $0x38] sm:$0xff] %vm440, %v5638
        %s5649 = sand.u32 %s313, 1
        %s5650 = scalar_lea.sflag [#allocation7], %s5649
        %s5651 = sand.u32 %s313, 1
        %s5652 = smul.addr %s5651, 64
        %s5653 = scalar_lea.vmem [#allocation6], %s5652
        // Predicated region
        $region73: #{conv_head_forward.1} parent=71 // pred_check
          %p5654 = pneg %p323
        $region74: #{conv_head_forward.1} parent=71 // pred_check_branch
          %5656 = sbr.rel (%p5654) target = $region76
        $region75: #{conv_head_forward.1} parent=71 // pred_region
          %s5658 = ssub.s32 1024, 1024
          %5659 = vsyncadd %s5650, %s5658
          %s5660 = smul.addr %s27, 8
          %s5661 = smul.addr %s5660, 128
          %s5662 = scalar_lea.hbm %s13, %s5661
          %s5663 = sshll.u32 %s5653, 4
          %s5664 = int_to_ptr.vmem [resolvable:$true] %s5663
          %5669 = dma.vmem_to_hbm [thread:$0]  %s5664, 1024, %s5662, %s5650, 128, 128, 8
        $region76: #{conv_head_forward.1} parent=71 // pred_fallthru
          _
      $region72: #{conv_head_forward.1} parent=5 // pred_fallthru
        _
      %p5670 = scmp.le.s32.totalorder 2, %s22
      // Predicated region
      $region77: #{conv_head_forward.1} parent=5 // pred_check
        %p5671 = pneg %p5670
      $region78: #{conv_head_forward.1} parent=5 // pred_check_branch
        %5673 = sbr.rel (%p5671) target = $region80
      $region79: #{conv_head_forward.1} parent=5 // pred_region
        %s5674 = ssub.s32 %s22, 2
        // Predicated region
        $region81: #{conv_head_forward.1} parent=79 // pred_check
          %p5675 = pneg %p329
        $region82: #{conv_head_forward.1} parent=79 // pred_check_branch
          %5677 = sbr.rel (%p5675) target = $region84
        $region83: #{conv_head_forward.1} parent=79 // pred_region
          %s5678 = sand.u32 %s314, 1
          %s5679 = scalar_lea.sflag [#allocation7], %s5678
          %s5680 = sand.u32 %s314, 1
          %s5681 = smul.addr %s5680, 64
          %s5682 = scalar_lea.vmem [#allocation6], %s5681
          %5683 = dma.done %s5679, 1024
        $region84: #{conv_head_forward.1} parent=79 // pred_fallthru
          _
      $region80: #{conv_head_forward.1} parent=5 // pred_fallthru
        _
    $region6: #{conv_head_forward.1} parent=1 // loop_footer
      %s26 = sadd.s32 1, %s22
    $region7: #{conv_head_forward.1} parent=1 // loop_footer_branch
      %21 = sbr.rel target = $region3
    $region8: #{conv_head_forward.1} parent=1 // loop_exit
      _
    %5684 = vsyncpa [#allocation7], 1
    %s5685 = scalar_lea.sflag [#allocation7], 1
    %5686 = vsyncpa %s5685, 1

</llo_original>
